<compile_context>
chip_gen: v6e
topology: v6e:2x2x1
jax: 0.10.0
libtpu: 0.0.40
codegen_flags: <defaults>
</compile_context>

<pallas_src>
import functools

import jax
import jax.numpy as jnp
from jax.experimental import pallas as pl
from jax.experimental.pallas import tpu as pltpu


def _chunked_attn_kernel(x_ref, wqkv_ref, bq_ref, bkv_ref, wo_ref, bo_ref,
                         gamma_ref, o_ref, *, nb, c):
    """One grid step = `nb` chunks, channel-major lane-dense (C, nb*Nc)."""
    C, L = x_ref.shape
    Nc = L // nb                         # spatial positions per chunk
    M = Nc // 4                          # pooled positions per chunk

    xb = x_ref[...].astype(jnp.bfloat16)                         # (C, L)

    # 1) Fused Q|K|V 1x1 conv: ONE wide MXU matmul (K=C, N=nb*Nc lanes).
    qkv = jnp.dot(wqkv_ref[...], xb,
                  preferred_element_type=jnp.float32)            # (3c, L) f32

    # 2) Per-chunk (block-diagonal) view for the attention core.  The chunk
    #    batch is peeled off the lane axis with static 64-lane slices (simple,
    #    always-lowerable relayout) -- attention never mixes chunks.
    qkv_b = jnp.stack([qkv[:, j * Nc:(j + 1) * Nc] for j in range(nb)],
                      axis=0)                                    # (nb, 3c, Nc)

    q = qkv_b[:, :c, :] + bq_ref[...]                            # (nb, c, Nc)
    kv = qkv_b[:, c:, :]                                         # (nb, 2c, Nc)

    # 3) MaxPool2d(2): within-chunk lanes are ordered (h%2, w%2, h//2, w//2),
    #    so the 2x2-window max is a max over four contiguous lane groups.
    kvp = jnp.maximum(jnp.maximum(kv[..., 0:M], kv[..., M:2 * M]),
                      jnp.maximum(kv[..., 2 * M:3 * M], kv[..., 3 * M:4 * M]))
    kvp = kvp + bkv_ref[...]                    # K/V bias AFTER pooling (exact)
    kp = kvp[:, :c, :].astype(jnp.bfloat16)                      # (nb, c, M)
    vp = kvp[:, c:, :].astype(jnp.bfloat16)                      # (nb, c, M)

    # 4) energy^T[b, m, n] = <k_m, q_n> (torch softmaxes over m).  Contract
    #    over the channel axis directly -- no explicit transpose.
    energy = jnp.einsum("bcm,bcn->bmn", kp, q.astype(jnp.bfloat16),
                        preferred_element_type=jnp.float32)      # (nb, M, Nc)
    energy = energy - jnp.max(energy, axis=1, keepdims=True)
    p = jnp.exp(energy)
    denom = jnp.sum(p, axis=1, keepdims=True)                    # (nb, 1, Nc)

    # 5) attention_out with DEFERRED softmax normalization: scale the small
    #    (nb, c, Nc) result instead of the (nb, M, Nc) attention matrix.
    ao = jnp.einsum("bcm,bmn->bcn", vp, p.astype(jnp.bfloat16),
                    preferred_element_type=jnp.float32)          # (nb, c, Nc)
    ao = (ao * pl.reciprocal(denom, approx=True)).astype(jnp.bfloat16)

    # 6) Back to the wide lane-dense layout; out-conv (1x1) is again one wide
    #    matmul.  Row-blocked epilogue: dense 8 x (nb*Nc) stores, small f32
    #    live ranges.
    ao_w = jnp.concatenate([ao[j] for j in range(nb)], axis=1)   # (c, L) bf16
    wo = wo_ref[...]                                             # (C, c) bf16
    gamma = gamma_ref[0, 0]
    rg = 8 if C % 8 == 0 else C
    for rb in range(C // rg):
        rs = slice(rb * rg, (rb + 1) * rg)
        out_r = jnp.dot(wo[rs, :], ao_w,
                        preferred_element_type=jnp.float32)      # (rg, L)
        out_r = out_r + bo_ref[rs, :]
        o_ref[rs, :] = gamma * out_r + x_ref[rs, :]


def _pick_chunks_per_step(nchunks, n_per_chunk):
    """Largest chunk batch with a >=128-multiple lane width, preferring a grid
    of >=4 steps (2 per TensorCore on v7x), then >=2, then anything."""
    cands = [nb for nb in (64, 32, 16, 8, 4, 2, 1)
             if nchunks % nb == 0
             and ((nb * n_per_chunk) % 128 == 0 or nb == nchunks)]
    for min_steps in (4, 2, 1):
        for nb in cands:
            if nchunks // nb >= min_steps:
                return nb
    return 1


def chunked_self_attn_fm(x, params, chunk_grid=(8, 8)):
    """Forward pass of Chuncked_Self_Attn_FM (subsample=True), NCHW in/out."""
    B, C, H, W = x.shape
    g0, g1 = chunk_grid
    assert H % g0 == 0 and W % g1 == 0
    cH, cW = H // g0, W // g1
    assert cH % 2 == 0 and cW % 2 == 0, "MaxPool2d(2) needs even chunk dims"
    Nc = cH * cW
    M = Nc // 4
    nchunks = B * g0 * g1
    c = params["wq"].shape[0]

    # Chunk interleave + 2x2-pool parity grouping (one layout permute each way):
    # lane = chunk*Nc + (h%2 * 2 + w%2)*M + (h//2)*(cW//2) + (w//2), chunk-major.
    xr = x.reshape(B, C, g0, cH // 2, 2, g1, cW // 2, 2)
    xr = xr.transpose(1, 0, 2, 5, 4, 7, 3, 6)       # (C, b, gh, gw, hp, wp, hh, ww)
    xc = xr.reshape(C, nchunks * Nc)

    # Fused QKV weights (out, in) orientation; weights bf16 (MXU), biases f32.
    wqkv = jnp.concatenate([params["wq"], params["wk"], params["wv"]],
                           axis=0).astype(jnp.bfloat16)          # (3c, C)
    bq = params["bq"].reshape(c, 1).astype(jnp.float32)
    bkv = jnp.concatenate([params["bk"], params["bv"]],
                          axis=0).reshape(2 * c, 1).astype(jnp.float32)
    wo = params["wo"].astype(jnp.bfloat16)                       # (C, c)
    bo = params["bo"].reshape(C, 1).astype(jnp.float32)
    gamma = params["gamma"].reshape(1, 1).astype(jnp.float32)

    nb = _pick_chunks_per_step(nchunks, Nc)          # chunks per grid step
    L = nb * Nc                                      # lanes per block

    kernel = functools.partial(_chunked_attn_kernel, nb=nb, c=c)
    out_c = pl.pallas_call(
        kernel,
        out_shape=jax.ShapeDtypeStruct((C, nchunks * Nc), jnp.float32),
        grid=(nchunks // nb,),
        in_specs=[
            pl.BlockSpec((C, L), lambda i: (0, i)),              # x slab
            pl.BlockSpec((3 * c, C), lambda i: (0, 0)),          # wqkv (bf16)
            pl.BlockSpec((c, 1), lambda i: (0, 0)),              # bq
            pl.BlockSpec((2 * c, 1), lambda i: (0, 0)),          # bk|bv
            pl.BlockSpec((C, c), lambda i: (0, 0)),              # wo (bf16)
            pl.BlockSpec((C, 1), lambda i: (0, 0)),              # bo
            pl.BlockSpec(memory_space=pltpu.MemorySpace.SMEM),   # gamma scalar
        ],
        out_specs=pl.BlockSpec((C, L), lambda i: (0, i)),
        compiler_params=pltpu.CompilerParams(
            dimension_semantics=("parallel",),
            # honest working set: 2x(in+out blocks) + small f32 intermediates
            vmem_limit_bytes=8 * 1024 * 1024,
        ),
    )(xc, wqkv, bq, bkv, wo, bo, gamma)

    # Undo the parity grouping + chunk interleave.
    y = out_c.reshape(C, B, g0, g1, 2, 2, cH // 2, cW // 2)
    y = y.transpose(1, 0, 2, 6, 4, 3, 7, 5)          # (B, C, gh, hh, hp, gw, ww, wp)
    return y.reshape(B, C, H, W)


# ----------------------------- pure-JAX reference ---------------------------
def _self_attn_fm_reference(x, params):
    B, C, H, W = x.shape
    hp = jax.lax.Precision.HIGHEST

    def conv1x1(t, w_oc, b):
        return (jnp.einsum("oi,bihw->bohw", w_oc, t, precision=hp)
                + b.reshape(1, -1, 1, 1))

    def maxpool2(t):
        b_, ck, hh, ww = t.shape
        return t.reshape(b_, ck, hh // 2, 2, ww // 2, 2).max(axis=(3, 5))

    c = params["wq"].shape[0]
    q = conv1x1(x, params["wq"], params["bq"]).reshape(B, c, -1).transpose(0, 2, 1)
    k = maxpool2(conv1x1(x, params["wk"], params["bk"])).reshape(B, c, -1)
    energy = jnp.einsum("bnc,bcm->bnm", q, k, precision=hp)
    attn = jax.nn.softmax(energy, axis=-1)
    v = maxpool2(conv1x1(x, params["wv"], params["bv"])).reshape(B, c, -1)
    ao = jnp.einsum("bcm,bnm->bcn", v, attn, precision=hp).reshape(B, c, H, W)
    out = conv1x1(ao, params["wo"], params["bo"])
    return params["gamma"].reshape(()) * out + x


def _reference_forward(x, params, chunk_grid=(8, 8)):
    B, C, H, W = x.shape
    g0, g1 = chunk_grid
    cH, cW = H // g0, W // g1
    xc = (x.reshape(B, C, g0, cH, g1, cW)
           .transpose(0, 2, 4, 1, 3, 5)
           .reshape(B * g0 * g1, C, cH, cW))
    yc = _self_attn_fm_reference(xc, params)
    return (yc.reshape(B, g0, g1, C, cH, cW)
              .transpose(0, 3, 1, 4, 2, 5)
              .reshape(B, C, H, W))


if __name__ == "__main__":
    # in_channel = 32, r = 8 -> channel_latent c = 4; grid (8, 8) -> 8x8 chunks.
    B, C, H, W = 2, 32, 64, 64
    r = 8
    grid_hw = (8, 8)
    c = C // r

    key = jax.random.PRNGKey(0)
    keys = jax.random.split(key, 9)
    # Conv weights stored (out, in) == squeezed torch 1x1 kernels.  Torch init
    # sets gamma = 0; use a nonzero gamma so the attention path contributes.
    params = {
        "wq": 0.1 * jax.random.normal(keys[0], (c, C), jnp.float32),
        "bq": 0.1 * jax.random.normal(keys[1], (c,), jnp.float32),
        "wk": 0.1 * jax.random.normal(keys[2], (c, C), jnp.float32),
        "bk": 0.1 * jax.random.normal(keys[3], (c,), jnp.float32),
        "wv": 0.1 * jax.random.normal(keys[4], (c, C), jnp.float32),
        "bv": 0.1 * jax.random.normal(keys[5], (c,), jnp.float32),
        "wo": 0.1 * jax.random.normal(keys[6], (C, c), jnp.float32),
        "bo": 0.1 * jax.random.normal(keys[7], (C,), jnp.float32),
        "gamma": jnp.array([0.5], jnp.float32),
    }
    x = jax.random.normal(keys[8], (B, C, H, W), jnp.float32)

    fwd = jax.jit(functools.partial(chunked_self_attn_fm, chunk_grid=grid_hw))
    out = jax.block_until_ready(fwd(x, params))

    ref = _reference_forward(x, params, chunk_grid=grid_hw)
    assert out.shape == (B, C, H, W)
    max_diff = jnp.max(jnp.abs(out - ref))
    # bf16 MXU operands (f32 accumulation) + approx reciprocal -> relaxed tol.
    assert jnp.allclose(out, ref, rtol=2e-2, atol=2e-2), (
        f"max abs diff = {max_diff}")

    print("KERNEL_OK")
</pallas_src>

<mosaic_0001>
module attributes {stable_mosaic.version = 11 : i64} {
  func.func @_chunked_attn_kernel(%arg0: i32, %arg1: memref<32x2048xf32, #tpu.memory_space<vmem>>, %arg2: memref<12x32xbf16, #tpu.memory_space<vmem>>, %arg3: memref<4x1xf32, #tpu.memory_space<vmem>>, %arg4: memref<8x1xf32, #tpu.memory_space<vmem>>, %arg5: memref<32x4xbf16, #tpu.memory_space<vmem>>, %arg6: memref<32x1xf32, #tpu.memory_space<vmem>>, %arg7: memref<1x1xf32, #tpu.memory_space<smem>>, %arg8: memref<32x2048xf32, #tpu.memory_space<vmem>>) attributes {dimension_semantics = [#tpu.dimension_semantics<parallel>], iteration_bounds = array<i64: 4>, scalar_prefetch = 0 : i64, scratch_operands = 0 : i64, tpu.core_type = #tpu.core_type<tc>, window_params = [{transform_indices = @transform_0, window_bounds = array<i64: 32, 2048>}, {pipeline_mode = #tpu.pipeline_mode<synchronous>, transform_indices = @transform_1, window_bounds = array<i64: 12, 32>}, {pipeline_mode = #tpu.pipeline_mode<synchronous>, transform_indices = @transform_2, window_bounds = array<i64: 4, 1>}, {pipeline_mode = #tpu.pipeline_mode<synchronous>, transform_indices = @transform_3, window_bounds = array<i64: 8, 1>}, {pipeline_mode = #tpu.pipeline_mode<synchronous>, transform_indices = @transform_4, window_bounds = array<i64: 32, 4>}, {pipeline_mode = #tpu.pipeline_mode<synchronous>, transform_indices = @transform_5, window_bounds = array<i64: 32, 1>}, {transform_indices = @transform_6, window_bounds = array<i64: 1, 1>}, {transform_indices = @transform_7, window_bounds = array<i64: 32, 2048>}]} {
    %c0 = arith.constant 0 : index
    %c0_0 = arith.constant 0 : index
    %0 = vector.load %arg1[%c0, %c0_0] : memref<32x2048xf32, #tpu.memory_space<vmem>>, vector<32x2048xf32>
    %1 = arith.truncf %0 : vector<32x2048xf32> to vector<32x2048xbf16>
    %c0_1 = arith.constant 0 : index
    %c0_2 = arith.constant 0 : index
    %2 = vector.load %arg2[%c0_1, %c0_2] : memref<12x32xbf16, #tpu.memory_space<vmem>>, vector<12x32xbf16>
    %cst = arith.constant dense<0.000000e+00> : vector<12x2048xf32>
    %3 = tpu.matmul %2, %1, %cst {dimension_numbers = #tpu.dot_dimension_numbers<[1], [0], [0], [1], [0, 0, 1, 1], [], []>} : vector<12x32xbf16>, vector<32x2048xbf16>, vector<12x2048xf32> -> vector<12x2048xf32>
    %4 = vector.extract_strided_slice %3 {offsets = [0, 0], sizes = [12, 64], strides = [1, 1]} : vector<12x2048xf32> to vector<12x64xf32>
    %5 = vector.extract_strided_slice %3 {offsets = [0, 64], sizes = [12, 64], strides = [1, 1]} : vector<12x2048xf32> to vector<12x64xf32>
    %6 = vector.extract_strided_slice %3 {offsets = [0, 128], sizes = [12, 64], strides = [1, 1]} : vector<12x2048xf32> to vector<12x64xf32>
    %7 = vector.extract_strided_slice %3 {offsets = [0, 192], sizes = [12, 64], strides = [1, 1]} : vector<12x2048xf32> to vector<12x64xf32>
    %8 = vector.extract_strided_slice %3 {offsets = [0, 256], sizes = [12, 64], strides = [1, 1]} : vector<12x2048xf32> to vector<12x64xf32>
    %9 = vector.extract_strided_slice %3 {offsets = [0, 320], sizes = [12, 64], strides = [1, 1]} : vector<12x2048xf32> to vector<12x64xf32>
    %10 = vector.extract_strided_slice %3 {offsets = [0, 384], sizes = [12, 64], strides = [1, 1]} : vector<12x2048xf32> to vector<12x64xf32>
    %11 = vector.extract_strided_slice %3 {offsets = [0, 448], sizes = [12, 64], strides = [1, 1]} : vector<12x2048xf32> to vector<12x64xf32>
    %12 = vector.extract_strided_slice %3 {offsets = [0, 512], sizes = [12, 64], strides = [1, 1]} : vector<12x2048xf32> to vector<12x64xf32>
    %13 = vector.extract_strided_slice %3 {offsets = [0, 576], sizes = [12, 64], strides = [1, 1]} : vector<12x2048xf32> to vector<12x64xf32>
    %14 = vector.extract_strided_slice %3 {offsets = [0, 640], sizes = [12, 64], strides = [1, 1]} : vector<12x2048xf32> to vector<12x64xf32>
    %15 = vector.extract_strided_slice %3 {offsets = [0, 704], sizes = [12, 64], strides = [1, 1]} : vector<12x2048xf32> to vector<12x64xf32>
    %16 = vector.extract_strided_slice %3 {offsets = [0, 768], sizes = [12, 64], strides = [1, 1]} : vector<12x2048xf32> to vector<12x64xf32>
    %17 = vector.extract_strided_slice %3 {offsets = [0, 832], sizes = [12, 64], strides = [1, 1]} : vector<12x2048xf32> to vector<12x64xf32>
    %18 = vector.extract_strided_slice %3 {offsets = [0, 896], sizes = [12, 64], strides = [1, 1]} : vector<12x2048xf32> to vector<12x64xf32>
    %19 = vector.extract_strided_slice %3 {offsets = [0, 960], sizes = [12, 64], strides = [1, 1]} : vector<12x2048xf32> to vector<12x64xf32>
    %20 = vector.extract_strided_slice %3 {offsets = [0, 1024], sizes = [12, 64], strides = [1, 1]} : vector<12x2048xf32> to vector<12x64xf32>
    %21 = vector.extract_strided_slice %3 {offsets = [0, 1088], sizes = [12, 64], strides = [1, 1]} : vector<12x2048xf32> to vector<12x64xf32>
    %22 = vector.extract_strided_slice %3 {offsets = [0, 1152], sizes = [12, 64], strides = [1, 1]} : vector<12x2048xf32> to vector<12x64xf32>
    %23 = vector.extract_strided_slice %3 {offsets = [0, 1216], sizes = [12, 64], strides = [1, 1]} : vector<12x2048xf32> to vector<12x64xf32>
    %24 = vector.extract_strided_slice %3 {offsets = [0, 1280], sizes = [12, 64], strides = [1, 1]} : vector<12x2048xf32> to vector<12x64xf32>
    %25 = vector.extract_strided_slice %3 {offsets = [0, 1344], sizes = [12, 64], strides = [1, 1]} : vector<12x2048xf32> to vector<12x64xf32>
    %26 = vector.extract_strided_slice %3 {offsets = [0, 1408], sizes = [12, 64], strides = [1, 1]} : vector<12x2048xf32> to vector<12x64xf32>
    %27 = vector.extract_strided_slice %3 {offsets = [0, 1472], sizes = [12, 64], strides = [1, 1]} : vector<12x2048xf32> to vector<12x64xf32>
    %28 = vector.extract_strided_slice %3 {offsets = [0, 1536], sizes = [12, 64], strides = [1, 1]} : vector<12x2048xf32> to vector<12x64xf32>
    %29 = vector.extract_strided_slice %3 {offsets = [0, 1600], sizes = [12, 64], strides = [1, 1]} : vector<12x2048xf32> to vector<12x64xf32>
    %30 = vector.extract_strided_slice %3 {offsets = [0, 1664], sizes = [12, 64], strides = [1, 1]} : vector<12x2048xf32> to vector<12x64xf32>
    %31 = vector.extract_strided_slice %3 {offsets = [0, 1728], sizes = [12, 64], strides = [1, 1]} : vector<12x2048xf32> to vector<12x64xf32>
    %32 = vector.extract_strided_slice %3 {offsets = [0, 1792], sizes = [12, 64], strides = [1, 1]} : vector<12x2048xf32> to vector<12x64xf32>
    %33 = vector.extract_strided_slice %3 {offsets = [0, 1856], sizes = [12, 64], strides = [1, 1]} : vector<12x2048xf32> to vector<12x64xf32>
    %34 = vector.extract_strided_slice %3 {offsets = [0, 1920], sizes = [12, 64], strides = [1, 1]} : vector<12x2048xf32> to vector<12x64xf32>
    %35 = vector.extract_strided_slice %3 {offsets = [0, 1984], sizes = [12, 64], strides = [1, 1]} : vector<12x2048xf32> to vector<12x64xf32>
    %36 = vector.shape_cast %4 : vector<12x64xf32> to vector<1x12x64xf32>
    %37 = vector.shape_cast %5 : vector<12x64xf32> to vector<1x12x64xf32>
    %38 = vector.shape_cast %6 : vector<12x64xf32> to vector<1x12x64xf32>
    %39 = vector.shape_cast %7 : vector<12x64xf32> to vector<1x12x64xf32>
    %40 = vector.shape_cast %8 : vector<12x64xf32> to vector<1x12x64xf32>
    %41 = vector.shape_cast %9 : vector<12x64xf32> to vector<1x12x64xf32>
    %42 = vector.shape_cast %10 : vector<12x64xf32> to vector<1x12x64xf32>
    %43 = vector.shape_cast %11 : vector<12x64xf32> to vector<1x12x64xf32>
    %44 = vector.shape_cast %12 : vector<12x64xf32> to vector<1x12x64xf32>
    %45 = vector.shape_cast %13 : vector<12x64xf32> to vector<1x12x64xf32>
    %46 = vector.shape_cast %14 : vector<12x64xf32> to vector<1x12x64xf32>
    %47 = vector.shape_cast %15 : vector<12x64xf32> to vector<1x12x64xf32>
    %48 = vector.shape_cast %16 : vector<12x64xf32> to vector<1x12x64xf32>
    %49 = vector.shape_cast %17 : vector<12x64xf32> to vector<1x12x64xf32>
    %50 = vector.shape_cast %18 : vector<12x64xf32> to vector<1x12x64xf32>
    %51 = vector.shape_cast %19 : vector<12x64xf32> to vector<1x12x64xf32>
    %52 = vector.shape_cast %20 : vector<12x64xf32> to vector<1x12x64xf32>
    %53 = vector.shape_cast %21 : vector<12x64xf32> to vector<1x12x64xf32>
    %54 = vector.shape_cast %22 : vector<12x64xf32> to vector<1x12x64xf32>
    %55 = vector.shape_cast %23 : vector<12x64xf32> to vector<1x12x64xf32>
    %56 = vector.shape_cast %24 : vector<12x64xf32> to vector<1x12x64xf32>
    %57 = vector.shape_cast %25 : vector<12x64xf32> to vector<1x12x64xf32>
    %58 = vector.shape_cast %26 : vector<12x64xf32> to vector<1x12x64xf32>
    %59 = vector.shape_cast %27 : vector<12x64xf32> to vector<1x12x64xf32>
    %60 = vector.shape_cast %28 : vector<12x64xf32> to vector<1x12x64xf32>
    %61 = vector.shape_cast %29 : vector<12x64xf32> to vector<1x12x64xf32>
    %62 = vector.shape_cast %30 : vector<12x64xf32> to vector<1x12x64xf32>
    %63 = vector.shape_cast %31 : vector<12x64xf32> to vector<1x12x64xf32>
    %64 = vector.shape_cast %32 : vector<12x64xf32> to vector<1x12x64xf32>
    %65 = vector.shape_cast %33 : vector<12x64xf32> to vector<1x12x64xf32>
    %66 = vector.shape_cast %34 : vector<12x64xf32> to vector<1x12x64xf32>
    %67 = vector.shape_cast %35 : vector<12x64xf32> to vector<1x12x64xf32>
    %68 = tpu.concatenate %36, %37, %38, %39, %40, %41, %42, %43, %44, %45, %46, %47, %48, %49, %50, %51 in 0 : vector<1x12x64xf32>, vector<1x12x64xf32>, vector<1x12x64xf32>, vector<1x12x64xf32>, vector<1x12x64xf32>, vector<1x12x64xf32>, vector<1x12x64xf32>, vector<1x12x64xf32>, vector<1x12x64xf32>, vector<1x12x64xf32>, vector<1x12x64xf32>, vector<1x12x64xf32>, vector<1x12x64xf32>, vector<1x12x64xf32>, vector<1x12x64xf32>, vector<1x12x64xf32> -> vector<16x12x64xf32>
    %69 = tpu.concatenate %52, %53, %54, %55, %56, %57, %58, %59, %60, %61, %62, %63, %64, %65, %66, %67 in 0 : vector<1x12x64xf32>, vector<1x12x64xf32>, vector<1x12x64xf32>, vector<1x12x64xf32>, vector<1x12x64xf32>, vector<1x12x64xf32>, vector<1x12x64xf32>, vector<1x12x64xf32>, vector<1x12x64xf32>, vector<1x12x64xf32>, vector<1x12x64xf32>, vector<1x12x64xf32>, vector<1x12x64xf32>, vector<1x12x64xf32>, vector<1x12x64xf32>, vector<1x12x64xf32> -> vector<16x12x64xf32>
    %70 = tpu.concatenate %68, %69 in 0 : vector<16x12x64xf32>, vector<16x12x64xf32> -> vector<32x12x64xf32>
    %71 = vector.extract_strided_slice %70 {offsets = [0, 0, 0], sizes = [32, 4, 64], strides = [1, 1, 1]} : vector<32x12x64xf32> to vector<32x4x64xf32>
    %c0_3 = arith.constant 0 : index
    %c0_4 = arith.constant 0 : index
    %72 = vector.load %arg3[%c0_3, %c0_4] : memref<4x1xf32, #tpu.memory_space<vmem>>, vector<4x1xf32>
    %73 = vector.shape_cast %72 : vector<4x1xf32> to vector<1x4x1xf32>
    %74 = vector.broadcast %73 : vector<1x4x1xf32> to vector<32x4x64xf32>
    %75 = arith.addf %71, %74 : vector<32x4x64xf32>
    %76 = vector.extract_strided_slice %70 {offsets = [0, 4, 0], sizes = [32, 8, 64], strides = [1, 1, 1]} : vector<32x12x64xf32> to vector<32x8x64xf32>
    %77 = vector.extract_strided_slice %76 {offsets = [0, 0, 0], sizes = [32, 8, 16], strides = [1, 1, 1]} : vector<32x8x64xf32> to vector<32x8x16xf32>
    %78 = vector.extract_strided_slice %76 {offsets = [0, 0, 16], sizes = [32, 8, 16], strides = [1, 1, 1]} : vector<32x8x64xf32> to vector<32x8x16xf32>
    %79 = arith.maximumf %77, %78 : vector<32x8x16xf32>
    %80 = vector.extract_strided_slice %76 {offsets = [0, 0, 32], sizes = [32, 8, 16], strides = [1, 1, 1]} : vector<32x8x64xf32> to vector<32x8x16xf32>
    %81 = vector.extract_strided_slice %76 {offsets = [0, 0, 48], sizes = [32, 8, 16], strides = [1, 1, 1]} : vector<32x8x64xf32> to vector<32x8x16xf32>
    %82 = arith.maximumf %80, %81 : vector<32x8x16xf32>
    %83 = arith.maximumf %79, %82 : vector<32x8x16xf32>
    %c0_5 = arith.constant 0 : index
    %c0_6 = arith.constant 0 : index
    %84 = vector.load %arg4[%c0_5, %c0_6] : memref<8x1xf32, #tpu.memory_space<vmem>>, vector<8x1xf32>
    %85 = vector.shape_cast %84 : vector<8x1xf32> to vector<1x8x1xf32>
    %86 = vector.broadcast %85 : vector<1x8x1xf32> to vector<32x8x16xf32>
    %87 = arith.addf %83, %86 : vector<32x8x16xf32>
    %88 = vector.extract_strided_slice %87 {offsets = [0, 0, 0], sizes = [32, 4, 16], strides = [1, 1, 1]} : vector<32x8x16xf32> to vector<32x4x16xf32>
    %89 = arith.truncf %88 : vector<32x4x16xf32> to vector<32x4x16xbf16>
    %90 = vector.extract_strided_slice %87 {offsets = [0, 4, 0], sizes = [32, 4, 16], strides = [1, 1, 1]} : vector<32x8x16xf32> to vector<32x4x16xf32>
    %91 = arith.truncf %90 : vector<32x4x16xf32> to vector<32x4x16xbf16>
    %92 = arith.truncf %75 : vector<32x4x64xf32> to vector<32x4x64xbf16>
    "tpu.trace_start"() <{level = 10 : i32, message = "bcm,bcn->bmn"}> : () -> ()
    %cst_7 = arith.constant dense<0.000000e+00> : vector<32x16x64xf32>
    %93 = tpu.matmul %89, %92, %cst_7 {dimension_numbers = #tpu.dot_dimension_numbers<[1], [1], [2], [2], [0, 0, 0, 2, 1, 2], [0], [0]>} : vector<32x4x16xbf16>, vector<32x4x64xbf16>, vector<32x16x64xf32> -> vector<32x16x64xf32>
    "tpu.trace_stop"() : () -> ()
    %cst_8 = arith.constant dense<0xFF800000> : vector<32x64xf32>
    %94 = vector.multi_reduction <maximumf>, %93, %cst_8 [1] : vector<32x16x64xf32> to vector<32x64xf32>
    %95 = vector.shape_cast %94 : vector<32x64xf32> to vector<32x1x64xf32>
    %96 = vector.broadcast %95 : vector<32x1x64xf32> to vector<32x16x64xf32>
    %97 = arith.subf %93, %96 : vector<32x16x64xf32>
    %98 = math.exp %97 : vector<32x16x64xf32>
    %cst_9 = arith.constant dense<0.000000e+00> : vector<32x64xf32>
    %99 = vector.multi_reduction <add>, %98, %cst_9 [1] : vector<32x16x64xf32> to vector<32x64xf32>
    %100 = vector.shape_cast %99 : vector<32x64xf32> to vector<32x1x64xf32>
    %101 = arith.truncf %98 : vector<32x16x64xf32> to vector<32x16x64xbf16>
    "tpu.trace_start"() <{level = 10 : i32, message = "bcm,bmn->bcn"}> : () -> ()
    %cst_10 = arith.constant dense<0.000000e+00> : vector<32x4x64xf32>
    %102 = tpu.matmul %91, %101, %cst_10 {dimension_numbers = #tpu.dot_dimension_numbers<[2], [1], [1], [2], [0, 0, 0, 1, 1, 2], [0], [0]>} : vector<32x4x16xbf16>, vector<32x16x64xbf16>, vector<32x4x64xf32> -> vector<32x4x64xf32>
    "tpu.trace_stop"() : () -> ()
    %103 = tpu.reciprocal %100 {approx = true} : vector<32x1x64xf32> -> vector<32x1x64xf32>
    %104 = vector.broadcast %103 : vector<32x1x64xf32> to vector<32x4x64xf32>
    %105 = arith.mulf %102, %104 : vector<32x4x64xf32>
    %106 = arith.truncf %105 : vector<32x4x64xf32> to vector<32x4x64xbf16>
    %107 = vector.extract_strided_slice %106 {offsets = [0, 0, 0], sizes = [1, 4, 64], strides = [1, 1, 1]} : vector<32x4x64xbf16> to vector<1x4x64xbf16>
    %108 = vector.shape_cast %107 : vector<1x4x64xbf16> to vector<4x64xbf16>
    %109 = vector.extract_strided_slice %106 {offsets = [1, 0, 0], sizes = [1, 4, 64], strides = [1, 1, 1]} : vector<32x4x64xbf16> to vector<1x4x64xbf16>
    %110 = vector.shape_cast %109 : vector<1x4x64xbf16> to vector<4x64xbf16>
    %111 = vector.extract_strided_slice %106 {offsets = [2, 0, 0], sizes = [1, 4, 64], strides = [1, 1, 1]} : vector<32x4x64xbf16> to vector<1x4x64xbf16>
    %112 = vector.shape_cast %111 : vector<1x4x64xbf16> to vector<4x64xbf16>
    %113 = vector.extract_strided_slice %106 {offsets = [3, 0, 0], sizes = [1, 4, 64], strides = [1, 1, 1]} : vector<32x4x64xbf16> to vector<1x4x64xbf16>
    %114 = vector.shape_cast %113 : vector<1x4x64xbf16> to vector<4x64xbf16>
    %115 = vector.extract_strided_slice %106 {offsets = [4, 0, 0], sizes = [1, 4, 64], strides = [1, 1, 1]} : vector<32x4x64xbf16> to vector<1x4x64xbf16>
    %116 = vector.shape_cast %115 : vector<1x4x64xbf16> to vector<4x64xbf16>
    %117 = vector.extract_strided_slice %106 {offsets = [5, 0, 0], sizes = [1, 4, 64], strides = [1, 1, 1]} : vector<32x4x64xbf16> to vector<1x4x64xbf16>
    %118 = vector.shape_cast %117 : vector<1x4x64xbf16> to vector<4x64xbf16>
    %119 = vector.extract_strided_slice %106 {offsets = [6, 0, 0], sizes = [1, 4, 64], strides = [1, 1, 1]} : vector<32x4x64xbf16> to vector<1x4x64xbf16>
    %120 = vector.shape_cast %119 : vector<1x4x64xbf16> to vector<4x64xbf16>
    %121 = vector.extract_strided_slice %106 {offsets = [7, 0, 0], sizes = [1, 4, 64], strides = [1, 1, 1]} : vector<32x4x64xbf16> to vector<1x4x64xbf16>
    %122 = vector.shape_cast %121 : vector<1x4x64xbf16> to vector<4x64xbf16>
    %123 = vector.extract_strided_slice %106 {offsets = [8, 0, 0], sizes = [1, 4, 64], strides = [1, 1, 1]} : vector<32x4x64xbf16> to vector<1x4x64xbf16>
    %124 = vector.shape_cast %123 : vector<1x4x64xbf16> to vector<4x64xbf16>
    %125 = vector.extract_strided_slice %106 {offsets = [9, 0, 0], sizes = [1, 4, 64], strides = [1, 1, 1]} : vector<32x4x64xbf16> to vector<1x4x64xbf16>
    %126 = vector.shape_cast %125 : vector<1x4x64xbf16> to vector<4x64xbf16>
    %127 = vector.extract_strided_slice %106 {offsets = [10, 0, 0], sizes = [1, 4, 64], strides = [1, 1, 1]} : vector<32x4x64xbf16> to vector<1x4x64xbf16>
    %128 = vector.shape_cast %127 : vector<1x4x64xbf16> to vector<4x64xbf16>
    %129 = vector.extract_strided_slice %106 {offsets = [11, 0, 0], sizes = [1, 4, 64], strides = [1, 1, 1]} : vector<32x4x64xbf16> to vector<1x4x64xbf16>
    %130 = vector.shape_cast %129 : vector<1x4x64xbf16> to vector<4x64xbf16>
    %131 = vector.extract_strided_slice %106 {offsets = [12, 0, 0], sizes = [1, 4, 64], strides = [1, 1, 1]} : vector<32x4x64xbf16> to vector<1x4x64xbf16>
    %132 = vector.shape_cast %131 : vector<1x4x64xbf16> to vector<4x64xbf16>
    %133 = vector.extract_strided_slice %106 {offsets = [13, 0, 0], sizes = [1, 4, 64], strides = [1, 1, 1]} : vector<32x4x64xbf16> to vector<1x4x64xbf16>
    %134 = vector.shape_cast %133 : vector<1x4x64xbf16> to vector<4x64xbf16>
    %135 = vector.extract_strided_slice %106 {offsets = [14, 0, 0], sizes = [1, 4, 64], strides = [1, 1, 1]} : vector<32x4x64xbf16> to vector<1x4x64xbf16>
    %136 = vector.shape_cast %135 : vector<1x4x64xbf16> to vector<4x64xbf16>
    %137 = vector.extract_strided_slice %106 {offsets = [15, 0, 0], sizes = [1, 4, 64], strides = [1, 1, 1]} : vector<32x4x64xbf16> to vector<1x4x64xbf16>
    %138 = vector.shape_cast %137 : vector<1x4x64xbf16> to vector<4x64xbf16>
    %139 = vector.extract_strided_slice %106 {offsets = [16, 0, 0], sizes = [1, 4, 64], strides = [1, 1, 1]} : vector<32x4x64xbf16> to vector<1x4x64xbf16>
    %140 = vector.shape_cast %139 : vector<1x4x64xbf16> to vector<4x64xbf16>
    %141 = vector.extract_strided_slice %106 {offsets = [17, 0, 0], sizes = [1, 4, 64], strides = [1, 1, 1]} : vector<32x4x64xbf16> to vector<1x4x64xbf16>
    %142 = vector.shape_cast %141 : vector<1x4x64xbf16> to vector<4x64xbf16>
    %143 = vector.extract_strided_slice %106 {offsets = [18, 0, 0], sizes = [1, 4, 64], strides = [1, 1, 1]} : vector<32x4x64xbf16> to vector<1x4x64xbf16>
    %144 = vector.shape_cast %143 : vector<1x4x64xbf16> to vector<4x64xbf16>
    %145 = vector.extract_strided_slice %106 {offsets = [19, 0, 0], sizes = [1, 4, 64], strides = [1, 1, 1]} : vector<32x4x64xbf16> to vector<1x4x64xbf16>
    %146 = vector.shape_cast %145 : vector<1x4x64xbf16> to vector<4x64xbf16>
    %147 = vector.extract_strided_slice %106 {offsets = [20, 0, 0], sizes = [1, 4, 64], strides = [1, 1, 1]} : vector<32x4x64xbf16> to vector<1x4x64xbf16>
    %148 = vector.shape_cast %147 : vector<1x4x64xbf16> to vector<4x64xbf16>
    %149 = vector.extract_strided_slice %106 {offsets = [21, 0, 0], sizes = [1, 4, 64], strides = [1, 1, 1]} : vector<32x4x64xbf16> to vector<1x4x64xbf16>
    %150 = vector.shape_cast %149 : vector<1x4x64xbf16> to vector<4x64xbf16>
    %151 = vector.extract_strided_slice %106 {offsets = [22, 0, 0], sizes = [1, 4, 64], strides = [1, 1, 1]} : vector<32x4x64xbf16> to vector<1x4x64xbf16>
    %152 = vector.shape_cast %151 : vector<1x4x64xbf16> to vector<4x64xbf16>
    %153 = vector.extract_strided_slice %106 {offsets = [23, 0, 0], sizes = [1, 4, 64], strides = [1, 1, 1]} : vector<32x4x64xbf16> to vector<1x4x64xbf16>
    %154 = vector.shape_cast %153 : vector<1x4x64xbf16> to vector<4x64xbf16>
    %155 = vector.extract_strided_slice %106 {offsets = [24, 0, 0], sizes = [1, 4, 64], strides = [1, 1, 1]} : vector<32x4x64xbf16> to vector<1x4x64xbf16>
    %156 = vector.shape_cast %155 : vector<1x4x64xbf16> to vector<4x64xbf16>
    %157 = vector.extract_strided_slice %106 {offsets = [25, 0, 0], sizes = [1, 4, 64], strides = [1, 1, 1]} : vector<32x4x64xbf16> to vector<1x4x64xbf16>
    %158 = vector.shape_cast %157 : vector<1x4x64xbf16> to vector<4x64xbf16>
    %159 = vector.extract_strided_slice %106 {offsets = [26, 0, 0], sizes = [1, 4, 64], strides = [1, 1, 1]} : vector<32x4x64xbf16> to vector<1x4x64xbf16>
    %160 = vector.shape_cast %159 : vector<1x4x64xbf16> to vector<4x64xbf16>
    %161 = vector.extract_strided_slice %106 {offsets = [27, 0, 0], sizes = [1, 4, 64], strides = [1, 1, 1]} : vector<32x4x64xbf16> to vector<1x4x64xbf16>
    %162 = vector.shape_cast %161 : vector<1x4x64xbf16> to vector<4x64xbf16>
    %163 = vector.extract_strided_slice %106 {offsets = [28, 0, 0], sizes = [1, 4, 64], strides = [1, 1, 1]} : vector<32x4x64xbf16> to vector<1x4x64xbf16>
    %164 = vector.shape_cast %163 : vector<1x4x64xbf16> to vector<4x64xbf16>
    %165 = vector.extract_strided_slice %106 {offsets = [29, 0, 0], sizes = [1, 4, 64], strides = [1, 1, 1]} : vector<32x4x64xbf16> to vector<1x4x64xbf16>
    %166 = vector.shape_cast %165 : vector<1x4x64xbf16> to vector<4x64xbf16>
    %167 = vector.extract_strided_slice %106 {offsets = [30, 0, 0], sizes = [1, 4, 64], strides = [1, 1, 1]} : vector<32x4x64xbf16> to vector<1x4x64xbf16>
    %168 = vector.shape_cast %167 : vector<1x4x64xbf16> to vector<4x64xbf16>
    %169 = vector.extract_strided_slice %106 {offsets = [31, 0, 0], sizes = [1, 4, 64], strides = [1, 1, 1]} : vector<32x4x64xbf16> to vector<1x4x64xbf16>
    %170 = vector.shape_cast %169 : vector<1x4x64xbf16> to vector<4x64xbf16>
    %171 = tpu.concatenate %108, %110, %112, %114, %116, %118, %120, %122, %124, %126, %128, %130, %132, %134, %136, %138 in 1 : vector<4x64xbf16>, vector<4x64xbf16>, vector<4x64xbf16>, vector<4x64xbf16>, vector<4x64xbf16>, vector<4x64xbf16>, vector<4x64xbf16>, vector<4x64xbf16>, vector<4x64xbf16>, vector<4x64xbf16>, vector<4x64xbf16>, vector<4x64xbf16>, vector<4x64xbf16>, vector<4x64xbf16>, vector<4x64xbf16>, vector<4x64xbf16> -> vector<4x1024xbf16>
    %172 = tpu.concatenate %140, %142, %144, %146, %148, %150, %152, %154, %156, %158, %160, %162, %164, %166, %168, %170 in 1 : vector<4x64xbf16>, vector<4x64xbf16>, vector<4x64xbf16>, vector<4x64xbf16>, vector<4x64xbf16>, vector<4x64xbf16>, vector<4x64xbf16>, vector<4x64xbf16>, vector<4x64xbf16>, vector<4x64xbf16>, vector<4x64xbf16>, vector<4x64xbf16>, vector<4x64xbf16>, vector<4x64xbf16>, vector<4x64xbf16>, vector<4x64xbf16> -> vector<4x1024xbf16>
    %173 = tpu.concatenate %171, %172 in 1 : vector<4x1024xbf16>, vector<4x1024xbf16> -> vector<4x2048xbf16>
    %c0_11 = arith.constant 0 : index
    %c0_12 = arith.constant 0 : index
    %174 = vector.load %arg5[%c0_11, %c0_12] : memref<32x4xbf16, #tpu.memory_space<vmem>>, vector<32x4xbf16>
    %c0_13 = arith.constant 0 : index
    %c0_14 = arith.constant 0 : index
    %175 = memref.load %arg7[%c0_13, %c0_14] : memref<1x1xf32, #tpu.memory_space<smem>>
    %176 = vector.extract_strided_slice %174 {offsets = [0, 0], sizes = [8, 4], strides = [1, 1]} : vector<32x4xbf16> to vector<8x4xbf16>
    %cst_15 = arith.constant dense<0.000000e+00> : vector<8x2048xf32>
    %177 = tpu.matmul %176, %173, %cst_15 {dimension_numbers = #tpu.dot_dimension_numbers<[1], [0], [0], [1], [0, 0, 1, 1], [], []>} : vector<8x4xbf16>, vector<4x2048xbf16>, vector<8x2048xf32> -> vector<8x2048xf32>
    %c0_16 = arith.constant 0 : index
    %c0_17 = arith.constant 0 : index
    %178 = vector.load %arg6[%c0_16, %c0_17] : memref<32x1xf32, #tpu.memory_space<vmem>>, vector<8x1xf32>
    %179 = vector.broadcast %178 : vector<8x1xf32> to vector<8x2048xf32>
    %180 = arith.addf %177, %179 : vector<8x2048xf32>
    %181 = vector.broadcast %175 : f32 to vector<8x2048xf32>
    %182 = arith.mulf %181, %180 : vector<8x2048xf32>
    %c0_18 = arith.constant 0 : index
    %c0_19 = arith.constant 0 : index
    %183 = vector.load %arg1[%c0_18, %c0_19] : memref<32x2048xf32, #tpu.memory_space<vmem>>, vector<8x2048xf32>
    %184 = arith.addf %182, %183 : vector<8x2048xf32>
    %c0_20 = arith.constant 0 : index
    %c0_21 = arith.constant 0 : index
    %185 = vector.load %arg8[%c0_20, %c0_21] : memref<32x2048xf32, #tpu.memory_space<vmem>>, vector<8x2048xf32>
    tpu.vector_store %arg8[%c0_20, %c0_21], %184 {strides = array<i32>} : memref<32x2048xf32, #tpu.memory_space<vmem>>, vector<8x2048xf32>,
    %186 = vector.extract_strided_slice %174 {offsets = [8, 0], sizes = [8, 4], strides = [1, 1]} : vector<32x4xbf16> to vector<8x4xbf16>
    %cst_22 = arith.constant dense<0.000000e+00> : vector<8x2048xf32>
    %187 = tpu.matmul %186, %173, %cst_22 {dimension_numbers = #tpu.dot_dimension_numbers<[1], [0], [0], [1], [0, 0, 1, 1], [], []>} : vector<8x4xbf16>, vector<4x2048xbf16>, vector<8x2048xf32> -> vector<8x2048xf32>
    %c8 = arith.constant 8 : index
    %c0_23 = arith.constant 0 : index
    %188 = vector.load %arg6[%c8, %c0_23] : memref<32x1xf32, #tpu.memory_space<vmem>>, vector<8x1xf32>
    %189 = vector.broadcast %188 : vector<8x1xf32> to vector<8x2048xf32>
    %190 = arith.addf %187, %189 : vector<8x2048xf32>
    %191 = vector.broadcast %175 : f32 to vector<8x2048xf32>
    %192 = arith.mulf %191, %190 : vector<8x2048xf32>
    %c8_24 = arith.constant 8 : index
    %c0_25 = arith.constant 0 : index
    %193 = vector.load %arg1[%c8_24, %c0_25] : memref<32x2048xf32, #tpu.memory_space<vmem>>, vector<8x2048xf32>
    %194 = arith.addf %192, %193 : vector<8x2048xf32>
    %c8_26 = arith.constant 8 : index
    %c0_27 = arith.constant 0 : index
    %195 = vector.load %arg8[%c8_26, %c0_27] : memref<32x2048xf32, #tpu.memory_space<vmem>>, vector<8x2048xf32>
    tpu.vector_store %arg8[%c8_26, %c0_27], %194 {strides = array<i32>} : memref<32x2048xf32, #tpu.memory_space<vmem>>, vector<8x2048xf32>,
    %196 = vector.extract_strided_slice %174 {offsets = [16, 0], sizes = [8, 4], strides = [1, 1]} : vector<32x4xbf16> to vector<8x4xbf16>
    %cst_28 = arith.constant dense<0.000000e+00> : vector<8x2048xf32>
    %197 = tpu.matmul %196, %173, %cst_28 {dimension_numbers = #tpu.dot_dimension_numbers<[1], [0], [0], [1], [0, 0, 1, 1], [], []>} : vector<8x4xbf16>, vector<4x2048xbf16>, vector<8x2048xf32> -> vector<8x2048xf32>
    %c16 = arith.constant 16 : index
    %c0_29 = arith.constant 0 : index
    %198 = vector.load %arg6[%c16, %c0_29] : memref<32x1xf32, #tpu.memory_space<vmem>>, vector<8x1xf32>
    %199 = vector.broadcast %198 : vector<8x1xf32> to vector<8x2048xf32>
    %200 = arith.addf %197, %199 : vector<8x2048xf32>
    %201 = vector.broadcast %175 : f32 to vector<8x2048xf32>
    %202 = arith.mulf %201, %200 : vector<8x2048xf32>
    %c16_30 = arith.constant 16 : index
    %c0_31 = arith.constant 0 : index
    %203 = vector.load %arg1[%c16_30, %c0_31] : memref<32x2048xf32, #tpu.memory_space<vmem>>, vector<8x2048xf32>
    %204 = arith.addf %202, %203 : vector<8x2048xf32>
    %c16_32 = arith.constant 16 : index
    %c0_33 = arith.constant 0 : index
    %205 = vector.load %arg8[%c16_32, %c0_33] : memref<32x2048xf32, #tpu.memory_space<vmem>>, vector<8x2048xf32>
    tpu.vector_store %arg8[%c16_32, %c0_33], %204 {strides = array<i32>} : memref<32x2048xf32, #tpu.memory_space<vmem>>, vector<8x2048xf32>,
    %206 = vector.extract_strided_slice %174 {offsets = [24, 0], sizes = [8, 4], strides = [1, 1]} : vector<32x4xbf16> to vector<8x4xbf16>
    %cst_34 = arith.constant dense<0.000000e+00> : vector<8x2048xf32>
    %207 = tpu.matmul %206, %173, %cst_34 {dimension_numbers = #tpu.dot_dimension_numbers<[1], [0], [0], [1], [0, 0, 1, 1], [], []>} : vector<8x4xbf16>, vector<4x2048xbf16>, vector<8x2048xf32> -> vector<8x2048xf32>
    %c24 = arith.constant 24 : index
    %c0_35 = arith.constant 0 : index
    %208 = vector.load %arg6[%c24, %c0_35] : memref<32x1xf32, #tpu.memory_space<vmem>>, vector<8x1xf32>
    %209 = vector.broadcast %208 : vector<8x1xf32> to vector<8x2048xf32>
    %210 = arith.addf %207, %209 : vector<8x2048xf32>
    %211 = vector.broadcast %175 : f32 to vector<8x2048xf32>
    %212 = arith.mulf %211, %210 : vector<8x2048xf32>
    %c24_36 = arith.constant 24 : index
    %c0_37 = arith.constant 0 : index
    %213 = vector.load %arg1[%c24_36, %c0_37] : memref<32x2048xf32, #tpu.memory_space<vmem>>, vector<8x2048xf32>
    %214 = arith.addf %212, %213 : vector<8x2048xf32>
    %c24_38 = arith.constant 24 : index
    %c0_39 = arith.constant 0 : index
    %215 = vector.load %arg8[%c24_38, %c0_39] : memref<32x2048xf32, #tpu.memory_space<vmem>>, vector<8x2048xf32>
    tpu.vector_store %arg8[%c24_38, %c0_39], %214 {strides = array<i32>} : memref<32x2048xf32, #tpu.memory_space<vmem>>, vector<8x2048xf32>,
    return
  }
  func.func @transform_0(%arg0: i32) -> (i32, i32) {
    %c0_i32 = arith.constant 0 : i32
    %c0_i32_0 = arith.constant 0 : i32
    return %c0_i32, %arg0 : i32, i32
  }
  func.func @transform_1(%arg0: i32) -> (i32, i32) {
    %c0_i32 = arith.constant 0 : i32
    %c0_i32_0 = arith.constant 0 : i32
    %c0_i32_1 = arith.constant 0 : i32
    return %c0_i32, %c0_i32_0 : i32, i32
  }
  func.func @transform_2(%arg0: i32) -> (i32, i32) {
    %c0_i32 = arith.constant 0 : i32
    %c0_i32_0 = arith.constant 0 : i32
    %c0_i32_1 = arith.constant 0 : i32
    return %c0_i32, %c0_i32_0 : i32, i32
  }
  func.func @transform_3(%arg0: i32) -> (i32, i32) {
    %c0_i32 = arith.constant 0 : i32
    %c0_i32_0 = arith.constant 0 : i32
    %c0_i32_1 = arith.constant 0 : i32
    return %c0_i32, %c0_i32_0 : i32, i32
  }
  func.func @transform_4(%arg0: i32) -> (i32, i32) {
    %c0_i32 = arith.constant 0 : i32
    %c0_i32_0 = arith.constant 0 : i32
    %c0_i32_1 = arith.constant 0 : i32
    return %c0_i32, %c0_i32_0 : i32, i32
  }
  func.func @transform_5(%arg0: i32) -> (i32, i32) {
    %c0_i32 = arith.constant 0 : i32
    %c0_i32_0 = arith.constant 0 : i32
    %c0_i32_1 = arith.constant 0 : i32
    return %c0_i32, %c0_i32_0 : i32, i32
  }
  func.func @transform_6(%arg0: i32) -> (i32, i32) {
    %c0_i32 = arith.constant 0 : i32
    %c0_i32_0 = arith.constant 0 : i32
    %c0_i32_1 = arith.constant 0 : i32
    return %c0_i32, %c0_i32_0 : i32, i32
  }
  func.func @transform_7(%arg0: i32) -> (i32, i32) {
    %c0_i32 = arith.constant 0 : i32
    %c0_i32_0 = arith.constant 0 : i32
    return %c0_i32, %arg0 : i32, i32
  }
}

</mosaic_0001>

<llo_original>
// kernel: chunked_self_attn_fm.1
$region0: #{chunked_self_attn_fm.1}
  #allocation0 [shape = 'u32[]', space=smem, size = 0x4, offset = 0x4, fixed_abs, tag = 'smem constant byte address 0x4 - core index']
  #allocation1 [shape = 'u32[144,128]{1,0:T(1,128)}', space=vmem, size = 0x12000, scoped, tag = 'internal scratch']
  #allocation2 [shape = 'f32[1,1]{1,0:T(1,128)S(6)}', space=smem, size = 0x200, scoped, tag = 'scoped memory for chunked_self_attn_fm.1']
  %s0 = inlined_call_operand.vmem [shape: f32[32,8192], index: 0, kind: input, shape index: {}]
  %s1 = inlined_call_operand.vmem [shape: bf16[12,32], index: 1, kind: input, shape index: {}]
  %s2 = inlined_call_operand.vmem [shape: f32[4,1], index: 2, kind: input, shape index: {}]
  %s3 = inlined_call_operand.vmem [shape: f32[8,1], index: 3, kind: input, shape index: {}]
  %s4 = inlined_call_operand.vmem [shape: bf16[32,4], index: 4, kind: input, shape index: {}]
  %s5 = inlined_call_operand.vmem [shape: f32[32,1], index: 5, kind: input, shape index: {}]
  %s6 = inlined_call_operand.<no memory space> [shape: f32[1,1], index: 6, kind: input, shape index: {}]
  %s7 = inlined_call_operand.vmem [shape: f32[32,8192], index: 7, kind: output, shape index: {}]
  %s8 = sld [smem:[#allocation0]]
  $region103: #{chunked_self_attn_fm.1} parent=0
    _
  %s10 = ssub.s32 1, %s8
  %s11 = scalar_select 0, %s10, %s8
  %12 = sst [smem:[#allocation2]] %s6
  $region1: #{chunked_self_attn_fm.1} parent=0
    #allocation3 [shape = 'u8[524288]{0}', space=vmem, size = 0x80000, scoped, tag = 'input window, operand 0']
    #allocation4 [shape = 'u8[524288]{0}', space=vmem, size = 0x80000, scoped, tag = 'output window, operand 0']
    loop: start=0, step=1, limit=6
    $region2: #{chunked_self_attn_fm.1} parent=1 // loop_pre_header
      _
    $region3: #{chunked_self_attn_fm.1} parent=1 // loop_header
      %s14 = sphi 0, %s18
      %p15 = scmp.ge.s32.totalorder %s14, 6
      %s24 = sphi 0, %s26
      %s27 = sphi 0, %s24
      %s28 = sphi 0, %s27
      %s44 = sphi 0, %s28
      %s48 = sphi 0, %s48
      %s50 = sphi 0, %s48
      %s51 = sphi 0, %s50
      %s65 = sphi 0, %s51
      %s69 = sphi 0, %s69
      %s71 = sphi 0, %s69
      %s72 = sphi 0, %s71
      %s86 = sphi 0, %s72
      %s90 = sphi 0, %s90
      %s92 = sphi 0, %s90
      %s93 = sphi 0, %s92
      %s107 = sphi 0, %s93
      %s111 = sphi 0, %s111
      %s113 = sphi 0, %s111
      %s114 = sphi 0, %s113
      %s128 = sphi 0, %s114
      %s132 = sphi 0, %s132
      %s134 = sphi 0, %s132
      %s135 = sphi 0, %s134
      %s149 = sphi 0, %s135
      %s153 = sphi 0, %s153
      %s155 = sphi 0, %s153
      %s156 = sphi 0, %s155
      %s170 = sphi 0, %s156
      %s176 = sphi 0, %s178
      %s179 = sphi 0, %s176
      %s180 = sphi 0, %s179
      %s196 = sphi 0, %s180
    $region4: #{chunked_self_attn_fm.1} parent=1 // loop_header_branch
      %17 = sbr.rel (%p15) target = $region8
    $region5: #{chunked_self_attn_fm.1} parent=1 // loop_body
      %s19 = ssub.s32 %s14, 1
      %s20 = ssub.s32 %s14, 2
      %s21 = sadd.s32 %s14, 1
      %s22 = ssub.s32 %s14, %s21
      %p23 = scmp.eq.s32.totalorder %s22, 0
      %s25 = sadd.s32 %s24, 1
      %s26 = scalar_select %p23, %s24, %s25
      %p29 = pneg %p23
      %p30 = scmp.eq.s32.totalorder %s14, 3
      %p31 = por %p29, %p30
      %p32 = scmp.ne.s32.totalorder %s24, %s27
      %p33 = scmp.eq.s32.totalorder %s14, 0
      %p34 = por %p32, %p33
      %p35 = scmp.ne.s32.totalorder %s24, %s27
      %p36 = scmp.eq.s32.totalorder %s19, 3
      %p37 = por %p35, %p36
      %p38 = scmp.ne.s32.totalorder %s27, %s28
      %p39 = scmp.eq.s32.totalorder %s19, 0
      %p40 = por %p38, %p39
      %p41 = scmp.ne.s32.totalorder %s27, %s28
      %p42 = scmp.eq.s32.totalorder %s20, 3
      %p43 = por %p41, %p42
      %p45 = scmp.ne.s32.totalorder %s28, %s44
      %p46 = scmp.eq.s32.totalorder %s20, 0
      %p47 = por %p45, %p46
      %s49 = sadd.s32 %s48, 1
      %p52 = scmp.eq.s32.totalorder %s14, 3
      %p53 = scmp.ne.s32.totalorder %s48, %s50
      %p54 = scmp.eq.s32.totalorder %s14, 0
      %p55 = por %p53, %p54
      %p56 = scmp.ne.s32.totalorder %s48, %s50
      %p57 = scmp.eq.s32.totalorder %s19, 3
      %p58 = por %p56, %p57
      %p59 = scmp.ne.s32.totalorder %s50, %s51
      %p60 = scmp.eq.s32.totalorder %s19, 0
      %p61 = por %p59, %p60
      %p62 = scmp.ne.s32.totalorder %s50, %s51
      %p63 = scmp.eq.s32.totalorder %s20, 3
      %p64 = por %p62, %p63
      %p66 = scmp.ne.s32.totalorder %s51, %s65
      %p67 = scmp.eq.s32.totalorder %s20, 0
      %p68 = por %p66, %p67
      %s70 = sadd.s32 %s69, 1
      %p73 = scmp.eq.s32.totalorder %s14, 3
      %p74 = scmp.ne.s32.totalorder %s69, %s71
      %p75 = scmp.eq.s32.totalorder %s14, 0
      %p76 = por %p74, %p75
      %p77 = scmp.ne.s32.totalorder %s69, %s71
      %p78 = scmp.eq.s32.totalorder %s19, 3
      %p79 = por %p77, %p78
      %p80 = scmp.ne.s32.totalorder %s71, %s72
      %p81 = scmp.eq.s32.totalorder %s19, 0
      %p82 = por %p80, %p81
      %p83 = scmp.ne.s32.totalorder %s71, %s72
      %p84 = scmp.eq.s32.totalorder %s20, 3
      %p85 = por %p83, %p84
      %p87 = scmp.ne.s32.totalorder %s72, %s86
      %p88 = scmp.eq.s32.totalorder %s20, 0
      %p89 = por %p87, %p88
      %s91 = sadd.s32 %s90, 1
      %p94 = scmp.eq.s32.totalorder %s14, 3
      %p95 = scmp.ne.s32.totalorder %s90, %s92
      %p96 = scmp.eq.s32.totalorder %s14, 0
      %p97 = por %p95, %p96
      %p98 = scmp.ne.s32.totalorder %s90, %s92
      %p99 = scmp.eq.s32.totalorder %s19, 3
      %p100 = por %p98, %p99
      %p101 = scmp.ne.s32.totalorder %s92, %s93
      %p102 = scmp.eq.s32.totalorder %s19, 0
      %p103 = por %p101, %p102
      %p104 = scmp.ne.s32.totalorder %s92, %s93
      %p105 = scmp.eq.s32.totalorder %s20, 3
      %p106 = por %p104, %p105
      %p108 = scmp.ne.s32.totalorder %s93, %s107
      %p109 = scmp.eq.s32.totalorder %s20, 0
      %p110 = por %p108, %p109
      %s112 = sadd.s32 %s111, 1
      %p115 = scmp.eq.s32.totalorder %s14, 3
      %p116 = scmp.ne.s32.totalorder %s111, %s113
      %p117 = scmp.eq.s32.totalorder %s14, 0
      %p118 = por %p116, %p117
      %p119 = scmp.ne.s32.totalorder %s111, %s113
      %p120 = scmp.eq.s32.totalorder %s19, 3
      %p121 = por %p119, %p120
      %p122 = scmp.ne.s32.totalorder %s113, %s114
      %p123 = scmp.eq.s32.totalorder %s19, 0
      %p124 = por %p122, %p123
      %p125 = scmp.ne.s32.totalorder %s113, %s114
      %p126 = scmp.eq.s32.totalorder %s20, 3
      %p127 = por %p125, %p126
      %p129 = scmp.ne.s32.totalorder %s114, %s128
      %p130 = scmp.eq.s32.totalorder %s20, 0
      %p131 = por %p129, %p130
      %s133 = sadd.s32 %s132, 1
      %p136 = scmp.eq.s32.totalorder %s14, 3
      %p137 = scmp.ne.s32.totalorder %s132, %s134
      %p138 = scmp.eq.s32.totalorder %s14, 0
      %p139 = por %p137, %p138
      %p140 = scmp.ne.s32.totalorder %s132, %s134
      %p141 = scmp.eq.s32.totalorder %s19, 3
      %p142 = por %p140, %p141
      %p143 = scmp.ne.s32.totalorder %s134, %s135
      %p144 = scmp.eq.s32.totalorder %s19, 0
      %p145 = por %p143, %p144
      %p146 = scmp.ne.s32.totalorder %s134, %s135
      %p147 = scmp.eq.s32.totalorder %s20, 3
      %p148 = por %p146, %p147
      %p150 = scmp.ne.s32.totalorder %s135, %s149
      %p151 = scmp.eq.s32.totalorder %s20, 0
      %p152 = por %p150, %p151
      %s154 = sadd.s32 %s153, 1
      %p157 = scmp.eq.s32.totalorder %s14, 3
      %p158 = scmp.ne.s32.totalorder %s153, %s155
      %p159 = scmp.eq.s32.totalorder %s14, 0
      %p160 = por %p158, %p159
      %p161 = scmp.ne.s32.totalorder %s153, %s155
      %p162 = scmp.eq.s32.totalorder %s19, 3
      %p163 = por %p161, %p162
      %p164 = scmp.ne.s32.totalorder %s155, %s156
      %p165 = scmp.eq.s32.totalorder %s19, 0
      %p166 = por %p164, %p165
      %p167 = scmp.ne.s32.totalorder %s155, %s156
      %p168 = scmp.eq.s32.totalorder %s20, 3
      %p169 = por %p167, %p168
      %p171 = scmp.ne.s32.totalorder %s156, %s170
      %p172 = scmp.eq.s32.totalorder %s20, 0
      %p173 = por %p171, %p172
      %s174 = ssub.s32 %s14, %s21
      %p175 = scmp.eq.s32.totalorder %s174, 0
      %s177 = sadd.s32 %s176, 1
      %s178 = scalar_select %p175, %s176, %s177
      %p181 = pneg %p175
      %p182 = scmp.eq.s32.totalorder %s14, 3
      %p183 = por %p181, %p182
      %p184 = scmp.ne.s32.totalorder %s176, %s179
      %p185 = scmp.eq.s32.totalorder %s14, 0
      %p186 = por %p184, %p185
      %p187 = scmp.ne.s32.totalorder %s176, %s179
      %p188 = scmp.eq.s32.totalorder %s19, 3
      %p189 = por %p187, %p188
      %p190 = scmp.ne.s32.totalorder %s179, %s180
      %p191 = scmp.eq.s32.totalorder %s19, 0
      %p192 = por %p190, %p191
      %p193 = scmp.ne.s32.totalorder %s179, %s180
      %p194 = scmp.eq.s32.totalorder %s20, 3
      %p195 = por %p193, %p194
      %p197 = scmp.ne.s32.totalorder %s180, %s196
      %p198 = scmp.eq.s32.totalorder %s20, 0
      %p199 = por %p197, %p198
      %p200 = scmp.le.s32.totalorder 1, %s14
      %p201 = scmp.lt.s32.totalorder %s14, 5
      %p202 = pnand %p200, %p201
      %p203 = pneg %p202
      // Predicated region
      $region9: #{chunked_self_attn_fm.1} parent=5 // pred_check
        _
      $region10: #{chunked_self_attn_fm.1} parent=5 // pred_check_branch
        %205 = sbr.rel (%p202) target = $region12
      $region11: #{chunked_self_attn_fm.1} parent=5 // pred_region
        %s206 = ssub.s32 %s14, 1
        // Predicated region
        $region13: #{chunked_self_attn_fm.1} parent=11 // pred_check
          %p207 = pneg %p61
        $region14: #{chunked_self_attn_fm.1} parent=11 // pred_check_branch
          %209 = sbr.rel (%p207) target = $region16
        $region15: #{chunked_self_attn_fm.1} parent=11 // pred_region
          _
        $region16: #{chunked_self_attn_fm.1} parent=11 // pred_fallthru
          _
        // Predicated region
        $region17: #{chunked_self_attn_fm.1} parent=11 // pred_check
          %p210 = pneg %p82
        $region18: #{chunked_self_attn_fm.1} parent=11 // pred_check_branch
          %212 = sbr.rel (%p210) target = $region20
        $region19: #{chunked_self_attn_fm.1} parent=11 // pred_region
          _
        $region20: #{chunked_self_attn_fm.1} parent=11 // pred_fallthru
          _
        // Predicated region
        $region21: #{chunked_self_attn_fm.1} parent=11 // pred_check
          %p213 = pneg %p103
        $region22: #{chunked_self_attn_fm.1} parent=11 // pred_check_branch
          %215 = sbr.rel (%p213) target = $region24
        $region23: #{chunked_self_attn_fm.1} parent=11 // pred_region
          _
        $region24: #{chunked_self_attn_fm.1} parent=11 // pred_fallthru
          _
        // Predicated region
        $region25: #{chunked_self_attn_fm.1} parent=11 // pred_check
          %p216 = pneg %p124
        $region26: #{chunked_self_attn_fm.1} parent=11 // pred_check_branch
          %218 = sbr.rel (%p216) target = $region28
        $region27: #{chunked_self_attn_fm.1} parent=11 // pred_region
          _
        $region28: #{chunked_self_attn_fm.1} parent=11 // pred_fallthru
          _
        // Predicated region
        $region29: #{chunked_self_attn_fm.1} parent=11 // pred_check
          %p219 = pneg %p145
        $region30: #{chunked_self_attn_fm.1} parent=11 // pred_check_branch
          %221 = sbr.rel (%p219) target = $region32
        $region31: #{chunked_self_attn_fm.1} parent=11 // pred_region
          _
        $region32: #{chunked_self_attn_fm.1} parent=11 // pred_fallthru
          _
        // Predicated region
        $region33: #{chunked_self_attn_fm.1} parent=11 // pred_check
          %p222 = pneg %p166
        $region34: #{chunked_self_attn_fm.1} parent=11 // pred_check_branch
          %224 = sbr.rel (%p222) target = $region36
        $region35: #{chunked_self_attn_fm.1} parent=11 // pred_region
          _
        $region36: #{chunked_self_attn_fm.1} parent=11 // pred_fallthru
          _
      $region12: #{chunked_self_attn_fm.1} parent=5 // pred_fallthru
        _
      %p225 = scmp.lt.s32.totalorder %s14, 4
      // Predicated region
      $region37: #{chunked_self_attn_fm.1} parent=5 // pred_check
        %p226 = pneg %p225
      $region38: #{chunked_self_attn_fm.1} parent=5 // pred_check_branch
        %228 = sbr.rel (%p226) target = $region40
      $region39: #{chunked_self_attn_fm.1} parent=5 // pred_region
        // Predicated region
        $region41: #{chunked_self_attn_fm.1} parent=39 // pred_check
          %p229 = pneg %p34
        $region42: #{chunked_self_attn_fm.1} parent=39 // pred_check_branch
          %231 = sbr.rel (%p229) target = $region44
        $region43: #{chunked_self_attn_fm.1} parent=39 // pred_region
          %s232 = sand.u32 %s24, 1
          %s233 = sand.u32 %s24, 1
          %s234 = smul.addr %s233, 512
          %s235 = scalar_lea.vmem [#allocation3], %s234
          %s236 = smul.u32 16, %s14
          %s237 = smul.addr %s236, 8
          %s238 = scalar_lea.vmem %s0, %s237
          // Predicated region
          $region45: #{chunked_self_attn_fm.1} parent=43 // pred_check
            _
          $region46: #{chunked_self_attn_fm.1} parent=43 // pred_check_branch
            %240 = sbr.rel (0) target = $region48
          $region47: #{chunked_self_attn_fm.1} parent=43 // pred_region
            // Predicated region
            $region49: #{chunked_self_attn_fm.1} parent=47 // pred_check
              _
            $region50: #{chunked_self_attn_fm.1} parent=47 // pred_check_branch
              %242 = sbr.rel (0) target = $region52
            $region51: #{chunked_self_attn_fm.1} parent=47 // pred_region
              loop: start=0, step=1, limit=1
              $region53: #{chunked_self_attn_fm.1} parent=51 // loop_pre_header
                _
              $region54: #{chunked_self_attn_fm.1} parent=51 // loop_header
                %s244 = sphi 0, %s248
                %p245 = scmp.ge.s32.totalorder %s244, 1
                %s249 = sphi %s238, %s238
                %s250 = sphi %s235, %s235
              $region55: #{chunked_self_attn_fm.1} parent=51 // loop_header_branch
                %247 = sbr.rel (%p245) target = $region59
              $region56: #{chunked_self_attn_fm.1} parent=51 // loop_body
                %v251 = vld [vmem:[%s249] sm:$0xff]
                %252 = vst [vmem:[%s250] sm:$0xff] %v251
                %v253 = vld [vmem:[%s249 + $0x8] sm:$0xff]
                %254 = vst [vmem:[%s250 + $0x8] sm:$0xff] %v253
                %v255 = vld [vmem:[%s249 + $0x10] sm:$0xff]
                %256 = vst [vmem:[%s250 + $0x10] sm:$0xff] %v255
                %v257 = vld [vmem:[%s249 + $0x18] sm:$0xff]
                %258 = vst [vmem:[%s250 + $0x18] sm:$0xff] %v257
                %v259 = vld [vmem:[%s249 + $0x20] sm:$0xff]
                %260 = vst [vmem:[%s250 + $0x20] sm:$0xff] %v259
                %v261 = vld [vmem:[%s249 + $0x28] sm:$0xff]
                %262 = vst [vmem:[%s250 + $0x28] sm:$0xff] %v261
                %v263 = vld [vmem:[%s249 + $0x30] sm:$0xff]
                %264 = vst [vmem:[%s250 + $0x30] sm:$0xff] %v263
                %v265 = vld [vmem:[%s249 + $0x38] sm:$0xff]
                %266 = vst [vmem:[%s250 + $0x38] sm:$0xff] %v265
                %v267 = vld [vmem:[%s249 + $0x40] sm:$0xff]
                %268 = vst [vmem:[%s250 + $0x40] sm:$0xff] %v267
                %v269 = vld [vmem:[%s249 + $0x48] sm:$0xff]
                %270 = vst [vmem:[%s250 + $0x48] sm:$0xff] %v269
                %v271 = vld [vmem:[%s249 + $0x50] sm:$0xff]
                %272 = vst [vmem:[%s250 + $0x50] sm:$0xff] %v271
                %v273 = vld [vmem:[%s249 + $0x58] sm:$0xff]
                %274 = vst [vmem:[%s250 + $0x58] sm:$0xff] %v273
                %v275 = vld [vmem:[%s249 + $0x60] sm:$0xff]
                %276 = vst [vmem:[%s250 + $0x60] sm:$0xff] %v275
                %v277 = vld [vmem:[%s249 + $0x68] sm:$0xff]
                %278 = vst [vmem:[%s250 + $0x68] sm:$0xff] %v277
                %v279 = vld [vmem:[%s249 + $0x70] sm:$0xff]
                %280 = vst [vmem:[%s250 + $0x70] sm:$0xff] %v279
                %v281 = vld [vmem:[%s249 + $0x78] sm:$0xff]
                %282 = vst [vmem:[%s250 + $0x78] sm:$0xff] %v281
                %v283 = vld [vmem:[%s249 + $0x200] sm:$0xff]
                %284 = vst [vmem:[%s250 + $0x80] sm:$0xff] %v283
                %v285 = vld [vmem:[%s249 + $0x208] sm:$0xff]
                %286 = vst [vmem:[%s250 + $0x88] sm:$0xff] %v285
                %v287 = vld [vmem:[%s249 + $0x210] sm:$0xff]
                %288 = vst [vmem:[%s250 + $0x90] sm:$0xff] %v287
                %v289 = vld [vmem:[%s249 + $0x218] sm:$0xff]
                %290 = vst [vmem:[%s250 + $0x98] sm:$0xff] %v289
                %v291 = vld [vmem:[%s249 + $0x220] sm:$0xff]
                %292 = vst [vmem:[%s250 + $0xa0] sm:$0xff] %v291
                %v293 = vld [vmem:[%s249 + $0x228] sm:$0xff]
                %294 = vst [vmem:[%s250 + $0xa8] sm:$0xff] %v293
                %v295 = vld [vmem:[%s249 + $0x230] sm:$0xff]
                %296 = vst [vmem:[%s250 + $0xb0] sm:$0xff] %v295
                %v297 = vld [vmem:[%s249 + $0x238] sm:$0xff]
                %298 = vst [vmem:[%s250 + $0xb8] sm:$0xff] %v297
                %v299 = vld [vmem:[%s249 + $0x240] sm:$0xff]
                %300 = vst [vmem:[%s250 + $0xc0] sm:$0xff] %v299
                %v301 = vld [vmem:[%s249 + $0x248] sm:$0xff]
                %302 = vst [vmem:[%s250 + $0xc8] sm:$0xff] %v301
                %v303 = vld [vmem:[%s249 + $0x250] sm:$0xff]
                %304 = vst [vmem:[%s250 + $0xd0] sm:$0xff] %v303
                %v305 = vld [vmem:[%s249 + $0x258] sm:$0xff]
                %306 = vst [vmem:[%s250 + $0xd8] sm:$0xff] %v305
                %v307 = vld [vmem:[%s249 + $0x260] sm:$0xff]
                %308 = vst [vmem:[%s250 + $0xe0] sm:$0xff] %v307
                %v309 = vld [vmem:[%s249 + $0x268] sm:$0xff]
                %310 = vst [vmem:[%s250 + $0xe8] sm:$0xff] %v309
                %v311 = vld [vmem:[%s249 + $0x270] sm:$0xff]
                %312 = vst [vmem:[%s250 + $0xf0] sm:$0xff] %v311
                %v313 = vld [vmem:[%s249 + $0x278] sm:$0xff]
                %314 = vst [vmem:[%s250 + $0xf8] sm:$0xff] %v313
                %v315 = vld [vmem:[%s249 + $0x400] sm:$0xff]
                %316 = vst [vmem:[%s250 + $0x100] sm:$0xff] %v315
                %v317 = vld [vmem:[%s249 + $0x408] sm:$0xff]
                %318 = vst [vmem:[%s250 + $0x108] sm:$0xff] %v317
                %v319 = vld [vmem:[%s249 + $0x410] sm:$0xff]
                %320 = vst [vmem:[%s250 + $0x110] sm:$0xff] %v319
                %v321 = vld [vmem:[%s249 + $0x418] sm:$0xff]
                %322 = vst [vmem:[%s250 + $0x118] sm:$0xff] %v321
                %v323 = vld [vmem:[%s249 + $0x420] sm:$0xff]
                %324 = vst [vmem:[%s250 + $0x120] sm:$0xff] %v323
                %v325 = vld [vmem:[%s249 + $0x428] sm:$0xff]
                %326 = vst [vmem:[%s250 + $0x128] sm:$0xff] %v325
                %v327 = vld [vmem:[%s249 + $0x430] sm:$0xff]
                %328 = vst [vmem:[%s250 + $0x130] sm:$0xff] %v327
                %v329 = vld [vmem:[%s249 + $0x438] sm:$0xff]
                %330 = vst [vmem:[%s250 + $0x138] sm:$0xff] %v329
                %v331 = vld [vmem:[%s249 + $0x440] sm:$0xff]
                %332 = vst [vmem:[%s250 + $0x140] sm:$0xff] %v331
                %v333 = vld [vmem:[%s249 + $0x448] sm:$0xff]
                %334 = vst [vmem:[%s250 + $0x148] sm:$0xff] %v333
                %v335 = vld [vmem:[%s249 + $0x450] sm:$0xff]
                %336 = vst [vmem:[%s250 + $0x150] sm:$0xff] %v335
                %v337 = vld [vmem:[%s249 + $0x458] sm:$0xff]
                %338 = vst [vmem:[%s250 + $0x158] sm:$0xff] %v337
                %v339 = vld [vmem:[%s249 + $0x460] sm:$0xff]
                %340 = vst [vmem:[%s250 + $0x160] sm:$0xff] %v339
                %v341 = vld [vmem:[%s249 + $0x468] sm:$0xff]
                %342 = vst [vmem:[%s250 + $0x168] sm:$0xff] %v341
                %v343 = vld [vmem:[%s249 + $0x470] sm:$0xff]
                %344 = vst [vmem:[%s250 + $0x170] sm:$0xff] %v343
                %v345 = vld [vmem:[%s249 + $0x478] sm:$0xff]
                %346 = vst [vmem:[%s250 + $0x178] sm:$0xff] %v345
                %v347 = vld [vmem:[%s249 + $0x600] sm:$0xff]
                %348 = vst [vmem:[%s250 + $0x180] sm:$0xff] %v347
                %v349 = vld [vmem:[%s249 + $0x608] sm:$0xff]
                %350 = vst [vmem:[%s250 + $0x188] sm:$0xff] %v349
                %v351 = vld [vmem:[%s249 + $0x610] sm:$0xff]
                %352 = vst [vmem:[%s250 + $0x190] sm:$0xff] %v351
                %v353 = vld [vmem:[%s249 + $0x618] sm:$0xff]
                %354 = vst [vmem:[%s250 + $0x198] sm:$0xff] %v353
                %v355 = vld [vmem:[%s249 + $0x620] sm:$0xff]
                %356 = vst [vmem:[%s250 + $0x1a0] sm:$0xff] %v355
                %v357 = vld [vmem:[%s249 + $0x628] sm:$0xff]
                %358 = vst [vmem:[%s250 + $0x1a8] sm:$0xff] %v357
                %v359 = vld [vmem:[%s249 + $0x630] sm:$0xff]
                %360 = vst [vmem:[%s250 + $0x1b0] sm:$0xff] %v359
                %v361 = vld [vmem:[%s249 + $0x638] sm:$0xff]
                %362 = vst [vmem:[%s250 + $0x1b8] sm:$0xff] %v361
                %v363 = vld [vmem:[%s249 + $0x640] sm:$0xff]
                %364 = vst [vmem:[%s250 + $0x1c0] sm:$0xff] %v363
                %v365 = vld [vmem:[%s249 + $0x648] sm:$0xff]
                %366 = vst [vmem:[%s250 + $0x1c8] sm:$0xff] %v365
                %v367 = vld [vmem:[%s249 + $0x650] sm:$0xff]
                %368 = vst [vmem:[%s250 + $0x1d0] sm:$0xff] %v367
                %v369 = vld [vmem:[%s249 + $0x658] sm:$0xff]
                %370 = vst [vmem:[%s250 + $0x1d8] sm:$0xff] %v369
                %v371 = vld [vmem:[%s249 + $0x660] sm:$0xff]
                %372 = vst [vmem:[%s250 + $0x1e0] sm:$0xff] %v371
                %v373 = vld [vmem:[%s249 + $0x668] sm:$0xff]
                %374 = vst [vmem:[%s250 + $0x1e8] sm:$0xff] %v373
                %v375 = vld [vmem:[%s249 + $0x670] sm:$0xff]
                %376 = vst [vmem:[%s250 + $0x1f0] sm:$0xff] %v375
                %v377 = vld [vmem:[%s249 + $0x678] sm:$0xff]
                %378 = vst [vmem:[%s250 + $0x1f8] sm:$0xff] %v377
              $region57: #{chunked_self_attn_fm.1} parent=51 // loop_footer
                %s248 = sadd.s32 1, %s244
              $region58: #{chunked_self_attn_fm.1} parent=51 // loop_footer_branch
                %243 = sbr.rel target = $region54
              $region59: #{chunked_self_attn_fm.1} parent=51 // loop_exit
                _
            $region52: #{chunked_self_attn_fm.1} parent=47 // pred_fallthru
              _
            // Predicated region
            $region60: #{chunked_self_attn_fm.1} parent=47 // pred_check
              _
            $region61: #{chunked_self_attn_fm.1} parent=47 // pred_check_branch
              %380 = sbr.rel target = $region63
            $region62: #{chunked_self_attn_fm.1} parent=47 // pred_region
              _
            $region63: #{chunked_self_attn_fm.1} parent=47 // pred_fallthru
              _
          $region48: #{chunked_self_attn_fm.1} parent=43 // pred_fallthru
            _
          %381 = vnop
        $region44: #{chunked_self_attn_fm.1} parent=39 // pred_fallthru
          _
      $region40: #{chunked_self_attn_fm.1} parent=5 // pred_fallthru
        _
      %p382 = scmp.le.s32.totalorder 1, %s14
      %p383 = scmp.lt.s32.totalorder %s14, 5
      %p384 = pnand %p382, %p383
      %p385 = pneg %p384
      // Predicated region
      $region64: #{chunked_self_attn_fm.1} parent=5 // pred_check
        _
      $region65: #{chunked_self_attn_fm.1} parent=5 // pred_check_branch
        %387 = sbr.rel (%p384) target = $region67
      $region66: #{chunked_self_attn_fm.1} parent=5 // pred_region
        %s388 = ssub.s32 %s14, 1
        %s389 = sand.u32 %s27, 1
        %s390 = sand.u32 %s27, 1
        %s391 = smul.addr %s390, 512
        %s392 = scalar_lea.vmem [#allocation3], %s391
        // Predicated region
        $region68: #{chunked_self_attn_fm.1} parent=66 // pred_check
          %p393 = pneg %p40
        $region69: #{chunked_self_attn_fm.1} parent=66 // pred_check_branch
          %395 = sbr.rel (%p393) target = $region71
        $region70: #{chunked_self_attn_fm.1} parent=66 // pred_region
          _
        $region71: #{chunked_self_attn_fm.1} parent=66 // pred_fallthru
          _
        %s396 = sand.u32 %s27, 1
        %s397 = sand.u32 %s27, 1
        %s398 = smul.addr %s397, 512
        %s399 = scalar_lea.vmem [#allocation3], %s398
        %p400 = pneg %p40
        %p401 = pneg %p37
        %p402 = pneg %p61
        %p403 = pneg %p58
        %p404 = pneg %p82
        %p405 = pneg %p79
        %p406 = pneg %p103
        %p407 = pneg %p100
        %p408 = pneg %p124
        %p409 = pneg %p121
        %p410 = pneg %p145
        %p411 = pneg %p142
        %p412 = pneg %p166
        %p413 = pneg %p163
        %p414 = pneg %p192
        %p415 = pneg %p189
        %s416 = sand.u32 %s179, 1
        %s417 = sand.u32 %s179, 1
        %s418 = smul.addr %s417, 512
        %s419 = scalar_lea.vmem [#allocation4], %s418
        %s420 = smul.u32 16, %s19
        %s421 = smul.u32 16, %s19
        %v423 = vld [vmem:[%s392] sm:$0xff]
        %v424 = vld [vmem:[%s392 + $0x8] sm:$0xff]
        %v425 = vld [vmem:[%s392 + $0x10] sm:$0xff]
        %v426 = vld [vmem:[%s392 + $0x18] sm:$0xff]
        %v427 = vld [vmem:[%s392 + $0x20] sm:$0xff]
        %v428 = vld [vmem:[%s392 + $0x28] sm:$0xff]
        %v429 = vld [vmem:[%s392 + $0x30] sm:$0xff]
        %v430 = vld [vmem:[%s392 + $0x38] sm:$0xff]
        %v431 = vld [vmem:[%s392 + $0x40] sm:$0xff]
        %v432 = vld [vmem:[%s392 + $0x48] sm:$0xff]
        %v433 = vld [vmem:[%s392 + $0x50] sm:$0xff]
        %v434 = vld [vmem:[%s392 + $0x58] sm:$0xff]
        %v435 = vld [vmem:[%s392 + $0x60] sm:$0xff]
        %v436 = vld [vmem:[%s392 + $0x68] sm:$0xff]
        %v437 = vld [vmem:[%s392 + $0x70] sm:$0xff]
        %v438 = vld [vmem:[%s392 + $0x78] sm:$0xff]
        %v439 = vld [vmem:[%s392 + $0x80] sm:$0xff]
        %v440 = vld [vmem:[%s392 + $0x88] sm:$0xff]
        %v441 = vld [vmem:[%s392 + $0x90] sm:$0xff]
        %v442 = vld [vmem:[%s392 + $0x98] sm:$0xff]
        %v443 = vld [vmem:[%s392 + $0xa0] sm:$0xff]
        %v444 = vld [vmem:[%s392 + $0xa8] sm:$0xff]
        %v445 = vld [vmem:[%s392 + $0xb0] sm:$0xff]
        %v446 = vld [vmem:[%s392 + $0xb8] sm:$0xff]
        %v447 = vld [vmem:[%s392 + $0xc0] sm:$0xff]
        %v448 = vld [vmem:[%s392 + $0xc8] sm:$0xff]
        %v449 = vld [vmem:[%s392 + $0xd0] sm:$0xff]
        %v450 = vld [vmem:[%s392 + $0xd8] sm:$0xff]
        %v451 = vld [vmem:[%s392 + $0xe0] sm:$0xff]
        %v452 = vld [vmem:[%s392 + $0xe8] sm:$0xff]
        %v453 = vld [vmem:[%s392 + $0xf0] sm:$0xff]
        %v454 = vld [vmem:[%s392 + $0xf8] sm:$0xff]
        %v455 = vld [vmem:[%s392 + $0x100] sm:$0xff]
        %v456 = vld [vmem:[%s392 + $0x108] sm:$0xff]
        %v457 = vld [vmem:[%s392 + $0x110] sm:$0xff]
        %v458 = vld [vmem:[%s392 + $0x118] sm:$0xff]
        %v459 = vld [vmem:[%s392 + $0x120] sm:$0xff]
        %v460 = vld [vmem:[%s392 + $0x128] sm:$0xff]
        %v461 = vld [vmem:[%s392 + $0x130] sm:$0xff]
        %v462 = vld [vmem:[%s392 + $0x138] sm:$0xff]
        %v463 = vld [vmem:[%s392 + $0x140] sm:$0xff]
        %v464 = vld [vmem:[%s392 + $0x148] sm:$0xff]
        %v465 = vld [vmem:[%s392 + $0x150] sm:$0xff]
        %v466 = vld [vmem:[%s392 + $0x158] sm:$0xff]
        %v467 = vld [vmem:[%s392 + $0x160] sm:$0xff]
        %v468 = vld [vmem:[%s392 + $0x168] sm:$0xff]
        %v469 = vld [vmem:[%s392 + $0x170] sm:$0xff]
        %v470 = vld [vmem:[%s392 + $0x178] sm:$0xff]
        %v471 = vld [vmem:[%s392 + $0x180] sm:$0xff]
        %v472 = vld [vmem:[%s392 + $0x188] sm:$0xff]
        %v473 = vld [vmem:[%s392 + $0x190] sm:$0xff]
        %v474 = vld [vmem:[%s392 + $0x198] sm:$0xff]
        %v475 = vld [vmem:[%s392 + $0x1a0] sm:$0xff]
        %v476 = vld [vmem:[%s392 + $0x1a8] sm:$0xff]
        %v477 = vld [vmem:[%s392 + $0x1b0] sm:$0xff]
        %v478 = vld [vmem:[%s392 + $0x1b8] sm:$0xff]
        %v479 = vld [vmem:[%s392 + $0x1c0] sm:$0xff]
        %v480 = vld [vmem:[%s392 + $0x1c8] sm:$0xff]
        %v481 = vld [vmem:[%s392 + $0x1d0] sm:$0xff]
        %v482 = vld [vmem:[%s392 + $0x1d8] sm:$0xff]
        %v483 = vld [vmem:[%s392 + $0x1e0] sm:$0xff]
        %v484 = vld [vmem:[%s392 + $0x1e8] sm:$0xff]
        %v485 = vld [vmem:[%s392 + $0x1f0] sm:$0xff]
        %v486 = vld [vmem:[%s392 + $0x1f8] sm:$0xff]
        %v487 = vpack.c.bf16 %v439, %v423
        %v488 = vpack.c.bf16 %v440, %v424
        %v489 = vpack.c.bf16 %v441, %v425
        %v490 = vpack.c.bf16 %v442, %v426
        %v491 = vpack.c.bf16 %v443, %v427
        %v492 = vpack.c.bf16 %v444, %v428
        %v493 = vpack.c.bf16 %v445, %v429
        %v494 = vpack.c.bf16 %v446, %v430
        %v495 = vpack.c.bf16 %v447, %v431
        %v496 = vpack.c.bf16 %v448, %v432
        %v497 = vpack.c.bf16 %v449, %v433
        %v498 = vpack.c.bf16 %v450, %v434
        %v499 = vpack.c.bf16 %v451, %v435
        %v500 = vpack.c.bf16 %v452, %v436
        %v501 = vpack.c.bf16 %v453, %v437
        %v502 = vpack.c.bf16 %v454, %v438
        %v503 = vpack.c.bf16 %v471, %v455
        %v504 = vpack.c.bf16 %v472, %v456
        %v505 = vpack.c.bf16 %v473, %v457
        %v506 = vpack.c.bf16 %v474, %v458
        %v507 = vpack.c.bf16 %v475, %v459
        %v508 = vpack.c.bf16 %v476, %v460
        %v509 = vpack.c.bf16 %v477, %v461
        %v510 = vpack.c.bf16 %v478, %v462
        %v511 = vpack.c.bf16 %v479, %v463
        %v512 = vpack.c.bf16 %v480, %v464
        %v513 = vpack.c.bf16 %v481, %v465
        %v514 = vpack.c.bf16 %v482, %v466
        %v515 = vpack.c.bf16 %v483, %v467
        %v516 = vpack.c.bf16 %v484, %v468
        %v517 = vpack.c.bf16 %v485, %v469
        %v518 = vpack.c.bf16 %v486, %v470
        %v519 = vld [vmem:[%s1] sm:$0xf]
        %v520 = vld [vmem:[%s1 + $0x4] sm:$0x3]
        %v523 = vunpack.c.l.b16 %v519
        %v524 = vunpack.c.l.b16 %v520
        %v525 = vpack.c.b16 %v524, %v523
        %vm526 = vcmask 261120
        %v528 = vsel %vm526, %v525, 0
        %530 = vmatprep.subr.bf16.mxu0 0
        %531 = vmatpush1.bf16.msra.mxu0 0
        %532 = vmatprep.subr.bf16.mxu0 0
        %533 = vmatpush1.bf16.msra.mxu0 0
        %534 = vmatprep.subr.bf16.mxu0 0
        %535 = vmatpush1.bf16.msra.mxu0 0
        %536 = vmatprep.subr.bf16.mxu0 0
        %537 = vmatpush1.bf16.msra.mxu0 0
        %538 = vmatprep.subr.bf16.mxu0 0
        %539 = vmatpush1.bf16.msra.mxu0 0
        %540 = vmatprep.subr.bf16.mxu0 0
        %541 = vmatpush1.bf16.msra.mxu0 0
        %542 = vmatprep.subr.bf16.mxu0 %v504
        %543 = vmatpush1.bf16.msra.mxu0 %v503
        %544 = vmatprep.subr.bf16.mxu0 %v488
        %545 = vmatpush1.bf16.msra.mxu0 %v487
        %546 = vmatprep.subr.bf16.mxu0 0
        %547 = vmatpush2.bf16.msra.mxu0 0
        %548 = vmatprep.subr.bf16.mxu0 0
        %549 = vmatpush2.bf16.msra.mxu0 0
        %550 = vmatprep.subr.bf16.mxu0 0
        %551 = vmatpush2.bf16.msra.mxu0 0
        %552 = vmatprep.subr.bf16.mxu0 0
        %553 = vmatpush2.bf16.msra.mxu0 0
        %554 = vmatprep.subr.bf16.mxu0 0
        %555 = vmatpush2.bf16.msra.mxu0 0
        %556 = vmatprep.subr.bf16.mxu0 0
        %557 = vmatpush2.bf16.msra.mxu0 0
        %558 = vmatprep.subr.bf16.mxu0 0
        %559 = vmatpush2.bf16.msra.mxu0 0
        %560 = vmatprep.subr.bf16.mxu0 0
        %561 = vmatpush2.bf16.msra.mxu0 0
        %562 = vmatprep.mubr.bf16.mxu0 0
        %563 = vmatmul.mubr.bf16.gmra.mxu0 %v528
        %v564 = vpop.f32.mrf.mxu0
        %v565 = vadd.f32 0.0, %v564
        %v566 = vpop.f32.mrf.mxu0
        %v567 = vadd.f32 0.0, %v566
        %v568 = vpop.f32.mrf.mxu0
        %v569 = vadd.f32 0.0, %v568
        %v570 = vpop.f32.mrf.mxu0
        %v571 = vadd.f32 0.0, %v570
        %572 = vdwg.mxu0
        %573 = vmatprep.subr.bf16.mxu0 0
        %574 = vmatpush1.bf16.msra.mxu0 0
        %575 = vmatprep.subr.bf16.mxu0 0
        %576 = vmatpush1.bf16.msra.mxu0 0
        %577 = vmatprep.subr.bf16.mxu0 0
        %578 = vmatpush1.bf16.msra.mxu0 0
        %579 = vmatprep.subr.bf16.mxu0 0
        %580 = vmatpush1.bf16.msra.mxu0 0
        %581 = vmatprep.subr.bf16.mxu0 0
        %582 = vmatpush1.bf16.msra.mxu0 0
        %583 = vmatprep.subr.bf16.mxu0 0
        %584 = vmatpush1.bf16.msra.mxu0 0
        %585 = vmatprep.subr.bf16.mxu0 %v506
        %586 = vmatpush1.bf16.msra.mxu0 %v505
        %587 = vmatprep.subr.bf16.mxu0 %v490
        %588 = vmatpush1.bf16.msra.mxu0 %v489
        %589 = vmatprep.subr.bf16.mxu0 0
        %590 = vmatpush2.bf16.msra.mxu0 0
        %591 = vmatprep.subr.bf16.mxu0 0
        %592 = vmatpush2.bf16.msra.mxu0 0
        %593 = vmatprep.subr.bf16.mxu0 0
        %594 = vmatpush2.bf16.msra.mxu0 0
        %595 = vmatprep.subr.bf16.mxu0 0
        %596 = vmatpush2.bf16.msra.mxu0 0
        %597 = vmatprep.subr.bf16.mxu0 0
        %598 = vmatpush2.bf16.msra.mxu0 0
        %599 = vmatprep.subr.bf16.mxu0 0
        %600 = vmatpush2.bf16.msra.mxu0 0
        %601 = vmatprep.subr.bf16.mxu0 0
        %602 = vmatpush2.bf16.msra.mxu0 0
        %603 = vmatprep.subr.bf16.mxu0 0
        %604 = vmatpush2.bf16.msra.mxu0 0
        %605 = vmatprep.mubr.bf16.mxu0 0
        %606 = vmatmul.mubr.bf16.gmra.mxu0 %v528
        %v607 = vpop.f32.mrf.mxu0
        %v608 = vadd.f32 0.0, %v607
        %v609 = vpop.f32.mrf.mxu0
        %v610 = vadd.f32 0.0, %v609
        %v611 = vpop.f32.mrf.mxu0
        %v612 = vadd.f32 0.0, %v611
        %v613 = vpop.f32.mrf.mxu0
        %v614 = vadd.f32 0.0, %v613
        %615 = vdwg.mxu0
        %616 = vmatprep.subr.bf16.mxu0 0
        %617 = vmatpush1.bf16.msra.mxu0 0
        %618 = vmatprep.subr.bf16.mxu0 0
        %619 = vmatpush1.bf16.msra.mxu0 0
        %620 = vmatprep.subr.bf16.mxu0 0
        %621 = vmatpush1.bf16.msra.mxu0 0
        %622 = vmatprep.subr.bf16.mxu0 0
        %623 = vmatpush1.bf16.msra.mxu0 0
        %624 = vmatprep.subr.bf16.mxu0 0
        %625 = vmatpush1.bf16.msra.mxu0 0
        %626 = vmatprep.subr.bf16.mxu0 0
        %627 = vmatpush1.bf16.msra.mxu0 0
        %628 = vmatprep.subr.bf16.mxu0 %v508
        %629 = vmatpush1.bf16.msra.mxu0 %v507
        %630 = vmatprep.subr.bf16.mxu0 %v492
        %631 = vmatpush1.bf16.msra.mxu0 %v491
        %632 = vmatprep.subr.bf16.mxu0 0
        %633 = vmatpush2.bf16.msra.mxu0 0
        %634 = vmatprep.subr.bf16.mxu0 0
        %635 = vmatpush2.bf16.msra.mxu0 0
        %636 = vmatprep.subr.bf16.mxu0 0
        %637 = vmatpush2.bf16.msra.mxu0 0
        %638 = vmatprep.subr.bf16.mxu0 0
        %639 = vmatpush2.bf16.msra.mxu0 0
        %640 = vmatprep.subr.bf16.mxu0 0
        %641 = vmatpush2.bf16.msra.mxu0 0
        %642 = vmatprep.subr.bf16.mxu0 0
        %643 = vmatpush2.bf16.msra.mxu0 0
        %644 = vmatprep.subr.bf16.mxu0 0
        %645 = vmatpush2.bf16.msra.mxu0 0
        %646 = vmatprep.subr.bf16.mxu0 0
        %647 = vmatpush2.bf16.msra.mxu0 0
        %648 = vmatprep.mubr.bf16.mxu0 0
        %649 = vmatmul.mubr.bf16.gmra.mxu0 %v528
        %v650 = vpop.f32.mrf.mxu0
        %v651 = vadd.f32 0.0, %v650
        %v652 = vpop.f32.mrf.mxu0
        %v653 = vadd.f32 0.0, %v652
        %v654 = vpop.f32.mrf.mxu0
        %v655 = vadd.f32 0.0, %v654
        %v656 = vpop.f32.mrf.mxu0
        %v657 = vadd.f32 0.0, %v656
        %658 = vdwg.mxu0
        %659 = vmatprep.subr.bf16.mxu0 0
        %660 = vmatpush1.bf16.msra.mxu0 0
        %661 = vmatprep.subr.bf16.mxu0 0
        %662 = vmatpush1.bf16.msra.mxu0 0
        %663 = vmatprep.subr.bf16.mxu0 0
        %664 = vmatpush1.bf16.msra.mxu0 0
        %665 = vmatprep.subr.bf16.mxu0 0
        %666 = vmatpush1.bf16.msra.mxu0 0
        %667 = vmatprep.subr.bf16.mxu0 0
        %668 = vmatpush1.bf16.msra.mxu0 0
        %669 = vmatprep.subr.bf16.mxu0 0
        %670 = vmatpush1.bf16.msra.mxu0 0
        %671 = vmatprep.subr.bf16.mxu0 %v510
        %672 = vmatpush1.bf16.msra.mxu0 %v509
        %673 = vmatprep.subr.bf16.mxu0 %v494
        %674 = vmatpush1.bf16.msra.mxu0 %v493
        %675 = vmatprep.subr.bf16.mxu0 0
        %676 = vmatpush2.bf16.msra.mxu0 0
        %677 = vmatprep.subr.bf16.mxu0 0
        %678 = vmatpush2.bf16.msra.mxu0 0
        %679 = vmatprep.subr.bf16.mxu0 0
        %680 = vmatpush2.bf16.msra.mxu0 0
        %681 = vmatprep.subr.bf16.mxu0 0
        %682 = vmatpush2.bf16.msra.mxu0 0
        %683 = vmatprep.subr.bf16.mxu0 0
        %684 = vmatpush2.bf16.msra.mxu0 0
        %685 = vmatprep.subr.bf16.mxu0 0
        %686 = vmatpush2.bf16.msra.mxu0 0
        %687 = vmatprep.subr.bf16.mxu0 0
        %688 = vmatpush2.bf16.msra.mxu0 0
        %689 = vmatprep.subr.bf16.mxu0 0
        %690 = vmatpush2.bf16.msra.mxu0 0
        %691 = vmatprep.mubr.bf16.mxu0 0
        %692 = vmatmul.mubr.bf16.gmra.mxu0 %v528
        %v693 = vpop.f32.mrf.mxu0
        %v694 = vadd.f32 0.0, %v693
        %v695 = vpop.f32.mrf.mxu0
        %v696 = vadd.f32 0.0, %v695
        %v697 = vpop.f32.mrf.mxu0
        %v698 = vadd.f32 0.0, %v697
        %v699 = vpop.f32.mrf.mxu0
        %v700 = vadd.f32 0.0, %v699
        %701 = vdwg.mxu0
        %702 = vmatprep.subr.bf16.mxu0 0
        %703 = vmatpush1.bf16.msra.mxu0 0
        %704 = vmatprep.subr.bf16.mxu0 0
        %705 = vmatpush1.bf16.msra.mxu0 0
        %706 = vmatprep.subr.bf16.mxu0 0
        %707 = vmatpush1.bf16.msra.mxu0 0
        %708 = vmatprep.subr.bf16.mxu0 0
        %709 = vmatpush1.bf16.msra.mxu0 0
        %710 = vmatprep.subr.bf16.mxu0 0
        %711 = vmatpush1.bf16.msra.mxu0 0
        %712 = vmatprep.subr.bf16.mxu0 0
        %713 = vmatpush1.bf16.msra.mxu0 0
        %714 = vmatprep.subr.bf16.mxu0 %v512
        %715 = vmatpush1.bf16.msra.mxu0 %v511
        %716 = vmatprep.subr.bf16.mxu0 %v496
        %717 = vmatpush1.bf16.msra.mxu0 %v495
        %718 = vmatprep.subr.bf16.mxu0 0
        %719 = vmatpush2.bf16.msra.mxu0 0
        %720 = vmatprep.subr.bf16.mxu0 0
        %721 = vmatpush2.bf16.msra.mxu0 0
        %722 = vmatprep.subr.bf16.mxu0 0
        %723 = vmatpush2.bf16.msra.mxu0 0
        %724 = vmatprep.subr.bf16.mxu0 0
        %725 = vmatpush2.bf16.msra.mxu0 0
        %726 = vmatprep.subr.bf16.mxu0 0
        %727 = vmatpush2.bf16.msra.mxu0 0
        %728 = vmatprep.subr.bf16.mxu0 0
        %729 = vmatpush2.bf16.msra.mxu0 0
        %730 = vmatprep.subr.bf16.mxu0 0
        %731 = vmatpush2.bf16.msra.mxu0 0
        %732 = vmatprep.subr.bf16.mxu0 0
        %733 = vmatpush2.bf16.msra.mxu0 0
        %734 = vmatprep.mubr.bf16.mxu0 0
        %735 = vmatmul.mubr.bf16.gmra.mxu0 %v528
        %v736 = vpop.f32.mrf.mxu0
        %v737 = vadd.f32 0.0, %v736
        %v738 = vpop.f32.mrf.mxu0
        %v739 = vadd.f32 0.0, %v738
        %v740 = vpop.f32.mrf.mxu0
        %v741 = vadd.f32 0.0, %v740
        %v742 = vpop.f32.mrf.mxu0
        %v743 = vadd.f32 0.0, %v742
        %744 = vdwg.mxu0
        %745 = vmatprep.subr.bf16.mxu0 0
        %746 = vmatpush1.bf16.msra.mxu0 0
        %747 = vmatprep.subr.bf16.mxu0 0
        %748 = vmatpush1.bf16.msra.mxu0 0
        %749 = vmatprep.subr.bf16.mxu0 0
        %750 = vmatpush1.bf16.msra.mxu0 0
        %751 = vmatprep.subr.bf16.mxu0 0
        %752 = vmatpush1.bf16.msra.mxu0 0
        %753 = vmatprep.subr.bf16.mxu0 0
        %754 = vmatpush1.bf16.msra.mxu0 0
        %755 = vmatprep.subr.bf16.mxu0 0
        %756 = vmatpush1.bf16.msra.mxu0 0
        %757 = vmatprep.subr.bf16.mxu0 %v514
        %758 = vmatpush1.bf16.msra.mxu0 %v513
        %759 = vmatprep.subr.bf16.mxu0 %v498
        %760 = vmatpush1.bf16.msra.mxu0 %v497
        %761 = vmatprep.subr.bf16.mxu0 0
        %762 = vmatpush2.bf16.msra.mxu0 0
        %763 = vmatprep.subr.bf16.mxu0 0
        %764 = vmatpush2.bf16.msra.mxu0 0
        %765 = vmatprep.subr.bf16.mxu0 0
        %766 = vmatpush2.bf16.msra.mxu0 0
        %767 = vmatprep.subr.bf16.mxu0 0
        %768 = vmatpush2.bf16.msra.mxu0 0
        %769 = vmatprep.subr.bf16.mxu0 0
        %770 = vmatpush2.bf16.msra.mxu0 0
        %771 = vmatprep.subr.bf16.mxu0 0
        %772 = vmatpush2.bf16.msra.mxu0 0
        %773 = vmatprep.subr.bf16.mxu0 0
        %774 = vmatpush2.bf16.msra.mxu0 0
        %775 = vmatprep.subr.bf16.mxu0 0
        %776 = vmatpush2.bf16.msra.mxu0 0
        %777 = vmatprep.mubr.bf16.mxu0 0
        %778 = vmatmul.mubr.bf16.gmra.mxu0 %v528
        %v779 = vpop.f32.mrf.mxu0
        %v780 = vadd.f32 0.0, %v779
        %v781 = vpop.f32.mrf.mxu0
        %v782 = vadd.f32 0.0, %v781
        %v783 = vpop.f32.mrf.mxu0
        %v784 = vadd.f32 0.0, %v783
        %v785 = vpop.f32.mrf.mxu0
        %v786 = vadd.f32 0.0, %v785
        %787 = vdwg.mxu0
        %788 = vmatprep.subr.bf16.mxu0 0
        %789 = vmatpush1.bf16.msra.mxu0 0
        %790 = vmatprep.subr.bf16.mxu0 0
        %791 = vmatpush1.bf16.msra.mxu0 0
        %792 = vmatprep.subr.bf16.mxu0 0
        %793 = vmatpush1.bf16.msra.mxu0 0
        %794 = vmatprep.subr.bf16.mxu0 0
        %795 = vmatpush1.bf16.msra.mxu0 0
        %796 = vmatprep.subr.bf16.mxu0 0
        %797 = vmatpush1.bf16.msra.mxu0 0
        %798 = vmatprep.subr.bf16.mxu0 0
        %799 = vmatpush1.bf16.msra.mxu0 0
        %800 = vmatprep.subr.bf16.mxu0 %v516
        %801 = vmatpush1.bf16.msra.mxu0 %v515
        %802 = vmatprep.subr.bf16.mxu0 %v500
        %803 = vmatpush1.bf16.msra.mxu0 %v499
        %804 = vmatprep.subr.bf16.mxu0 0
        %805 = vmatpush2.bf16.msra.mxu0 0
        %806 = vmatprep.subr.bf16.mxu0 0
        %807 = vmatpush2.bf16.msra.mxu0 0
        %808 = vmatprep.subr.bf16.mxu0 0
        %809 = vmatpush2.bf16.msra.mxu0 0
        %810 = vmatprep.subr.bf16.mxu0 0
        %811 = vmatpush2.bf16.msra.mxu0 0
        %812 = vmatprep.subr.bf16.mxu0 0
        %813 = vmatpush2.bf16.msra.mxu0 0
        %814 = vmatprep.subr.bf16.mxu0 0
        %815 = vmatpush2.bf16.msra.mxu0 0
        %816 = vmatprep.subr.bf16.mxu0 0
        %817 = vmatpush2.bf16.msra.mxu0 0
        %818 = vmatprep.subr.bf16.mxu0 0
        %819 = vmatpush2.bf16.msra.mxu0 0
        %820 = vmatprep.mubr.bf16.mxu0 0
        %821 = vmatmul.mubr.bf16.gmra.mxu0 %v528
        %v822 = vpop.f32.mrf.mxu0
        %v823 = vadd.f32 0.0, %v822
        %v824 = vpop.f32.mrf.mxu0
        %v825 = vadd.f32 0.0, %v824
        %v826 = vpop.f32.mrf.mxu0
        %v827 = vadd.f32 0.0, %v826
        %v828 = vpop.f32.mrf.mxu0
        %v829 = vadd.f32 0.0, %v828
        %830 = vdwg.mxu0
        %831 = vmatprep.subr.bf16.mxu0 0
        %832 = vmatpush1.bf16.msra.mxu0 0
        %833 = vmatprep.subr.bf16.mxu0 0
        %834 = vmatpush1.bf16.msra.mxu0 0
        %835 = vmatprep.subr.bf16.mxu0 0
        %836 = vmatpush1.bf16.msra.mxu0 0
        %837 = vmatprep.subr.bf16.mxu0 0
        %838 = vmatpush1.bf16.msra.mxu0 0
        %839 = vmatprep.subr.bf16.mxu0 0
        %840 = vmatpush1.bf16.msra.mxu0 0
        %841 = vmatprep.subr.bf16.mxu0 0
        %842 = vmatpush1.bf16.msra.mxu0 0
        %843 = vmatprep.subr.bf16.mxu0 %v518
        %844 = vmatpush1.bf16.msra.mxu0 %v517
        %845 = vmatprep.subr.bf16.mxu0 %v502
        %846 = vmatpush1.bf16.msra.mxu0 %v501
        %847 = vmatprep.subr.bf16.mxu0 0
        %848 = vmatpush2.bf16.msra.mxu0 0
        %849 = vmatprep.subr.bf16.mxu0 0
        %850 = vmatpush2.bf16.msra.mxu0 0
        %851 = vmatprep.subr.bf16.mxu0 0
        %852 = vmatpush2.bf16.msra.mxu0 0
        %853 = vmatprep.subr.bf16.mxu0 0
        %854 = vmatpush2.bf16.msra.mxu0 0
        %855 = vmatprep.subr.bf16.mxu0 0
        %856 = vmatpush2.bf16.msra.mxu0 0
        %857 = vmatprep.subr.bf16.mxu0 0
        %858 = vmatpush2.bf16.msra.mxu0 0
        %859 = vmatprep.subr.bf16.mxu0 0
        %860 = vmatpush2.bf16.msra.mxu0 0
        %861 = vmatprep.subr.bf16.mxu0 0
        %862 = vmatpush2.bf16.msra.mxu0 0
        %863 = vmatprep.mubr.bf16.mxu0 0
        %864 = vmatmul.mubr.bf16.gmra.mxu0 %v528
        %v865 = vpop.f32.mrf.mxu0
        %v866 = vadd.f32 0.0, %v865
        %v867 = vpop.f32.mrf.mxu0
        %v868 = vadd.f32 0.0, %v867
        %v869 = vpop.f32.mrf.mxu0
        %v870 = vadd.f32 0.0, %v869
        %v871 = vpop.f32.mrf.mxu0
        %v872 = vadd.f32 0.0, %v871
        %873 = vdwg.mxu0
        %876 = vrot.lane.b32.xlu0 %v565, 64
        %v877 = vpop.permute.xlu0 %876
        %878 = vrot.lane.b32.xlu0 %v569, 64
        %v879 = vpop.permute.xlu0 %878
        %884 = vrot.lane.b32.xlu0 %v567, 64
        %v885 = vpop.permute.xlu0 %884
        %886 = vrot.lane.b32.xlu0 %v571, 64
        %v887 = vpop.permute.xlu0 %886
        %892 = vrot.lane.b32.xlu0 %v608, 64
        %v893 = vpop.permute.xlu0 %892
        %894 = vrot.lane.b32.xlu0 %v612, 64
        %v895 = vpop.permute.xlu0 %894
        %900 = vrot.lane.b32.xlu0 %v610, 64
        %v901 = vpop.permute.xlu0 %900
        %902 = vrot.lane.b32.xlu0 %v614, 64
        %v903 = vpop.permute.xlu0 %902
        %908 = vrot.lane.b32.xlu0 %v651, 64
        %v909 = vpop.permute.xlu0 %908
        %910 = vrot.lane.b32.xlu0 %v655, 64
        %v911 = vpop.permute.xlu0 %910
        %916 = vrot.lane.b32.xlu0 %v653, 64
        %v917 = vpop.permute.xlu0 %916
        %918 = vrot.lane.b32.xlu0 %v657, 64
        %v919 = vpop.permute.xlu0 %918
        %924 = vrot.lane.b32.xlu0 %v694, 64
        %v925 = vpop.permute.xlu0 %924
        %926 = vrot.lane.b32.xlu0 %v698, 64
        %v927 = vpop.permute.xlu0 %926
        %932 = vrot.lane.b32.xlu0 %v696, 64
        %v933 = vpop.permute.xlu0 %932
        %934 = vrot.lane.b32.xlu0 %v700, 64
        %v935 = vpop.permute.xlu0 %934
        %940 = vrot.lane.b32.xlu0 %v737, 64
        %v941 = vpop.permute.xlu0 %940
        %942 = vrot.lane.b32.xlu0 %v741, 64
        %v943 = vpop.permute.xlu0 %942
        %948 = vrot.lane.b32.xlu0 %v739, 64
        %v949 = vpop.permute.xlu0 %948
        %950 = vrot.lane.b32.xlu0 %v743, 64
        %v951 = vpop.permute.xlu0 %950
        %956 = vrot.lane.b32.xlu0 %v780, 64
        %v957 = vpop.permute.xlu0 %956
        %958 = vrot.lane.b32.xlu0 %v784, 64
        %v959 = vpop.permute.xlu0 %958
        %964 = vrot.lane.b32.xlu0 %v782, 64
        %v965 = vpop.permute.xlu0 %964
        %966 = vrot.lane.b32.xlu0 %v786, 64
        %v967 = vpop.permute.xlu0 %966
        %972 = vrot.lane.b32.xlu0 %v823, 64
        %v973 = vpop.permute.xlu0 %972
        %974 = vrot.lane.b32.xlu0 %v827, 64
        %v975 = vpop.permute.xlu0 %974
        %980 = vrot.lane.b32.xlu0 %v825, 64
        %v981 = vpop.permute.xlu0 %980
        %982 = vrot.lane.b32.xlu0 %v829, 64
        %v983 = vpop.permute.xlu0 %982
        %988 = vrot.lane.b32.xlu0 %v866, 64
        %v989 = vpop.permute.xlu0 %988
        %990 = vrot.lane.b32.xlu0 %v870, 64
        %v991 = vpop.permute.xlu0 %990
        %996 = vrot.lane.b32.xlu0 %v868, 64
        %v997 = vpop.permute.xlu0 %996
        %998 = vrot.lane.b32.xlu0 %v872, 64
        %v999 = vpop.permute.xlu0 %998
        %v1002 = vld [vmem:[%s2] sm:$0xf]
        %1004 = vset.pattern.permute.xlu0 0
        %1005 = vperm.xlu0 %1004, %v1002
        %v1006 = vpop.permute.xlu0 %1005
        %v1008 = vadd.f32 %v565, %v1006
        %v1009 = vadd.f32 %v877, %v1006
        %v1010 = vadd.f32 %v567, %v1006
        %v1011 = vadd.f32 %v885, %v1006
        %v1012 = vadd.f32 %v608, %v1006
        %v1013 = vadd.f32 %v893, %v1006
        %v1014 = vadd.f32 %v610, %v1006
        %v1015 = vadd.f32 %v901, %v1006
        %v1016 = vadd.f32 %v651, %v1006
        %v1017 = vadd.f32 %v909, %v1006
        %v1018 = vadd.f32 %v653, %v1006
        %v1019 = vadd.f32 %v917, %v1006
        %v1020 = vadd.f32 %v694, %v1006
        %v1021 = vadd.f32 %v925, %v1006
        %v1022 = vadd.f32 %v696, %v1006
        %v1023 = vadd.f32 %v933, %v1006
        %v1024 = vadd.f32 %v737, %v1006
        %v1025 = vadd.f32 %v941, %v1006
        %v1026 = vadd.f32 %v739, %v1006
        %v1027 = vadd.f32 %v949, %v1006
        %v1028 = vadd.f32 %v780, %v1006
        %v1029 = vadd.f32 %v957, %v1006
        %v1030 = vadd.f32 %v782, %v1006
        %v1031 = vadd.f32 %v965, %v1006
        %v1032 = vadd.f32 %v823, %v1006
        %v1033 = vadd.f32 %v973, %v1006
        %v1034 = vadd.f32 %v825, %v1006
        %v1035 = vadd.f32 %v981, %v1006
        %v1036 = vadd.f32 %v866, %v1006
        %v1037 = vadd.f32 %v989, %v1006
        %v1038 = vadd.f32 %v868, %v1006
        %v1039 = vadd.f32 %v997, %v1006
        %1040 = vrot.lane.b32.xlu0 %v565, 112
        %v1041 = vpop.permute.xlu0 %1040
        %1042 = vrot.lane.b32.xlu0 %v569, 112
        %v1043 = vpop.permute.xlu0 %1042
        %1044 = vrot.lane.b32.xlu0 %v877, 112
        %v1045 = vpop.permute.xlu0 %1044
        %1046 = vrot.lane.b32.xlu0 %v879, 112
        %v1047 = vpop.permute.xlu0 %1046
        %1048 = vrot.lane.b32.xlu0 %v567, 112
        %v1049 = vpop.permute.xlu0 %1048
        %1050 = vrot.lane.b32.xlu0 %v571, 112
        %v1051 = vpop.permute.xlu0 %1050
        %1052 = vrot.lane.b32.xlu0 %v885, 112
        %v1053 = vpop.permute.xlu0 %1052
        %1054 = vrot.lane.b32.xlu0 %v887, 112
        %v1055 = vpop.permute.xlu0 %1054
        %1056 = vrot.lane.b32.xlu0 %v608, 112
        %v1057 = vpop.permute.xlu0 %1056
        %1058 = vrot.lane.b32.xlu0 %v612, 112
        %v1059 = vpop.permute.xlu0 %1058
        %1060 = vrot.lane.b32.xlu0 %v893, 112
        %v1061 = vpop.permute.xlu0 %1060
        %1062 = vrot.lane.b32.xlu0 %v895, 112
        %v1063 = vpop.permute.xlu0 %1062
        %1064 = vrot.lane.b32.xlu0 %v610, 112
        %v1065 = vpop.permute.xlu0 %1064
        %1066 = vrot.lane.b32.xlu0 %v614, 112
        %v1067 = vpop.permute.xlu0 %1066
        %1068 = vrot.lane.b32.xlu0 %v901, 112
        %v1069 = vpop.permute.xlu0 %1068
        %1070 = vrot.lane.b32.xlu0 %v903, 112
        %v1071 = vpop.permute.xlu0 %1070
        %1072 = vrot.lane.b32.xlu0 %v651, 112
        %v1073 = vpop.permute.xlu0 %1072
        %1074 = vrot.lane.b32.xlu0 %v655, 112
        %v1075 = vpop.permute.xlu0 %1074
        %1076 = vrot.lane.b32.xlu0 %v909, 112
        %v1077 = vpop.permute.xlu0 %1076
        %1078 = vrot.lane.b32.xlu0 %v911, 112
        %v1079 = vpop.permute.xlu0 %1078
        %1080 = vrot.lane.b32.xlu0 %v653, 112
        %v1081 = vpop.permute.xlu0 %1080
        %1082 = vrot.lane.b32.xlu0 %v657, 112
        %v1083 = vpop.permute.xlu0 %1082
        %1084 = vrot.lane.b32.xlu0 %v917, 112
        %v1085 = vpop.permute.xlu0 %1084
        %1086 = vrot.lane.b32.xlu0 %v919, 112
        %v1087 = vpop.permute.xlu0 %1086
        %1088 = vrot.lane.b32.xlu0 %v694, 112
        %v1089 = vpop.permute.xlu0 %1088
        %1090 = vrot.lane.b32.xlu0 %v698, 112
        %v1091 = vpop.permute.xlu0 %1090
        %1092 = vrot.lane.b32.xlu0 %v925, 112
        %v1093 = vpop.permute.xlu0 %1092
        %1094 = vrot.lane.b32.xlu0 %v927, 112
        %v1095 = vpop.permute.xlu0 %1094
        %1096 = vrot.lane.b32.xlu0 %v696, 112
        %v1097 = vpop.permute.xlu0 %1096
        %1098 = vrot.lane.b32.xlu0 %v700, 112
        %v1099 = vpop.permute.xlu0 %1098
        %1100 = vrot.lane.b32.xlu0 %v933, 112
        %v1101 = vpop.permute.xlu0 %1100
        %1102 = vrot.lane.b32.xlu0 %v935, 112
        %v1103 = vpop.permute.xlu0 %1102
        %1104 = vrot.lane.b32.xlu0 %v737, 112
        %v1105 = vpop.permute.xlu0 %1104
        %1106 = vrot.lane.b32.xlu0 %v741, 112
        %v1107 = vpop.permute.xlu0 %1106
        %1108 = vrot.lane.b32.xlu0 %v941, 112
        %v1109 = vpop.permute.xlu0 %1108
        %1110 = vrot.lane.b32.xlu0 %v943, 112
        %v1111 = vpop.permute.xlu0 %1110
        %1112 = vrot.lane.b32.xlu0 %v739, 112
        %v1113 = vpop.permute.xlu0 %1112
        %1114 = vrot.lane.b32.xlu0 %v743, 112
        %v1115 = vpop.permute.xlu0 %1114
        %1116 = vrot.lane.b32.xlu0 %v949, 112
        %v1117 = vpop.permute.xlu0 %1116
        %1118 = vrot.lane.b32.xlu0 %v951, 112
        %v1119 = vpop.permute.xlu0 %1118
        %1120 = vrot.lane.b32.xlu0 %v780, 112
        %v1121 = vpop.permute.xlu0 %1120
        %1122 = vrot.lane.b32.xlu0 %v784, 112
        %v1123 = vpop.permute.xlu0 %1122
        %1124 = vrot.lane.b32.xlu0 %v957, 112
        %v1125 = vpop.permute.xlu0 %1124
        %1126 = vrot.lane.b32.xlu0 %v959, 112
        %v1127 = vpop.permute.xlu0 %1126
        %1128 = vrot.lane.b32.xlu0 %v782, 112
        %v1129 = vpop.permute.xlu0 %1128
        %1130 = vrot.lane.b32.xlu0 %v786, 112
        %v1131 = vpop.permute.xlu0 %1130
        %1132 = vrot.lane.b32.xlu0 %v965, 112
        %v1133 = vpop.permute.xlu0 %1132
        %1134 = vrot.lane.b32.xlu0 %v967, 112
        %v1135 = vpop.permute.xlu0 %1134
        %1136 = vrot.lane.b32.xlu0 %v823, 112
        %v1137 = vpop.permute.xlu0 %1136
        %1138 = vrot.lane.b32.xlu0 %v827, 112
        %v1139 = vpop.permute.xlu0 %1138
        %1140 = vrot.lane.b32.xlu0 %v973, 112
        %v1141 = vpop.permute.xlu0 %1140
        %1142 = vrot.lane.b32.xlu0 %v975, 112
        %v1143 = vpop.permute.xlu0 %1142
        %1144 = vrot.lane.b32.xlu0 %v825, 112
        %v1145 = vpop.permute.xlu0 %1144
        %1146 = vrot.lane.b32.xlu0 %v829, 112
        %v1147 = vpop.permute.xlu0 %1146
        %1148 = vrot.lane.b32.xlu0 %v981, 112
        %v1149 = vpop.permute.xlu0 %1148
        %1150 = vrot.lane.b32.xlu0 %v983, 112
        %v1151 = vpop.permute.xlu0 %1150
        %1152 = vrot.lane.b32.xlu0 %v866, 112
        %v1153 = vpop.permute.xlu0 %1152
        %1154 = vrot.lane.b32.xlu0 %v870, 112
        %v1155 = vpop.permute.xlu0 %1154
        %1156 = vrot.lane.b32.xlu0 %v989, 112
        %v1157 = vpop.permute.xlu0 %1156
        %1158 = vrot.lane.b32.xlu0 %v991, 112
        %v1159 = vpop.permute.xlu0 %1158
        %1160 = vrot.lane.b32.xlu0 %v868, 112
        %v1161 = vpop.permute.xlu0 %1160
        %1162 = vrot.lane.b32.xlu0 %v872, 112
        %v1163 = vpop.permute.xlu0 %1162
        %1164 = vrot.lane.b32.xlu0 %v997, 112
        %v1165 = vpop.permute.xlu0 %1164
        %1166 = vrot.lane.b32.xlu0 %v999, 112
        %v1167 = vpop.permute.xlu0 %1166
        %v1232 = vmax.f32 %v565, %v1041
        %v1233 = vmax.f32 %v569, %v1043
        %v1234 = vmax.f32 %v877, %v1045
        %v1235 = vmax.f32 %v879, %v1047
        %v1236 = vmax.f32 %v567, %v1049
        %v1237 = vmax.f32 %v571, %v1051
        %v1238 = vmax.f32 %v885, %v1053
        %v1239 = vmax.f32 %v887, %v1055
        %v1240 = vmax.f32 %v608, %v1057
        %v1241 = vmax.f32 %v612, %v1059
        %v1242 = vmax.f32 %v893, %v1061
        %v1243 = vmax.f32 %v895, %v1063
        %v1244 = vmax.f32 %v610, %v1065
        %v1245 = vmax.f32 %v614, %v1067
        %v1246 = vmax.f32 %v901, %v1069
        %v1247 = vmax.f32 %v903, %v1071
        %v1248 = vmax.f32 %v651, %v1073
        %v1249 = vmax.f32 %v655, %v1075
        %v1250 = vmax.f32 %v909, %v1077
        %v1251 = vmax.f32 %v911, %v1079
        %v1252 = vmax.f32 %v653, %v1081
        %v1253 = vmax.f32 %v657, %v1083
        %v1254 = vmax.f32 %v917, %v1085
        %v1255 = vmax.f32 %v919, %v1087
        %v1256 = vmax.f32 %v694, %v1089
        %v1257 = vmax.f32 %v698, %v1091
        %v1258 = vmax.f32 %v925, %v1093
        %v1259 = vmax.f32 %v927, %v1095
        %v1260 = vmax.f32 %v696, %v1097
        %v1261 = vmax.f32 %v700, %v1099
        %v1262 = vmax.f32 %v933, %v1101
        %v1263 = vmax.f32 %v935, %v1103
        %v1264 = vmax.f32 %v737, %v1105
        %v1265 = vmax.f32 %v741, %v1107
        %v1266 = vmax.f32 %v941, %v1109
        %v1267 = vmax.f32 %v943, %v1111
        %v1268 = vmax.f32 %v739, %v1113
        %v1269 = vmax.f32 %v743, %v1115
        %v1270 = vmax.f32 %v949, %v1117
        %v1271 = vmax.f32 %v951, %v1119
        %v1272 = vmax.f32 %v780, %v1121
        %v1273 = vmax.f32 %v784, %v1123
        %v1274 = vmax.f32 %v957, %v1125
        %v1275 = vmax.f32 %v959, %v1127
        %v1276 = vmax.f32 %v782, %v1129
        %v1277 = vmax.f32 %v786, %v1131
        %v1278 = vmax.f32 %v965, %v1133
        %v1279 = vmax.f32 %v967, %v1135
        %v1280 = vmax.f32 %v823, %v1137
        %v1281 = vmax.f32 %v827, %v1139
        %v1282 = vmax.f32 %v973, %v1141
        %v1283 = vmax.f32 %v975, %v1143
        %v1284 = vmax.f32 %v825, %v1145
        %v1285 = vmax.f32 %v829, %v1147
        %v1286 = vmax.f32 %v981, %v1149
        %v1287 = vmax.f32 %v983, %v1151
        %v1288 = vmax.f32 %v866, %v1153
        %v1289 = vmax.f32 %v870, %v1155
        %v1290 = vmax.f32 %v989, %v1157
        %v1291 = vmax.f32 %v991, %v1159
        %v1292 = vmax.f32 %v868, %v1161
        %v1293 = vmax.f32 %v872, %v1163
        %v1294 = vmax.f32 %v997, %v1165
        %v1295 = vmax.f32 %v999, %v1167
        %1360 = vrot.lane.b32.xlu0 %v1232, 96
        %v1361 = vpop.permute.xlu0 %1360
        %1362 = vrot.lane.b32.xlu0 %v1233, 96
        %v1363 = vpop.permute.xlu0 %1362
        %1364 = vrot.lane.b32.xlu0 %v1234, 96
        %v1365 = vpop.permute.xlu0 %1364
        %1366 = vrot.lane.b32.xlu0 %v1235, 96
        %v1367 = vpop.permute.xlu0 %1366
        %1368 = vrot.lane.b32.xlu0 %v1236, 96
        %v1369 = vpop.permute.xlu0 %1368
        %1370 = vrot.lane.b32.xlu0 %v1237, 96
        %v1371 = vpop.permute.xlu0 %1370
        %1372 = vrot.lane.b32.xlu0 %v1238, 96
        %v1373 = vpop.permute.xlu0 %1372
        %1374 = vrot.lane.b32.xlu0 %v1239, 96
        %v1375 = vpop.permute.xlu0 %1374
        %1376 = vrot.lane.b32.xlu0 %v1240, 96
        %v1377 = vpop.permute.xlu0 %1376
        %1378 = vrot.lane.b32.xlu0 %v1241, 96
        %v1379 = vpop.permute.xlu0 %1378
        %1380 = vrot.lane.b32.xlu0 %v1242, 96
        %v1381 = vpop.permute.xlu0 %1380
        %1382 = vrot.lane.b32.xlu0 %v1243, 96
        %v1383 = vpop.permute.xlu0 %1382
        %1384 = vrot.lane.b32.xlu0 %v1244, 96
        %v1385 = vpop.permute.xlu0 %1384
        %1386 = vrot.lane.b32.xlu0 %v1245, 96
        %v1387 = vpop.permute.xlu0 %1386
        %1388 = vrot.lane.b32.xlu0 %v1246, 96
        %v1389 = vpop.permute.xlu0 %1388
        %1390 = vrot.lane.b32.xlu0 %v1247, 96
        %v1391 = vpop.permute.xlu0 %1390
        %1392 = vrot.lane.b32.xlu0 %v1248, 96
        %v1393 = vpop.permute.xlu0 %1392
        %1394 = vrot.lane.b32.xlu0 %v1249, 96
        %v1395 = vpop.permute.xlu0 %1394
        %1396 = vrot.lane.b32.xlu0 %v1250, 96
        %v1397 = vpop.permute.xlu0 %1396
        %1398 = vrot.lane.b32.xlu0 %v1251, 96
        %v1399 = vpop.permute.xlu0 %1398
        %1400 = vrot.lane.b32.xlu0 %v1252, 96
        %v1401 = vpop.permute.xlu0 %1400
        %1402 = vrot.lane.b32.xlu0 %v1253, 96
        %v1403 = vpop.permute.xlu0 %1402
        %1404 = vrot.lane.b32.xlu0 %v1254, 96
        %v1405 = vpop.permute.xlu0 %1404
        %1406 = vrot.lane.b32.xlu0 %v1255, 96
        %v1407 = vpop.permute.xlu0 %1406
        %1408 = vrot.lane.b32.xlu0 %v1256, 96
        %v1409 = vpop.permute.xlu0 %1408
        %1410 = vrot.lane.b32.xlu0 %v1257, 96
        %v1411 = vpop.permute.xlu0 %1410
        %1412 = vrot.lane.b32.xlu0 %v1258, 96
        %v1413 = vpop.permute.xlu0 %1412
        %1414 = vrot.lane.b32.xlu0 %v1259, 96
        %v1415 = vpop.permute.xlu0 %1414
        %1416 = vrot.lane.b32.xlu0 %v1260, 96
        %v1417 = vpop.permute.xlu0 %1416
        %1418 = vrot.lane.b32.xlu0 %v1261, 96
        %v1419 = vpop.permute.xlu0 %1418
        %1420 = vrot.lane.b32.xlu0 %v1262, 96
        %v1421 = vpop.permute.xlu0 %1420
        %1422 = vrot.lane.b32.xlu0 %v1263, 96
        %v1423 = vpop.permute.xlu0 %1422
        %1424 = vrot.lane.b32.xlu0 %v1264, 96
        %v1425 = vpop.permute.xlu0 %1424
        %1426 = vrot.lane.b32.xlu0 %v1265, 96
        %v1427 = vpop.permute.xlu0 %1426
        %1428 = vrot.lane.b32.xlu0 %v1266, 96
        %v1429 = vpop.permute.xlu0 %1428
        %1430 = vrot.lane.b32.xlu0 %v1267, 96
        %v1431 = vpop.permute.xlu0 %1430
        %1432 = vrot.lane.b32.xlu0 %v1268, 96
        %v1433 = vpop.permute.xlu0 %1432
        %1434 = vrot.lane.b32.xlu0 %v1269, 96
        %v1435 = vpop.permute.xlu0 %1434
        %1436 = vrot.lane.b32.xlu0 %v1270, 96
        %v1437 = vpop.permute.xlu0 %1436
        %1438 = vrot.lane.b32.xlu0 %v1271, 96
        %v1439 = vpop.permute.xlu0 %1438
        %1440 = vrot.lane.b32.xlu0 %v1272, 96
        %v1441 = vpop.permute.xlu0 %1440
        %1442 = vrot.lane.b32.xlu0 %v1273, 96
        %v1443 = vpop.permute.xlu0 %1442
        %1444 = vrot.lane.b32.xlu0 %v1274, 96
        %v1445 = vpop.permute.xlu0 %1444
        %1446 = vrot.lane.b32.xlu0 %v1275, 96
        %v1447 = vpop.permute.xlu0 %1446
        %1448 = vrot.lane.b32.xlu0 %v1276, 96
        %v1449 = vpop.permute.xlu0 %1448
        %1450 = vrot.lane.b32.xlu0 %v1277, 96
        %v1451 = vpop.permute.xlu0 %1450
        %1452 = vrot.lane.b32.xlu0 %v1278, 96
        %v1453 = vpop.permute.xlu0 %1452
        %1454 = vrot.lane.b32.xlu0 %v1279, 96
        %v1455 = vpop.permute.xlu0 %1454
        %1456 = vrot.lane.b32.xlu0 %v1280, 96
        %v1457 = vpop.permute.xlu0 %1456
        %1458 = vrot.lane.b32.xlu0 %v1281, 96
        %v1459 = vpop.permute.xlu0 %1458
        %1460 = vrot.lane.b32.xlu0 %v1282, 96
        %v1461 = vpop.permute.xlu0 %1460
        %1462 = vrot.lane.b32.xlu0 %v1283, 96
        %v1463 = vpop.permute.xlu0 %1462
        %1464 = vrot.lane.b32.xlu0 %v1284, 96
        %v1465 = vpop.permute.xlu0 %1464
        %1466 = vrot.lane.b32.xlu0 %v1285, 96
        %v1467 = vpop.permute.xlu0 %1466
        %1468 = vrot.lane.b32.xlu0 %v1286, 96
        %v1469 = vpop.permute.xlu0 %1468
        %1470 = vrot.lane.b32.xlu0 %v1287, 96
        %v1471 = vpop.permute.xlu0 %1470
        %1472 = vrot.lane.b32.xlu0 %v1288, 96
        %v1473 = vpop.permute.xlu0 %1472
        %1474 = vrot.lane.b32.xlu0 %v1289, 96
        %v1475 = vpop.permute.xlu0 %1474
        %1476 = vrot.lane.b32.xlu0 %v1290, 96
        %v1477 = vpop.permute.xlu0 %1476
        %1478 = vrot.lane.b32.xlu0 %v1291, 96
        %v1479 = vpop.permute.xlu0 %1478
        %1480 = vrot.lane.b32.xlu0 %v1292, 96
        %v1481 = vpop.permute.xlu0 %1480
        %1482 = vrot.lane.b32.xlu0 %v1293, 96
        %v1483 = vpop.permute.xlu0 %1482
        %1484 = vrot.lane.b32.xlu0 %v1294, 96
        %v1485 = vpop.permute.xlu0 %1484
        %1486 = vrot.lane.b32.xlu0 %v1295, 96
        %v1487 = vpop.permute.xlu0 %1486
        %v1552 = vmax.f32 %v1232, %v1361
        %v1553 = vmax.f32 %v1233, %v1363
        %v1554 = vmax.f32 %v1234, %v1365
        %v1555 = vmax.f32 %v1235, %v1367
        %v1556 = vmax.f32 %v1236, %v1369
        %v1557 = vmax.f32 %v1237, %v1371
        %v1558 = vmax.f32 %v1238, %v1373
        %v1559 = vmax.f32 %v1239, %v1375
        %v1560 = vmax.f32 %v1240, %v1377
        %v1561 = vmax.f32 %v1241, %v1379
        %v1562 = vmax.f32 %v1242, %v1381
        %v1563 = vmax.f32 %v1243, %v1383
        %v1564 = vmax.f32 %v1244, %v1385
        %v1565 = vmax.f32 %v1245, %v1387
        %v1566 = vmax.f32 %v1246, %v1389
        %v1567 = vmax.f32 %v1247, %v1391
        %v1568 = vmax.f32 %v1248, %v1393
        %v1569 = vmax.f32 %v1249, %v1395
        %v1570 = vmax.f32 %v1250, %v1397
        %v1571 = vmax.f32 %v1251, %v1399
        %v1572 = vmax.f32 %v1252, %v1401
        %v1573 = vmax.f32 %v1253, %v1403
        %v1574 = vmax.f32 %v1254, %v1405
        %v1575 = vmax.f32 %v1255, %v1407
        %v1576 = vmax.f32 %v1256, %v1409
        %v1577 = vmax.f32 %v1257, %v1411
        %v1578 = vmax.f32 %v1258, %v1413
        %v1579 = vmax.f32 %v1259, %v1415
        %v1580 = vmax.f32 %v1260, %v1417
        %v1581 = vmax.f32 %v1261, %v1419
        %v1582 = vmax.f32 %v1262, %v1421
        %v1583 = vmax.f32 %v1263, %v1423
        %v1584 = vmax.f32 %v1264, %v1425
        %v1585 = vmax.f32 %v1265, %v1427
        %v1586 = vmax.f32 %v1266, %v1429
        %v1587 = vmax.f32 %v1267, %v1431
        %v1588 = vmax.f32 %v1268, %v1433
        %v1589 = vmax.f32 %v1269, %v1435
        %v1590 = vmax.f32 %v1270, %v1437
        %v1591 = vmax.f32 %v1271, %v1439
        %v1592 = vmax.f32 %v1272, %v1441
        %v1593 = vmax.f32 %v1273, %v1443
        %v1594 = vmax.f32 %v1274, %v1445
        %v1595 = vmax.f32 %v1275, %v1447
        %v1596 = vmax.f32 %v1276, %v1449
        %v1597 = vmax.f32 %v1277, %v1451
        %v1598 = vmax.f32 %v1278, %v1453
        %v1599 = vmax.f32 %v1279, %v1455
        %v1600 = vmax.f32 %v1280, %v1457
        %v1601 = vmax.f32 %v1281, %v1459
        %v1602 = vmax.f32 %v1282, %v1461
        %v1603 = vmax.f32 %v1283, %v1463
        %v1604 = vmax.f32 %v1284, %v1465
        %v1605 = vmax.f32 %v1285, %v1467
        %v1606 = vmax.f32 %v1286, %v1469
        %v1607 = vmax.f32 %v1287, %v1471
        %v1608 = vmax.f32 %v1288, %v1473
        %v1609 = vmax.f32 %v1289, %v1475
        %v1610 = vmax.f32 %v1290, %v1477
        %v1611 = vmax.f32 %v1291, %v1479
        %v1612 = vmax.f32 %v1292, %v1481
        %v1613 = vmax.f32 %v1293, %v1483
        %v1614 = vmax.f32 %v1294, %v1485
        %v1615 = vmax.f32 %v1295, %v1487
        %v1616 = vld [vmem:[%s3] sm:$0xff]
        %1618 = vset.pattern.permute.xlu0 0
        %1619 = vperm.xlu0 %1618, %v1616
        %v1620 = vpop.permute.xlu0 %1619
        %v1621 = vrot.slane %v1620, 4
        %v1623 = vadd.f32 %v1552, %v1621
        %v1624 = vadd.f32 %v1553, %v1621
        %v1625 = vadd.f32 %v1554, %v1621
        %v1626 = vadd.f32 %v1555, %v1621
        %v1627 = vadd.f32 %v1556, %v1621
        %v1628 = vadd.f32 %v1557, %v1621
        %v1629 = vadd.f32 %v1558, %v1621
        %v1630 = vadd.f32 %v1559, %v1621
        %v1631 = vadd.f32 %v1560, %v1621
        %v1632 = vadd.f32 %v1561, %v1621
        %v1633 = vadd.f32 %v1562, %v1621
        %v1634 = vadd.f32 %v1563, %v1621
        %v1635 = vadd.f32 %v1564, %v1621
        %v1636 = vadd.f32 %v1565, %v1621
        %v1637 = vadd.f32 %v1566, %v1621
        %v1638 = vadd.f32 %v1567, %v1621
        %v1639 = vadd.f32 %v1568, %v1621
        %v1640 = vadd.f32 %v1569, %v1621
        %v1641 = vadd.f32 %v1570, %v1621
        %v1642 = vadd.f32 %v1571, %v1621
        %v1643 = vadd.f32 %v1572, %v1621
        %v1644 = vadd.f32 %v1573, %v1621
        %v1645 = vadd.f32 %v1574, %v1621
        %v1646 = vadd.f32 %v1575, %v1621
        %v1647 = vadd.f32 %v1576, %v1621
        %v1648 = vadd.f32 %v1577, %v1621
        %v1649 = vadd.f32 %v1578, %v1621
        %v1650 = vadd.f32 %v1579, %v1621
        %v1651 = vadd.f32 %v1580, %v1621
        %v1652 = vadd.f32 %v1581, %v1621
        %v1653 = vadd.f32 %v1582, %v1621
        %v1654 = vadd.f32 %v1583, %v1621
        %v1655 = vadd.f32 %v1584, %v1621
        %v1656 = vadd.f32 %v1585, %v1621
        %v1657 = vadd.f32 %v1586, %v1621
        %v1658 = vadd.f32 %v1587, %v1621
        %v1659 = vadd.f32 %v1588, %v1621
        %v1660 = vadd.f32 %v1589, %v1621
        %v1661 = vadd.f32 %v1590, %v1621
        %v1662 = vadd.f32 %v1591, %v1621
        %v1663 = vadd.f32 %v1592, %v1621
        %v1664 = vadd.f32 %v1593, %v1621
        %v1665 = vadd.f32 %v1594, %v1621
        %v1666 = vadd.f32 %v1595, %v1621
        %v1667 = vadd.f32 %v1596, %v1621
        %v1668 = vadd.f32 %v1597, %v1621
        %v1669 = vadd.f32 %v1598, %v1621
        %v1670 = vadd.f32 %v1599, %v1621
        %v1671 = vadd.f32 %v1600, %v1621
        %v1672 = vadd.f32 %v1601, %v1621
        %v1673 = vadd.f32 %v1602, %v1621
        %v1674 = vadd.f32 %v1603, %v1621
        %v1675 = vadd.f32 %v1604, %v1621
        %v1676 = vadd.f32 %v1605, %v1621
        %v1677 = vadd.f32 %v1606, %v1621
        %v1678 = vadd.f32 %v1607, %v1621
        %v1679 = vadd.f32 %v1608, %v1621
        %v1680 = vadd.f32 %v1609, %v1621
        %v1681 = vadd.f32 %v1610, %v1621
        %v1682 = vadd.f32 %v1611, %v1621
        %v1683 = vadd.f32 %v1612, %v1621
        %v1684 = vadd.f32 %v1613, %v1621
        %v1685 = vadd.f32 %v1614, %v1621
        %v1686 = vadd.f32 %v1615, %v1621
        %v1687 = vpack.c.bf16 %v1623, %v1623
        %v1688 = vpack.c.bf16 %v1625, %v1625
        %v1689 = vpack.c.bf16 %v1627, %v1627
        %v1690 = vpack.c.bf16 %v1629, %v1629
        %v1691 = vpack.c.bf16 %v1631, %v1631
        %v1692 = vpack.c.bf16 %v1633, %v1633
        %v1693 = vpack.c.bf16 %v1635, %v1635
        %v1694 = vpack.c.bf16 %v1637, %v1637
        %v1695 = vpack.c.bf16 %v1639, %v1639
        %v1696 = vpack.c.bf16 %v1641, %v1641
        %v1697 = vpack.c.bf16 %v1643, %v1643
        %v1698 = vpack.c.bf16 %v1645, %v1645
        %v1699 = vpack.c.bf16 %v1647, %v1647
        %v1700 = vpack.c.bf16 %v1649, %v1649
        %v1701 = vpack.c.bf16 %v1651, %v1651
        %v1702 = vpack.c.bf16 %v1653, %v1653
        %v1703 = vpack.c.bf16 %v1655, %v1655
        %v1704 = vpack.c.bf16 %v1657, %v1657
        %v1705 = vpack.c.bf16 %v1659, %v1659
        %v1706 = vpack.c.bf16 %v1661, %v1661
        %v1707 = vpack.c.bf16 %v1663, %v1663
        %v1708 = vpack.c.bf16 %v1665, %v1665
        %v1709 = vpack.c.bf16 %v1667, %v1667
        %v1710 = vpack.c.bf16 %v1669, %v1669
        %v1711 = vpack.c.bf16 %v1671, %v1671
        %v1712 = vpack.c.bf16 %v1673, %v1673
        %v1713 = vpack.c.bf16 %v1675, %v1675
        %v1714 = vpack.c.bf16 %v1677, %v1677
        %v1715 = vpack.c.bf16 %v1679, %v1679
        %v1716 = vpack.c.bf16 %v1681, %v1681
        %v1717 = vpack.c.bf16 %v1683, %v1683
        %v1718 = vpack.c.bf16 %v1685, %v1685
        %v1719 = vpack.c.bf16 %v1624, %v1624
        %v1720 = vpack.c.bf16 %v1626, %v1626
        %v1721 = vpack.c.bf16 %v1628, %v1628
        %v1722 = vpack.c.bf16 %v1630, %v1630
        %v1723 = vpack.c.bf16 %v1632, %v1632
        %v1724 = vpack.c.bf16 %v1634, %v1634
        %v1725 = vpack.c.bf16 %v1636, %v1636
        %v1726 = vpack.c.bf16 %v1638, %v1638
        %v1727 = vpack.c.bf16 %v1640, %v1640
        %v1728 = vpack.c.bf16 %v1642, %v1642
        %v1729 = vpack.c.bf16 %v1644, %v1644
        %v1730 = vpack.c.bf16 %v1646, %v1646
        %v1731 = vpack.c.bf16 %v1648, %v1648
        %v1732 = vpack.c.bf16 %v1650, %v1650
        %v1733 = vpack.c.bf16 %v1652, %v1652
        %v1734 = vpack.c.bf16 %v1654, %v1654
        %v1735 = vpack.c.bf16 %v1656, %v1656
        %v1736 = vpack.c.bf16 %v1658, %v1658
        %v1737 = vpack.c.bf16 %v1660, %v1660
        %v1738 = vpack.c.bf16 %v1662, %v1662
        %v1739 = vpack.c.bf16 %v1664, %v1664
        %v1740 = vpack.c.bf16 %v1666, %v1666
        %v1741 = vpack.c.bf16 %v1668, %v1668
        %v1742 = vpack.c.bf16 %v1670, %v1670
        %v1743 = vpack.c.bf16 %v1672, %v1672
        %v1744 = vpack.c.bf16 %v1674, %v1674
        %v1745 = vpack.c.bf16 %v1676, %v1676
        %v1746 = vpack.c.bf16 %v1678, %v1678
        %v1747 = vpack.c.bf16 %v1680, %v1680
        %v1748 = vpack.c.bf16 %v1682, %v1682
        %v1749 = vpack.c.bf16 %v1684, %v1684
        %v1750 = vpack.c.bf16 %v1686, %v1686
        %v1751 = vpack.c.bf16 %v1008, %v1008
        %v1752 = vpack.c.bf16 %v1009, %v1009
        %v1753 = vpack.c.bf16 %v1010, %v1010
        %v1754 = vpack.c.bf16 %v1011, %v1011
        %v1755 = vpack.c.bf16 %v1012, %v1012
        %v1756 = vpack.c.bf16 %v1013, %v1013
        %v1757 = vpack.c.bf16 %v1014, %v1014
        %v1758 = vpack.c.bf16 %v1015, %v1015
        %v1759 = vpack.c.bf16 %v1016, %v1016
        %v1760 = vpack.c.bf16 %v1017, %v1017
        %v1761 = vpack.c.bf16 %v1018, %v1018
        %v1762 = vpack.c.bf16 %v1019, %v1019
        %v1763 = vpack.c.bf16 %v1020, %v1020
        %v1764 = vpack.c.bf16 %v1021, %v1021
        %v1765 = vpack.c.bf16 %v1022, %v1022
        %v1766 = vpack.c.bf16 %v1023, %v1023
        %v1767 = vpack.c.bf16 %v1024, %v1024
        %v1768 = vpack.c.bf16 %v1025, %v1025
        %v1769 = vpack.c.bf16 %v1026, %v1026
        %v1770 = vpack.c.bf16 %v1027, %v1027
        %v1771 = vpack.c.bf16 %v1028, %v1028
        %v1772 = vpack.c.bf16 %v1029, %v1029
        %v1773 = vpack.c.bf16 %v1030, %v1030
        %v1774 = vpack.c.bf16 %v1031, %v1031
        %v1775 = vpack.c.bf16 %v1032, %v1032
        %v1776 = vpack.c.bf16 %v1033, %v1033
        %v1777 = vpack.c.bf16 %v1034, %v1034
        %v1778 = vpack.c.bf16 %v1035, %v1035
        %v1779 = vpack.c.bf16 %v1036, %v1036
        %v1780 = vpack.c.bf16 %v1037, %v1037
        %v1781 = vpack.c.bf16 %v1038, %v1038
        %v1782 = vpack.c.bf16 %v1039, %v1039
        %v1784 = vrot.slane %v1687, 2
        %1786 = vxpose.xlu0.c.b16.start [1/8] %v1784, 128
        %1787 = vxpose.xlu0.c.b16.cont [2/8] 0, 128
        %1788 = vxpose.xlu0.c.b16.cont [3/8] 0, 128
        %1789 = vxpose.xlu0.c.b16.cont [4/8] 0, 128
        %1790 = vxpose.xlu0.c.b16.cont [5/8] 0, 128
        %1791 = vxpose.xlu0.c.b16.cont [6/8] 0, 128
        %1792 = vxpose.xlu0.c.b16.cont [7/8] 0, 128
        %1793 = vxpose.xlu0.c.b16.end [8/8] 0, 128
        %v1794 = vpop.trf.xlu0
        %v1795 = vpop.trf.xlu0
        %v1796 = vpop.trf.xlu0
        %v1797 = vpop.trf.xlu0
        %v1798 = vpop.trf.xlu0
        %v1799 = vpop.trf.xlu0
        %v1800 = vpop.trf.xlu0
        %v1801 = vpop.trf.xlu0
        %vm1802 = vcmask 31744
        %v1804 = vsel %vm1802, %v1794, 0
        %vm1806 = vcmask 1041408
        %v1808 = vsel %vm1806, %v1751, 0
        %1810 = vmatprep.subr.bf16.mxu0 0
        %1811 = vmatpush1.bf16.msra.mxu0 0
        %1812 = vmatprep.subr.bf16.mxu0 0
        %1813 = vmatpush1.bf16.msra.mxu0 0
        %1814 = vmatprep.subr.bf16.mxu0 0
        %1815 = vmatpush1.bf16.msra.mxu0 0
        %1816 = vmatprep.subr.bf16.mxu0 0
        %1817 = vmatpush1.bf16.msra.mxu0 0
        %1818 = vmatprep.subr.bf16.mxu0 0
        %1819 = vmatpush1.bf16.msra.mxu0 0
        %1820 = vmatprep.subr.bf16.mxu0 0
        %1821 = vmatpush1.bf16.msra.mxu0 0
        %1822 = vmatprep.subr.bf16.mxu0 0
        %1823 = vmatpush1.bf16.msra.mxu0 0
        %1824 = vmatprep.subr.bf16.mxu0 0
        %1825 = vmatpush1.bf16.msra.mxu0 %v1808
        %1826 = vmatprep.subr.bf16.mxu0 0
        %1827 = vmatpush2.bf16.msra.mxu0 0
        %1828 = vmatprep.subr.bf16.mxu0 0
        %1829 = vmatpush2.bf16.msra.mxu0 0
        %1830 = vmatprep.subr.bf16.mxu0 0
        %1831 = vmatpush2.bf16.msra.mxu0 0
        %1832 = vmatprep.subr.bf16.mxu0 0
        %1833 = vmatpush2.bf16.msra.mxu0 0
        %1834 = vmatprep.subr.bf16.mxu0 0
        %1835 = vmatpush2.bf16.msra.mxu0 0
        %1836 = vmatprep.subr.bf16.mxu0 0
        %1837 = vmatpush2.bf16.msra.mxu0 0
        %1838 = vmatprep.subr.bf16.mxu0 0
        %1839 = vmatpush2.bf16.msra.mxu0 0
        %1840 = vmatprep.subr.bf16.mxu0 0
        %1841 = vmatpush2.bf16.msra.mxu0 0
        %1842 = vmatprep.mubr.bf16.mxu0 0
        %1843 = vmatmul.mubr.bf16.gmra.mxu0 %v1804
        %v1844 = vpop.f32.mrf.mxu0
        %v1845 = vadd.f32 0.0, %v1844
        %v1846 = vpop.f32.mrf.mxu0
        %v1847 = vpop.f32.mrf.mxu0
        %v1848 = vadd.f32 0.0, %v1847
        %v1849 = vpop.f32.mrf.mxu0
        %1850 = vdwg.mxu0
        %v1852 = vrot.slane %v1688, 2
        %1854 = vxpose.xlu0.c.b16.start [1/8] %v1852, 128
        %1855 = vxpose.xlu0.c.b16.cont [2/8] 0, 128
        %1856 = vxpose.xlu0.c.b16.cont [3/8] 0, 128
        %1857 = vxpose.xlu0.c.b16.cont [4/8] 0, 128
        %1858 = vxpose.xlu0.c.b16.cont [5/8] 0, 128
        %1859 = vxpose.xlu0.c.b16.cont [6/8] 0, 128
        %1860 = vxpose.xlu0.c.b16.cont [7/8] 0, 128
        %1861 = vxpose.xlu0.c.b16.end [8/8] 0, 128
        %v1862 = vpop.trf.xlu0
        %v1863 = vpop.trf.xlu0
        %v1864 = vpop.trf.xlu0
        %v1865 = vpop.trf.xlu0
        %v1866 = vpop.trf.xlu0
        %v1867 = vpop.trf.xlu0
        %v1868 = vpop.trf.xlu0
        %v1869 = vpop.trf.xlu0
        %v1871 = vsel %vm1802, %v1862, 0
        %v1874 = vsel %vm1806, %v1752, 0
        %1876 = vmatprep.subr.bf16.mxu0 0
        %1877 = vmatpush1.bf16.msra.mxu0 0
        %1878 = vmatprep.subr.bf16.mxu0 0
        %1879 = vmatpush1.bf16.msra.mxu0 0
        %1880 = vmatprep.subr.bf16.mxu0 0
        %1881 = vmatpush1.bf16.msra.mxu0 0
        %1882 = vmatprep.subr.bf16.mxu0 0
        %1883 = vmatpush1.bf16.msra.mxu0 0
        %1884 = vmatprep.subr.bf16.mxu0 0
        %1885 = vmatpush1.bf16.msra.mxu0 0
        %1886 = vmatprep.subr.bf16.mxu0 0
        %1887 = vmatpush1.bf16.msra.mxu0 0
        %1888 = vmatprep.subr.bf16.mxu0 0
        %1889 = vmatpush1.bf16.msra.mxu0 0
        %1890 = vmatprep.subr.bf16.mxu0 0
        %1891 = vmatpush1.bf16.msra.mxu0 %v1874
        %1892 = vmatprep.subr.bf16.mxu0 0
        %1893 = vmatpush2.bf16.msra.mxu0 0
        %1894 = vmatprep.subr.bf16.mxu0 0
        %1895 = vmatpush2.bf16.msra.mxu0 0
        %1896 = vmatprep.subr.bf16.mxu0 0
        %1897 = vmatpush2.bf16.msra.mxu0 0
        %1898 = vmatprep.subr.bf16.mxu0 0
        %1899 = vmatpush2.bf16.msra.mxu0 0
        %1900 = vmatprep.subr.bf16.mxu0 0
        %1901 = vmatpush2.bf16.msra.mxu0 0
        %1902 = vmatprep.subr.bf16.mxu0 0
        %1903 = vmatpush2.bf16.msra.mxu0 0
        %1904 = vmatprep.subr.bf16.mxu0 0
        %1905 = vmatpush2.bf16.msra.mxu0 0
        %1906 = vmatprep.subr.bf16.mxu0 0
        %1907 = vmatpush2.bf16.msra.mxu0 0
        %1908 = vmatprep.mubr.bf16.mxu0 0
        %1909 = vmatmul.mubr.bf16.gmra.mxu0 %v1871
        %v1910 = vpop.f32.mrf.mxu0
        %v1911 = vadd.f32 0.0, %v1910
        %v1912 = vpop.f32.mrf.mxu0
        %v1913 = vpop.f32.mrf.mxu0
        %v1914 = vadd.f32 0.0, %v1913
        %v1915 = vpop.f32.mrf.mxu0
        %1916 = vdwg.mxu0
        %v1918 = vrot.slane %v1689, 2
        %1920 = vxpose.xlu0.c.b16.start [1/8] %v1918, 128
        %1921 = vxpose.xlu0.c.b16.cont [2/8] 0, 128
        %1922 = vxpose.xlu0.c.b16.cont [3/8] 0, 128
        %1923 = vxpose.xlu0.c.b16.cont [4/8] 0, 128
        %1924 = vxpose.xlu0.c.b16.cont [5/8] 0, 128
        %1925 = vxpose.xlu0.c.b16.cont [6/8] 0, 128
        %1926 = vxpose.xlu0.c.b16.cont [7/8] 0, 128
        %1927 = vxpose.xlu0.c.b16.end [8/8] 0, 128
        %v1928 = vpop.trf.xlu0
        %v1929 = vpop.trf.xlu0
        %v1930 = vpop.trf.xlu0
        %v1931 = vpop.trf.xlu0
        %v1932 = vpop.trf.xlu0
        %v1933 = vpop.trf.xlu0
        %v1934 = vpop.trf.xlu0
        %v1935 = vpop.trf.xlu0
        %v1937 = vsel %vm1802, %v1928, 0
        %v1940 = vsel %vm1806, %v1753, 0
        %1942 = vmatprep.subr.bf16.mxu0 0
        %1943 = vmatpush1.bf16.msra.mxu0 0
        %1944 = vmatprep.subr.bf16.mxu0 0
        %1945 = vmatpush1.bf16.msra.mxu0 0
        %1946 = vmatprep.subr.bf16.mxu0 0
        %1947 = vmatpush1.bf16.msra.mxu0 0
        %1948 = vmatprep.subr.bf16.mxu0 0
        %1949 = vmatpush1.bf16.msra.mxu0 0
        %1950 = vmatprep.subr.bf16.mxu0 0
        %1951 = vmatpush1.bf16.msra.mxu0 0
        %1952 = vmatprep.subr.bf16.mxu0 0
        %1953 = vmatpush1.bf16.msra.mxu0 0
        %1954 = vmatprep.subr.bf16.mxu0 0
        %1955 = vmatpush1.bf16.msra.mxu0 0
        %1956 = vmatprep.subr.bf16.mxu0 0
        %1957 = vmatpush1.bf16.msra.mxu0 %v1940
        %1958 = vmatprep.subr.bf16.mxu0 0
        %1959 = vmatpush2.bf16.msra.mxu0 0
        %1960 = vmatprep.subr.bf16.mxu0 0
        %1961 = vmatpush2.bf16.msra.mxu0 0
        %1962 = vmatprep.subr.bf16.mxu0 0
        %1963 = vmatpush2.bf16.msra.mxu0 0
        %1964 = vmatprep.subr.bf16.mxu0 0
        %1965 = vmatpush2.bf16.msra.mxu0 0
        %1966 = vmatprep.subr.bf16.mxu0 0
        %1967 = vmatpush2.bf16.msra.mxu0 0
        %1968 = vmatprep.subr.bf16.mxu0 0
        %1969 = vmatpush2.bf16.msra.mxu0 0
        %1970 = vmatprep.subr.bf16.mxu0 0
        %1971 = vmatpush2.bf16.msra.mxu0 0
        %1972 = vmatprep.subr.bf16.mxu0 0
        %1973 = vmatpush2.bf16.msra.mxu0 0
        %1974 = vmatprep.mubr.bf16.mxu0 0
        %1975 = vmatmul.mubr.bf16.gmra.mxu0 %v1937
        %v1976 = vpop.f32.mrf.mxu0
        %v1977 = vadd.f32 0.0, %v1976
        %v1978 = vpop.f32.mrf.mxu0
        %v1979 = vpop.f32.mrf.mxu0
        %v1980 = vadd.f32 0.0, %v1979
        %v1981 = vpop.f32.mrf.mxu0
        %1982 = vdwg.mxu0
        %v1984 = vrot.slane %v1690, 2
        %1986 = vxpose.xlu0.c.b16.start [1/8] %v1984, 128
        %1987 = vxpose.xlu0.c.b16.cont [2/8] 0, 128
        %1988 = vxpose.xlu0.c.b16.cont [3/8] 0, 128
        %1989 = vxpose.xlu0.c.b16.cont [4/8] 0, 128
        %1990 = vxpose.xlu0.c.b16.cont [5/8] 0, 128
        %1991 = vxpose.xlu0.c.b16.cont [6/8] 0, 128
        %1992 = vxpose.xlu0.c.b16.cont [7/8] 0, 128
        %1993 = vxpose.xlu0.c.b16.end [8/8] 0, 128
        %v1994 = vpop.trf.xlu0
        %v1995 = vpop.trf.xlu0
        %v1996 = vpop.trf.xlu0
        %v1997 = vpop.trf.xlu0
        %v1998 = vpop.trf.xlu0
        %v1999 = vpop.trf.xlu0
        %v2000 = vpop.trf.xlu0
        %v2001 = vpop.trf.xlu0
        %v2003 = vsel %vm1802, %v1994, 0
        %v2006 = vsel %vm1806, %v1754, 0
        %2008 = vmatprep.subr.bf16.mxu0 0
        %2009 = vmatpush1.bf16.msra.mxu0 0
        %2010 = vmatprep.subr.bf16.mxu0 0
        %2011 = vmatpush1.bf16.msra.mxu0 0
        %2012 = vmatprep.subr.bf16.mxu0 0
        %2013 = vmatpush1.bf16.msra.mxu0 0
        %2014 = vmatprep.subr.bf16.mxu0 0
        %2015 = vmatpush1.bf16.msra.mxu0 0
        %2016 = vmatprep.subr.bf16.mxu0 0
        %2017 = vmatpush1.bf16.msra.mxu0 0
        %2018 = vmatprep.subr.bf16.mxu0 0
        %2019 = vmatpush1.bf16.msra.mxu0 0
        %2020 = vmatprep.subr.bf16.mxu0 0
        %2021 = vmatpush1.bf16.msra.mxu0 0
        %2022 = vmatprep.subr.bf16.mxu0 0
        %2023 = vmatpush1.bf16.msra.mxu0 %v2006
        %2024 = vmatprep.subr.bf16.mxu0 0
        %2025 = vmatpush2.bf16.msra.mxu0 0
        %2026 = vmatprep.subr.bf16.mxu0 0
        %2027 = vmatpush2.bf16.msra.mxu0 0
        %2028 = vmatprep.subr.bf16.mxu0 0
        %2029 = vmatpush2.bf16.msra.mxu0 0
        %2030 = vmatprep.subr.bf16.mxu0 0
        %2031 = vmatpush2.bf16.msra.mxu0 0
        %2032 = vmatprep.subr.bf16.mxu0 0
        %2033 = vmatpush2.bf16.msra.mxu0 0
        %2034 = vmatprep.subr.bf16.mxu0 0
        %2035 = vmatpush2.bf16.msra.mxu0 0
        %2036 = vmatprep.subr.bf16.mxu0 0
        %2037 = vmatpush2.bf16.msra.mxu0 0
        %2038 = vmatprep.subr.bf16.mxu0 0
        %2039 = vmatpush2.bf16.msra.mxu0 0
        %2040 = vmatprep.mubr.bf16.mxu0 0
        %2041 = vmatmul.mubr.bf16.gmra.mxu0 %v2003
        %v2042 = vpop.f32.mrf.mxu0
        %v2043 = vadd.f32 0.0, %v2042
        %v2044 = vpop.f32.mrf.mxu0
        %v2045 = vpop.f32.mrf.mxu0
        %v2046 = vadd.f32 0.0, %v2045
        %v2047 = vpop.f32.mrf.mxu0
        %2048 = vdwg.mxu0
        %v2050 = vrot.slane %v1691, 2
        %2052 = vxpose.xlu0.c.b16.start [1/8] %v2050, 128
        %2053 = vxpose.xlu0.c.b16.cont [2/8] 0, 128
        %2054 = vxpose.xlu0.c.b16.cont [3/8] 0, 128
        %2055 = vxpose.xlu0.c.b16.cont [4/8] 0, 128
        %2056 = vxpose.xlu0.c.b16.cont [5/8] 0, 128
        %2057 = vxpose.xlu0.c.b16.cont [6/8] 0, 128
        %2058 = vxpose.xlu0.c.b16.cont [7/8] 0, 128
        %2059 = vxpose.xlu0.c.b16.end [8/8] 0, 128
        %v2060 = vpop.trf.xlu0
        %v2061 = vpop.trf.xlu0
        %v2062 = vpop.trf.xlu0
        %v2063 = vpop.trf.xlu0
        %v2064 = vpop.trf.xlu0
        %v2065 = vpop.trf.xlu0
        %v2066 = vpop.trf.xlu0
        %v2067 = vpop.trf.xlu0
        %v2069 = vsel %vm1802, %v2060, 0
        %v2072 = vsel %vm1806, %v1755, 0
        %2074 = vmatprep.subr.bf16.mxu0 0
        %2075 = vmatpush1.bf16.msra.mxu0 0
        %2076 = vmatprep.subr.bf16.mxu0 0
        %2077 = vmatpush1.bf16.msra.mxu0 0
        %2078 = vmatprep.subr.bf16.mxu0 0
        %2079 = vmatpush1.bf16.msra.mxu0 0
        %2080 = vmatprep.subr.bf16.mxu0 0
        %2081 = vmatpush1.bf16.msra.mxu0 0
        %2082 = vmatprep.subr.bf16.mxu0 0
        %2083 = vmatpush1.bf16.msra.mxu0 0
        %2084 = vmatprep.subr.bf16.mxu0 0
        %2085 = vmatpush1.bf16.msra.mxu0 0
        %2086 = vmatprep.subr.bf16.mxu0 0
        %2087 = vmatpush1.bf16.msra.mxu0 0
        %2088 = vmatprep.subr.bf16.mxu0 0
        %2089 = vmatpush1.bf16.msra.mxu0 %v2072
        %2090 = vmatprep.subr.bf16.mxu0 0
        %2091 = vmatpush2.bf16.msra.mxu0 0
        %2092 = vmatprep.subr.bf16.mxu0 0
        %2093 = vmatpush2.bf16.msra.mxu0 0
        %2094 = vmatprep.subr.bf16.mxu0 0
        %2095 = vmatpush2.bf16.msra.mxu0 0
        %2096 = vmatprep.subr.bf16.mxu0 0
        %2097 = vmatpush2.bf16.msra.mxu0 0
        %2098 = vmatprep.subr.bf16.mxu0 0
        %2099 = vmatpush2.bf16.msra.mxu0 0
        %2100 = vmatprep.subr.bf16.mxu0 0
        %2101 = vmatpush2.bf16.msra.mxu0 0
        %2102 = vmatprep.subr.bf16.mxu0 0
        %2103 = vmatpush2.bf16.msra.mxu0 0
        %2104 = vmatprep.subr.bf16.mxu0 0
        %2105 = vmatpush2.bf16.msra.mxu0 0
        %2106 = vmatprep.mubr.bf16.mxu0 0
        %2107 = vmatmul.mubr.bf16.gmra.mxu0 %v2069
        %v2108 = vpop.f32.mrf.mxu0
        %v2109 = vadd.f32 0.0, %v2108
        %v2110 = vpop.f32.mrf.mxu0
        %v2111 = vpop.f32.mrf.mxu0
        %v2112 = vadd.f32 0.0, %v2111
        %v2113 = vpop.f32.mrf.mxu0
        %2114 = vdwg.mxu0
        %v2116 = vrot.slane %v1692, 2
        %2118 = vxpose.xlu0.c.b16.start [1/8] %v2116, 128
        %2119 = vxpose.xlu0.c.b16.cont [2/8] 0, 128
        %2120 = vxpose.xlu0.c.b16.cont [3/8] 0, 128
        %2121 = vxpose.xlu0.c.b16.cont [4/8] 0, 128
        %2122 = vxpose.xlu0.c.b16.cont [5/8] 0, 128
        %2123 = vxpose.xlu0.c.b16.cont [6/8] 0, 128
        %2124 = vxpose.xlu0.c.b16.cont [7/8] 0, 128
        %2125 = vxpose.xlu0.c.b16.end [8/8] 0, 128
        %v2126 = vpop.trf.xlu0
        %v2127 = vpop.trf.xlu0
        %v2128 = vpop.trf.xlu0
        %v2129 = vpop.trf.xlu0
        %v2130 = vpop.trf.xlu0
        %v2131 = vpop.trf.xlu0
        %v2132 = vpop.trf.xlu0
        %v2133 = vpop.trf.xlu0
        %v2135 = vsel %vm1802, %v2126, 0
        %v2138 = vsel %vm1806, %v1756, 0
        %2140 = vmatprep.subr.bf16.mxu0 0
        %2141 = vmatpush1.bf16.msra.mxu0 0
        %2142 = vmatprep.subr.bf16.mxu0 0
        %2143 = vmatpush1.bf16.msra.mxu0 0
        %2144 = vmatprep.subr.bf16.mxu0 0
        %2145 = vmatpush1.bf16.msra.mxu0 0
        %2146 = vmatprep.subr.bf16.mxu0 0
        %2147 = vmatpush1.bf16.msra.mxu0 0
        %2148 = vmatprep.subr.bf16.mxu0 0
        %2149 = vmatpush1.bf16.msra.mxu0 0
        %2150 = vmatprep.subr.bf16.mxu0 0
        %2151 = vmatpush1.bf16.msra.mxu0 0
        %2152 = vmatprep.subr.bf16.mxu0 0
        %2153 = vmatpush1.bf16.msra.mxu0 0
        %2154 = vmatprep.subr.bf16.mxu0 0
        %2155 = vmatpush1.bf16.msra.mxu0 %v2138
        %2156 = vmatprep.subr.bf16.mxu0 0
        %2157 = vmatpush2.bf16.msra.mxu0 0
        %2158 = vmatprep.subr.bf16.mxu0 0
        %2159 = vmatpush2.bf16.msra.mxu0 0
        %2160 = vmatprep.subr.bf16.mxu0 0
        %2161 = vmatpush2.bf16.msra.mxu0 0
        %2162 = vmatprep.subr.bf16.mxu0 0
        %2163 = vmatpush2.bf16.msra.mxu0 0
        %2164 = vmatprep.subr.bf16.mxu0 0
        %2165 = vmatpush2.bf16.msra.mxu0 0
        %2166 = vmatprep.subr.bf16.mxu0 0
        %2167 = vmatpush2.bf16.msra.mxu0 0
        %2168 = vmatprep.subr.bf16.mxu0 0
        %2169 = vmatpush2.bf16.msra.mxu0 0
        %2170 = vmatprep.subr.bf16.mxu0 0
        %2171 = vmatpush2.bf16.msra.mxu0 0
        %2172 = vmatprep.mubr.bf16.mxu0 0
        %2173 = vmatmul.mubr.bf16.gmra.mxu0 %v2135
        %v2174 = vpop.f32.mrf.mxu0
        %v2175 = vadd.f32 0.0, %v2174
        %v2176 = vpop.f32.mrf.mxu0
        %v2177 = vpop.f32.mrf.mxu0
        %v2178 = vadd.f32 0.0, %v2177
        %v2179 = vpop.f32.mrf.mxu0
        %2180 = vdwg.mxu0
        %v2182 = vrot.slane %v1693, 2
        %2184 = vxpose.xlu0.c.b16.start [1/8] %v2182, 128
        %2185 = vxpose.xlu0.c.b16.cont [2/8] 0, 128
        %2186 = vxpose.xlu0.c.b16.cont [3/8] 0, 128
        %2187 = vxpose.xlu0.c.b16.cont [4/8] 0, 128
        %2188 = vxpose.xlu0.c.b16.cont [5/8] 0, 128
        %2189 = vxpose.xlu0.c.b16.cont [6/8] 0, 128
        %2190 = vxpose.xlu0.c.b16.cont [7/8] 0, 128
        %2191 = vxpose.xlu0.c.b16.end [8/8] 0, 128
        %v2192 = vpop.trf.xlu0
        %v2193 = vpop.trf.xlu0
        %v2194 = vpop.trf.xlu0
        %v2195 = vpop.trf.xlu0
        %v2196 = vpop.trf.xlu0
        %v2197 = vpop.trf.xlu0
        %v2198 = vpop.trf.xlu0
        %v2199 = vpop.trf.xlu0
        %v2201 = vsel %vm1802, %v2192, 0
        %v2204 = vsel %vm1806, %v1757, 0
        %2206 = vmatprep.subr.bf16.mxu0 0
        %2207 = vmatpush1.bf16.msra.mxu0 0
        %2208 = vmatprep.subr.bf16.mxu0 0
        %2209 = vmatpush1.bf16.msra.mxu0 0
        %2210 = vmatprep.subr.bf16.mxu0 0
        %2211 = vmatpush1.bf16.msra.mxu0 0
        %2212 = vmatprep.subr.bf16.mxu0 0
        %2213 = vmatpush1.bf16.msra.mxu0 0
        %2214 = vmatprep.subr.bf16.mxu0 0
        %2215 = vmatpush1.bf16.msra.mxu0 0
        %2216 = vmatprep.subr.bf16.mxu0 0
        %2217 = vmatpush1.bf16.msra.mxu0 0
        %2218 = vmatprep.subr.bf16.mxu0 0
        %2219 = vmatpush1.bf16.msra.mxu0 0
        %2220 = vmatprep.subr.bf16.mxu0 0
        %2221 = vmatpush1.bf16.msra.mxu0 %v2204
        %2222 = vmatprep.subr.bf16.mxu0 0
        %2223 = vmatpush2.bf16.msra.mxu0 0
        %2224 = vmatprep.subr.bf16.mxu0 0
        %2225 = vmatpush2.bf16.msra.mxu0 0
        %2226 = vmatprep.subr.bf16.mxu0 0
        %2227 = vmatpush2.bf16.msra.mxu0 0
        %2228 = vmatprep.subr.bf16.mxu0 0
        %2229 = vmatpush2.bf16.msra.mxu0 0
        %2230 = vmatprep.subr.bf16.mxu0 0
        %2231 = vmatpush2.bf16.msra.mxu0 0
        %2232 = vmatprep.subr.bf16.mxu0 0
        %2233 = vmatpush2.bf16.msra.mxu0 0
        %2234 = vmatprep.subr.bf16.mxu0 0
        %2235 = vmatpush2.bf16.msra.mxu0 0
        %2236 = vmatprep.subr.bf16.mxu0 0
        %2237 = vmatpush2.bf16.msra.mxu0 0
        %2238 = vmatprep.mubr.bf16.mxu0 0
        %2239 = vmatmul.mubr.bf16.gmra.mxu0 %v2201
        %v2240 = vpop.f32.mrf.mxu0
        %v2241 = vadd.f32 0.0, %v2240
        %v2242 = vpop.f32.mrf.mxu0
        %v2243 = vpop.f32.mrf.mxu0
        %v2244 = vadd.f32 0.0, %v2243
        %v2245 = vpop.f32.mrf.mxu0
        %2246 = vdwg.mxu0
        %v2248 = vrot.slane %v1694, 2
        %2250 = vxpose.xlu0.c.b16.start [1/8] %v2248, 128
        %2251 = vxpose.xlu0.c.b16.cont [2/8] 0, 128
        %2252 = vxpose.xlu0.c.b16.cont [3/8] 0, 128
        %2253 = vxpose.xlu0.c.b16.cont [4/8] 0, 128
        %2254 = vxpose.xlu0.c.b16.cont [5/8] 0, 128
        %2255 = vxpose.xlu0.c.b16.cont [6/8] 0, 128
        %2256 = vxpose.xlu0.c.b16.cont [7/8] 0, 128
        %2257 = vxpose.xlu0.c.b16.end [8/8] 0, 128
        %v2258 = vpop.trf.xlu0
        %v2259 = vpop.trf.xlu0
        %v2260 = vpop.trf.xlu0
        %v2261 = vpop.trf.xlu0
        %v2262 = vpop.trf.xlu0
        %v2263 = vpop.trf.xlu0
        %v2264 = vpop.trf.xlu0
        %v2265 = vpop.trf.xlu0
        %v2267 = vsel %vm1802, %v2258, 0
        %v2270 = vsel %vm1806, %v1758, 0
        %2272 = vmatprep.subr.bf16.mxu0 0
        %2273 = vmatpush1.bf16.msra.mxu0 0
        %2274 = vmatprep.subr.bf16.mxu0 0
        %2275 = vmatpush1.bf16.msra.mxu0 0
        %2276 = vmatprep.subr.bf16.mxu0 0
        %2277 = vmatpush1.bf16.msra.mxu0 0
        %2278 = vmatprep.subr.bf16.mxu0 0
        %2279 = vmatpush1.bf16.msra.mxu0 0
        %2280 = vmatprep.subr.bf16.mxu0 0
        %2281 = vmatpush1.bf16.msra.mxu0 0
        %2282 = vmatprep.subr.bf16.mxu0 0
        %2283 = vmatpush1.bf16.msra.mxu0 0
        %2284 = vmatprep.subr.bf16.mxu0 0
        %2285 = vmatpush1.bf16.msra.mxu0 0
        %2286 = vmatprep.subr.bf16.mxu0 0
        %2287 = vmatpush1.bf16.msra.mxu0 %v2270
        %2288 = vmatprep.subr.bf16.mxu0 0
        %2289 = vmatpush2.bf16.msra.mxu0 0
        %2290 = vmatprep.subr.bf16.mxu0 0
        %2291 = vmatpush2.bf16.msra.mxu0 0
        %2292 = vmatprep.subr.bf16.mxu0 0
        %2293 = vmatpush2.bf16.msra.mxu0 0
        %2294 = vmatprep.subr.bf16.mxu0 0
        %2295 = vmatpush2.bf16.msra.mxu0 0
        %2296 = vmatprep.subr.bf16.mxu0 0
        %2297 = vmatpush2.bf16.msra.mxu0 0
        %2298 = vmatprep.subr.bf16.mxu0 0
        %2299 = vmatpush2.bf16.msra.mxu0 0
        %2300 = vmatprep.subr.bf16.mxu0 0
        %2301 = vmatpush2.bf16.msra.mxu0 0
        %2302 = vmatprep.subr.bf16.mxu0 0
        %2303 = vmatpush2.bf16.msra.mxu0 0
        %2304 = vmatprep.mubr.bf16.mxu0 0
        %2305 = vmatmul.mubr.bf16.gmra.mxu0 %v2267
        %v2306 = vpop.f32.mrf.mxu0
        %v2307 = vadd.f32 0.0, %v2306
        %v2308 = vpop.f32.mrf.mxu0
        %v2309 = vpop.f32.mrf.mxu0
        %v2310 = vadd.f32 0.0, %v2309
        %v2311 = vpop.f32.mrf.mxu0
        %2312 = vdwg.mxu0
        %v2314 = vrot.slane %v1695, 2
        %2316 = vxpose.xlu0.c.b16.start [1/8] %v2314, 128
        %2317 = vxpose.xlu0.c.b16.cont [2/8] 0, 128
        %2318 = vxpose.xlu0.c.b16.cont [3/8] 0, 128
        %2319 = vxpose.xlu0.c.b16.cont [4/8] 0, 128
        %2320 = vxpose.xlu0.c.b16.cont [5/8] 0, 128
        %2321 = vxpose.xlu0.c.b16.cont [6/8] 0, 128
        %2322 = vxpose.xlu0.c.b16.cont [7/8] 0, 128
        %2323 = vxpose.xlu0.c.b16.end [8/8] 0, 128
        %v2324 = vpop.trf.xlu0
        %v2325 = vpop.trf.xlu0
        %v2326 = vpop.trf.xlu0
        %v2327 = vpop.trf.xlu0
        %v2328 = vpop.trf.xlu0
        %v2329 = vpop.trf.xlu0
        %v2330 = vpop.trf.xlu0
        %v2331 = vpop.trf.xlu0
        %v2333 = vsel %vm1802, %v2324, 0
        %v2336 = vsel %vm1806, %v1759, 0
        %2338 = vmatprep.subr.bf16.mxu0 0
        %2339 = vmatpush1.bf16.msra.mxu0 0
        %2340 = vmatprep.subr.bf16.mxu0 0
        %2341 = vmatpush1.bf16.msra.mxu0 0
        %2342 = vmatprep.subr.bf16.mxu0 0
        %2343 = vmatpush1.bf16.msra.mxu0 0
        %2344 = vmatprep.subr.bf16.mxu0 0
        %2345 = vmatpush1.bf16.msra.mxu0 0
        %2346 = vmatprep.subr.bf16.mxu0 0
        %2347 = vmatpush1.bf16.msra.mxu0 0
        %2348 = vmatprep.subr.bf16.mxu0 0
        %2349 = vmatpush1.bf16.msra.mxu0 0
        %2350 = vmatprep.subr.bf16.mxu0 0
        %2351 = vmatpush1.bf16.msra.mxu0 0
        %2352 = vmatprep.subr.bf16.mxu0 0
        %2353 = vmatpush1.bf16.msra.mxu0 %v2336
        %2354 = vmatprep.subr.bf16.mxu0 0
        %2355 = vmatpush2.bf16.msra.mxu0 0
        %2356 = vmatprep.subr.bf16.mxu0 0
        %2357 = vmatpush2.bf16.msra.mxu0 0
        %2358 = vmatprep.subr.bf16.mxu0 0
        %2359 = vmatpush2.bf16.msra.mxu0 0
        %2360 = vmatprep.subr.bf16.mxu0 0
        %2361 = vmatpush2.bf16.msra.mxu0 0
        %2362 = vmatprep.subr.bf16.mxu0 0
        %2363 = vmatpush2.bf16.msra.mxu0 0
        %2364 = vmatprep.subr.bf16.mxu0 0
        %2365 = vmatpush2.bf16.msra.mxu0 0
        %2366 = vmatprep.subr.bf16.mxu0 0
        %2367 = vmatpush2.bf16.msra.mxu0 0
        %2368 = vmatprep.subr.bf16.mxu0 0
        %2369 = vmatpush2.bf16.msra.mxu0 0
        %2370 = vmatprep.mubr.bf16.mxu0 0
        %2371 = vmatmul.mubr.bf16.gmra.mxu0 %v2333
        %v2372 = vpop.f32.mrf.mxu0
        %v2373 = vadd.f32 0.0, %v2372
        %v2374 = vpop.f32.mrf.mxu0
        %v2375 = vpop.f32.mrf.mxu0
        %v2376 = vadd.f32 0.0, %v2375
        %v2377 = vpop.f32.mrf.mxu0
        %2378 = vdwg.mxu0
        %v2380 = vrot.slane %v1696, 2
        %2382 = vxpose.xlu0.c.b16.start [1/8] %v2380, 128
        %2383 = vxpose.xlu0.c.b16.cont [2/8] 0, 128
        %2384 = vxpose.xlu0.c.b16.cont [3/8] 0, 128
        %2385 = vxpose.xlu0.c.b16.cont [4/8] 0, 128
        %2386 = vxpose.xlu0.c.b16.cont [5/8] 0, 128
        %2387 = vxpose.xlu0.c.b16.cont [6/8] 0, 128
        %2388 = vxpose.xlu0.c.b16.cont [7/8] 0, 128
        %2389 = vxpose.xlu0.c.b16.end [8/8] 0, 128
        %v2390 = vpop.trf.xlu0
        %v2391 = vpop.trf.xlu0
        %v2392 = vpop.trf.xlu0
        %v2393 = vpop.trf.xlu0
        %v2394 = vpop.trf.xlu0
        %v2395 = vpop.trf.xlu0
        %v2396 = vpop.trf.xlu0
        %v2397 = vpop.trf.xlu0
        %v2399 = vsel %vm1802, %v2390, 0
        %v2402 = vsel %vm1806, %v1760, 0
        %2404 = vmatprep.subr.bf16.mxu0 0
        %2405 = vmatpush1.bf16.msra.mxu0 0
        %2406 = vmatprep.subr.bf16.mxu0 0
        %2407 = vmatpush1.bf16.msra.mxu0 0
        %2408 = vmatprep.subr.bf16.mxu0 0
        %2409 = vmatpush1.bf16.msra.mxu0 0
        %2410 = vmatprep.subr.bf16.mxu0 0
        %2411 = vmatpush1.bf16.msra.mxu0 0
        %2412 = vmatprep.subr.bf16.mxu0 0
        %2413 = vmatpush1.bf16.msra.mxu0 0
        %2414 = vmatprep.subr.bf16.mxu0 0
        %2415 = vmatpush1.bf16.msra.mxu0 0
        %2416 = vmatprep.subr.bf16.mxu0 0
        %2417 = vmatpush1.bf16.msra.mxu0 0
        %2418 = vmatprep.subr.bf16.mxu0 0
        %2419 = vmatpush1.bf16.msra.mxu0 %v2402
        %2420 = vmatprep.subr.bf16.mxu0 0
        %2421 = vmatpush2.bf16.msra.mxu0 0
        %2422 = vmatprep.subr.bf16.mxu0 0
        %2423 = vmatpush2.bf16.msra.mxu0 0
        %2424 = vmatprep.subr.bf16.mxu0 0
        %2425 = vmatpush2.bf16.msra.mxu0 0
        %2426 = vmatprep.subr.bf16.mxu0 0
        %2427 = vmatpush2.bf16.msra.mxu0 0
        %2428 = vmatprep.subr.bf16.mxu0 0
        %2429 = vmatpush2.bf16.msra.mxu0 0
        %2430 = vmatprep.subr.bf16.mxu0 0
        %2431 = vmatpush2.bf16.msra.mxu0 0
        %2432 = vmatprep.subr.bf16.mxu0 0
        %2433 = vmatpush2.bf16.msra.mxu0 0
        %2434 = vmatprep.subr.bf16.mxu0 0
        %2435 = vmatpush2.bf16.msra.mxu0 0
        %2436 = vmatprep.mubr.bf16.mxu0 0
        %2437 = vmatmul.mubr.bf16.gmra.mxu0 %v2399
        %v2438 = vpop.f32.mrf.mxu0
        %v2439 = vadd.f32 0.0, %v2438
        %v2440 = vpop.f32.mrf.mxu0
        %v2441 = vpop.f32.mrf.mxu0
        %v2442 = vadd.f32 0.0, %v2441
        %v2443 = vpop.f32.mrf.mxu0
        %2444 = vdwg.mxu0
        %v2446 = vrot.slane %v1697, 2
        %2448 = vxpose.xlu0.c.b16.start [1/8] %v2446, 128
        %2449 = vxpose.xlu0.c.b16.cont [2/8] 0, 128
        %2450 = vxpose.xlu0.c.b16.cont [3/8] 0, 128
        %2451 = vxpose.xlu0.c.b16.cont [4/8] 0, 128
        %2452 = vxpose.xlu0.c.b16.cont [5/8] 0, 128
        %2453 = vxpose.xlu0.c.b16.cont [6/8] 0, 128
        %2454 = vxpose.xlu0.c.b16.cont [7/8] 0, 128
        %2455 = vxpose.xlu0.c.b16.end [8/8] 0, 128
        %v2456 = vpop.trf.xlu0
        %v2457 = vpop.trf.xlu0
        %v2458 = vpop.trf.xlu0
        %v2459 = vpop.trf.xlu0
        %v2460 = vpop.trf.xlu0
        %v2461 = vpop.trf.xlu0
        %v2462 = vpop.trf.xlu0
        %v2463 = vpop.trf.xlu0
        %v2465 = vsel %vm1802, %v2456, 0
        %v2468 = vsel %vm1806, %v1761, 0
        %2470 = vmatprep.subr.bf16.mxu0 0
        %2471 = vmatpush1.bf16.msra.mxu0 0
        %2472 = vmatprep.subr.bf16.mxu0 0
        %2473 = vmatpush1.bf16.msra.mxu0 0
        %2474 = vmatprep.subr.bf16.mxu0 0
        %2475 = vmatpush1.bf16.msra.mxu0 0
        %2476 = vmatprep.subr.bf16.mxu0 0
        %2477 = vmatpush1.bf16.msra.mxu0 0
        %2478 = vmatprep.subr.bf16.mxu0 0
        %2479 = vmatpush1.bf16.msra.mxu0 0
        %2480 = vmatprep.subr.bf16.mxu0 0
        %2481 = vmatpush1.bf16.msra.mxu0 0
        %2482 = vmatprep.subr.bf16.mxu0 0
        %2483 = vmatpush1.bf16.msra.mxu0 0
        %2484 = vmatprep.subr.bf16.mxu0 0
        %2485 = vmatpush1.bf16.msra.mxu0 %v2468
        %2486 = vmatprep.subr.bf16.mxu0 0
        %2487 = vmatpush2.bf16.msra.mxu0 0
        %2488 = vmatprep.subr.bf16.mxu0 0
        %2489 = vmatpush2.bf16.msra.mxu0 0
        %2490 = vmatprep.subr.bf16.mxu0 0
        %2491 = vmatpush2.bf16.msra.mxu0 0
        %2492 = vmatprep.subr.bf16.mxu0 0
        %2493 = vmatpush2.bf16.msra.mxu0 0
        %2494 = vmatprep.subr.bf16.mxu0 0
        %2495 = vmatpush2.bf16.msra.mxu0 0
        %2496 = vmatprep.subr.bf16.mxu0 0
        %2497 = vmatpush2.bf16.msra.mxu0 0
        %2498 = vmatprep.subr.bf16.mxu0 0
        %2499 = vmatpush2.bf16.msra.mxu0 0
        %2500 = vmatprep.subr.bf16.mxu0 0
        %2501 = vmatpush2.bf16.msra.mxu0 0
        %2502 = vmatprep.mubr.bf16.mxu0 0
        %2503 = vmatmul.mubr.bf16.gmra.mxu0 %v2465
        %v2504 = vpop.f32.mrf.mxu0
        %v2505 = vadd.f32 0.0, %v2504
        %v2506 = vpop.f32.mrf.mxu0
        %v2507 = vpop.f32.mrf.mxu0
        %v2508 = vadd.f32 0.0, %v2507
        %v2509 = vpop.f32.mrf.mxu0
        %2510 = vdwg.mxu0
        %v2512 = vrot.slane %v1698, 2
        %2514 = vxpose.xlu0.c.b16.start [1/8] %v2512, 128
        %2515 = vxpose.xlu0.c.b16.cont [2/8] 0, 128
        %2516 = vxpose.xlu0.c.b16.cont [3/8] 0, 128
        %2517 = vxpose.xlu0.c.b16.cont [4/8] 0, 128
        %2518 = vxpose.xlu0.c.b16.cont [5/8] 0, 128
        %2519 = vxpose.xlu0.c.b16.cont [6/8] 0, 128
        %2520 = vxpose.xlu0.c.b16.cont [7/8] 0, 128
        %2521 = vxpose.xlu0.c.b16.end [8/8] 0, 128
        %v2522 = vpop.trf.xlu0
        %v2523 = vpop.trf.xlu0
        %v2524 = vpop.trf.xlu0
        %v2525 = vpop.trf.xlu0
        %v2526 = vpop.trf.xlu0
        %v2527 = vpop.trf.xlu0
        %v2528 = vpop.trf.xlu0
        %v2529 = vpop.trf.xlu0
        %v2531 = vsel %vm1802, %v2522, 0
        %v2534 = vsel %vm1806, %v1762, 0
        %2536 = vmatprep.subr.bf16.mxu0 0
        %2537 = vmatpush1.bf16.msra.mxu0 0
        %2538 = vmatprep.subr.bf16.mxu0 0
        %2539 = vmatpush1.bf16.msra.mxu0 0
        %2540 = vmatprep.subr.bf16.mxu0 0
        %2541 = vmatpush1.bf16.msra.mxu0 0
        %2542 = vmatprep.subr.bf16.mxu0 0
        %2543 = vmatpush1.bf16.msra.mxu0 0
        %2544 = vmatprep.subr.bf16.mxu0 0
        %2545 = vmatpush1.bf16.msra.mxu0 0
        %2546 = vmatprep.subr.bf16.mxu0 0
        %2547 = vmatpush1.bf16.msra.mxu0 0
        %2548 = vmatprep.subr.bf16.mxu0 0
        %2549 = vmatpush1.bf16.msra.mxu0 0
        %2550 = vmatprep.subr.bf16.mxu0 0
        %2551 = vmatpush1.bf16.msra.mxu0 %v2534
        %2552 = vmatprep.subr.bf16.mxu0 0
        %2553 = vmatpush2.bf16.msra.mxu0 0
        %2554 = vmatprep.subr.bf16.mxu0 0
        %2555 = vmatpush2.bf16.msra.mxu0 0
        %2556 = vmatprep.subr.bf16.mxu0 0
        %2557 = vmatpush2.bf16.msra.mxu0 0
        %2558 = vmatprep.subr.bf16.mxu0 0
        %2559 = vmatpush2.bf16.msra.mxu0 0
        %2560 = vmatprep.subr.bf16.mxu0 0
        %2561 = vmatpush2.bf16.msra.mxu0 0
        %2562 = vmatprep.subr.bf16.mxu0 0
        %2563 = vmatpush2.bf16.msra.mxu0 0
        %2564 = vmatprep.subr.bf16.mxu0 0
        %2565 = vmatpush2.bf16.msra.mxu0 0
        %2566 = vmatprep.subr.bf16.mxu0 0
        %2567 = vmatpush2.bf16.msra.mxu0 0
        %2568 = vmatprep.mubr.bf16.mxu0 0
        %2569 = vmatmul.mubr.bf16.gmra.mxu0 %v2531
        %v2570 = vpop.f32.mrf.mxu0
        %v2571 = vadd.f32 0.0, %v2570
        %v2572 = vpop.f32.mrf.mxu0
        %v2573 = vpop.f32.mrf.mxu0
        %v2574 = vadd.f32 0.0, %v2573
        %v2575 = vpop.f32.mrf.mxu0
        %2576 = vdwg.mxu0
        %v2578 = vrot.slane %v1699, 2
        %2580 = vxpose.xlu0.c.b16.start [1/8] %v2578, 128
        %2581 = vxpose.xlu0.c.b16.cont [2/8] 0, 128
        %2582 = vxpose.xlu0.c.b16.cont [3/8] 0, 128
        %2583 = vxpose.xlu0.c.b16.cont [4/8] 0, 128
        %2584 = vxpose.xlu0.c.b16.cont [5/8] 0, 128
        %2585 = vxpose.xlu0.c.b16.cont [6/8] 0, 128
        %2586 = vxpose.xlu0.c.b16.cont [7/8] 0, 128
        %2587 = vxpose.xlu0.c.b16.end [8/8] 0, 128
        %v2588 = vpop.trf.xlu0
        %v2589 = vpop.trf.xlu0
        %v2590 = vpop.trf.xlu0
        %v2591 = vpop.trf.xlu0
        %v2592 = vpop.trf.xlu0
        %v2593 = vpop.trf.xlu0
        %v2594 = vpop.trf.xlu0
        %v2595 = vpop.trf.xlu0
        %v2597 = vsel %vm1802, %v2588, 0
        %v2600 = vsel %vm1806, %v1763, 0
        %2602 = vmatprep.subr.bf16.mxu0 0
        %2603 = vmatpush1.bf16.msra.mxu0 0
        %2604 = vmatprep.subr.bf16.mxu0 0
        %2605 = vmatpush1.bf16.msra.mxu0 0
        %2606 = vmatprep.subr.bf16.mxu0 0
        %2607 = vmatpush1.bf16.msra.mxu0 0
        %2608 = vmatprep.subr.bf16.mxu0 0
        %2609 = vmatpush1.bf16.msra.mxu0 0
        %2610 = vmatprep.subr.bf16.mxu0 0
        %2611 = vmatpush1.bf16.msra.mxu0 0
        %2612 = vmatprep.subr.bf16.mxu0 0
        %2613 = vmatpush1.bf16.msra.mxu0 0
        %2614 = vmatprep.subr.bf16.mxu0 0
        %2615 = vmatpush1.bf16.msra.mxu0 0
        %2616 = vmatprep.subr.bf16.mxu0 0
        %2617 = vmatpush1.bf16.msra.mxu0 %v2600
        %2618 = vmatprep.subr.bf16.mxu0 0
        %2619 = vmatpush2.bf16.msra.mxu0 0
        %2620 = vmatprep.subr.bf16.mxu0 0
        %2621 = vmatpush2.bf16.msra.mxu0 0
        %2622 = vmatprep.subr.bf16.mxu0 0
        %2623 = vmatpush2.bf16.msra.mxu0 0
        %2624 = vmatprep.subr.bf16.mxu0 0
        %2625 = vmatpush2.bf16.msra.mxu0 0
        %2626 = vmatprep.subr.bf16.mxu0 0
        %2627 = vmatpush2.bf16.msra.mxu0 0
        %2628 = vmatprep.subr.bf16.mxu0 0
        %2629 = vmatpush2.bf16.msra.mxu0 0
        %2630 = vmatprep.subr.bf16.mxu0 0
        %2631 = vmatpush2.bf16.msra.mxu0 0
        %2632 = vmatprep.subr.bf16.mxu0 0
        %2633 = vmatpush2.bf16.msra.mxu0 0
        %2634 = vmatprep.mubr.bf16.mxu0 0
        %2635 = vmatmul.mubr.bf16.gmra.mxu0 %v2597
        %v2636 = vpop.f32.mrf.mxu0
        %v2637 = vadd.f32 0.0, %v2636
        %v2638 = vpop.f32.mrf.mxu0
        %v2639 = vpop.f32.mrf.mxu0
        %v2640 = vadd.f32 0.0, %v2639
        %v2641 = vpop.f32.mrf.mxu0
        %2642 = vdwg.mxu0
        %v2644 = vrot.slane %v1700, 2
        %2646 = vxpose.xlu0.c.b16.start [1/8] %v2644, 128
        %2647 = vxpose.xlu0.c.b16.cont [2/8] 0, 128
        %2648 = vxpose.xlu0.c.b16.cont [3/8] 0, 128
        %2649 = vxpose.xlu0.c.b16.cont [4/8] 0, 128
        %2650 = vxpose.xlu0.c.b16.cont [5/8] 0, 128
        %2651 = vxpose.xlu0.c.b16.cont [6/8] 0, 128
        %2652 = vxpose.xlu0.c.b16.cont [7/8] 0, 128
        %2653 = vxpose.xlu0.c.b16.end [8/8] 0, 128
        %v2654 = vpop.trf.xlu0
        %v2655 = vpop.trf.xlu0
        %v2656 = vpop.trf.xlu0
        %v2657 = vpop.trf.xlu0
        %v2658 = vpop.trf.xlu0
        %v2659 = vpop.trf.xlu0
        %v2660 = vpop.trf.xlu0
        %v2661 = vpop.trf.xlu0
        %v2663 = vsel %vm1802, %v2654, 0
        %v2666 = vsel %vm1806, %v1764, 0
        %2668 = vmatprep.subr.bf16.mxu0 0
        %2669 = vmatpush1.bf16.msra.mxu0 0
        %2670 = vmatprep.subr.bf16.mxu0 0
        %2671 = vmatpush1.bf16.msra.mxu0 0
        %2672 = vmatprep.subr.bf16.mxu0 0
        %2673 = vmatpush1.bf16.msra.mxu0 0
        %2674 = vmatprep.subr.bf16.mxu0 0
        %2675 = vmatpush1.bf16.msra.mxu0 0
        %2676 = vmatprep.subr.bf16.mxu0 0
        %2677 = vmatpush1.bf16.msra.mxu0 0
        %2678 = vmatprep.subr.bf16.mxu0 0
        %2679 = vmatpush1.bf16.msra.mxu0 0
        %2680 = vmatprep.subr.bf16.mxu0 0
        %2681 = vmatpush1.bf16.msra.mxu0 0
        %2682 = vmatprep.subr.bf16.mxu0 0
        %2683 = vmatpush1.bf16.msra.mxu0 %v2666
        %2684 = vmatprep.subr.bf16.mxu0 0
        %2685 = vmatpush2.bf16.msra.mxu0 0
        %2686 = vmatprep.subr.bf16.mxu0 0
        %2687 = vmatpush2.bf16.msra.mxu0 0
        %2688 = vmatprep.subr.bf16.mxu0 0
        %2689 = vmatpush2.bf16.msra.mxu0 0
        %2690 = vmatprep.subr.bf16.mxu0 0
        %2691 = vmatpush2.bf16.msra.mxu0 0
        %2692 = vmatprep.subr.bf16.mxu0 0
        %2693 = vmatpush2.bf16.msra.mxu0 0
        %2694 = vmatprep.subr.bf16.mxu0 0
        %2695 = vmatpush2.bf16.msra.mxu0 0
        %2696 = vmatprep.subr.bf16.mxu0 0
        %2697 = vmatpush2.bf16.msra.mxu0 0
        %2698 = vmatprep.subr.bf16.mxu0 0
        %2699 = vmatpush2.bf16.msra.mxu0 0
        %2700 = vmatprep.mubr.bf16.mxu0 0
        %2701 = vmatmul.mubr.bf16.gmra.mxu0 %v2663
        %v2702 = vpop.f32.mrf.mxu0
        %v2703 = vadd.f32 0.0, %v2702
        %v2704 = vpop.f32.mrf.mxu0
        %v2705 = vpop.f32.mrf.mxu0
        %v2706 = vadd.f32 0.0, %v2705
        %v2707 = vpop.f32.mrf.mxu0
        %2708 = vdwg.mxu0
        %v2710 = vrot.slane %v1701, 2
        %2712 = vxpose.xlu0.c.b16.start [1/8] %v2710, 128
        %2713 = vxpose.xlu0.c.b16.cont [2/8] 0, 128
        %2714 = vxpose.xlu0.c.b16.cont [3/8] 0, 128
        %2715 = vxpose.xlu0.c.b16.cont [4/8] 0, 128
        %2716 = vxpose.xlu0.c.b16.cont [5/8] 0, 128
        %2717 = vxpose.xlu0.c.b16.cont [6/8] 0, 128
        %2718 = vxpose.xlu0.c.b16.cont [7/8] 0, 128
        %2719 = vxpose.xlu0.c.b16.end [8/8] 0, 128
        %v2720 = vpop.trf.xlu0
        %v2721 = vpop.trf.xlu0
        %v2722 = vpop.trf.xlu0
        %v2723 = vpop.trf.xlu0
        %v2724 = vpop.trf.xlu0
        %v2725 = vpop.trf.xlu0
        %v2726 = vpop.trf.xlu0
        %v2727 = vpop.trf.xlu0
        %v2729 = vsel %vm1802, %v2720, 0
        %v2732 = vsel %vm1806, %v1765, 0
        %2734 = vmatprep.subr.bf16.mxu0 0
        %2735 = vmatpush1.bf16.msra.mxu0 0
        %2736 = vmatprep.subr.bf16.mxu0 0
        %2737 = vmatpush1.bf16.msra.mxu0 0
        %2738 = vmatprep.subr.bf16.mxu0 0
        %2739 = vmatpush1.bf16.msra.mxu0 0
        %2740 = vmatprep.subr.bf16.mxu0 0
        %2741 = vmatpush1.bf16.msra.mxu0 0
        %2742 = vmatprep.subr.bf16.mxu0 0
        %2743 = vmatpush1.bf16.msra.mxu0 0
        %2744 = vmatprep.subr.bf16.mxu0 0
        %2745 = vmatpush1.bf16.msra.mxu0 0
        %2746 = vmatprep.subr.bf16.mxu0 0
        %2747 = vmatpush1.bf16.msra.mxu0 0
        %2748 = vmatprep.subr.bf16.mxu0 0
        %2749 = vmatpush1.bf16.msra.mxu0 %v2732
        %2750 = vmatprep.subr.bf16.mxu0 0
        %2751 = vmatpush2.bf16.msra.mxu0 0
        %2752 = vmatprep.subr.bf16.mxu0 0
        %2753 = vmatpush2.bf16.msra.mxu0 0
        %2754 = vmatprep.subr.bf16.mxu0 0
        %2755 = vmatpush2.bf16.msra.mxu0 0
        %2756 = vmatprep.subr.bf16.mxu0 0
        %2757 = vmatpush2.bf16.msra.mxu0 0
        %2758 = vmatprep.subr.bf16.mxu0 0
        %2759 = vmatpush2.bf16.msra.mxu0 0
        %2760 = vmatprep.subr.bf16.mxu0 0
        %2761 = vmatpush2.bf16.msra.mxu0 0
        %2762 = vmatprep.subr.bf16.mxu0 0
        %2763 = vmatpush2.bf16.msra.mxu0 0
        %2764 = vmatprep.subr.bf16.mxu0 0
        %2765 = vmatpush2.bf16.msra.mxu0 0
        %2766 = vmatprep.mubr.bf16.mxu0 0
        %2767 = vmatmul.mubr.bf16.gmra.mxu0 %v2729
        %v2768 = vpop.f32.mrf.mxu0
        %v2769 = vadd.f32 0.0, %v2768
        %v2770 = vpop.f32.mrf.mxu0
        %v2771 = vpop.f32.mrf.mxu0
        %v2772 = vadd.f32 0.0, %v2771
        %v2773 = vpop.f32.mrf.mxu0
        %2774 = vdwg.mxu0
        %v2776 = vrot.slane %v1702, 2
        %2778 = vxpose.xlu0.c.b16.start [1/8] %v2776, 128
        %2779 = vxpose.xlu0.c.b16.cont [2/8] 0, 128
        %2780 = vxpose.xlu0.c.b16.cont [3/8] 0, 128
        %2781 = vxpose.xlu0.c.b16.cont [4/8] 0, 128
        %2782 = vxpose.xlu0.c.b16.cont [5/8] 0, 128
        %2783 = vxpose.xlu0.c.b16.cont [6/8] 0, 128
        %2784 = vxpose.xlu0.c.b16.cont [7/8] 0, 128
        %2785 = vxpose.xlu0.c.b16.end [8/8] 0, 128
        %v2786 = vpop.trf.xlu0
        %v2787 = vpop.trf.xlu0
        %v2788 = vpop.trf.xlu0
        %v2789 = vpop.trf.xlu0
        %v2790 = vpop.trf.xlu0
        %v2791 = vpop.trf.xlu0
        %v2792 = vpop.trf.xlu0
        %v2793 = vpop.trf.xlu0
        %v2795 = vsel %vm1802, %v2786, 0
        %v2798 = vsel %vm1806, %v1766, 0
        %2800 = vmatprep.subr.bf16.mxu0 0
        %2801 = vmatpush1.bf16.msra.mxu0 0
        %2802 = vmatprep.subr.bf16.mxu0 0
        %2803 = vmatpush1.bf16.msra.mxu0 0
        %2804 = vmatprep.subr.bf16.mxu0 0
        %2805 = vmatpush1.bf16.msra.mxu0 0
        %2806 = vmatprep.subr.bf16.mxu0 0
        %2807 = vmatpush1.bf16.msra.mxu0 0
        %2808 = vmatprep.subr.bf16.mxu0 0
        %2809 = vmatpush1.bf16.msra.mxu0 0
        %2810 = vmatprep.subr.bf16.mxu0 0
        %2811 = vmatpush1.bf16.msra.mxu0 0
        %2812 = vmatprep.subr.bf16.mxu0 0
        %2813 = vmatpush1.bf16.msra.mxu0 0
        %2814 = vmatprep.subr.bf16.mxu0 0
        %2815 = vmatpush1.bf16.msra.mxu0 %v2798
        %2816 = vmatprep.subr.bf16.mxu0 0
        %2817 = vmatpush2.bf16.msra.mxu0 0
        %2818 = vmatprep.subr.bf16.mxu0 0
        %2819 = vmatpush2.bf16.msra.mxu0 0
        %2820 = vmatprep.subr.bf16.mxu0 0
        %2821 = vmatpush2.bf16.msra.mxu0 0
        %2822 = vmatprep.subr.bf16.mxu0 0
        %2823 = vmatpush2.bf16.msra.mxu0 0
        %2824 = vmatprep.subr.bf16.mxu0 0
        %2825 = vmatpush2.bf16.msra.mxu0 0
        %2826 = vmatprep.subr.bf16.mxu0 0
        %2827 = vmatpush2.bf16.msra.mxu0 0
        %2828 = vmatprep.subr.bf16.mxu0 0
        %2829 = vmatpush2.bf16.msra.mxu0 0
        %2830 = vmatprep.subr.bf16.mxu0 0
        %2831 = vmatpush2.bf16.msra.mxu0 0
        %2832 = vmatprep.mubr.bf16.mxu0 0
        %2833 = vmatmul.mubr.bf16.gmra.mxu0 %v2795
        %v2834 = vpop.f32.mrf.mxu0
        %v2835 = vadd.f32 0.0, %v2834
        %v2836 = vpop.f32.mrf.mxu0
        %v2837 = vpop.f32.mrf.mxu0
        %v2838 = vadd.f32 0.0, %v2837
        %v2839 = vpop.f32.mrf.mxu0
        %2840 = vdwg.mxu0
        %v2842 = vrot.slane %v1703, 2
        %2844 = vxpose.xlu0.c.b16.start [1/8] %v2842, 128
        %2845 = vxpose.xlu0.c.b16.cont [2/8] 0, 128
        %2846 = vxpose.xlu0.c.b16.cont [3/8] 0, 128
        %2847 = vxpose.xlu0.c.b16.cont [4/8] 0, 128
        %2848 = vxpose.xlu0.c.b16.cont [5/8] 0, 128
        %2849 = vxpose.xlu0.c.b16.cont [6/8] 0, 128
        %2850 = vxpose.xlu0.c.b16.cont [7/8] 0, 128
        %2851 = vxpose.xlu0.c.b16.end [8/8] 0, 128
        %v2852 = vpop.trf.xlu0
        %v2853 = vpop.trf.xlu0
        %v2854 = vpop.trf.xlu0
        %v2855 = vpop.trf.xlu0
        %v2856 = vpop.trf.xlu0
        %v2857 = vpop.trf.xlu0
        %v2858 = vpop.trf.xlu0
        %v2859 = vpop.trf.xlu0
        %v2861 = vsel %vm1802, %v2852, 0
        %v2864 = vsel %vm1806, %v1767, 0
        %2866 = vmatprep.subr.bf16.mxu0 0
        %2867 = vmatpush1.bf16.msra.mxu0 0
        %2868 = vmatprep.subr.bf16.mxu0 0
        %2869 = vmatpush1.bf16.msra.mxu0 0
        %2870 = vmatprep.subr.bf16.mxu0 0
        %2871 = vmatpush1.bf16.msra.mxu0 0
        %2872 = vmatprep.subr.bf16.mxu0 0
        %2873 = vmatpush1.bf16.msra.mxu0 0
        %2874 = vmatprep.subr.bf16.mxu0 0
        %2875 = vmatpush1.bf16.msra.mxu0 0
        %2876 = vmatprep.subr.bf16.mxu0 0
        %2877 = vmatpush1.bf16.msra.mxu0 0
        %2878 = vmatprep.subr.bf16.mxu0 0
        %2879 = vmatpush1.bf16.msra.mxu0 0
        %2880 = vmatprep.subr.bf16.mxu0 0
        %2881 = vmatpush1.bf16.msra.mxu0 %v2864
        %2882 = vmatprep.subr.bf16.mxu0 0
        %2883 = vmatpush2.bf16.msra.mxu0 0
        %2884 = vmatprep.subr.bf16.mxu0 0
        %2885 = vmatpush2.bf16.msra.mxu0 0
        %2886 = vmatprep.subr.bf16.mxu0 0
        %2887 = vmatpush2.bf16.msra.mxu0 0
        %2888 = vmatprep.subr.bf16.mxu0 0
        %2889 = vmatpush2.bf16.msra.mxu0 0
        %2890 = vmatprep.subr.bf16.mxu0 0
        %2891 = vmatpush2.bf16.msra.mxu0 0
        %2892 = vmatprep.subr.bf16.mxu0 0
        %2893 = vmatpush2.bf16.msra.mxu0 0
        %2894 = vmatprep.subr.bf16.mxu0 0
        %2895 = vmatpush2.bf16.msra.mxu0 0
        %2896 = vmatprep.subr.bf16.mxu0 0
        %2897 = vmatpush2.bf16.msra.mxu0 0
        %2898 = vmatprep.mubr.bf16.mxu0 0
        %2899 = vmatmul.mubr.bf16.gmra.mxu0 %v2861
        %v2900 = vpop.f32.mrf.mxu0
        %v2901 = vadd.f32 0.0, %v2900
        %v2902 = vpop.f32.mrf.mxu0
        %v2903 = vpop.f32.mrf.mxu0
        %v2904 = vadd.f32 0.0, %v2903
        %v2905 = vpop.f32.mrf.mxu0
        %2906 = vdwg.mxu0
        %v2908 = vrot.slane %v1704, 2
        %2910 = vxpose.xlu0.c.b16.start [1/8] %v2908, 128
        %2911 = vxpose.xlu0.c.b16.cont [2/8] 0, 128
        %2912 = vxpose.xlu0.c.b16.cont [3/8] 0, 128
        %2913 = vxpose.xlu0.c.b16.cont [4/8] 0, 128
        %2914 = vxpose.xlu0.c.b16.cont [5/8] 0, 128
        %2915 = vxpose.xlu0.c.b16.cont [6/8] 0, 128
        %2916 = vxpose.xlu0.c.b16.cont [7/8] 0, 128
        %2917 = vxpose.xlu0.c.b16.end [8/8] 0, 128
        %v2918 = vpop.trf.xlu0
        %v2919 = vpop.trf.xlu0
        %v2920 = vpop.trf.xlu0
        %v2921 = vpop.trf.xlu0
        %v2922 = vpop.trf.xlu0
        %v2923 = vpop.trf.xlu0
        %v2924 = vpop.trf.xlu0
        %v2925 = vpop.trf.xlu0
        %v2927 = vsel %vm1802, %v2918, 0
        %v2930 = vsel %vm1806, %v1768, 0
        %2932 = vmatprep.subr.bf16.mxu0 0
        %2933 = vmatpush1.bf16.msra.mxu0 0
        %2934 = vmatprep.subr.bf16.mxu0 0
        %2935 = vmatpush1.bf16.msra.mxu0 0
        %2936 = vmatprep.subr.bf16.mxu0 0
        %2937 = vmatpush1.bf16.msra.mxu0 0
        %2938 = vmatprep.subr.bf16.mxu0 0
        %2939 = vmatpush1.bf16.msra.mxu0 0
        %2940 = vmatprep.subr.bf16.mxu0 0
        %2941 = vmatpush1.bf16.msra.mxu0 0
        %2942 = vmatprep.subr.bf16.mxu0 0
        %2943 = vmatpush1.bf16.msra.mxu0 0
        %2944 = vmatprep.subr.bf16.mxu0 0
        %2945 = vmatpush1.bf16.msra.mxu0 0
        %2946 = vmatprep.subr.bf16.mxu0 0
        %2947 = vmatpush1.bf16.msra.mxu0 %v2930
        %2948 = vmatprep.subr.bf16.mxu0 0
        %2949 = vmatpush2.bf16.msra.mxu0 0
        %2950 = vmatprep.subr.bf16.mxu0 0
        %2951 = vmatpush2.bf16.msra.mxu0 0
        %2952 = vmatprep.subr.bf16.mxu0 0
        %2953 = vmatpush2.bf16.msra.mxu0 0
        %2954 = vmatprep.subr.bf16.mxu0 0
        %2955 = vmatpush2.bf16.msra.mxu0 0
        %2956 = vmatprep.subr.bf16.mxu0 0
        %2957 = vmatpush2.bf16.msra.mxu0 0
        %2958 = vmatprep.subr.bf16.mxu0 0
        %2959 = vmatpush2.bf16.msra.mxu0 0
        %2960 = vmatprep.subr.bf16.mxu0 0
        %2961 = vmatpush2.bf16.msra.mxu0 0
        %2962 = vmatprep.subr.bf16.mxu0 0
        %2963 = vmatpush2.bf16.msra.mxu0 0
        %2964 = vmatprep.mubr.bf16.mxu0 0
        %2965 = vmatmul.mubr.bf16.gmra.mxu0 %v2927
        %v2966 = vpop.f32.mrf.mxu0
        %v2967 = vadd.f32 0.0, %v2966
        %v2968 = vpop.f32.mrf.mxu0
        %v2969 = vpop.f32.mrf.mxu0
        %v2970 = vadd.f32 0.0, %v2969
        %v2971 = vpop.f32.mrf.mxu0
        %2972 = vdwg.mxu0
        %v2974 = vrot.slane %v1705, 2
        %2976 = vxpose.xlu0.c.b16.start [1/8] %v2974, 128
        %2977 = vxpose.xlu0.c.b16.cont [2/8] 0, 128
        %2978 = vxpose.xlu0.c.b16.cont [3/8] 0, 128
        %2979 = vxpose.xlu0.c.b16.cont [4/8] 0, 128
        %2980 = vxpose.xlu0.c.b16.cont [5/8] 0, 128
        %2981 = vxpose.xlu0.c.b16.cont [6/8] 0, 128
        %2982 = vxpose.xlu0.c.b16.cont [7/8] 0, 128
        %2983 = vxpose.xlu0.c.b16.end [8/8] 0, 128
        %v2984 = vpop.trf.xlu0
        %v2985 = vpop.trf.xlu0
        %v2986 = vpop.trf.xlu0
        %v2987 = vpop.trf.xlu0
        %v2988 = vpop.trf.xlu0
        %v2989 = vpop.trf.xlu0
        %v2990 = vpop.trf.xlu0
        %v2991 = vpop.trf.xlu0
        %v2993 = vsel %vm1802, %v2984, 0
        %v2996 = vsel %vm1806, %v1769, 0
        %2998 = vmatprep.subr.bf16.mxu0 0
        %2999 = vmatpush1.bf16.msra.mxu0 0
        %3000 = vmatprep.subr.bf16.mxu0 0
        %3001 = vmatpush1.bf16.msra.mxu0 0
        %3002 = vmatprep.subr.bf16.mxu0 0
        %3003 = vmatpush1.bf16.msra.mxu0 0
        %3004 = vmatprep.subr.bf16.mxu0 0
        %3005 = vmatpush1.bf16.msra.mxu0 0
        %3006 = vmatprep.subr.bf16.mxu0 0
        %3007 = vmatpush1.bf16.msra.mxu0 0
        %3008 = vmatprep.subr.bf16.mxu0 0
        %3009 = vmatpush1.bf16.msra.mxu0 0
        %3010 = vmatprep.subr.bf16.mxu0 0
        %3011 = vmatpush1.bf16.msra.mxu0 0
        %3012 = vmatprep.subr.bf16.mxu0 0
        %3013 = vmatpush1.bf16.msra.mxu0 %v2996
        %3014 = vmatprep.subr.bf16.mxu0 0
        %3015 = vmatpush2.bf16.msra.mxu0 0
        %3016 = vmatprep.subr.bf16.mxu0 0
        %3017 = vmatpush2.bf16.msra.mxu0 0
        %3018 = vmatprep.subr.bf16.mxu0 0
        %3019 = vmatpush2.bf16.msra.mxu0 0
        %3020 = vmatprep.subr.bf16.mxu0 0
        %3021 = vmatpush2.bf16.msra.mxu0 0
        %3022 = vmatprep.subr.bf16.mxu0 0
        %3023 = vmatpush2.bf16.msra.mxu0 0
        %3024 = vmatprep.subr.bf16.mxu0 0
        %3025 = vmatpush2.bf16.msra.mxu0 0
        %3026 = vmatprep.subr.bf16.mxu0 0
        %3027 = vmatpush2.bf16.msra.mxu0 0
        %3028 = vmatprep.subr.bf16.mxu0 0
        %3029 = vmatpush2.bf16.msra.mxu0 0
        %3030 = vmatprep.mubr.bf16.mxu0 0
        %3031 = vmatmul.mubr.bf16.gmra.mxu0 %v2993
        %v3032 = vpop.f32.mrf.mxu0
        %v3033 = vadd.f32 0.0, %v3032
        %v3034 = vpop.f32.mrf.mxu0
        %v3035 = vpop.f32.mrf.mxu0
        %v3036 = vadd.f32 0.0, %v3035
        %v3037 = vpop.f32.mrf.mxu0
        %3038 = vdwg.mxu0
        %v3040 = vrot.slane %v1706, 2
        %3042 = vxpose.xlu0.c.b16.start [1/8] %v3040, 128
        %3043 = vxpose.xlu0.c.b16.cont [2/8] 0, 128
        %3044 = vxpose.xlu0.c.b16.cont [3/8] 0, 128
        %3045 = vxpose.xlu0.c.b16.cont [4/8] 0, 128
        %3046 = vxpose.xlu0.c.b16.cont [5/8] 0, 128
        %3047 = vxpose.xlu0.c.b16.cont [6/8] 0, 128
        %3048 = vxpose.xlu0.c.b16.cont [7/8] 0, 128
        %3049 = vxpose.xlu0.c.b16.end [8/8] 0, 128
        %v3050 = vpop.trf.xlu0
        %v3051 = vpop.trf.xlu0
        %v3052 = vpop.trf.xlu0
        %v3053 = vpop.trf.xlu0
        %v3054 = vpop.trf.xlu0
        %v3055 = vpop.trf.xlu0
        %v3056 = vpop.trf.xlu0
        %v3057 = vpop.trf.xlu0
        %v3059 = vsel %vm1802, %v3050, 0
        %v3062 = vsel %vm1806, %v1770, 0
        %3064 = vmatprep.subr.bf16.mxu0 0
        %3065 = vmatpush1.bf16.msra.mxu0 0
        %3066 = vmatprep.subr.bf16.mxu0 0
        %3067 = vmatpush1.bf16.msra.mxu0 0
        %3068 = vmatprep.subr.bf16.mxu0 0
        %3069 = vmatpush1.bf16.msra.mxu0 0
        %3070 = vmatprep.subr.bf16.mxu0 0
        %3071 = vmatpush1.bf16.msra.mxu0 0
        %3072 = vmatprep.subr.bf16.mxu0 0
        %3073 = vmatpush1.bf16.msra.mxu0 0
        %3074 = vmatprep.subr.bf16.mxu0 0
        %3075 = vmatpush1.bf16.msra.mxu0 0
        %3076 = vmatprep.subr.bf16.mxu0 0
        %3077 = vmatpush1.bf16.msra.mxu0 0
        %3078 = vmatprep.subr.bf16.mxu0 0
        %3079 = vmatpush1.bf16.msra.mxu0 %v3062
        %3080 = vmatprep.subr.bf16.mxu0 0
        %3081 = vmatpush2.bf16.msra.mxu0 0
        %3082 = vmatprep.subr.bf16.mxu0 0
        %3083 = vmatpush2.bf16.msra.mxu0 0
        %3084 = vmatprep.subr.bf16.mxu0 0
        %3085 = vmatpush2.bf16.msra.mxu0 0
        %3086 = vmatprep.subr.bf16.mxu0 0
        %3087 = vmatpush2.bf16.msra.mxu0 0
        %3088 = vmatprep.subr.bf16.mxu0 0
        %3089 = vmatpush2.bf16.msra.mxu0 0
        %3090 = vmatprep.subr.bf16.mxu0 0
        %3091 = vmatpush2.bf16.msra.mxu0 0
        %3092 = vmatprep.subr.bf16.mxu0 0
        %3093 = vmatpush2.bf16.msra.mxu0 0
        %3094 = vmatprep.subr.bf16.mxu0 0
        %3095 = vmatpush2.bf16.msra.mxu0 0
        %3096 = vmatprep.mubr.bf16.mxu0 0
        %3097 = vmatmul.mubr.bf16.gmra.mxu0 %v3059
        %v3098 = vpop.f32.mrf.mxu0
        %v3099 = vadd.f32 0.0, %v3098
        %v3100 = vpop.f32.mrf.mxu0
        %v3101 = vpop.f32.mrf.mxu0
        %v3102 = vadd.f32 0.0, %v3101
        %v3103 = vpop.f32.mrf.mxu0
        %3104 = vdwg.mxu0
        %v3106 = vrot.slane %v1707, 2
        %3108 = vxpose.xlu0.c.b16.start [1/8] %v3106, 128
        %3109 = vxpose.xlu0.c.b16.cont [2/8] 0, 128
        %3110 = vxpose.xlu0.c.b16.cont [3/8] 0, 128
        %3111 = vxpose.xlu0.c.b16.cont [4/8] 0, 128
        %3112 = vxpose.xlu0.c.b16.cont [5/8] 0, 128
        %3113 = vxpose.xlu0.c.b16.cont [6/8] 0, 128
        %3114 = vxpose.xlu0.c.b16.cont [7/8] 0, 128
        %3115 = vxpose.xlu0.c.b16.end [8/8] 0, 128
        %v3116 = vpop.trf.xlu0
        %v3117 = vpop.trf.xlu0
        %v3118 = vpop.trf.xlu0
        %v3119 = vpop.trf.xlu0
        %v3120 = vpop.trf.xlu0
        %v3121 = vpop.trf.xlu0
        %v3122 = vpop.trf.xlu0
        %v3123 = vpop.trf.xlu0
        %v3125 = vsel %vm1802, %v3116, 0
        %v3128 = vsel %vm1806, %v1771, 0
        %3130 = vmatprep.subr.bf16.mxu0 0
        %3131 = vmatpush1.bf16.msra.mxu0 0
        %3132 = vmatprep.subr.bf16.mxu0 0
        %3133 = vmatpush1.bf16.msra.mxu0 0
        %3134 = vmatprep.subr.bf16.mxu0 0
        %3135 = vmatpush1.bf16.msra.mxu0 0
        %3136 = vmatprep.subr.bf16.mxu0 0
        %3137 = vmatpush1.bf16.msra.mxu0 0
        %3138 = vmatprep.subr.bf16.mxu0 0
        %3139 = vmatpush1.bf16.msra.mxu0 0
        %3140 = vmatprep.subr.bf16.mxu0 0
        %3141 = vmatpush1.bf16.msra.mxu0 0
        %3142 = vmatprep.subr.bf16.mxu0 0
        %3143 = vmatpush1.bf16.msra.mxu0 0
        %3144 = vmatprep.subr.bf16.mxu0 0
        %3145 = vmatpush1.bf16.msra.mxu0 %v3128
        %3146 = vmatprep.subr.bf16.mxu0 0
        %3147 = vmatpush2.bf16.msra.mxu0 0
        %3148 = vmatprep.subr.bf16.mxu0 0
        %3149 = vmatpush2.bf16.msra.mxu0 0
        %3150 = vmatprep.subr.bf16.mxu0 0
        %3151 = vmatpush2.bf16.msra.mxu0 0
        %3152 = vmatprep.subr.bf16.mxu0 0
        %3153 = vmatpush2.bf16.msra.mxu0 0
        %3154 = vmatprep.subr.bf16.mxu0 0
        %3155 = vmatpush2.bf16.msra.mxu0 0
        %3156 = vmatprep.subr.bf16.mxu0 0
        %3157 = vmatpush2.bf16.msra.mxu0 0
        %3158 = vmatprep.subr.bf16.mxu0 0
        %3159 = vmatpush2.bf16.msra.mxu0 0
        %3160 = vmatprep.subr.bf16.mxu0 0
        %3161 = vmatpush2.bf16.msra.mxu0 0
        %3162 = vmatprep.mubr.bf16.mxu0 0
        %3163 = vmatmul.mubr.bf16.gmra.mxu0 %v3125
        %v3164 = vpop.f32.mrf.mxu0
        %v3165 = vadd.f32 0.0, %v3164
        %v3166 = vpop.f32.mrf.mxu0
        %v3167 = vpop.f32.mrf.mxu0
        %v3168 = vadd.f32 0.0, %v3167
        %v3169 = vpop.f32.mrf.mxu0
        %3170 = vdwg.mxu0
        %v3172 = vrot.slane %v1708, 2
        %3174 = vxpose.xlu0.c.b16.start [1/8] %v3172, 128
        %3175 = vxpose.xlu0.c.b16.cont [2/8] 0, 128
        %3176 = vxpose.xlu0.c.b16.cont [3/8] 0, 128
        %3177 = vxpose.xlu0.c.b16.cont [4/8] 0, 128
        %3178 = vxpose.xlu0.c.b16.cont [5/8] 0, 128
        %3179 = vxpose.xlu0.c.b16.cont [6/8] 0, 128
        %3180 = vxpose.xlu0.c.b16.cont [7/8] 0, 128
        %3181 = vxpose.xlu0.c.b16.end [8/8] 0, 128
        %v3182 = vpop.trf.xlu0
        %v3183 = vpop.trf.xlu0
        %v3184 = vpop.trf.xlu0
        %v3185 = vpop.trf.xlu0
        %v3186 = vpop.trf.xlu0
        %v3187 = vpop.trf.xlu0
        %v3188 = vpop.trf.xlu0
        %v3189 = vpop.trf.xlu0
        %v3191 = vsel %vm1802, %v3182, 0
        %v3194 = vsel %vm1806, %v1772, 0
        %3196 = vmatprep.subr.bf16.mxu0 0
        %3197 = vmatpush1.bf16.msra.mxu0 0
        %3198 = vmatprep.subr.bf16.mxu0 0
        %3199 = vmatpush1.bf16.msra.mxu0 0
        %3200 = vmatprep.subr.bf16.mxu0 0
        %3201 = vmatpush1.bf16.msra.mxu0 0
        %3202 = vmatprep.subr.bf16.mxu0 0
        %3203 = vmatpush1.bf16.msra.mxu0 0
        %3204 = vmatprep.subr.bf16.mxu0 0
        %3205 = vmatpush1.bf16.msra.mxu0 0
        %3206 = vmatprep.subr.bf16.mxu0 0
        %3207 = vmatpush1.bf16.msra.mxu0 0
        %3208 = vmatprep.subr.bf16.mxu0 0
        %3209 = vmatpush1.bf16.msra.mxu0 0
        %3210 = vmatprep.subr.bf16.mxu0 0
        %3211 = vmatpush1.bf16.msra.mxu0 %v3194
        %3212 = vmatprep.subr.bf16.mxu0 0
        %3213 = vmatpush2.bf16.msra.mxu0 0
        %3214 = vmatprep.subr.bf16.mxu0 0
        %3215 = vmatpush2.bf16.msra.mxu0 0
        %3216 = vmatprep.subr.bf16.mxu0 0
        %3217 = vmatpush2.bf16.msra.mxu0 0
        %3218 = vmatprep.subr.bf16.mxu0 0
        %3219 = vmatpush2.bf16.msra.mxu0 0
        %3220 = vmatprep.subr.bf16.mxu0 0
        %3221 = vmatpush2.bf16.msra.mxu0 0
        %3222 = vmatprep.subr.bf16.mxu0 0
        %3223 = vmatpush2.bf16.msra.mxu0 0
        %3224 = vmatprep.subr.bf16.mxu0 0
        %3225 = vmatpush2.bf16.msra.mxu0 0
        %3226 = vmatprep.subr.bf16.mxu0 0
        %3227 = vmatpush2.bf16.msra.mxu0 0
        %3228 = vmatprep.mubr.bf16.mxu0 0
        %3229 = vmatmul.mubr.bf16.gmra.mxu0 %v3191
        %v3230 = vpop.f32.mrf.mxu0
        %v3231 = vadd.f32 0.0, %v3230
        %v3232 = vpop.f32.mrf.mxu0
        %v3233 = vpop.f32.mrf.mxu0
        %v3234 = vadd.f32 0.0, %v3233
        %v3235 = vpop.f32.mrf.mxu0
        %3236 = vdwg.mxu0
        %v3238 = vrot.slane %v1709, 2
        %3240 = vxpose.xlu0.c.b16.start [1/8] %v3238, 128
        %3241 = vxpose.xlu0.c.b16.cont [2/8] 0, 128
        %3242 = vxpose.xlu0.c.b16.cont [3/8] 0, 128
        %3243 = vxpose.xlu0.c.b16.cont [4/8] 0, 128
        %3244 = vxpose.xlu0.c.b16.cont [5/8] 0, 128
        %3245 = vxpose.xlu0.c.b16.cont [6/8] 0, 128
        %3246 = vxpose.xlu0.c.b16.cont [7/8] 0, 128
        %3247 = vxpose.xlu0.c.b16.end [8/8] 0, 128
        %v3248 = vpop.trf.xlu0
        %v3249 = vpop.trf.xlu0
        %v3250 = vpop.trf.xlu0
        %v3251 = vpop.trf.xlu0
        %v3252 = vpop.trf.xlu0
        %v3253 = vpop.trf.xlu0
        %v3254 = vpop.trf.xlu0
        %v3255 = vpop.trf.xlu0
        %v3257 = vsel %vm1802, %v3248, 0
        %v3260 = vsel %vm1806, %v1773, 0
        %3262 = vmatprep.subr.bf16.mxu0 0
        %3263 = vmatpush1.bf16.msra.mxu0 0
        %3264 = vmatprep.subr.bf16.mxu0 0
        %3265 = vmatpush1.bf16.msra.mxu0 0
        %3266 = vmatprep.subr.bf16.mxu0 0
        %3267 = vmatpush1.bf16.msra.mxu0 0
        %3268 = vmatprep.subr.bf16.mxu0 0
        %3269 = vmatpush1.bf16.msra.mxu0 0
        %3270 = vmatprep.subr.bf16.mxu0 0
        %3271 = vmatpush1.bf16.msra.mxu0 0
        %3272 = vmatprep.subr.bf16.mxu0 0
        %3273 = vmatpush1.bf16.msra.mxu0 0
        %3274 = vmatprep.subr.bf16.mxu0 0
        %3275 = vmatpush1.bf16.msra.mxu0 0
        %3276 = vmatprep.subr.bf16.mxu0 0
        %3277 = vmatpush1.bf16.msra.mxu0 %v3260
        %3278 = vmatprep.subr.bf16.mxu0 0
        %3279 = vmatpush2.bf16.msra.mxu0 0
        %3280 = vmatprep.subr.bf16.mxu0 0
        %3281 = vmatpush2.bf16.msra.mxu0 0
        %3282 = vmatprep.subr.bf16.mxu0 0
        %3283 = vmatpush2.bf16.msra.mxu0 0
        %3284 = vmatprep.subr.bf16.mxu0 0
        %3285 = vmatpush2.bf16.msra.mxu0 0
        %3286 = vmatprep.subr.bf16.mxu0 0
        %3287 = vmatpush2.bf16.msra.mxu0 0
        %3288 = vmatprep.subr.bf16.mxu0 0
        %3289 = vmatpush2.bf16.msra.mxu0 0
        %3290 = vmatprep.subr.bf16.mxu0 0
        %3291 = vmatpush2.bf16.msra.mxu0 0
        %3292 = vmatprep.subr.bf16.mxu0 0
        %3293 = vmatpush2.bf16.msra.mxu0 0
        %3294 = vmatprep.mubr.bf16.mxu0 0
        %3295 = vmatmul.mubr.bf16.gmra.mxu0 %v3257
        %v3296 = vpop.f32.mrf.mxu0
        %v3297 = vadd.f32 0.0, %v3296
        %v3298 = vpop.f32.mrf.mxu0
        %v3299 = vpop.f32.mrf.mxu0
        %v3300 = vadd.f32 0.0, %v3299
        %v3301 = vpop.f32.mrf.mxu0
        %3302 = vdwg.mxu0
        %v3304 = vrot.slane %v1710, 2
        %3306 = vxpose.xlu0.c.b16.start [1/8] %v3304, 128
        %3307 = vxpose.xlu0.c.b16.cont [2/8] 0, 128
        %3308 = vxpose.xlu0.c.b16.cont [3/8] 0, 128
        %3309 = vxpose.xlu0.c.b16.cont [4/8] 0, 128
        %3310 = vxpose.xlu0.c.b16.cont [5/8] 0, 128
        %3311 = vxpose.xlu0.c.b16.cont [6/8] 0, 128
        %3312 = vxpose.xlu0.c.b16.cont [7/8] 0, 128
        %3313 = vxpose.xlu0.c.b16.end [8/8] 0, 128
        %v3314 = vpop.trf.xlu0
        %v3315 = vpop.trf.xlu0
        %v3316 = vpop.trf.xlu0
        %v3317 = vpop.trf.xlu0
        %v3318 = vpop.trf.xlu0
        %v3319 = vpop.trf.xlu0
        %v3320 = vpop.trf.xlu0
        %v3321 = vpop.trf.xlu0
        %v3323 = vsel %vm1802, %v3314, 0
        %v3326 = vsel %vm1806, %v1774, 0
        %3328 = vmatprep.subr.bf16.mxu0 0
        %3329 = vmatpush1.bf16.msra.mxu0 0
        %3330 = vmatprep.subr.bf16.mxu0 0
        %3331 = vmatpush1.bf16.msra.mxu0 0
        %3332 = vmatprep.subr.bf16.mxu0 0
        %3333 = vmatpush1.bf16.msra.mxu0 0
        %3334 = vmatprep.subr.bf16.mxu0 0
        %3335 = vmatpush1.bf16.msra.mxu0 0
        %3336 = vmatprep.subr.bf16.mxu0 0
        %3337 = vmatpush1.bf16.msra.mxu0 0
        %3338 = vmatprep.subr.bf16.mxu0 0
        %3339 = vmatpush1.bf16.msra.mxu0 0
        %3340 = vmatprep.subr.bf16.mxu0 0
        %3341 = vmatpush1.bf16.msra.mxu0 0
        %3342 = vmatprep.subr.bf16.mxu0 0
        %3343 = vmatpush1.bf16.msra.mxu0 %v3326
        %3344 = vmatprep.subr.bf16.mxu0 0
        %3345 = vmatpush2.bf16.msra.mxu0 0
        %3346 = vmatprep.subr.bf16.mxu0 0
        %3347 = vmatpush2.bf16.msra.mxu0 0
        %3348 = vmatprep.subr.bf16.mxu0 0
        %3349 = vmatpush2.bf16.msra.mxu0 0
        %3350 = vmatprep.subr.bf16.mxu0 0
        %3351 = vmatpush2.bf16.msra.mxu0 0
        %3352 = vmatprep.subr.bf16.mxu0 0
        %3353 = vmatpush2.bf16.msra.mxu0 0
        %3354 = vmatprep.subr.bf16.mxu0 0
        %3355 = vmatpush2.bf16.msra.mxu0 0
        %3356 = vmatprep.subr.bf16.mxu0 0
        %3357 = vmatpush2.bf16.msra.mxu0 0
        %3358 = vmatprep.subr.bf16.mxu0 0
        %3359 = vmatpush2.bf16.msra.mxu0 0
        %3360 = vmatprep.mubr.bf16.mxu0 0
        %3361 = vmatmul.mubr.bf16.gmra.mxu0 %v3323
        %v3362 = vpop.f32.mrf.mxu0
        %v3363 = vadd.f32 0.0, %v3362
        %v3364 = vpop.f32.mrf.mxu0
        %v3365 = vpop.f32.mrf.mxu0
        %v3366 = vadd.f32 0.0, %v3365
        %v3367 = vpop.f32.mrf.mxu0
        %3368 = vdwg.mxu0
        %v3370 = vrot.slane %v1711, 2
        %3372 = vxpose.xlu0.c.b16.start [1/8] %v3370, 128
        %3373 = vxpose.xlu0.c.b16.cont [2/8] 0, 128
        %3374 = vxpose.xlu0.c.b16.cont [3/8] 0, 128
        %3375 = vxpose.xlu0.c.b16.cont [4/8] 0, 128
        %3376 = vxpose.xlu0.c.b16.cont [5/8] 0, 128
        %3377 = vxpose.xlu0.c.b16.cont [6/8] 0, 128
        %3378 = vxpose.xlu0.c.b16.cont [7/8] 0, 128
        %3379 = vxpose.xlu0.c.b16.end [8/8] 0, 128
        %v3380 = vpop.trf.xlu0
        %v3381 = vpop.trf.xlu0
        %v3382 = vpop.trf.xlu0
        %v3383 = vpop.trf.xlu0
        %v3384 = vpop.trf.xlu0
        %v3385 = vpop.trf.xlu0
        %v3386 = vpop.trf.xlu0
        %v3387 = vpop.trf.xlu0
        %v3389 = vsel %vm1802, %v3380, 0
        %v3392 = vsel %vm1806, %v1775, 0
        %3394 = vmatprep.subr.bf16.mxu0 0
        %3395 = vmatpush1.bf16.msra.mxu0 0
        %3396 = vmatprep.subr.bf16.mxu0 0
        %3397 = vmatpush1.bf16.msra.mxu0 0
        %3398 = vmatprep.subr.bf16.mxu0 0
        %3399 = vmatpush1.bf16.msra.mxu0 0
        %3400 = vmatprep.subr.bf16.mxu0 0
        %3401 = vmatpush1.bf16.msra.mxu0 0
        %3402 = vmatprep.subr.bf16.mxu0 0
        %3403 = vmatpush1.bf16.msra.mxu0 0
        %3404 = vmatprep.subr.bf16.mxu0 0
        %3405 = vmatpush1.bf16.msra.mxu0 0
        %3406 = vmatprep.subr.bf16.mxu0 0
        %3407 = vmatpush1.bf16.msra.mxu0 0
        %3408 = vmatprep.subr.bf16.mxu0 0
        %3409 = vmatpush1.bf16.msra.mxu0 %v3392
        %3410 = vmatprep.subr.bf16.mxu0 0
        %3411 = vmatpush2.bf16.msra.mxu0 0
        %3412 = vmatprep.subr.bf16.mxu0 0
        %3413 = vmatpush2.bf16.msra.mxu0 0
        %3414 = vmatprep.subr.bf16.mxu0 0
        %3415 = vmatpush2.bf16.msra.mxu0 0
        %3416 = vmatprep.subr.bf16.mxu0 0
        %3417 = vmatpush2.bf16.msra.mxu0 0
        %3418 = vmatprep.subr.bf16.mxu0 0
        %3419 = vmatpush2.bf16.msra.mxu0 0
        %3420 = vmatprep.subr.bf16.mxu0 0
        %3421 = vmatpush2.bf16.msra.mxu0 0
        %3422 = vmatprep.subr.bf16.mxu0 0
        %3423 = vmatpush2.bf16.msra.mxu0 0
        %3424 = vmatprep.subr.bf16.mxu0 0
        %3425 = vmatpush2.bf16.msra.mxu0 0
        %3426 = vmatprep.mubr.bf16.mxu0 0
        %3427 = vmatmul.mubr.bf16.gmra.mxu0 %v3389
        %v3428 = vpop.f32.mrf.mxu0
        %v3429 = vadd.f32 0.0, %v3428
        %v3430 = vpop.f32.mrf.mxu0
        %v3431 = vpop.f32.mrf.mxu0
        %v3432 = vadd.f32 0.0, %v3431
        %v3433 = vpop.f32.mrf.mxu0
        %3434 = vdwg.mxu0
        %v3436 = vrot.slane %v1712, 2
        %3438 = vxpose.xlu0.c.b16.start [1/8] %v3436, 128
        %3439 = vxpose.xlu0.c.b16.cont [2/8] 0, 128
        %3440 = vxpose.xlu0.c.b16.cont [3/8] 0, 128
        %3441 = vxpose.xlu0.c.b16.cont [4/8] 0, 128
        %3442 = vxpose.xlu0.c.b16.cont [5/8] 0, 128
        %3443 = vxpose.xlu0.c.b16.cont [6/8] 0, 128
        %3444 = vxpose.xlu0.c.b16.cont [7/8] 0, 128
        %3445 = vxpose.xlu0.c.b16.end [8/8] 0, 128
        %v3446 = vpop.trf.xlu0
        %v3447 = vpop.trf.xlu0
        %v3448 = vpop.trf.xlu0
        %v3449 = vpop.trf.xlu0
        %v3450 = vpop.trf.xlu0
        %v3451 = vpop.trf.xlu0
        %v3452 = vpop.trf.xlu0
        %v3453 = vpop.trf.xlu0
        %v3455 = vsel %vm1802, %v3446, 0
        %v3458 = vsel %vm1806, %v1776, 0
        %3460 = vmatprep.subr.bf16.mxu0 0
        %3461 = vmatpush1.bf16.msra.mxu0 0
        %3462 = vmatprep.subr.bf16.mxu0 0
        %3463 = vmatpush1.bf16.msra.mxu0 0
        %3464 = vmatprep.subr.bf16.mxu0 0
        %3465 = vmatpush1.bf16.msra.mxu0 0
        %3466 = vmatprep.subr.bf16.mxu0 0
        %3467 = vmatpush1.bf16.msra.mxu0 0
        %3468 = vmatprep.subr.bf16.mxu0 0
        %3469 = vmatpush1.bf16.msra.mxu0 0
        %3470 = vmatprep.subr.bf16.mxu0 0
        %3471 = vmatpush1.bf16.msra.mxu0 0
        %3472 = vmatprep.subr.bf16.mxu0 0
        %3473 = vmatpush1.bf16.msra.mxu0 0
        %3474 = vmatprep.subr.bf16.mxu0 0
        %3475 = vmatpush1.bf16.msra.mxu0 %v3458
        %3476 = vmatprep.subr.bf16.mxu0 0
        %3477 = vmatpush2.bf16.msra.mxu0 0
        %3478 = vmatprep.subr.bf16.mxu0 0
        %3479 = vmatpush2.bf16.msra.mxu0 0
        %3480 = vmatprep.subr.bf16.mxu0 0
        %3481 = vmatpush2.bf16.msra.mxu0 0
        %3482 = vmatprep.subr.bf16.mxu0 0
        %3483 = vmatpush2.bf16.msra.mxu0 0
        %3484 = vmatprep.subr.bf16.mxu0 0
        %3485 = vmatpush2.bf16.msra.mxu0 0
        %3486 = vmatprep.subr.bf16.mxu0 0
        %3487 = vmatpush2.bf16.msra.mxu0 0
        %3488 = vmatprep.subr.bf16.mxu0 0
        %3489 = vmatpush2.bf16.msra.mxu0 0
        %3490 = vmatprep.subr.bf16.mxu0 0
        %3491 = vmatpush2.bf16.msra.mxu0 0
        %3492 = vmatprep.mubr.bf16.mxu0 0
        %3493 = vmatmul.mubr.bf16.gmra.mxu0 %v3455
        %v3494 = vpop.f32.mrf.mxu0
        %v3495 = vadd.f32 0.0, %v3494
        %v3496 = vpop.f32.mrf.mxu0
        %v3497 = vpop.f32.mrf.mxu0
        %v3498 = vadd.f32 0.0, %v3497
        %v3499 = vpop.f32.mrf.mxu0
        %3500 = vdwg.mxu0
        %v3502 = vrot.slane %v1713, 2
        %3504 = vxpose.xlu0.c.b16.start [1/8] %v3502, 128
        %3505 = vxpose.xlu0.c.b16.cont [2/8] 0, 128
        %3506 = vxpose.xlu0.c.b16.cont [3/8] 0, 128
        %3507 = vxpose.xlu0.c.b16.cont [4/8] 0, 128
        %3508 = vxpose.xlu0.c.b16.cont [5/8] 0, 128
        %3509 = vxpose.xlu0.c.b16.cont [6/8] 0, 128
        %3510 = vxpose.xlu0.c.b16.cont [7/8] 0, 128
        %3511 = vxpose.xlu0.c.b16.end [8/8] 0, 128
        %v3512 = vpop.trf.xlu0
        %v3513 = vpop.trf.xlu0
        %v3514 = vpop.trf.xlu0
        %v3515 = vpop.trf.xlu0
        %v3516 = vpop.trf.xlu0
        %v3517 = vpop.trf.xlu0
        %v3518 = vpop.trf.xlu0
        %v3519 = vpop.trf.xlu0
        %v3521 = vsel %vm1802, %v3512, 0
        %v3524 = vsel %vm1806, %v1777, 0
        %3526 = vmatprep.subr.bf16.mxu0 0
        %3527 = vmatpush1.bf16.msra.mxu0 0
        %3528 = vmatprep.subr.bf16.mxu0 0
        %3529 = vmatpush1.bf16.msra.mxu0 0
        %3530 = vmatprep.subr.bf16.mxu0 0
        %3531 = vmatpush1.bf16.msra.mxu0 0
        %3532 = vmatprep.subr.bf16.mxu0 0
        %3533 = vmatpush1.bf16.msra.mxu0 0
        %3534 = vmatprep.subr.bf16.mxu0 0
        %3535 = vmatpush1.bf16.msra.mxu0 0
        %3536 = vmatprep.subr.bf16.mxu0 0
        %3537 = vmatpush1.bf16.msra.mxu0 0
        %3538 = vmatprep.subr.bf16.mxu0 0
        %3539 = vmatpush1.bf16.msra.mxu0 0
        %3540 = vmatprep.subr.bf16.mxu0 0
        %3541 = vmatpush1.bf16.msra.mxu0 %v3524
        %3542 = vmatprep.subr.bf16.mxu0 0
        %3543 = vmatpush2.bf16.msra.mxu0 0
        %3544 = vmatprep.subr.bf16.mxu0 0
        %3545 = vmatpush2.bf16.msra.mxu0 0
        %3546 = vmatprep.subr.bf16.mxu0 0
        %3547 = vmatpush2.bf16.msra.mxu0 0
        %3548 = vmatprep.subr.bf16.mxu0 0
        %3549 = vmatpush2.bf16.msra.mxu0 0
        %3550 = vmatprep.subr.bf16.mxu0 0
        %3551 = vmatpush2.bf16.msra.mxu0 0
        %3552 = vmatprep.subr.bf16.mxu0 0
        %3553 = vmatpush2.bf16.msra.mxu0 0
        %3554 = vmatprep.subr.bf16.mxu0 0
        %3555 = vmatpush2.bf16.msra.mxu0 0
        %3556 = vmatprep.subr.bf16.mxu0 0
        %3557 = vmatpush2.bf16.msra.mxu0 0
        %3558 = vmatprep.mubr.bf16.mxu0 0
        %3559 = vmatmul.mubr.bf16.gmra.mxu0 %v3521
        %v3560 = vpop.f32.mrf.mxu0
        %v3561 = vadd.f32 0.0, %v3560
        %v3562 = vpop.f32.mrf.mxu0
        %v3563 = vpop.f32.mrf.mxu0
        %v3564 = vadd.f32 0.0, %v3563
        %v3565 = vpop.f32.mrf.mxu0
        %3566 = vdwg.mxu0
        %v3568 = vrot.slane %v1714, 2
        %3570 = vxpose.xlu0.c.b16.start [1/8] %v3568, 128
        %3571 = vxpose.xlu0.c.b16.cont [2/8] 0, 128
        %3572 = vxpose.xlu0.c.b16.cont [3/8] 0, 128
        %3573 = vxpose.xlu0.c.b16.cont [4/8] 0, 128
        %3574 = vxpose.xlu0.c.b16.cont [5/8] 0, 128
        %3575 = vxpose.xlu0.c.b16.cont [6/8] 0, 128
        %3576 = vxpose.xlu0.c.b16.cont [7/8] 0, 128
        %3577 = vxpose.xlu0.c.b16.end [8/8] 0, 128
        %v3578 = vpop.trf.xlu0
        %v3579 = vpop.trf.xlu0
        %v3580 = vpop.trf.xlu0
        %v3581 = vpop.trf.xlu0
        %v3582 = vpop.trf.xlu0
        %v3583 = vpop.trf.xlu0
        %v3584 = vpop.trf.xlu0
        %v3585 = vpop.trf.xlu0
        %v3587 = vsel %vm1802, %v3578, 0
        %v3590 = vsel %vm1806, %v1778, 0
        %3592 = vmatprep.subr.bf16.mxu0 0
        %3593 = vmatpush1.bf16.msra.mxu0 0
        %3594 = vmatprep.subr.bf16.mxu0 0
        %3595 = vmatpush1.bf16.msra.mxu0 0
        %3596 = vmatprep.subr.bf16.mxu0 0
        %3597 = vmatpush1.bf16.msra.mxu0 0
        %3598 = vmatprep.subr.bf16.mxu0 0
        %3599 = vmatpush1.bf16.msra.mxu0 0
        %3600 = vmatprep.subr.bf16.mxu0 0
        %3601 = vmatpush1.bf16.msra.mxu0 0
        %3602 = vmatprep.subr.bf16.mxu0 0
        %3603 = vmatpush1.bf16.msra.mxu0 0
        %3604 = vmatprep.subr.bf16.mxu0 0
        %3605 = vmatpush1.bf16.msra.mxu0 0
        %3606 = vmatprep.subr.bf16.mxu0 0
        %3607 = vmatpush1.bf16.msra.mxu0 %v3590
        %3608 = vmatprep.subr.bf16.mxu0 0
        %3609 = vmatpush2.bf16.msra.mxu0 0
        %3610 = vmatprep.subr.bf16.mxu0 0
        %3611 = vmatpush2.bf16.msra.mxu0 0
        %3612 = vmatprep.subr.bf16.mxu0 0
        %3613 = vmatpush2.bf16.msra.mxu0 0
        %3614 = vmatprep.subr.bf16.mxu0 0
        %3615 = vmatpush2.bf16.msra.mxu0 0
        %3616 = vmatprep.subr.bf16.mxu0 0
        %3617 = vmatpush2.bf16.msra.mxu0 0
        %3618 = vmatprep.subr.bf16.mxu0 0
        %3619 = vmatpush2.bf16.msra.mxu0 0
        %3620 = vmatprep.subr.bf16.mxu0 0
        %3621 = vmatpush2.bf16.msra.mxu0 0
        %3622 = vmatprep.subr.bf16.mxu0 0
        %3623 = vmatpush2.bf16.msra.mxu0 0
        %3624 = vmatprep.mubr.bf16.mxu0 0
        %3625 = vmatmul.mubr.bf16.gmra.mxu0 %v3587
        %v3626 = vpop.f32.mrf.mxu0
        %v3627 = vadd.f32 0.0, %v3626
        %v3628 = vpop.f32.mrf.mxu0
        %v3629 = vpop.f32.mrf.mxu0
        %v3630 = vadd.f32 0.0, %v3629
        %v3631 = vpop.f32.mrf.mxu0
        %3632 = vdwg.mxu0
        %v3634 = vrot.slane %v1715, 2
        %3636 = vxpose.xlu0.c.b16.start [1/8] %v3634, 128
        %3637 = vxpose.xlu0.c.b16.cont [2/8] 0, 128
        %3638 = vxpose.xlu0.c.b16.cont [3/8] 0, 128
        %3639 = vxpose.xlu0.c.b16.cont [4/8] 0, 128
        %3640 = vxpose.xlu0.c.b16.cont [5/8] 0, 128
        %3641 = vxpose.xlu0.c.b16.cont [6/8] 0, 128
        %3642 = vxpose.xlu0.c.b16.cont [7/8] 0, 128
        %3643 = vxpose.xlu0.c.b16.end [8/8] 0, 128
        %v3644 = vpop.trf.xlu0
        %v3645 = vpop.trf.xlu0
        %v3646 = vpop.trf.xlu0
        %v3647 = vpop.trf.xlu0
        %v3648 = vpop.trf.xlu0
        %v3649 = vpop.trf.xlu0
        %v3650 = vpop.trf.xlu0
        %v3651 = vpop.trf.xlu0
        %v3653 = vsel %vm1802, %v3644, 0
        %v3656 = vsel %vm1806, %v1779, 0
        %3658 = vmatprep.subr.bf16.mxu0 0
        %3659 = vmatpush1.bf16.msra.mxu0 0
        %3660 = vmatprep.subr.bf16.mxu0 0
        %3661 = vmatpush1.bf16.msra.mxu0 0
        %3662 = vmatprep.subr.bf16.mxu0 0
        %3663 = vmatpush1.bf16.msra.mxu0 0
        %3664 = vmatprep.subr.bf16.mxu0 0
        %3665 = vmatpush1.bf16.msra.mxu0 0
        %3666 = vmatprep.subr.bf16.mxu0 0
        %3667 = vmatpush1.bf16.msra.mxu0 0
        %3668 = vmatprep.subr.bf16.mxu0 0
        %3669 = vmatpush1.bf16.msra.mxu0 0
        %3670 = vmatprep.subr.bf16.mxu0 0
        %3671 = vmatpush1.bf16.msra.mxu0 0
        %3672 = vmatprep.subr.bf16.mxu0 0
        %3673 = vmatpush1.bf16.msra.mxu0 %v3656
        %3674 = vmatprep.subr.bf16.mxu0 0
        %3675 = vmatpush2.bf16.msra.mxu0 0
        %3676 = vmatprep.subr.bf16.mxu0 0
        %3677 = vmatpush2.bf16.msra.mxu0 0
        %3678 = vmatprep.subr.bf16.mxu0 0
        %3679 = vmatpush2.bf16.msra.mxu0 0
        %3680 = vmatprep.subr.bf16.mxu0 0
        %3681 = vmatpush2.bf16.msra.mxu0 0
        %3682 = vmatprep.subr.bf16.mxu0 0
        %3683 = vmatpush2.bf16.msra.mxu0 0
        %3684 = vmatprep.subr.bf16.mxu0 0
        %3685 = vmatpush2.bf16.msra.mxu0 0
        %3686 = vmatprep.subr.bf16.mxu0 0
        %3687 = vmatpush2.bf16.msra.mxu0 0
        %3688 = vmatprep.subr.bf16.mxu0 0
        %3689 = vmatpush2.bf16.msra.mxu0 0
        %3690 = vmatprep.mubr.bf16.mxu0 0
        %3691 = vmatmul.mubr.bf16.gmra.mxu0 %v3653
        %v3692 = vpop.f32.mrf.mxu0
        %v3693 = vadd.f32 0.0, %v3692
        %v3694 = vpop.f32.mrf.mxu0
        %v3695 = vpop.f32.mrf.mxu0
        %v3696 = vadd.f32 0.0, %v3695
        %v3697 = vpop.f32.mrf.mxu0
        %3698 = vdwg.mxu0
        %v3700 = vrot.slane %v1716, 2
        %3702 = vxpose.xlu0.c.b16.start [1/8] %v3700, 128
        %3703 = vxpose.xlu0.c.b16.cont [2/8] 0, 128
        %3704 = vxpose.xlu0.c.b16.cont [3/8] 0, 128
        %3705 = vxpose.xlu0.c.b16.cont [4/8] 0, 128
        %3706 = vxpose.xlu0.c.b16.cont [5/8] 0, 128
        %3707 = vxpose.xlu0.c.b16.cont [6/8] 0, 128
        %3708 = vxpose.xlu0.c.b16.cont [7/8] 0, 128
        %3709 = vxpose.xlu0.c.b16.end [8/8] 0, 128
        %v3710 = vpop.trf.xlu0
        %v3711 = vpop.trf.xlu0
        %v3712 = vpop.trf.xlu0
        %v3713 = vpop.trf.xlu0
        %v3714 = vpop.trf.xlu0
        %v3715 = vpop.trf.xlu0
        %v3716 = vpop.trf.xlu0
        %v3717 = vpop.trf.xlu0
        %v3719 = vsel %vm1802, %v3710, 0
        %v3722 = vsel %vm1806, %v1780, 0
        %3724 = vmatprep.subr.bf16.mxu0 0
        %3725 = vmatpush1.bf16.msra.mxu0 0
        %3726 = vmatprep.subr.bf16.mxu0 0
        %3727 = vmatpush1.bf16.msra.mxu0 0
        %3728 = vmatprep.subr.bf16.mxu0 0
        %3729 = vmatpush1.bf16.msra.mxu0 0
        %3730 = vmatprep.subr.bf16.mxu0 0
        %3731 = vmatpush1.bf16.msra.mxu0 0
        %3732 = vmatprep.subr.bf16.mxu0 0
        %3733 = vmatpush1.bf16.msra.mxu0 0
        %3734 = vmatprep.subr.bf16.mxu0 0
        %3735 = vmatpush1.bf16.msra.mxu0 0
        %3736 = vmatprep.subr.bf16.mxu0 0
        %3737 = vmatpush1.bf16.msra.mxu0 0
        %3738 = vmatprep.subr.bf16.mxu0 0
        %3739 = vmatpush1.bf16.msra.mxu0 %v3722
        %3740 = vmatprep.subr.bf16.mxu0 0
        %3741 = vmatpush2.bf16.msra.mxu0 0
        %3742 = vmatprep.subr.bf16.mxu0 0
        %3743 = vmatpush2.bf16.msra.mxu0 0
        %3744 = vmatprep.subr.bf16.mxu0 0
        %3745 = vmatpush2.bf16.msra.mxu0 0
        %3746 = vmatprep.subr.bf16.mxu0 0
        %3747 = vmatpush2.bf16.msra.mxu0 0
        %3748 = vmatprep.subr.bf16.mxu0 0
        %3749 = vmatpush2.bf16.msra.mxu0 0
        %3750 = vmatprep.subr.bf16.mxu0 0
        %3751 = vmatpush2.bf16.msra.mxu0 0
        %3752 = vmatprep.subr.bf16.mxu0 0
        %3753 = vmatpush2.bf16.msra.mxu0 0
        %3754 = vmatprep.subr.bf16.mxu0 0
        %3755 = vmatpush2.bf16.msra.mxu0 0
        %3756 = vmatprep.mubr.bf16.mxu0 0
        %3757 = vmatmul.mubr.bf16.gmra.mxu0 %v3719
        %v3758 = vpop.f32.mrf.mxu0
        %v3759 = vadd.f32 0.0, %v3758
        %v3760 = vpop.f32.mrf.mxu0
        %v3761 = vpop.f32.mrf.mxu0
        %v3762 = vadd.f32 0.0, %v3761
        %v3763 = vpop.f32.mrf.mxu0
        %3764 = vdwg.mxu0
        %v3766 = vrot.slane %v1717, 2
        %3768 = vxpose.xlu0.c.b16.start [1/8] %v3766, 128
        %3769 = vxpose.xlu0.c.b16.cont [2/8] 0, 128
        %3770 = vxpose.xlu0.c.b16.cont [3/8] 0, 128
        %3771 = vxpose.xlu0.c.b16.cont [4/8] 0, 128
        %3772 = vxpose.xlu0.c.b16.cont [5/8] 0, 128
        %3773 = vxpose.xlu0.c.b16.cont [6/8] 0, 128
        %3774 = vxpose.xlu0.c.b16.cont [7/8] 0, 128
        %3775 = vxpose.xlu0.c.b16.end [8/8] 0, 128
        %v3776 = vpop.trf.xlu0
        %v3777 = vpop.trf.xlu0
        %v3778 = vpop.trf.xlu0
        %v3779 = vpop.trf.xlu0
        %v3780 = vpop.trf.xlu0
        %v3781 = vpop.trf.xlu0
        %v3782 = vpop.trf.xlu0
        %v3783 = vpop.trf.xlu0
        %v3785 = vsel %vm1802, %v3776, 0
        %v3788 = vsel %vm1806, %v1781, 0
        %3790 = vmatprep.subr.bf16.mxu0 0
        %3791 = vmatpush1.bf16.msra.mxu0 0
        %3792 = vmatprep.subr.bf16.mxu0 0
        %3793 = vmatpush1.bf16.msra.mxu0 0
        %3794 = vmatprep.subr.bf16.mxu0 0
        %3795 = vmatpush1.bf16.msra.mxu0 0
        %3796 = vmatprep.subr.bf16.mxu0 0
        %3797 = vmatpush1.bf16.msra.mxu0 0
        %3798 = vmatprep.subr.bf16.mxu0 0
        %3799 = vmatpush1.bf16.msra.mxu0 0
        %3800 = vmatprep.subr.bf16.mxu0 0
        %3801 = vmatpush1.bf16.msra.mxu0 0
        %3802 = vmatprep.subr.bf16.mxu0 0
        %3803 = vmatpush1.bf16.msra.mxu0 0
        %3804 = vmatprep.subr.bf16.mxu0 0
        %3805 = vmatpush1.bf16.msra.mxu0 %v3788
        %3806 = vmatprep.subr.bf16.mxu0 0
        %3807 = vmatpush2.bf16.msra.mxu0 0
        %3808 = vmatprep.subr.bf16.mxu0 0
        %3809 = vmatpush2.bf16.msra.mxu0 0
        %3810 = vmatprep.subr.bf16.mxu0 0
        %3811 = vmatpush2.bf16.msra.mxu0 0
        %3812 = vmatprep.subr.bf16.mxu0 0
        %3813 = vmatpush2.bf16.msra.mxu0 0
        %3814 = vmatprep.subr.bf16.mxu0 0
        %3815 = vmatpush2.bf16.msra.mxu0 0
        %3816 = vmatprep.subr.bf16.mxu0 0
        %3817 = vmatpush2.bf16.msra.mxu0 0
        %3818 = vmatprep.subr.bf16.mxu0 0
        %3819 = vmatpush2.bf16.msra.mxu0 0
        %3820 = vmatprep.subr.bf16.mxu0 0
        %3821 = vmatpush2.bf16.msra.mxu0 0
        %3822 = vmatprep.mubr.bf16.mxu0 0
        %3823 = vmatmul.mubr.bf16.gmra.mxu0 %v3785
        %v3824 = vpop.f32.mrf.mxu0
        %v3825 = vadd.f32 0.0, %v3824
        %v3826 = vpop.f32.mrf.mxu0
        %v3827 = vpop.f32.mrf.mxu0
        %v3828 = vadd.f32 0.0, %v3827
        %v3829 = vpop.f32.mrf.mxu0
        %3830 = vdwg.mxu0
        %v3832 = vrot.slane %v1718, 2
        %3834 = vxpose.xlu0.c.b16.start [1/8] %v3832, 128
        %3835 = vxpose.xlu0.c.b16.cont [2/8] 0, 128
        %3836 = vxpose.xlu0.c.b16.cont [3/8] 0, 128
        %3837 = vxpose.xlu0.c.b16.cont [4/8] 0, 128
        %3838 = vxpose.xlu0.c.b16.cont [5/8] 0, 128
        %3839 = vxpose.xlu0.c.b16.cont [6/8] 0, 128
        %3840 = vxpose.xlu0.c.b16.cont [7/8] 0, 128
        %3841 = vxpose.xlu0.c.b16.end [8/8] 0, 128
        %v3842 = vpop.trf.xlu0
        %v3843 = vpop.trf.xlu0
        %v3844 = vpop.trf.xlu0
        %v3845 = vpop.trf.xlu0
        %v3846 = vpop.trf.xlu0
        %v3847 = vpop.trf.xlu0
        %v3848 = vpop.trf.xlu0
        %v3849 = vpop.trf.xlu0
        %v3851 = vsel %vm1802, %v3842, 0
        %v3854 = vsel %vm1806, %v1782, 0
        %3856 = vmatprep.subr.bf16.mxu0 0
        %3857 = vmatpush1.bf16.msra.mxu0 0
        %3858 = vmatprep.subr.bf16.mxu0 0
        %3859 = vmatpush1.bf16.msra.mxu0 0
        %3860 = vmatprep.subr.bf16.mxu0 0
        %3861 = vmatpush1.bf16.msra.mxu0 0
        %3862 = vmatprep.subr.bf16.mxu0 0
        %3863 = vmatpush1.bf16.msra.mxu0 0
        %3864 = vmatprep.subr.bf16.mxu0 0
        %3865 = vmatpush1.bf16.msra.mxu0 0
        %3866 = vmatprep.subr.bf16.mxu0 0
        %3867 = vmatpush1.bf16.msra.mxu0 0
        %3868 = vmatprep.subr.bf16.mxu0 0
        %3869 = vmatpush1.bf16.msra.mxu0 0
        %3870 = vmatprep.subr.bf16.mxu0 0
        %3871 = vmatpush1.bf16.msra.mxu0 %v3854
        %3872 = vmatprep.subr.bf16.mxu0 0
        %3873 = vmatpush2.bf16.msra.mxu0 0
        %3874 = vmatprep.subr.bf16.mxu0 0
        %3875 = vmatpush2.bf16.msra.mxu0 0
        %3876 = vmatprep.subr.bf16.mxu0 0
        %3877 = vmatpush2.bf16.msra.mxu0 0
        %3878 = vmatprep.subr.bf16.mxu0 0
        %3879 = vmatpush2.bf16.msra.mxu0 0
        %3880 = vmatprep.subr.bf16.mxu0 0
        %3881 = vmatpush2.bf16.msra.mxu0 0
        %3882 = vmatprep.subr.bf16.mxu0 0
        %3883 = vmatpush2.bf16.msra.mxu0 0
        %3884 = vmatprep.subr.bf16.mxu0 0
        %3885 = vmatpush2.bf16.msra.mxu0 0
        %3886 = vmatprep.subr.bf16.mxu0 0
        %3887 = vmatpush2.bf16.msra.mxu0 0
        %3888 = vmatprep.mubr.bf16.mxu0 0
        %3889 = vmatmul.mubr.bf16.gmra.mxu0 %v3851
        %v3890 = vpop.f32.mrf.mxu0
        %v3891 = vadd.f32 0.0, %v3890
        %v3892 = vpop.f32.mrf.mxu0
        %v3893 = vpop.f32.mrf.mxu0
        %v3894 = vadd.f32 0.0, %v3893
        %v3895 = vpop.f32.mrf.mxu0
        %3896 = vdwg.mxu0
        %vm3897 = vcmask 523264
        %v3898 = vsel %vm3897, %v1845, -inf
        %v3899 = vsel %vm3897, %v1848, -inf
        %v3900 = vmax.f32 %v3898, %v3899
        %v3901 = vrot.slane %v3900, 4
        %v3902 = vmax.f32 %v3900, %v3901
        %v3903 = vrot.slane %v3902, 2
        %v3904 = vmax.f32 %v3902, %v3903
        %v3905 = vrot.slane %v3904, 1
        %v3906 = vmax.f32 %v3904, %v3905
        %v3907 = vsel %vm3897, %v1911, -inf
        %v3908 = vsel %vm3897, %v1914, -inf
        %v3909 = vmax.f32 %v3907, %v3908
        %v3910 = vrot.slane %v3909, 4
        %v3911 = vmax.f32 %v3909, %v3910
        %v3912 = vrot.slane %v3911, 2
        %v3913 = vmax.f32 %v3911, %v3912
        %v3914 = vrot.slane %v3913, 1
        %v3915 = vmax.f32 %v3913, %v3914
        %v3916 = vsel %vm3897, %v1977, -inf
        %v3917 = vsel %vm3897, %v1980, -inf
        %v3918 = vmax.f32 %v3916, %v3917
        %v3919 = vrot.slane %v3918, 4
        %v3920 = vmax.f32 %v3918, %v3919
        %v3921 = vrot.slane %v3920, 2
        %v3922 = vmax.f32 %v3920, %v3921
        %v3923 = vrot.slane %v3922, 1
        %v3924 = vmax.f32 %v3922, %v3923
        %v3925 = vsel %vm3897, %v2043, -inf
        %v3926 = vsel %vm3897, %v2046, -inf
        %v3927 = vmax.f32 %v3925, %v3926
        %v3928 = vrot.slane %v3927, 4
        %v3929 = vmax.f32 %v3927, %v3928
        %v3930 = vrot.slane %v3929, 2
        %v3931 = vmax.f32 %v3929, %v3930
        %v3932 = vrot.slane %v3931, 1
        %v3933 = vmax.f32 %v3931, %v3932
        %v3934 = vsel %vm3897, %v2109, -inf
        %v3935 = vsel %vm3897, %v2112, -inf
        %v3936 = vmax.f32 %v3934, %v3935
        %v3937 = vrot.slane %v3936, 4
        %v3938 = vmax.f32 %v3936, %v3937
        %v3939 = vrot.slane %v3938, 2
        %v3940 = vmax.f32 %v3938, %v3939
        %v3941 = vrot.slane %v3940, 1
        %v3942 = vmax.f32 %v3940, %v3941
        %v3943 = vsel %vm3897, %v2175, -inf
        %v3944 = vsel %vm3897, %v2178, -inf
        %v3945 = vmax.f32 %v3943, %v3944
        %v3946 = vrot.slane %v3945, 4
        %v3947 = vmax.f32 %v3945, %v3946
        %v3948 = vrot.slane %v3947, 2
        %v3949 = vmax.f32 %v3947, %v3948
        %v3950 = vrot.slane %v3949, 1
        %v3951 = vmax.f32 %v3949, %v3950
        %v3952 = vsel %vm3897, %v2241, -inf
        %v3953 = vsel %vm3897, %v2244, -inf
        %v3954 = vmax.f32 %v3952, %v3953
        %v3955 = vrot.slane %v3954, 4
        %v3956 = vmax.f32 %v3954, %v3955
        %v3957 = vrot.slane %v3956, 2
        %v3958 = vmax.f32 %v3956, %v3957
        %v3959 = vrot.slane %v3958, 1
        %v3960 = vmax.f32 %v3958, %v3959
        %v3961 = vsel %vm3897, %v2307, -inf
        %v3962 = vsel %vm3897, %v2310, -inf
        %v3963 = vmax.f32 %v3961, %v3962
        %v3964 = vrot.slane %v3963, 4
        %v3965 = vmax.f32 %v3963, %v3964
        %v3966 = vrot.slane %v3965, 2
        %v3967 = vmax.f32 %v3965, %v3966
        %v3968 = vrot.slane %v3967, 1
        %v3969 = vmax.f32 %v3967, %v3968
        %v3970 = vsel %vm3897, %v2373, -inf
        %v3971 = vsel %vm3897, %v2376, -inf
        %v3972 = vmax.f32 %v3970, %v3971
        %v3973 = vrot.slane %v3972, 4
        %v3974 = vmax.f32 %v3972, %v3973
        %v3975 = vrot.slane %v3974, 2
        %v3976 = vmax.f32 %v3974, %v3975
        %v3977 = vrot.slane %v3976, 1
        %v3978 = vmax.f32 %v3976, %v3977
        %v3979 = vsel %vm3897, %v2439, -inf
        %v3980 = vsel %vm3897, %v2442, -inf
        %v3981 = vmax.f32 %v3979, %v3980
        %v3982 = vrot.slane %v3981, 4
        %v3983 = vmax.f32 %v3981, %v3982
        %v3984 = vrot.slane %v3983, 2
        %v3985 = vmax.f32 %v3983, %v3984
        %v3986 = vrot.slane %v3985, 1
        %v3987 = vmax.f32 %v3985, %v3986
        %v3988 = vsel %vm3897, %v2505, -inf
        %v3989 = vsel %vm3897, %v2508, -inf
        %v3990 = vmax.f32 %v3988, %v3989
        %v3991 = vrot.slane %v3990, 4
        %v3992 = vmax.f32 %v3990, %v3991
        %v3993 = vrot.slane %v3992, 2
        %v3994 = vmax.f32 %v3992, %v3993
        %v3995 = vrot.slane %v3994, 1
        %v3996 = vmax.f32 %v3994, %v3995
        %v3997 = vsel %vm3897, %v2571, -inf
        %v3998 = vsel %vm3897, %v2574, -inf
        %v3999 = vmax.f32 %v3997, %v3998
        %v4000 = vrot.slane %v3999, 4
        %v4001 = vmax.f32 %v3999, %v4000
        %v4002 = vrot.slane %v4001, 2
        %v4003 = vmax.f32 %v4001, %v4002
        %v4004 = vrot.slane %v4003, 1
        %v4005 = vmax.f32 %v4003, %v4004
        %v4006 = vsel %vm3897, %v2637, -inf
        %v4007 = vsel %vm3897, %v2640, -inf
        %v4008 = vmax.f32 %v4006, %v4007
        %v4009 = vrot.slane %v4008, 4
        %v4010 = vmax.f32 %v4008, %v4009
        %v4011 = vrot.slane %v4010, 2
        %v4012 = vmax.f32 %v4010, %v4011
        %v4013 = vrot.slane %v4012, 1
        %v4014 = vmax.f32 %v4012, %v4013
        %v4015 = vsel %vm3897, %v2703, -inf
        %v4016 = vsel %vm3897, %v2706, -inf
        %v4017 = vmax.f32 %v4015, %v4016
        %v4018 = vrot.slane %v4017, 4
        %v4019 = vmax.f32 %v4017, %v4018
        %v4020 = vrot.slane %v4019, 2
        %v4021 = vmax.f32 %v4019, %v4020
        %v4022 = vrot.slane %v4021, 1
        %v4023 = vmax.f32 %v4021, %v4022
        %v4024 = vsel %vm3897, %v2769, -inf
        %v4025 = vsel %vm3897, %v2772, -inf
        %v4026 = vmax.f32 %v4024, %v4025
        %v4027 = vrot.slane %v4026, 4
        %v4028 = vmax.f32 %v4026, %v4027
        %v4029 = vrot.slane %v4028, 2
        %v4030 = vmax.f32 %v4028, %v4029
        %v4031 = vrot.slane %v4030, 1
        %v4032 = vmax.f32 %v4030, %v4031
        %v4033 = vsel %vm3897, %v2835, -inf
        %v4034 = vsel %vm3897, %v2838, -inf
        %v4035 = vmax.f32 %v4033, %v4034
        %v4036 = vrot.slane %v4035, 4
        %v4037 = vmax.f32 %v4035, %v4036
        %v4038 = vrot.slane %v4037, 2
        %v4039 = vmax.f32 %v4037, %v4038
        %v4040 = vrot.slane %v4039, 1
        %v4041 = vmax.f32 %v4039, %v4040
        %v4042 = vsel %vm3897, %v2901, -inf
        %v4043 = vsel %vm3897, %v2904, -inf
        %v4044 = vmax.f32 %v4042, %v4043
        %v4045 = vrot.slane %v4044, 4
        %v4046 = vmax.f32 %v4044, %v4045
        %v4047 = vrot.slane %v4046, 2
        %v4048 = vmax.f32 %v4046, %v4047
        %v4049 = vrot.slane %v4048, 1
        %v4050 = vmax.f32 %v4048, %v4049
        %v4051 = vsel %vm3897, %v2967, -inf
        %v4052 = vsel %vm3897, %v2970, -inf
        %v4053 = vmax.f32 %v4051, %v4052
        %v4054 = vrot.slane %v4053, 4
        %v4055 = vmax.f32 %v4053, %v4054
        %v4056 = vrot.slane %v4055, 2
        %v4057 = vmax.f32 %v4055, %v4056
        %v4058 = vrot.slane %v4057, 1
        %v4059 = vmax.f32 %v4057, %v4058
        %v4060 = vsel %vm3897, %v3033, -inf
        %v4061 = vsel %vm3897, %v3036, -inf
        %v4062 = vmax.f32 %v4060, %v4061
        %v4063 = vrot.slane %v4062, 4
        %v4064 = vmax.f32 %v4062, %v4063
        %v4065 = vrot.slane %v4064, 2
        %v4066 = vmax.f32 %v4064, %v4065
        %v4067 = vrot.slane %v4066, 1
        %v4068 = vmax.f32 %v4066, %v4067
        %v4069 = vsel %vm3897, %v3099, -inf
        %v4070 = vsel %vm3897, %v3102, -inf
        %v4071 = vmax.f32 %v4069, %v4070
        %v4072 = vrot.slane %v4071, 4
        %v4073 = vmax.f32 %v4071, %v4072
        %v4074 = vrot.slane %v4073, 2
        %v4075 = vmax.f32 %v4073, %v4074
        %v4076 = vrot.slane %v4075, 1
        %v4077 = vmax.f32 %v4075, %v4076
        %v4078 = vsel %vm3897, %v3165, -inf
        %v4079 = vsel %vm3897, %v3168, -inf
        %v4080 = vmax.f32 %v4078, %v4079
        %v4081 = vrot.slane %v4080, 4
        %v4082 = vmax.f32 %v4080, %v4081
        %v4083 = vrot.slane %v4082, 2
        %v4084 = vmax.f32 %v4082, %v4083
        %v4085 = vrot.slane %v4084, 1
        %v4086 = vmax.f32 %v4084, %v4085
        %v4087 = vsel %vm3897, %v3231, -inf
        %v4088 = vsel %vm3897, %v3234, -inf
        %v4089 = vmax.f32 %v4087, %v4088
        %v4090 = vrot.slane %v4089, 4
        %v4091 = vmax.f32 %v4089, %v4090
        %v4092 = vrot.slane %v4091, 2
        %v4093 = vmax.f32 %v4091, %v4092
        %v4094 = vrot.slane %v4093, 1
        %v4095 = vmax.f32 %v4093, %v4094
        %v4096 = vsel %vm3897, %v3297, -inf
        %v4097 = vsel %vm3897, %v3300, -inf
        %v4098 = vmax.f32 %v4096, %v4097
        %v4099 = vrot.slane %v4098, 4
        %v4100 = vmax.f32 %v4098, %v4099
        %v4101 = vrot.slane %v4100, 2
        %v4102 = vmax.f32 %v4100, %v4101
        %v4103 = vrot.slane %v4102, 1
        %v4104 = vmax.f32 %v4102, %v4103
        %v4105 = vsel %vm3897, %v3363, -inf
        %v4106 = vsel %vm3897, %v3366, -inf
        %v4107 = vmax.f32 %v4105, %v4106
        %v4108 = vrot.slane %v4107, 4
        %v4109 = vmax.f32 %v4107, %v4108
        %v4110 = vrot.slane %v4109, 2
        %v4111 = vmax.f32 %v4109, %v4110
        %v4112 = vrot.slane %v4111, 1
        %v4113 = vmax.f32 %v4111, %v4112
        %v4114 = vsel %vm3897, %v3429, -inf
        %v4115 = vsel %vm3897, %v3432, -inf
        %v4116 = vmax.f32 %v4114, %v4115
        %v4117 = vrot.slane %v4116, 4
        %v4118 = vmax.f32 %v4116, %v4117
        %v4119 = vrot.slane %v4118, 2
        %v4120 = vmax.f32 %v4118, %v4119
        %v4121 = vrot.slane %v4120, 1
        %v4122 = vmax.f32 %v4120, %v4121
        %v4123 = vsel %vm3897, %v3495, -inf
        %v4124 = vsel %vm3897, %v3498, -inf
        %v4125 = vmax.f32 %v4123, %v4124
        %v4126 = vrot.slane %v4125, 4
        %v4127 = vmax.f32 %v4125, %v4126
        %v4128 = vrot.slane %v4127, 2
        %v4129 = vmax.f32 %v4127, %v4128
        %v4130 = vrot.slane %v4129, 1
        %v4131 = vmax.f32 %v4129, %v4130
        %v4132 = vsel %vm3897, %v3561, -inf
        %v4133 = vsel %vm3897, %v3564, -inf
        %v4134 = vmax.f32 %v4132, %v4133
        %v4135 = vrot.slane %v4134, 4
        %v4136 = vmax.f32 %v4134, %v4135
        %v4137 = vrot.slane %v4136, 2
        %v4138 = vmax.f32 %v4136, %v4137
        %v4139 = vrot.slane %v4138, 1
        %v4140 = vmax.f32 %v4138, %v4139
        %v4141 = vsel %vm3897, %v3627, -inf
        %v4142 = vsel %vm3897, %v3630, -inf
        %v4143 = vmax.f32 %v4141, %v4142
        %v4144 = vrot.slane %v4143, 4
        %v4145 = vmax.f32 %v4143, %v4144
        %v4146 = vrot.slane %v4145, 2
        %v4147 = vmax.f32 %v4145, %v4146
        %v4148 = vrot.slane %v4147, 1
        %v4149 = vmax.f32 %v4147, %v4148
        %v4150 = vsel %vm3897, %v3693, -inf
        %v4151 = vsel %vm3897, %v3696, -inf
        %v4152 = vmax.f32 %v4150, %v4151
        %v4153 = vrot.slane %v4152, 4
        %v4154 = vmax.f32 %v4152, %v4153
        %v4155 = vrot.slane %v4154, 2
        %v4156 = vmax.f32 %v4154, %v4155
        %v4157 = vrot.slane %v4156, 1
        %v4158 = vmax.f32 %v4156, %v4157
        %v4159 = vsel %vm3897, %v3759, -inf
        %v4160 = vsel %vm3897, %v3762, -inf
        %v4161 = vmax.f32 %v4159, %v4160
        %v4162 = vrot.slane %v4161, 4
        %v4163 = vmax.f32 %v4161, %v4162
        %v4164 = vrot.slane %v4163, 2
        %v4165 = vmax.f32 %v4163, %v4164
        %v4166 = vrot.slane %v4165, 1
        %v4167 = vmax.f32 %v4165, %v4166
        %v4168 = vsel %vm3897, %v3825, -inf
        %v4169 = vsel %vm3897, %v3828, -inf
        %v4170 = vmax.f32 %v4168, %v4169
        %v4171 = vrot.slane %v4170, 4
        %v4172 = vmax.f32 %v4170, %v4171
        %v4173 = vrot.slane %v4172, 2
        %v4174 = vmax.f32 %v4172, %v4173
        %v4175 = vrot.slane %v4174, 1
        %v4176 = vmax.f32 %v4174, %v4175
        %v4177 = vsel %vm3897, %v3891, -inf
        %v4178 = vsel %vm3897, %v3894, -inf
        %v4179 = vmax.f32 %v4177, %v4178
        %v4180 = vrot.slane %v4179, 4
        %v4181 = vmax.f32 %v4179, %v4180
        %v4182 = vrot.slane %v4181, 2
        %v4183 = vmax.f32 %v4181, %v4182
        %v4184 = vrot.slane %v4183, 1
        %v4185 = vmax.f32 %v4183, %v4184
        %v4186 = vsub.f32 %v1845, %v3906
        %v4187 = vsub.f32 %v1848, %v3906
        %v4188 = vsub.f32 %v1911, %v3915
        %v4189 = vsub.f32 %v1914, %v3915
        %v4190 = vsub.f32 %v1977, %v3924
        %v4191 = vsub.f32 %v1980, %v3924
        %v4192 = vsub.f32 %v2043, %v3933
        %v4193 = vsub.f32 %v2046, %v3933
        %v4194 = vsub.f32 %v2109, %v3942
        %v4195 = vsub.f32 %v2112, %v3942
        %v4196 = vsub.f32 %v2175, %v3951
        %v4197 = vsub.f32 %v2178, %v3951
        %v4198 = vsub.f32 %v2241, %v3960
        %v4199 = vsub.f32 %v2244, %v3960
        %v4200 = vsub.f32 %v2307, %v3969
        %v4201 = vsub.f32 %v2310, %v3969
        %v4202 = vsub.f32 %v2373, %v3978
        %v4203 = vsub.f32 %v2376, %v3978
        %v4204 = vsub.f32 %v2439, %v3987
        %v4205 = vsub.f32 %v2442, %v3987
        %v4206 = vsub.f32 %v2505, %v3996
        %v4207 = vsub.f32 %v2508, %v3996
        %v4208 = vsub.f32 %v2571, %v4005
        %v4209 = vsub.f32 %v2574, %v4005
        %v4210 = vsub.f32 %v2637, %v4014
        %v4211 = vsub.f32 %v2640, %v4014
        %v4212 = vsub.f32 %v2703, %v4023
        %v4213 = vsub.f32 %v2706, %v4023
        %v4214 = vsub.f32 %v2769, %v4032
        %v4215 = vsub.f32 %v2772, %v4032
        %v4216 = vsub.f32 %v2835, %v4041
        %v4217 = vsub.f32 %v2838, %v4041
        %v4218 = vsub.f32 %v2901, %v4050
        %v4219 = vsub.f32 %v2904, %v4050
        %v4220 = vsub.f32 %v2967, %v4059
        %v4221 = vsub.f32 %v2970, %v4059
        %v4222 = vsub.f32 %v3033, %v4068
        %v4223 = vsub.f32 %v3036, %v4068
        %v4224 = vsub.f32 %v3099, %v4077
        %v4225 = vsub.f32 %v3102, %v4077
        %v4226 = vsub.f32 %v3165, %v4086
        %v4227 = vsub.f32 %v3168, %v4086
        %v4228 = vsub.f32 %v3231, %v4095
        %v4229 = vsub.f32 %v3234, %v4095
        %v4230 = vsub.f32 %v3297, %v4104
        %v4231 = vsub.f32 %v3300, %v4104
        %v4232 = vsub.f32 %v3363, %v4113
        %v4233 = vsub.f32 %v3366, %v4113
        %v4234 = vsub.f32 %v3429, %v4122
        %v4235 = vsub.f32 %v3432, %v4122
        %v4236 = vsub.f32 %v3495, %v4131
        %v4237 = vsub.f32 %v3498, %v4131
        %v4238 = vsub.f32 %v3561, %v4140
        %v4239 = vsub.f32 %v3564, %v4140
        %v4240 = vsub.f32 %v3627, %v4149
        %v4241 = vsub.f32 %v3630, %v4149
        %v4242 = vsub.f32 %v3693, %v4158
        %v4243 = vsub.f32 %v3696, %v4158
        %v4244 = vsub.f32 %v3759, %v4167
        %v4245 = vsub.f32 %v3762, %v4167
        %v4246 = vsub.f32 %v3825, %v4176
        %v4247 = vsub.f32 %v3828, %v4176
        %v4248 = vsub.f32 %v3891, %v4185
        %v4249 = vsub.f32 %v3894, %v4185
        %v4250 = vmul.f32 %v4186, 1.442695
        %v4251 = vpow.pop %v4250
        %v4252 = vmul.f32 %v4187, 1.442695
        %v4253 = vpow.pop %v4252
        %v4254 = vmul.f32 %v4188, 1.442695
        %v4255 = vpow.pop %v4254
        %v4256 = vmul.f32 %v4189, 1.442695
        %v4257 = vpow.pop %v4256
        %v4258 = vmul.f32 %v4190, 1.442695
        %v4259 = vpow.pop %v4258
        %v4260 = vmul.f32 %v4191, 1.442695
        %v4261 = vpow.pop %v4260
        %v4262 = vmul.f32 %v4192, 1.442695
        %v4263 = vpow.pop %v4262
        %v4264 = vmul.f32 %v4193, 1.442695
        %v4265 = vpow.pop %v4264
        %v4266 = vmul.f32 %v4194, 1.442695
        %v4267 = vpow.pop %v4266
        %v4268 = vmul.f32 %v4195, 1.442695
        %v4269 = vpow.pop %v4268
        %v4270 = vmul.f32 %v4196, 1.442695
        %v4271 = vpow.pop %v4270
        %v4272 = vmul.f32 %v4197, 1.442695
        %v4273 = vpow.pop %v4272
        %v4274 = vmul.f32 %v4198, 1.442695
        %v4275 = vpow.pop %v4274
        %v4276 = vmul.f32 %v4199, 1.442695
        %v4277 = vpow.pop %v4276
        %v4278 = vmul.f32 %v4200, 1.442695
        %v4279 = vpow.pop %v4278
        %v4280 = vmul.f32 %v4201, 1.442695
        %v4281 = vpow.pop %v4280
        %v4282 = vmul.f32 %v4202, 1.442695
        %v4283 = vpow.pop %v4282
        %v4284 = vmul.f32 %v4203, 1.442695
        %v4285 = vpow.pop %v4284
        %v4286 = vmul.f32 %v4204, 1.442695
        %v4287 = vpow.pop %v4286
        %v4288 = vmul.f32 %v4205, 1.442695
        %v4289 = vpow.pop %v4288
        %v4290 = vmul.f32 %v4206, 1.442695
        %v4291 = vpow.pop %v4290
        %v4292 = vmul.f32 %v4207, 1.442695
        %v4293 = vpow.pop %v4292
        %v4294 = vmul.f32 %v4208, 1.442695
        %v4295 = vpow.pop %v4294
        %v4296 = vmul.f32 %v4209, 1.442695
        %v4297 = vpow.pop %v4296
        %v4298 = vmul.f32 %v4210, 1.442695
        %v4299 = vpow.pop %v4298
        %v4300 = vmul.f32 %v4211, 1.442695
        %v4301 = vpow.pop %v4300
        %v4302 = vmul.f32 %v4212, 1.442695
        %v4303 = vpow.pop %v4302
        %v4304 = vmul.f32 %v4213, 1.442695
        %v4305 = vpow.pop %v4304
        %v4306 = vmul.f32 %v4214, 1.442695
        %v4307 = vpow.pop %v4306
        %v4308 = vmul.f32 %v4215, 1.442695
        %v4309 = vpow.pop %v4308
        %v4310 = vmul.f32 %v4216, 1.442695
        %v4311 = vpow.pop %v4310
        %v4312 = vmul.f32 %v4217, 1.442695
        %v4313 = vpow.pop %v4312
        %v4314 = vmul.f32 %v4218, 1.442695
        %v4315 = vpow.pop %v4314
        %v4316 = vmul.f32 %v4219, 1.442695
        %v4317 = vpow.pop %v4316
        %v4318 = vmul.f32 %v4220, 1.442695
        %v4319 = vpow.pop %v4318
        %v4320 = vmul.f32 %v4221, 1.442695
        %v4321 = vpow.pop %v4320
        %v4322 = vmul.f32 %v4222, 1.442695
        %v4323 = vpow.pop %v4322
        %v4324 = vmul.f32 %v4223, 1.442695
        %v4325 = vpow.pop %v4324
        %v4326 = vmul.f32 %v4224, 1.442695
        %v4327 = vpow.pop %v4326
        %v4328 = vmul.f32 %v4225, 1.442695
        %v4329 = vpow.pop %v4328
        %v4330 = vmul.f32 %v4226, 1.442695
        %v4331 = vpow.pop %v4330
        %v4332 = vmul.f32 %v4227, 1.442695
        %v4333 = vpow.pop %v4332
        %v4334 = vmul.f32 %v4228, 1.442695
        %v4335 = vpow.pop %v4334
        %v4336 = vmul.f32 %v4229, 1.442695
        %v4337 = vpow.pop %v4336
        %v4338 = vmul.f32 %v4230, 1.442695
        %v4339 = vpow.pop %v4338
        %v4340 = vmul.f32 %v4231, 1.442695
        %v4341 = vpow.pop %v4340
        %v4342 = vmul.f32 %v4232, 1.442695
        %v4343 = vpow.pop %v4342
        %v4344 = vmul.f32 %v4233, 1.442695
        %v4345 = vpow.pop %v4344
        %v4346 = vmul.f32 %v4234, 1.442695
        %v4347 = vpow.pop %v4346
        %v4348 = vmul.f32 %v4235, 1.442695
        %v4349 = vpow.pop %v4348
        %v4350 = vmul.f32 %v4236, 1.442695
        %v4351 = vpow.pop %v4350
        %v4352 = vmul.f32 %v4237, 1.442695
        %v4353 = vpow.pop %v4352
        %v4354 = vmul.f32 %v4238, 1.442695
        %v4355 = vpow.pop %v4354
        %v4356 = vmul.f32 %v4239, 1.442695
        %v4357 = vpow.pop %v4356
        %v4358 = vmul.f32 %v4240, 1.442695
        %v4359 = vpow.pop %v4358
        %v4360 = vmul.f32 %v4241, 1.442695
        %v4361 = vpow.pop %v4360
        %v4362 = vmul.f32 %v4242, 1.442695
        %v4363 = vpow.pop %v4362
        %v4364 = vmul.f32 %v4243, 1.442695
        %v4365 = vpow.pop %v4364
        %v4366 = vmul.f32 %v4244, 1.442695
        %v4367 = vpow.pop %v4366
        %v4368 = vmul.f32 %v4245, 1.442695
        %v4369 = vpow.pop %v4368
        %v4370 = vmul.f32 %v4246, 1.442695
        %v4371 = vpow.pop %v4370
        %v4372 = vmul.f32 %v4247, 1.442695
        %v4373 = vpow.pop %v4372
        %v4374 = vmul.f32 %v4248, 1.442695
        %v4375 = vpow.pop %v4374
        %v4376 = vmul.f32 %v4249, 1.442695
        %v4377 = vpow.pop %v4376
        %v4378 = vsel %vm3897, %v4251, 0.0
        %v4379 = vsel %vm3897, %v4253, 0.0
        %v4380 = vadd.f32 %v4378, %v4379
        %v4381 = vrot.slane %v4380, 4
        %v4382 = vadd.f32 %v4380, %v4381
        %v4383 = vrot.slane %v4382, 2
        %v4384 = vadd.f32 %v4382, %v4383
        %v4385 = vrot.slane %v4384, 1
        %v4386 = vadd.f32 %v4384, %v4385
        %v4387 = vsel %vm3897, %v4255, 0.0
        %v4388 = vsel %vm3897, %v4257, 0.0
        %v4389 = vadd.f32 %v4387, %v4388
        %v4390 = vrot.slane %v4389, 4
        %v4391 = vadd.f32 %v4389, %v4390
        %v4392 = vrot.slane %v4391, 2
        %v4393 = vadd.f32 %v4391, %v4392
        %v4394 = vrot.slane %v4393, 1
        %v4395 = vadd.f32 %v4393, %v4394
        %v4396 = vsel %vm3897, %v4259, 0.0
        %v4397 = vsel %vm3897, %v4261, 0.0
        %v4398 = vadd.f32 %v4396, %v4397
        %v4399 = vrot.slane %v4398, 4
        %v4400 = vadd.f32 %v4398, %v4399
        %v4401 = vrot.slane %v4400, 2
        %v4402 = vadd.f32 %v4400, %v4401
        %v4403 = vrot.slane %v4402, 1
        %v4404 = vadd.f32 %v4402, %v4403
        %v4405 = vsel %vm3897, %v4263, 0.0
        %v4406 = vsel %vm3897, %v4265, 0.0
        %v4407 = vadd.f32 %v4405, %v4406
        %v4408 = vrot.slane %v4407, 4
        %v4409 = vadd.f32 %v4407, %v4408
        %v4410 = vrot.slane %v4409, 2
        %v4411 = vadd.f32 %v4409, %v4410
        %v4412 = vrot.slane %v4411, 1
        %v4413 = vadd.f32 %v4411, %v4412
        %v4414 = vsel %vm3897, %v4267, 0.0
        %v4415 = vsel %vm3897, %v4269, 0.0
        %v4416 = vadd.f32 %v4414, %v4415
        %v4417 = vrot.slane %v4416, 4
        %v4418 = vadd.f32 %v4416, %v4417
        %v4419 = vrot.slane %v4418, 2
        %v4420 = vadd.f32 %v4418, %v4419
        %v4421 = vrot.slane %v4420, 1
        %v4422 = vadd.f32 %v4420, %v4421
        %v4423 = vsel %vm3897, %v4271, 0.0
        %v4424 = vsel %vm3897, %v4273, 0.0
        %v4425 = vadd.f32 %v4423, %v4424
        %v4426 = vrot.slane %v4425, 4
        %v4427 = vadd.f32 %v4425, %v4426
        %v4428 = vrot.slane %v4427, 2
        %v4429 = vadd.f32 %v4427, %v4428
        %v4430 = vrot.slane %v4429, 1
        %v4431 = vadd.f32 %v4429, %v4430
        %v4432 = vsel %vm3897, %v4275, 0.0
        %v4433 = vsel %vm3897, %v4277, 0.0
        %v4434 = vadd.f32 %v4432, %v4433
        %v4435 = vrot.slane %v4434, 4
        %v4436 = vadd.f32 %v4434, %v4435
        %v4437 = vrot.slane %v4436, 2
        %v4438 = vadd.f32 %v4436, %v4437
        %v4439 = vrot.slane %v4438, 1
        %v4440 = vadd.f32 %v4438, %v4439
        %v4441 = vsel %vm3897, %v4279, 0.0
        %v4442 = vsel %vm3897, %v4281, 0.0
        %v4443 = vadd.f32 %v4441, %v4442
        %v4444 = vrot.slane %v4443, 4
        %v4445 = vadd.f32 %v4443, %v4444
        %v4446 = vrot.slane %v4445, 2
        %v4447 = vadd.f32 %v4445, %v4446
        %v4448 = vrot.slane %v4447, 1
        %v4449 = vadd.f32 %v4447, %v4448
        %v4450 = vsel %vm3897, %v4283, 0.0
        %v4451 = vsel %vm3897, %v4285, 0.0
        %v4452 = vadd.f32 %v4450, %v4451
        %v4453 = vrot.slane %v4452, 4
        %v4454 = vadd.f32 %v4452, %v4453
        %v4455 = vrot.slane %v4454, 2
        %v4456 = vadd.f32 %v4454, %v4455
        %v4457 = vrot.slane %v4456, 1
        %v4458 = vadd.f32 %v4456, %v4457
        %v4459 = vsel %vm3897, %v4287, 0.0
        %v4460 = vsel %vm3897, %v4289, 0.0
        %v4461 = vadd.f32 %v4459, %v4460
        %v4462 = vrot.slane %v4461, 4
        %v4463 = vadd.f32 %v4461, %v4462
        %v4464 = vrot.slane %v4463, 2
        %v4465 = vadd.f32 %v4463, %v4464
        %v4466 = vrot.slane %v4465, 1
        %v4467 = vadd.f32 %v4465, %v4466
        %v4468 = vsel %vm3897, %v4291, 0.0
        %v4469 = vsel %vm3897, %v4293, 0.0
        %v4470 = vadd.f32 %v4468, %v4469
        %v4471 = vrot.slane %v4470, 4
        %v4472 = vadd.f32 %v4470, %v4471
        %v4473 = vrot.slane %v4472, 2
        %v4474 = vadd.f32 %v4472, %v4473
        %v4475 = vrot.slane %v4474, 1
        %v4476 = vadd.f32 %v4474, %v4475
        %v4477 = vsel %vm3897, %v4295, 0.0
        %v4478 = vsel %vm3897, %v4297, 0.0
        %v4479 = vadd.f32 %v4477, %v4478
        %v4480 = vrot.slane %v4479, 4
        %v4481 = vadd.f32 %v4479, %v4480
        %v4482 = vrot.slane %v4481, 2
        %v4483 = vadd.f32 %v4481, %v4482
        %v4484 = vrot.slane %v4483, 1
        %v4485 = vadd.f32 %v4483, %v4484
        %v4486 = vsel %vm3897, %v4299, 0.0
        %v4487 = vsel %vm3897, %v4301, 0.0
        %v4488 = vadd.f32 %v4486, %v4487
        %v4489 = vrot.slane %v4488, 4
        %v4490 = vadd.f32 %v4488, %v4489
        %v4491 = vrot.slane %v4490, 2
        %v4492 = vadd.f32 %v4490, %v4491
        %v4493 = vrot.slane %v4492, 1
        %v4494 = vadd.f32 %v4492, %v4493
        %v4495 = vsel %vm3897, %v4303, 0.0
        %v4496 = vsel %vm3897, %v4305, 0.0
        %v4497 = vadd.f32 %v4495, %v4496
        %v4498 = vrot.slane %v4497, 4
        %v4499 = vadd.f32 %v4497, %v4498
        %v4500 = vrot.slane %v4499, 2
        %v4501 = vadd.f32 %v4499, %v4500
        %v4502 = vrot.slane %v4501, 1
        %v4503 = vadd.f32 %v4501, %v4502
        %v4504 = vsel %vm3897, %v4307, 0.0
        %v4505 = vsel %vm3897, %v4309, 0.0
        %v4506 = vadd.f32 %v4504, %v4505
        %v4507 = vrot.slane %v4506, 4
        %v4508 = vadd.f32 %v4506, %v4507
        %v4509 = vrot.slane %v4508, 2
        %v4510 = vadd.f32 %v4508, %v4509
        %v4511 = vrot.slane %v4510, 1
        %v4512 = vadd.f32 %v4510, %v4511
        %v4513 = vsel %vm3897, %v4311, 0.0
        %v4514 = vsel %vm3897, %v4313, 0.0
        %v4515 = vadd.f32 %v4513, %v4514
        %v4516 = vrot.slane %v4515, 4
        %v4517 = vadd.f32 %v4515, %v4516
        %v4518 = vrot.slane %v4517, 2
        %v4519 = vadd.f32 %v4517, %v4518
        %v4520 = vrot.slane %v4519, 1
        %v4521 = vadd.f32 %v4519, %v4520
        %v4522 = vsel %vm3897, %v4315, 0.0
        %v4523 = vsel %vm3897, %v4317, 0.0
        %v4524 = vadd.f32 %v4522, %v4523
        %v4525 = vrot.slane %v4524, 4
        %v4526 = vadd.f32 %v4524, %v4525
        %v4527 = vrot.slane %v4526, 2
        %v4528 = vadd.f32 %v4526, %v4527
        %v4529 = vrot.slane %v4528, 1
        %v4530 = vadd.f32 %v4528, %v4529
        %v4531 = vsel %vm3897, %v4319, 0.0
        %v4532 = vsel %vm3897, %v4321, 0.0
        %v4533 = vadd.f32 %v4531, %v4532
        %v4534 = vrot.slane %v4533, 4
        %v4535 = vadd.f32 %v4533, %v4534
        %v4536 = vrot.slane %v4535, 2
        %v4537 = vadd.f32 %v4535, %v4536
        %v4538 = vrot.slane %v4537, 1
        %v4539 = vadd.f32 %v4537, %v4538
        %v4540 = vsel %vm3897, %v4323, 0.0
        %v4541 = vsel %vm3897, %v4325, 0.0
        %v4542 = vadd.f32 %v4540, %v4541
        %v4543 = vrot.slane %v4542, 4
        %v4544 = vadd.f32 %v4542, %v4543
        %v4545 = vrot.slane %v4544, 2
        %v4546 = vadd.f32 %v4544, %v4545
        %v4547 = vrot.slane %v4546, 1
        %v4548 = vadd.f32 %v4546, %v4547
        %v4549 = vsel %vm3897, %v4327, 0.0
        %v4550 = vsel %vm3897, %v4329, 0.0
        %v4551 = vadd.f32 %v4549, %v4550
        %v4552 = vrot.slane %v4551, 4
        %v4553 = vadd.f32 %v4551, %v4552
        %v4554 = vrot.slane %v4553, 2
        %v4555 = vadd.f32 %v4553, %v4554
        %v4556 = vrot.slane %v4555, 1
        %v4557 = vadd.f32 %v4555, %v4556
        %v4558 = vsel %vm3897, %v4331, 0.0
        %v4559 = vsel %vm3897, %v4333, 0.0
        %v4560 = vadd.f32 %v4558, %v4559
        %v4561 = vrot.slane %v4560, 4
        %v4562 = vadd.f32 %v4560, %v4561
        %v4563 = vrot.slane %v4562, 2
        %v4564 = vadd.f32 %v4562, %v4563
        %v4565 = vrot.slane %v4564, 1
        %v4566 = vadd.f32 %v4564, %v4565
        %v4567 = vsel %vm3897, %v4335, 0.0
        %v4568 = vsel %vm3897, %v4337, 0.0
        %v4569 = vadd.f32 %v4567, %v4568
        %v4570 = vrot.slane %v4569, 4
        %v4571 = vadd.f32 %v4569, %v4570
        %v4572 = vrot.slane %v4571, 2
        %v4573 = vadd.f32 %v4571, %v4572
        %v4574 = vrot.slane %v4573, 1
        %v4575 = vadd.f32 %v4573, %v4574
        %v4576 = vsel %vm3897, %v4339, 0.0
        %v4577 = vsel %vm3897, %v4341, 0.0
        %v4578 = vadd.f32 %v4576, %v4577
        %v4579 = vrot.slane %v4578, 4
        %v4580 = vadd.f32 %v4578, %v4579
        %v4581 = vrot.slane %v4580, 2
        %v4582 = vadd.f32 %v4580, %v4581
        %v4583 = vrot.slane %v4582, 1
        %v4584 = vadd.f32 %v4582, %v4583
        %v4585 = vsel %vm3897, %v4343, 0.0
        %v4586 = vsel %vm3897, %v4345, 0.0
        %v4587 = vadd.f32 %v4585, %v4586
        %v4588 = vrot.slane %v4587, 4
        %v4589 = vadd.f32 %v4587, %v4588
        %v4590 = vrot.slane %v4589, 2
        %v4591 = vadd.f32 %v4589, %v4590
        %v4592 = vrot.slane %v4591, 1
        %v4593 = vadd.f32 %v4591, %v4592
        %v4594 = vsel %vm3897, %v4347, 0.0
        %v4595 = vsel %vm3897, %v4349, 0.0
        %v4596 = vadd.f32 %v4594, %v4595
        %v4597 = vrot.slane %v4596, 4
        %v4598 = vadd.f32 %v4596, %v4597
        %v4599 = vrot.slane %v4598, 2
        %v4600 = vadd.f32 %v4598, %v4599
        %v4601 = vrot.slane %v4600, 1
        %v4602 = vadd.f32 %v4600, %v4601
        %v4603 = vsel %vm3897, %v4351, 0.0
        %v4604 = vsel %vm3897, %v4353, 0.0
        %v4605 = vadd.f32 %v4603, %v4604
        %v4606 = vrot.slane %v4605, 4
        %v4607 = vadd.f32 %v4605, %v4606
        %v4608 = vrot.slane %v4607, 2
        %v4609 = vadd.f32 %v4607, %v4608
        %v4610 = vrot.slane %v4609, 1
        %v4611 = vadd.f32 %v4609, %v4610
        %v4612 = vsel %vm3897, %v4355, 0.0
        %v4613 = vsel %vm3897, %v4357, 0.0
        %v4614 = vadd.f32 %v4612, %v4613
        %v4615 = vrot.slane %v4614, 4
        %v4616 = vadd.f32 %v4614, %v4615
        %v4617 = vrot.slane %v4616, 2
        %v4618 = vadd.f32 %v4616, %v4617
        %v4619 = vrot.slane %v4618, 1
        %v4620 = vadd.f32 %v4618, %v4619
        %v4621 = vsel %vm3897, %v4359, 0.0
        %v4622 = vsel %vm3897, %v4361, 0.0
        %v4623 = vadd.f32 %v4621, %v4622
        %v4624 = vrot.slane %v4623, 4
        %v4625 = vadd.f32 %v4623, %v4624
        %v4626 = vrot.slane %v4625, 2
        %v4627 = vadd.f32 %v4625, %v4626
        %v4628 = vrot.slane %v4627, 1
        %v4629 = vadd.f32 %v4627, %v4628
        %v4630 = vsel %vm3897, %v4363, 0.0
        %v4631 = vsel %vm3897, %v4365, 0.0
        %v4632 = vadd.f32 %v4630, %v4631
        %v4633 = vrot.slane %v4632, 4
        %v4634 = vadd.f32 %v4632, %v4633
        %v4635 = vrot.slane %v4634, 2
        %v4636 = vadd.f32 %v4634, %v4635
        %v4637 = vrot.slane %v4636, 1
        %v4638 = vadd.f32 %v4636, %v4637
        %v4639 = vsel %vm3897, %v4367, 0.0
        %v4640 = vsel %vm3897, %v4369, 0.0
        %v4641 = vadd.f32 %v4639, %v4640
        %v4642 = vrot.slane %v4641, 4
        %v4643 = vadd.f32 %v4641, %v4642
        %v4644 = vrot.slane %v4643, 2
        %v4645 = vadd.f32 %v4643, %v4644
        %v4646 = vrot.slane %v4645, 1
        %v4647 = vadd.f32 %v4645, %v4646
        %v4648 = vsel %vm3897, %v4371, 0.0
        %v4649 = vsel %vm3897, %v4373, 0.0
        %v4650 = vadd.f32 %v4648, %v4649
        %v4651 = vrot.slane %v4650, 4
        %v4652 = vadd.f32 %v4650, %v4651
        %v4653 = vrot.slane %v4652, 2
        %v4654 = vadd.f32 %v4652, %v4653
        %v4655 = vrot.slane %v4654, 1
        %v4656 = vadd.f32 %v4654, %v4655
        %v4657 = vsel %vm3897, %v4375, 0.0
        %v4658 = vsel %vm3897, %v4377, 0.0
        %v4659 = vadd.f32 %v4657, %v4658
        %v4660 = vrot.slane %v4659, 4
        %v4661 = vadd.f32 %v4659, %v4660
        %v4662 = vrot.slane %v4661, 2
        %v4663 = vadd.f32 %v4661, %v4662
        %v4664 = vrot.slane %v4663, 1
        %v4665 = vadd.f32 %v4663, %v4664
        %v4666 = vpack.c.bf16 %v4253, %v4251
        %v4667 = vpack.c.bf16 %v4257, %v4255
        %v4668 = vpack.c.bf16 %v4261, %v4259
        %v4669 = vpack.c.bf16 %v4265, %v4263
        %v4670 = vpack.c.bf16 %v4269, %v4267
        %v4671 = vpack.c.bf16 %v4273, %v4271
        %v4672 = vpack.c.bf16 %v4277, %v4275
        %v4673 = vpack.c.bf16 %v4281, %v4279
        %v4674 = vpack.c.bf16 %v4285, %v4283
        %v4675 = vpack.c.bf16 %v4289, %v4287
        %v4676 = vpack.c.bf16 %v4293, %v4291
        %v4677 = vpack.c.bf16 %v4297, %v4295
        %v4678 = vpack.c.bf16 %v4301, %v4299
        %v4679 = vpack.c.bf16 %v4305, %v4303
        %v4680 = vpack.c.bf16 %v4309, %v4307
        %v4681 = vpack.c.bf16 %v4313, %v4311
        %v4682 = vpack.c.bf16 %v4317, %v4315
        %v4683 = vpack.c.bf16 %v4321, %v4319
        %v4684 = vpack.c.bf16 %v4325, %v4323
        %v4685 = vpack.c.bf16 %v4329, %v4327
        %v4686 = vpack.c.bf16 %v4333, %v4331
        %v4687 = vpack.c.bf16 %v4337, %v4335
        %v4688 = vpack.c.bf16 %v4341, %v4339
        %v4689 = vpack.c.bf16 %v4345, %v4343
        %v4690 = vpack.c.bf16 %v4349, %v4347
        %v4691 = vpack.c.bf16 %v4353, %v4351
        %v4692 = vpack.c.bf16 %v4357, %v4355
        %v4693 = vpack.c.bf16 %v4361, %v4359
        %v4694 = vpack.c.bf16 %v4365, %v4363
        %v4695 = vpack.c.bf16 %v4369, %v4367
        %v4696 = vpack.c.bf16 %v4373, %v4371
        %v4697 = vpack.c.bf16 %v4377, %v4375
        %vm4698 = vcmask 130048
        %v4700 = vsel %vm4698, %v1719, 0
        %4702 = vmatprep.subr.bf16.mxu0 0
        %4703 = vmatpush1.bf16.msra.mxu0 0
        %4704 = vmatprep.subr.bf16.mxu0 0
        %4705 = vmatpush1.bf16.msra.mxu0 0
        %4706 = vmatprep.subr.bf16.mxu0 0
        %4707 = vmatpush1.bf16.msra.mxu0 0
        %4708 = vmatprep.subr.bf16.mxu0 0
        %4709 = vmatpush1.bf16.msra.mxu0 0
        %4710 = vmatprep.subr.bf16.mxu0 0
        %4711 = vmatpush1.bf16.msra.mxu0 0
        %4712 = vmatprep.subr.bf16.mxu0 0
        %4713 = vmatpush1.bf16.msra.mxu0 0
        %4714 = vmatprep.subr.bf16.mxu0 0
        %4715 = vmatpush1.bf16.msra.mxu0 0
        %4716 = vmatprep.subr.bf16.mxu0 0
        %4717 = vmatpush1.bf16.msra.mxu0 %v4666
        %4718 = vmatprep.subr.bf16.mxu0 0
        %4719 = vmatpush2.bf16.msra.mxu0 0
        %4720 = vmatprep.subr.bf16.mxu0 0
        %4721 = vmatpush2.bf16.msra.mxu0 0
        %4722 = vmatprep.subr.bf16.mxu0 0
        %4723 = vmatpush2.bf16.msra.mxu0 0
        %4724 = vmatprep.subr.bf16.mxu0 0
        %4725 = vmatpush2.bf16.msra.mxu0 0
        %4726 = vmatprep.subr.bf16.mxu0 0
        %4727 = vmatpush2.bf16.msra.mxu0 0
        %4728 = vmatprep.subr.bf16.mxu0 0
        %4729 = vmatpush2.bf16.msra.mxu0 0
        %4730 = vmatprep.subr.bf16.mxu0 0
        %4731 = vmatpush2.bf16.msra.mxu0 0
        %4732 = vmatprep.subr.bf16.mxu0 0
        %4733 = vmatpush2.bf16.msra.mxu0 0
        %4734 = vmatprep.mubr.bf16.mxu0 0
        %4735 = vmatmul.mubr.bf16.gmra.mxu0 %v4700
        %v4736 = vpop.f32.mrf.mxu0
        %v4737 = vadd.f32 0.0, %v4736
        %v4738 = vpop.f32.mrf.mxu0
        %v4739 = vpop.f32.mrf.mxu0
        %v4740 = vpop.f32.mrf.mxu0
        %4741 = vdwg.mxu0
        %v4743 = vsel %vm4698, %v1720, 0
        %4745 = vmatprep.subr.bf16.mxu0 0
        %4746 = vmatpush1.bf16.msra.mxu0 0
        %4747 = vmatprep.subr.bf16.mxu0 0
        %4748 = vmatpush1.bf16.msra.mxu0 0
        %4749 = vmatprep.subr.bf16.mxu0 0
        %4750 = vmatpush1.bf16.msra.mxu0 0
        %4751 = vmatprep.subr.bf16.mxu0 0
        %4752 = vmatpush1.bf16.msra.mxu0 0
        %4753 = vmatprep.subr.bf16.mxu0 0
        %4754 = vmatpush1.bf16.msra.mxu0 0
        %4755 = vmatprep.subr.bf16.mxu0 0
        %4756 = vmatpush1.bf16.msra.mxu0 0
        %4757 = vmatprep.subr.bf16.mxu0 0
        %4758 = vmatpush1.bf16.msra.mxu0 0
        %4759 = vmatprep.subr.bf16.mxu0 0
        %4760 = vmatpush1.bf16.msra.mxu0 %v4667
        %4761 = vmatprep.subr.bf16.mxu0 0
        %4762 = vmatpush2.bf16.msra.mxu0 0
        %4763 = vmatprep.subr.bf16.mxu0 0
        %4764 = vmatpush2.bf16.msra.mxu0 0
        %4765 = vmatprep.subr.bf16.mxu0 0
        %4766 = vmatpush2.bf16.msra.mxu0 0
        %4767 = vmatprep.subr.bf16.mxu0 0
        %4768 = vmatpush2.bf16.msra.mxu0 0
        %4769 = vmatprep.subr.bf16.mxu0 0
        %4770 = vmatpush2.bf16.msra.mxu0 0
        %4771 = vmatprep.subr.bf16.mxu0 0
        %4772 = vmatpush2.bf16.msra.mxu0 0
        %4773 = vmatprep.subr.bf16.mxu0 0
        %4774 = vmatpush2.bf16.msra.mxu0 0
        %4775 = vmatprep.subr.bf16.mxu0 0
        %4776 = vmatpush2.bf16.msra.mxu0 0
        %4777 = vmatprep.mubr.bf16.mxu0 0
        %4778 = vmatmul.mubr.bf16.gmra.mxu0 %v4743
        %v4779 = vpop.f32.mrf.mxu0
        %v4780 = vadd.f32 0.0, %v4779
        %v4781 = vpop.f32.mrf.mxu0
        %v4782 = vpop.f32.mrf.mxu0
        %v4783 = vpop.f32.mrf.mxu0
        %4784 = vdwg.mxu0
        %v4786 = vsel %vm4698, %v1721, 0
        %4788 = vmatprep.subr.bf16.mxu0 0
        %4789 = vmatpush1.bf16.msra.mxu0 0
        %4790 = vmatprep.subr.bf16.mxu0 0
        %4791 = vmatpush1.bf16.msra.mxu0 0
        %4792 = vmatprep.subr.bf16.mxu0 0
        %4793 = vmatpush1.bf16.msra.mxu0 0
        %4794 = vmatprep.subr.bf16.mxu0 0
        %4795 = vmatpush1.bf16.msra.mxu0 0
        %4796 = vmatprep.subr.bf16.mxu0 0
        %4797 = vmatpush1.bf16.msra.mxu0 0
        %4798 = vmatprep.subr.bf16.mxu0 0
        %4799 = vmatpush1.bf16.msra.mxu0 0
        %4800 = vmatprep.subr.bf16.mxu0 0
        %4801 = vmatpush1.bf16.msra.mxu0 0
        %4802 = vmatprep.subr.bf16.mxu0 0
        %4803 = vmatpush1.bf16.msra.mxu0 %v4668
        %4804 = vmatprep.subr.bf16.mxu0 0
        %4805 = vmatpush2.bf16.msra.mxu0 0
        %4806 = vmatprep.subr.bf16.mxu0 0
        %4807 = vmatpush2.bf16.msra.mxu0 0
        %4808 = vmatprep.subr.bf16.mxu0 0
        %4809 = vmatpush2.bf16.msra.mxu0 0
        %4810 = vmatprep.subr.bf16.mxu0 0
        %4811 = vmatpush2.bf16.msra.mxu0 0
        %4812 = vmatprep.subr.bf16.mxu0 0
        %4813 = vmatpush2.bf16.msra.mxu0 0
        %4814 = vmatprep.subr.bf16.mxu0 0
        %4815 = vmatpush2.bf16.msra.mxu0 0
        %4816 = vmatprep.subr.bf16.mxu0 0
        %4817 = vmatpush2.bf16.msra.mxu0 0
        %4818 = vmatprep.subr.bf16.mxu0 0
        %4819 = vmatpush2.bf16.msra.mxu0 0
        %4820 = vmatprep.mubr.bf16.mxu0 0
        %4821 = vmatmul.mubr.bf16.gmra.mxu0 %v4786
        %v4822 = vpop.f32.mrf.mxu0
        %v4823 = vadd.f32 0.0, %v4822
        %v4824 = vpop.f32.mrf.mxu0
        %v4825 = vpop.f32.mrf.mxu0
        %v4826 = vpop.f32.mrf.mxu0
        %4827 = vdwg.mxu0
        %v4829 = vsel %vm4698, %v1722, 0
        %4831 = vmatprep.subr.bf16.mxu0 0
        %4832 = vmatpush1.bf16.msra.mxu0 0
        %4833 = vmatprep.subr.bf16.mxu0 0
        %4834 = vmatpush1.bf16.msra.mxu0 0
        %4835 = vmatprep.subr.bf16.mxu0 0
        %4836 = vmatpush1.bf16.msra.mxu0 0
        %4837 = vmatprep.subr.bf16.mxu0 0
        %4838 = vmatpush1.bf16.msra.mxu0 0
        %4839 = vmatprep.subr.bf16.mxu0 0
        %4840 = vmatpush1.bf16.msra.mxu0 0
        %4841 = vmatprep.subr.bf16.mxu0 0
        %4842 = vmatpush1.bf16.msra.mxu0 0
        %4843 = vmatprep.subr.bf16.mxu0 0
        %4844 = vmatpush1.bf16.msra.mxu0 0
        %4845 = vmatprep.subr.bf16.mxu0 0
        %4846 = vmatpush1.bf16.msra.mxu0 %v4669
        %4847 = vmatprep.subr.bf16.mxu0 0
        %4848 = vmatpush2.bf16.msra.mxu0 0
        %4849 = vmatprep.subr.bf16.mxu0 0
        %4850 = vmatpush2.bf16.msra.mxu0 0
        %4851 = vmatprep.subr.bf16.mxu0 0
        %4852 = vmatpush2.bf16.msra.mxu0 0
        %4853 = vmatprep.subr.bf16.mxu0 0
        %4854 = vmatpush2.bf16.msra.mxu0 0
        %4855 = vmatprep.subr.bf16.mxu0 0
        %4856 = vmatpush2.bf16.msra.mxu0 0
        %4857 = vmatprep.subr.bf16.mxu0 0
        %4858 = vmatpush2.bf16.msra.mxu0 0
        %4859 = vmatprep.subr.bf16.mxu0 0
        %4860 = vmatpush2.bf16.msra.mxu0 0
        %4861 = vmatprep.subr.bf16.mxu0 0
        %4862 = vmatpush2.bf16.msra.mxu0 0
        %4863 = vmatprep.mubr.bf16.mxu0 0
        %4864 = vmatmul.mubr.bf16.gmra.mxu0 %v4829
        %v4865 = vpop.f32.mrf.mxu0
        %v4866 = vadd.f32 0.0, %v4865
        %v4867 = vpop.f32.mrf.mxu0
        %v4868 = vpop.f32.mrf.mxu0
        %v4869 = vpop.f32.mrf.mxu0
        %4870 = vdwg.mxu0
        %v4872 = vsel %vm4698, %v1723, 0
        %4874 = vmatprep.subr.bf16.mxu0 0
        %4875 = vmatpush1.bf16.msra.mxu0 0
        %4876 = vmatprep.subr.bf16.mxu0 0
        %4877 = vmatpush1.bf16.msra.mxu0 0
        %4878 = vmatprep.subr.bf16.mxu0 0
        %4879 = vmatpush1.bf16.msra.mxu0 0
        %4880 = vmatprep.subr.bf16.mxu0 0
        %4881 = vmatpush1.bf16.msra.mxu0 0
        %4882 = vmatprep.subr.bf16.mxu0 0
        %4883 = vmatpush1.bf16.msra.mxu0 0
        %4884 = vmatprep.subr.bf16.mxu0 0
        %4885 = vmatpush1.bf16.msra.mxu0 0
        %4886 = vmatprep.subr.bf16.mxu0 0
        %4887 = vmatpush1.bf16.msra.mxu0 0
        %4888 = vmatprep.subr.bf16.mxu0 0
        %4889 = vmatpush1.bf16.msra.mxu0 %v4670
        %4890 = vmatprep.subr.bf16.mxu0 0
        %4891 = vmatpush2.bf16.msra.mxu0 0
        %4892 = vmatprep.subr.bf16.mxu0 0
        %4893 = vmatpush2.bf16.msra.mxu0 0
        %4894 = vmatprep.subr.bf16.mxu0 0
        %4895 = vmatpush2.bf16.msra.mxu0 0
        %4896 = vmatprep.subr.bf16.mxu0 0
        %4897 = vmatpush2.bf16.msra.mxu0 0
        %4898 = vmatprep.subr.bf16.mxu0 0
        %4899 = vmatpush2.bf16.msra.mxu0 0
        %4900 = vmatprep.subr.bf16.mxu0 0
        %4901 = vmatpush2.bf16.msra.mxu0 0
        %4902 = vmatprep.subr.bf16.mxu0 0
        %4903 = vmatpush2.bf16.msra.mxu0 0
        %4904 = vmatprep.subr.bf16.mxu0 0
        %4905 = vmatpush2.bf16.msra.mxu0 0
        %4906 = vmatprep.mubr.bf16.mxu0 0
        %4907 = vmatmul.mubr.bf16.gmra.mxu0 %v4872
        %v4908 = vpop.f32.mrf.mxu0
        %v4909 = vadd.f32 0.0, %v4908
        %v4910 = vpop.f32.mrf.mxu0
        %v4911 = vpop.f32.mrf.mxu0
        %v4912 = vpop.f32.mrf.mxu0
        %4913 = vdwg.mxu0
        %v4915 = vsel %vm4698, %v1724, 0
        %4917 = vmatprep.subr.bf16.mxu0 0
        %4918 = vmatpush1.bf16.msra.mxu0 0
        %4919 = vmatprep.subr.bf16.mxu0 0
        %4920 = vmatpush1.bf16.msra.mxu0 0
        %4921 = vmatprep.subr.bf16.mxu0 0
        %4922 = vmatpush1.bf16.msra.mxu0 0
        %4923 = vmatprep.subr.bf16.mxu0 0
        %4924 = vmatpush1.bf16.msra.mxu0 0
        %4925 = vmatprep.subr.bf16.mxu0 0
        %4926 = vmatpush1.bf16.msra.mxu0 0
        %4927 = vmatprep.subr.bf16.mxu0 0
        %4928 = vmatpush1.bf16.msra.mxu0 0
        %4929 = vmatprep.subr.bf16.mxu0 0
        %4930 = vmatpush1.bf16.msra.mxu0 0
        %4931 = vmatprep.subr.bf16.mxu0 0
        %4932 = vmatpush1.bf16.msra.mxu0 %v4671
        %4933 = vmatprep.subr.bf16.mxu0 0
        %4934 = vmatpush2.bf16.msra.mxu0 0
        %4935 = vmatprep.subr.bf16.mxu0 0
        %4936 = vmatpush2.bf16.msra.mxu0 0
        %4937 = vmatprep.subr.bf16.mxu0 0
        %4938 = vmatpush2.bf16.msra.mxu0 0
        %4939 = vmatprep.subr.bf16.mxu0 0
        %4940 = vmatpush2.bf16.msra.mxu0 0
        %4941 = vmatprep.subr.bf16.mxu0 0
        %4942 = vmatpush2.bf16.msra.mxu0 0
        %4943 = vmatprep.subr.bf16.mxu0 0
        %4944 = vmatpush2.bf16.msra.mxu0 0
        %4945 = vmatprep.subr.bf16.mxu0 0
        %4946 = vmatpush2.bf16.msra.mxu0 0
        %4947 = vmatprep.subr.bf16.mxu0 0
        %4948 = vmatpush2.bf16.msra.mxu0 0
        %4949 = vmatprep.mubr.bf16.mxu0 0
        %4950 = vmatmul.mubr.bf16.gmra.mxu0 %v4915
        %v4951 = vpop.f32.mrf.mxu0
        %v4952 = vadd.f32 0.0, %v4951
        %v4953 = vpop.f32.mrf.mxu0
        %v4954 = vpop.f32.mrf.mxu0
        %v4955 = vpop.f32.mrf.mxu0
        %4956 = vdwg.mxu0
        %v4958 = vsel %vm4698, %v1725, 0
        %4960 = vmatprep.subr.bf16.mxu0 0
        %4961 = vmatpush1.bf16.msra.mxu0 0
        %4962 = vmatprep.subr.bf16.mxu0 0
        %4963 = vmatpush1.bf16.msra.mxu0 0
        %4964 = vmatprep.subr.bf16.mxu0 0
        %4965 = vmatpush1.bf16.msra.mxu0 0
        %4966 = vmatprep.subr.bf16.mxu0 0
        %4967 = vmatpush1.bf16.msra.mxu0 0
        %4968 = vmatprep.subr.bf16.mxu0 0
        %4969 = vmatpush1.bf16.msra.mxu0 0
        %4970 = vmatprep.subr.bf16.mxu0 0
        %4971 = vmatpush1.bf16.msra.mxu0 0
        %4972 = vmatprep.subr.bf16.mxu0 0
        %4973 = vmatpush1.bf16.msra.mxu0 0
        %4974 = vmatprep.subr.bf16.mxu0 0
        %4975 = vmatpush1.bf16.msra.mxu0 %v4672
        %4976 = vmatprep.subr.bf16.mxu0 0
        %4977 = vmatpush2.bf16.msra.mxu0 0
        %4978 = vmatprep.subr.bf16.mxu0 0
        %4979 = vmatpush2.bf16.msra.mxu0 0
        %4980 = vmatprep.subr.bf16.mxu0 0
        %4981 = vmatpush2.bf16.msra.mxu0 0
        %4982 = vmatprep.subr.bf16.mxu0 0
        %4983 = vmatpush2.bf16.msra.mxu0 0
        %4984 = vmatprep.subr.bf16.mxu0 0
        %4985 = vmatpush2.bf16.msra.mxu0 0
        %4986 = vmatprep.subr.bf16.mxu0 0
        %4987 = vmatpush2.bf16.msra.mxu0 0
        %4988 = vmatprep.subr.bf16.mxu0 0
        %4989 = vmatpush2.bf16.msra.mxu0 0
        %4990 = vmatprep.subr.bf16.mxu0 0
        %4991 = vmatpush2.bf16.msra.mxu0 0
        %4992 = vmatprep.mubr.bf16.mxu0 0
        %4993 = vmatmul.mubr.bf16.gmra.mxu0 %v4958
        %v4994 = vpop.f32.mrf.mxu0
        %v4995 = vadd.f32 0.0, %v4994
        %v4996 = vpop.f32.mrf.mxu0
        %v4997 = vpop.f32.mrf.mxu0
        %v4998 = vpop.f32.mrf.mxu0
        %4999 = vdwg.mxu0
        %v5001 = vsel %vm4698, %v1726, 0
        %5003 = vmatprep.subr.bf16.mxu0 0
        %5004 = vmatpush1.bf16.msra.mxu0 0
        %5005 = vmatprep.subr.bf16.mxu0 0
        %5006 = vmatpush1.bf16.msra.mxu0 0
        %5007 = vmatprep.subr.bf16.mxu0 0
        %5008 = vmatpush1.bf16.msra.mxu0 0
        %5009 = vmatprep.subr.bf16.mxu0 0
        %5010 = vmatpush1.bf16.msra.mxu0 0
        %5011 = vmatprep.subr.bf16.mxu0 0
        %5012 = vmatpush1.bf16.msra.mxu0 0
        %5013 = vmatprep.subr.bf16.mxu0 0
        %5014 = vmatpush1.bf16.msra.mxu0 0
        %5015 = vmatprep.subr.bf16.mxu0 0
        %5016 = vmatpush1.bf16.msra.mxu0 0
        %5017 = vmatprep.subr.bf16.mxu0 0
        %5018 = vmatpush1.bf16.msra.mxu0 %v4673
        %5019 = vmatprep.subr.bf16.mxu0 0
        %5020 = vmatpush2.bf16.msra.mxu0 0
        %5021 = vmatprep.subr.bf16.mxu0 0
        %5022 = vmatpush2.bf16.msra.mxu0 0
        %5023 = vmatprep.subr.bf16.mxu0 0
        %5024 = vmatpush2.bf16.msra.mxu0 0
        %5025 = vmatprep.subr.bf16.mxu0 0
        %5026 = vmatpush2.bf16.msra.mxu0 0
        %5027 = vmatprep.subr.bf16.mxu0 0
        %5028 = vmatpush2.bf16.msra.mxu0 0
        %5029 = vmatprep.subr.bf16.mxu0 0
        %5030 = vmatpush2.bf16.msra.mxu0 0
        %5031 = vmatprep.subr.bf16.mxu0 0
        %5032 = vmatpush2.bf16.msra.mxu0 0
        %5033 = vmatprep.subr.bf16.mxu0 0
        %5034 = vmatpush2.bf16.msra.mxu0 0
        %5035 = vmatprep.mubr.bf16.mxu0 0
        %5036 = vmatmul.mubr.bf16.gmra.mxu0 %v5001
        %v5037 = vpop.f32.mrf.mxu0
        %v5038 = vadd.f32 0.0, %v5037
        %v5039 = vpop.f32.mrf.mxu0
        %v5040 = vpop.f32.mrf.mxu0
        %v5041 = vpop.f32.mrf.mxu0
        %5042 = vdwg.mxu0
        %v5044 = vsel %vm4698, %v1727, 0
        %5046 = vmatprep.subr.bf16.mxu0 0
        %5047 = vmatpush1.bf16.msra.mxu0 0
        %5048 = vmatprep.subr.bf16.mxu0 0
        %5049 = vmatpush1.bf16.msra.mxu0 0
        %5050 = vmatprep.subr.bf16.mxu0 0
        %5051 = vmatpush1.bf16.msra.mxu0 0
        %5052 = vmatprep.subr.bf16.mxu0 0
        %5053 = vmatpush1.bf16.msra.mxu0 0
        %5054 = vmatprep.subr.bf16.mxu0 0
        %5055 = vmatpush1.bf16.msra.mxu0 0
        %5056 = vmatprep.subr.bf16.mxu0 0
        %5057 = vmatpush1.bf16.msra.mxu0 0
        %5058 = vmatprep.subr.bf16.mxu0 0
        %5059 = vmatpush1.bf16.msra.mxu0 0
        %5060 = vmatprep.subr.bf16.mxu0 0
        %5061 = vmatpush1.bf16.msra.mxu0 %v4674
        %5062 = vmatprep.subr.bf16.mxu0 0
        %5063 = vmatpush2.bf16.msra.mxu0 0
        %5064 = vmatprep.subr.bf16.mxu0 0
        %5065 = vmatpush2.bf16.msra.mxu0 0
        %5066 = vmatprep.subr.bf16.mxu0 0
        %5067 = vmatpush2.bf16.msra.mxu0 0
        %5068 = vmatprep.subr.bf16.mxu0 0
        %5069 = vmatpush2.bf16.msra.mxu0 0
        %5070 = vmatprep.subr.bf16.mxu0 0
        %5071 = vmatpush2.bf16.msra.mxu0 0
        %5072 = vmatprep.subr.bf16.mxu0 0
        %5073 = vmatpush2.bf16.msra.mxu0 0
        %5074 = vmatprep.subr.bf16.mxu0 0
        %5075 = vmatpush2.bf16.msra.mxu0 0
        %5076 = vmatprep.subr.bf16.mxu0 0
        %5077 = vmatpush2.bf16.msra.mxu0 0
        %5078 = vmatprep.mubr.bf16.mxu0 0
        %5079 = vmatmul.mubr.bf16.gmra.mxu0 %v5044
        %v5080 = vpop.f32.mrf.mxu0
        %v5081 = vadd.f32 0.0, %v5080
        %v5082 = vpop.f32.mrf.mxu0
        %v5083 = vpop.f32.mrf.mxu0
        %v5084 = vpop.f32.mrf.mxu0
        %5085 = vdwg.mxu0
        %v5087 = vsel %vm4698, %v1728, 0
        %5089 = vmatprep.subr.bf16.mxu0 0
        %5090 = vmatpush1.bf16.msra.mxu0 0
        %5091 = vmatprep.subr.bf16.mxu0 0
        %5092 = vmatpush1.bf16.msra.mxu0 0
        %5093 = vmatprep.subr.bf16.mxu0 0
        %5094 = vmatpush1.bf16.msra.mxu0 0
        %5095 = vmatprep.subr.bf16.mxu0 0
        %5096 = vmatpush1.bf16.msra.mxu0 0
        %5097 = vmatprep.subr.bf16.mxu0 0
        %5098 = vmatpush1.bf16.msra.mxu0 0
        %5099 = vmatprep.subr.bf16.mxu0 0
        %5100 = vmatpush1.bf16.msra.mxu0 0
        %5101 = vmatprep.subr.bf16.mxu0 0
        %5102 = vmatpush1.bf16.msra.mxu0 0
        %5103 = vmatprep.subr.bf16.mxu0 0
        %5104 = vmatpush1.bf16.msra.mxu0 %v4675
        %5105 = vmatprep.subr.bf16.mxu0 0
        %5106 = vmatpush2.bf16.msra.mxu0 0
        %5107 = vmatprep.subr.bf16.mxu0 0
        %5108 = vmatpush2.bf16.msra.mxu0 0
        %5109 = vmatprep.subr.bf16.mxu0 0
        %5110 = vmatpush2.bf16.msra.mxu0 0
        %5111 = vmatprep.subr.bf16.mxu0 0
        %5112 = vmatpush2.bf16.msra.mxu0 0
        %5113 = vmatprep.subr.bf16.mxu0 0
        %5114 = vmatpush2.bf16.msra.mxu0 0
        %5115 = vmatprep.subr.bf16.mxu0 0
        %5116 = vmatpush2.bf16.msra.mxu0 0
        %5117 = vmatprep.subr.bf16.mxu0 0
        %5118 = vmatpush2.bf16.msra.mxu0 0
        %5119 = vmatprep.subr.bf16.mxu0 0
        %5120 = vmatpush2.bf16.msra.mxu0 0
        %5121 = vmatprep.mubr.bf16.mxu0 0
        %5122 = vmatmul.mubr.bf16.gmra.mxu0 %v5087
        %v5123 = vpop.f32.mrf.mxu0
        %v5124 = vadd.f32 0.0, %v5123
        %v5125 = vpop.f32.mrf.mxu0
        %v5126 = vpop.f32.mrf.mxu0
        %v5127 = vpop.f32.mrf.mxu0
        %5128 = vdwg.mxu0
        %v5130 = vsel %vm4698, %v1729, 0
        %5132 = vmatprep.subr.bf16.mxu0 0
        %5133 = vmatpush1.bf16.msra.mxu0 0
        %5134 = vmatprep.subr.bf16.mxu0 0
        %5135 = vmatpush1.bf16.msra.mxu0 0
        %5136 = vmatprep.subr.bf16.mxu0 0
        %5137 = vmatpush1.bf16.msra.mxu0 0
        %5138 = vmatprep.subr.bf16.mxu0 0
        %5139 = vmatpush1.bf16.msra.mxu0 0
        %5140 = vmatprep.subr.bf16.mxu0 0
        %5141 = vmatpush1.bf16.msra.mxu0 0
        %5142 = vmatprep.subr.bf16.mxu0 0
        %5143 = vmatpush1.bf16.msra.mxu0 0
        %5144 = vmatprep.subr.bf16.mxu0 0
        %5145 = vmatpush1.bf16.msra.mxu0 0
        %5146 = vmatprep.subr.bf16.mxu0 0
        %5147 = vmatpush1.bf16.msra.mxu0 %v4676
        %5148 = vmatprep.subr.bf16.mxu0 0
        %5149 = vmatpush2.bf16.msra.mxu0 0
        %5150 = vmatprep.subr.bf16.mxu0 0
        %5151 = vmatpush2.bf16.msra.mxu0 0
        %5152 = vmatprep.subr.bf16.mxu0 0
        %5153 = vmatpush2.bf16.msra.mxu0 0
        %5154 = vmatprep.subr.bf16.mxu0 0
        %5155 = vmatpush2.bf16.msra.mxu0 0
        %5156 = vmatprep.subr.bf16.mxu0 0
        %5157 = vmatpush2.bf16.msra.mxu0 0
        %5158 = vmatprep.subr.bf16.mxu0 0
        %5159 = vmatpush2.bf16.msra.mxu0 0
        %5160 = vmatprep.subr.bf16.mxu0 0
        %5161 = vmatpush2.bf16.msra.mxu0 0
        %5162 = vmatprep.subr.bf16.mxu0 0
        %5163 = vmatpush2.bf16.msra.mxu0 0
        %5164 = vmatprep.mubr.bf16.mxu0 0
        %5165 = vmatmul.mubr.bf16.gmra.mxu0 %v5130
        %v5166 = vpop.f32.mrf.mxu0
        %v5167 = vadd.f32 0.0, %v5166
        %v5168 = vpop.f32.mrf.mxu0
        %v5169 = vpop.f32.mrf.mxu0
        %v5170 = vpop.f32.mrf.mxu0
        %5171 = vdwg.mxu0
        %v5173 = vsel %vm4698, %v1730, 0
        %5175 = vmatprep.subr.bf16.mxu0 0
        %5176 = vmatpush1.bf16.msra.mxu0 0
        %5177 = vmatprep.subr.bf16.mxu0 0
        %5178 = vmatpush1.bf16.msra.mxu0 0
        %5179 = vmatprep.subr.bf16.mxu0 0
        %5180 = vmatpush1.bf16.msra.mxu0 0
        %5181 = vmatprep.subr.bf16.mxu0 0
        %5182 = vmatpush1.bf16.msra.mxu0 0
        %5183 = vmatprep.subr.bf16.mxu0 0
        %5184 = vmatpush1.bf16.msra.mxu0 0
        %5185 = vmatprep.subr.bf16.mxu0 0
        %5186 = vmatpush1.bf16.msra.mxu0 0
        %5187 = vmatprep.subr.bf16.mxu0 0
        %5188 = vmatpush1.bf16.msra.mxu0 0
        %5189 = vmatprep.subr.bf16.mxu0 0
        %5190 = vmatpush1.bf16.msra.mxu0 %v4677
        %5191 = vmatprep.subr.bf16.mxu0 0
        %5192 = vmatpush2.bf16.msra.mxu0 0
        %5193 = vmatprep.subr.bf16.mxu0 0
        %5194 = vmatpush2.bf16.msra.mxu0 0
        %5195 = vmatprep.subr.bf16.mxu0 0
        %5196 = vmatpush2.bf16.msra.mxu0 0
        %5197 = vmatprep.subr.bf16.mxu0 0
        %5198 = vmatpush2.bf16.msra.mxu0 0
        %5199 = vmatprep.subr.bf16.mxu0 0
        %5200 = vmatpush2.bf16.msra.mxu0 0
        %5201 = vmatprep.subr.bf16.mxu0 0
        %5202 = vmatpush2.bf16.msra.mxu0 0
        %5203 = vmatprep.subr.bf16.mxu0 0
        %5204 = vmatpush2.bf16.msra.mxu0 0
        %5205 = vmatprep.subr.bf16.mxu0 0
        %5206 = vmatpush2.bf16.msra.mxu0 0
        %5207 = vmatprep.mubr.bf16.mxu0 0
        %5208 = vmatmul.mubr.bf16.gmra.mxu0 %v5173
        %v5209 = vpop.f32.mrf.mxu0
        %v5210 = vadd.f32 0.0, %v5209
        %v5211 = vpop.f32.mrf.mxu0
        %v5212 = vpop.f32.mrf.mxu0
        %v5213 = vpop.f32.mrf.mxu0
        %5214 = vdwg.mxu0
        %v5216 = vsel %vm4698, %v1731, 0
        %5218 = vmatprep.subr.bf16.mxu0 0
        %5219 = vmatpush1.bf16.msra.mxu0 0
        %5220 = vmatprep.subr.bf16.mxu0 0
        %5221 = vmatpush1.bf16.msra.mxu0 0
        %5222 = vmatprep.subr.bf16.mxu0 0
        %5223 = vmatpush1.bf16.msra.mxu0 0
        %5224 = vmatprep.subr.bf16.mxu0 0
        %5225 = vmatpush1.bf16.msra.mxu0 0
        %5226 = vmatprep.subr.bf16.mxu0 0
        %5227 = vmatpush1.bf16.msra.mxu0 0
        %5228 = vmatprep.subr.bf16.mxu0 0
        %5229 = vmatpush1.bf16.msra.mxu0 0
        %5230 = vmatprep.subr.bf16.mxu0 0
        %5231 = vmatpush1.bf16.msra.mxu0 0
        %5232 = vmatprep.subr.bf16.mxu0 0
        %5233 = vmatpush1.bf16.msra.mxu0 %v4678
        %5234 = vmatprep.subr.bf16.mxu0 0
        %5235 = vmatpush2.bf16.msra.mxu0 0
        %5236 = vmatprep.subr.bf16.mxu0 0
        %5237 = vmatpush2.bf16.msra.mxu0 0
        %5238 = vmatprep.subr.bf16.mxu0 0
        %5239 = vmatpush2.bf16.msra.mxu0 0
        %5240 = vmatprep.subr.bf16.mxu0 0
        %5241 = vmatpush2.bf16.msra.mxu0 0
        %5242 = vmatprep.subr.bf16.mxu0 0
        %5243 = vmatpush2.bf16.msra.mxu0 0
        %5244 = vmatprep.subr.bf16.mxu0 0
        %5245 = vmatpush2.bf16.msra.mxu0 0
        %5246 = vmatprep.subr.bf16.mxu0 0
        %5247 = vmatpush2.bf16.msra.mxu0 0
        %5248 = vmatprep.subr.bf16.mxu0 0
        %5249 = vmatpush2.bf16.msra.mxu0 0
        %5250 = vmatprep.mubr.bf16.mxu0 0
        %5251 = vmatmul.mubr.bf16.gmra.mxu0 %v5216
        %v5252 = vpop.f32.mrf.mxu0
        %v5253 = vadd.f32 0.0, %v5252
        %v5254 = vpop.f32.mrf.mxu0
        %v5255 = vpop.f32.mrf.mxu0
        %v5256 = vpop.f32.mrf.mxu0
        %5257 = vdwg.mxu0
        %v5259 = vsel %vm4698, %v1732, 0
        %5261 = vmatprep.subr.bf16.mxu0 0
        %5262 = vmatpush1.bf16.msra.mxu0 0
        %5263 = vmatprep.subr.bf16.mxu0 0
        %5264 = vmatpush1.bf16.msra.mxu0 0
        %5265 = vmatprep.subr.bf16.mxu0 0
        %5266 = vmatpush1.bf16.msra.mxu0 0
        %5267 = vmatprep.subr.bf16.mxu0 0
        %5268 = vmatpush1.bf16.msra.mxu0 0
        %5269 = vmatprep.subr.bf16.mxu0 0
        %5270 = vmatpush1.bf16.msra.mxu0 0
        %5271 = vmatprep.subr.bf16.mxu0 0
        %5272 = vmatpush1.bf16.msra.mxu0 0
        %5273 = vmatprep.subr.bf16.mxu0 0
        %5274 = vmatpush1.bf16.msra.mxu0 0
        %5275 = vmatprep.subr.bf16.mxu0 0
        %5276 = vmatpush1.bf16.msra.mxu0 %v4679
        %5277 = vmatprep.subr.bf16.mxu0 0
        %5278 = vmatpush2.bf16.msra.mxu0 0
        %5279 = vmatprep.subr.bf16.mxu0 0
        %5280 = vmatpush2.bf16.msra.mxu0 0
        %5281 = vmatprep.subr.bf16.mxu0 0
        %5282 = vmatpush2.bf16.msra.mxu0 0
        %5283 = vmatprep.subr.bf16.mxu0 0
        %5284 = vmatpush2.bf16.msra.mxu0 0
        %5285 = vmatprep.subr.bf16.mxu0 0
        %5286 = vmatpush2.bf16.msra.mxu0 0
        %5287 = vmatprep.subr.bf16.mxu0 0
        %5288 = vmatpush2.bf16.msra.mxu0 0
        %5289 = vmatprep.subr.bf16.mxu0 0
        %5290 = vmatpush2.bf16.msra.mxu0 0
        %5291 = vmatprep.subr.bf16.mxu0 0
        %5292 = vmatpush2.bf16.msra.mxu0 0
        %5293 = vmatprep.mubr.bf16.mxu0 0
        %5294 = vmatmul.mubr.bf16.gmra.mxu0 %v5259
        %v5295 = vpop.f32.mrf.mxu0
        %v5296 = vadd.f32 0.0, %v5295
        %v5297 = vpop.f32.mrf.mxu0
        %v5298 = vpop.f32.mrf.mxu0
        %v5299 = vpop.f32.mrf.mxu0
        %5300 = vdwg.mxu0
        %v5302 = vsel %vm4698, %v1733, 0
        %5304 = vmatprep.subr.bf16.mxu0 0
        %5305 = vmatpush1.bf16.msra.mxu0 0
        %5306 = vmatprep.subr.bf16.mxu0 0
        %5307 = vmatpush1.bf16.msra.mxu0 0
        %5308 = vmatprep.subr.bf16.mxu0 0
        %5309 = vmatpush1.bf16.msra.mxu0 0
        %5310 = vmatprep.subr.bf16.mxu0 0
        %5311 = vmatpush1.bf16.msra.mxu0 0
        %5312 = vmatprep.subr.bf16.mxu0 0
        %5313 = vmatpush1.bf16.msra.mxu0 0
        %5314 = vmatprep.subr.bf16.mxu0 0
        %5315 = vmatpush1.bf16.msra.mxu0 0
        %5316 = vmatprep.subr.bf16.mxu0 0
        %5317 = vmatpush1.bf16.msra.mxu0 0
        %5318 = vmatprep.subr.bf16.mxu0 0
        %5319 = vmatpush1.bf16.msra.mxu0 %v4680
        %5320 = vmatprep.subr.bf16.mxu0 0
        %5321 = vmatpush2.bf16.msra.mxu0 0
        %5322 = vmatprep.subr.bf16.mxu0 0
        %5323 = vmatpush2.bf16.msra.mxu0 0
        %5324 = vmatprep.subr.bf16.mxu0 0
        %5325 = vmatpush2.bf16.msra.mxu0 0
        %5326 = vmatprep.subr.bf16.mxu0 0
        %5327 = vmatpush2.bf16.msra.mxu0 0
        %5328 = vmatprep.subr.bf16.mxu0 0
        %5329 = vmatpush2.bf16.msra.mxu0 0
        %5330 = vmatprep.subr.bf16.mxu0 0
        %5331 = vmatpush2.bf16.msra.mxu0 0
        %5332 = vmatprep.subr.bf16.mxu0 0
        %5333 = vmatpush2.bf16.msra.mxu0 0
        %5334 = vmatprep.subr.bf16.mxu0 0
        %5335 = vmatpush2.bf16.msra.mxu0 0
        %5336 = vmatprep.mubr.bf16.mxu0 0
        %5337 = vmatmul.mubr.bf16.gmra.mxu0 %v5302
        %v5338 = vpop.f32.mrf.mxu0
        %v5339 = vadd.f32 0.0, %v5338
        %v5340 = vpop.f32.mrf.mxu0
        %v5341 = vpop.f32.mrf.mxu0
        %v5342 = vpop.f32.mrf.mxu0
        %5343 = vdwg.mxu0
        %v5345 = vsel %vm4698, %v1734, 0
        %5347 = vmatprep.subr.bf16.mxu0 0
        %5348 = vmatpush1.bf16.msra.mxu0 0
        %5349 = vmatprep.subr.bf16.mxu0 0
        %5350 = vmatpush1.bf16.msra.mxu0 0
        %5351 = vmatprep.subr.bf16.mxu0 0
        %5352 = vmatpush1.bf16.msra.mxu0 0
        %5353 = vmatprep.subr.bf16.mxu0 0
        %5354 = vmatpush1.bf16.msra.mxu0 0
        %5355 = vmatprep.subr.bf16.mxu0 0
        %5356 = vmatpush1.bf16.msra.mxu0 0
        %5357 = vmatprep.subr.bf16.mxu0 0
        %5358 = vmatpush1.bf16.msra.mxu0 0
        %5359 = vmatprep.subr.bf16.mxu0 0
        %5360 = vmatpush1.bf16.msra.mxu0 0
        %5361 = vmatprep.subr.bf16.mxu0 0
        %5362 = vmatpush1.bf16.msra.mxu0 %v4681
        %5363 = vmatprep.subr.bf16.mxu0 0
        %5364 = vmatpush2.bf16.msra.mxu0 0
        %5365 = vmatprep.subr.bf16.mxu0 0
        %5366 = vmatpush2.bf16.msra.mxu0 0
        %5367 = vmatprep.subr.bf16.mxu0 0
        %5368 = vmatpush2.bf16.msra.mxu0 0
        %5369 = vmatprep.subr.bf16.mxu0 0
        %5370 = vmatpush2.bf16.msra.mxu0 0
        %5371 = vmatprep.subr.bf16.mxu0 0
        %5372 = vmatpush2.bf16.msra.mxu0 0
        %5373 = vmatprep.subr.bf16.mxu0 0
        %5374 = vmatpush2.bf16.msra.mxu0 0
        %5375 = vmatprep.subr.bf16.mxu0 0
        %5376 = vmatpush2.bf16.msra.mxu0 0
        %5377 = vmatprep.subr.bf16.mxu0 0
        %5378 = vmatpush2.bf16.msra.mxu0 0
        %5379 = vmatprep.mubr.bf16.mxu0 0
        %5380 = vmatmul.mubr.bf16.gmra.mxu0 %v5345
        %v5381 = vpop.f32.mrf.mxu0
        %v5382 = vadd.f32 0.0, %v5381
        %v5383 = vpop.f32.mrf.mxu0
        %v5384 = vpop.f32.mrf.mxu0
        %v5385 = vpop.f32.mrf.mxu0
        %5386 = vdwg.mxu0
        %v5388 = vsel %vm4698, %v1735, 0
        %5390 = vmatprep.subr.bf16.mxu0 0
        %5391 = vmatpush1.bf16.msra.mxu0 0
        %5392 = vmatprep.subr.bf16.mxu0 0
        %5393 = vmatpush1.bf16.msra.mxu0 0
        %5394 = vmatprep.subr.bf16.mxu0 0
        %5395 = vmatpush1.bf16.msra.mxu0 0
        %5396 = vmatprep.subr.bf16.mxu0 0
        %5397 = vmatpush1.bf16.msra.mxu0 0
        %5398 = vmatprep.subr.bf16.mxu0 0
        %5399 = vmatpush1.bf16.msra.mxu0 0
        %5400 = vmatprep.subr.bf16.mxu0 0
        %5401 = vmatpush1.bf16.msra.mxu0 0
        %5402 = vmatprep.subr.bf16.mxu0 0
        %5403 = vmatpush1.bf16.msra.mxu0 0
        %5404 = vmatprep.subr.bf16.mxu0 0
        %5405 = vmatpush1.bf16.msra.mxu0 %v4682
        %5406 = vmatprep.subr.bf16.mxu0 0
        %5407 = vmatpush2.bf16.msra.mxu0 0
        %5408 = vmatprep.subr.bf16.mxu0 0
        %5409 = vmatpush2.bf16.msra.mxu0 0
        %5410 = vmatprep.subr.bf16.mxu0 0
        %5411 = vmatpush2.bf16.msra.mxu0 0
        %5412 = vmatprep.subr.bf16.mxu0 0
        %5413 = vmatpush2.bf16.msra.mxu0 0
        %5414 = vmatprep.subr.bf16.mxu0 0
        %5415 = vmatpush2.bf16.msra.mxu0 0
        %5416 = vmatprep.subr.bf16.mxu0 0
        %5417 = vmatpush2.bf16.msra.mxu0 0
        %5418 = vmatprep.subr.bf16.mxu0 0
        %5419 = vmatpush2.bf16.msra.mxu0 0
        %5420 = vmatprep.subr.bf16.mxu0 0
        %5421 = vmatpush2.bf16.msra.mxu0 0
        %5422 = vmatprep.mubr.bf16.mxu0 0
        %5423 = vmatmul.mubr.bf16.gmra.mxu0 %v5388
        %v5424 = vpop.f32.mrf.mxu0
        %v5425 = vadd.f32 0.0, %v5424
        %v5426 = vpop.f32.mrf.mxu0
        %v5427 = vpop.f32.mrf.mxu0
        %v5428 = vpop.f32.mrf.mxu0
        %5429 = vdwg.mxu0
        %v5431 = vsel %vm4698, %v1736, 0
        %5433 = vmatprep.subr.bf16.mxu0 0
        %5434 = vmatpush1.bf16.msra.mxu0 0
        %5435 = vmatprep.subr.bf16.mxu0 0
        %5436 = vmatpush1.bf16.msra.mxu0 0
        %5437 = vmatprep.subr.bf16.mxu0 0
        %5438 = vmatpush1.bf16.msra.mxu0 0
        %5439 = vmatprep.subr.bf16.mxu0 0
        %5440 = vmatpush1.bf16.msra.mxu0 0
        %5441 = vmatprep.subr.bf16.mxu0 0
        %5442 = vmatpush1.bf16.msra.mxu0 0
        %5443 = vmatprep.subr.bf16.mxu0 0
        %5444 = vmatpush1.bf16.msra.mxu0 0
        %5445 = vmatprep.subr.bf16.mxu0 0
        %5446 = vmatpush1.bf16.msra.mxu0 0
        %5447 = vmatprep.subr.bf16.mxu0 0
        %5448 = vmatpush1.bf16.msra.mxu0 %v4683
        %5449 = vmatprep.subr.bf16.mxu0 0
        %5450 = vmatpush2.bf16.msra.mxu0 0
        %5451 = vmatprep.subr.bf16.mxu0 0
        %5452 = vmatpush2.bf16.msra.mxu0 0
        %5453 = vmatprep.subr.bf16.mxu0 0
        %5454 = vmatpush2.bf16.msra.mxu0 0
        %5455 = vmatprep.subr.bf16.mxu0 0
        %5456 = vmatpush2.bf16.msra.mxu0 0
        %5457 = vmatprep.subr.bf16.mxu0 0
        %5458 = vmatpush2.bf16.msra.mxu0 0
        %5459 = vmatprep.subr.bf16.mxu0 0
        %5460 = vmatpush2.bf16.msra.mxu0 0
        %5461 = vmatprep.subr.bf16.mxu0 0
        %5462 = vmatpush2.bf16.msra.mxu0 0
        %5463 = vmatprep.subr.bf16.mxu0 0
        %5464 = vmatpush2.bf16.msra.mxu0 0
        %5465 = vmatprep.mubr.bf16.mxu0 0
        %5466 = vmatmul.mubr.bf16.gmra.mxu0 %v5431
        %v5467 = vpop.f32.mrf.mxu0
        %v5468 = vadd.f32 0.0, %v5467
        %v5469 = vpop.f32.mrf.mxu0
        %v5470 = vpop.f32.mrf.mxu0
        %v5471 = vpop.f32.mrf.mxu0
        %5472 = vdwg.mxu0
        %v5474 = vsel %vm4698, %v1737, 0
        %5476 = vmatprep.subr.bf16.mxu0 0
        %5477 = vmatpush1.bf16.msra.mxu0 0
        %5478 = vmatprep.subr.bf16.mxu0 0
        %5479 = vmatpush1.bf16.msra.mxu0 0
        %5480 = vmatprep.subr.bf16.mxu0 0
        %5481 = vmatpush1.bf16.msra.mxu0 0
        %5482 = vmatprep.subr.bf16.mxu0 0
        %5483 = vmatpush1.bf16.msra.mxu0 0
        %5484 = vmatprep.subr.bf16.mxu0 0
        %5485 = vmatpush1.bf16.msra.mxu0 0
        %5486 = vmatprep.subr.bf16.mxu0 0
        %5487 = vmatpush1.bf16.msra.mxu0 0
        %5488 = vmatprep.subr.bf16.mxu0 0
        %5489 = vmatpush1.bf16.msra.mxu0 0
        %5490 = vmatprep.subr.bf16.mxu0 0
        %5491 = vmatpush1.bf16.msra.mxu0 %v4684
        %5492 = vmatprep.subr.bf16.mxu0 0
        %5493 = vmatpush2.bf16.msra.mxu0 0
        %5494 = vmatprep.subr.bf16.mxu0 0
        %5495 = vmatpush2.bf16.msra.mxu0 0
        %5496 = vmatprep.subr.bf16.mxu0 0
        %5497 = vmatpush2.bf16.msra.mxu0 0
        %5498 = vmatprep.subr.bf16.mxu0 0
        %5499 = vmatpush2.bf16.msra.mxu0 0
        %5500 = vmatprep.subr.bf16.mxu0 0
        %5501 = vmatpush2.bf16.msra.mxu0 0
        %5502 = vmatprep.subr.bf16.mxu0 0
        %5503 = vmatpush2.bf16.msra.mxu0 0
        %5504 = vmatprep.subr.bf16.mxu0 0
        %5505 = vmatpush2.bf16.msra.mxu0 0
        %5506 = vmatprep.subr.bf16.mxu0 0
        %5507 = vmatpush2.bf16.msra.mxu0 0
        %5508 = vmatprep.mubr.bf16.mxu0 0
        %5509 = vmatmul.mubr.bf16.gmra.mxu0 %v5474
        %v5510 = vpop.f32.mrf.mxu0
        %v5511 = vadd.f32 0.0, %v5510
        %v5512 = vpop.f32.mrf.mxu0
        %v5513 = vpop.f32.mrf.mxu0
        %v5514 = vpop.f32.mrf.mxu0
        %5515 = vdwg.mxu0
        %v5517 = vsel %vm4698, %v1738, 0
        %5519 = vmatprep.subr.bf16.mxu0 0
        %5520 = vmatpush1.bf16.msra.mxu0 0
        %5521 = vmatprep.subr.bf16.mxu0 0
        %5522 = vmatpush1.bf16.msra.mxu0 0
        %5523 = vmatprep.subr.bf16.mxu0 0
        %5524 = vmatpush1.bf16.msra.mxu0 0
        %5525 = vmatprep.subr.bf16.mxu0 0
        %5526 = vmatpush1.bf16.msra.mxu0 0
        %5527 = vmatprep.subr.bf16.mxu0 0
        %5528 = vmatpush1.bf16.msra.mxu0 0
        %5529 = vmatprep.subr.bf16.mxu0 0
        %5530 = vmatpush1.bf16.msra.mxu0 0
        %5531 = vmatprep.subr.bf16.mxu0 0
        %5532 = vmatpush1.bf16.msra.mxu0 0
        %5533 = vmatprep.subr.bf16.mxu0 0
        %5534 = vmatpush1.bf16.msra.mxu0 %v4685
        %5535 = vmatprep.subr.bf16.mxu0 0
        %5536 = vmatpush2.bf16.msra.mxu0 0
        %5537 = vmatprep.subr.bf16.mxu0 0
        %5538 = vmatpush2.bf16.msra.mxu0 0
        %5539 = vmatprep.subr.bf16.mxu0 0
        %5540 = vmatpush2.bf16.msra.mxu0 0
        %5541 = vmatprep.subr.bf16.mxu0 0
        %5542 = vmatpush2.bf16.msra.mxu0 0
        %5543 = vmatprep.subr.bf16.mxu0 0
        %5544 = vmatpush2.bf16.msra.mxu0 0
        %5545 = vmatprep.subr.bf16.mxu0 0
        %5546 = vmatpush2.bf16.msra.mxu0 0
        %5547 = vmatprep.subr.bf16.mxu0 0
        %5548 = vmatpush2.bf16.msra.mxu0 0
        %5549 = vmatprep.subr.bf16.mxu0 0
        %5550 = vmatpush2.bf16.msra.mxu0 0
        %5551 = vmatprep.mubr.bf16.mxu0 0
        %5552 = vmatmul.mubr.bf16.gmra.mxu0 %v5517
        %v5553 = vpop.f32.mrf.mxu0
        %v5554 = vadd.f32 0.0, %v5553
        %v5555 = vpop.f32.mrf.mxu0
        %v5556 = vpop.f32.mrf.mxu0
        %v5557 = vpop.f32.mrf.mxu0
        %5558 = vdwg.mxu0
        %v5560 = vsel %vm4698, %v1739, 0
        %5562 = vmatprep.subr.bf16.mxu0 0
        %5563 = vmatpush1.bf16.msra.mxu0 0
        %5564 = vmatprep.subr.bf16.mxu0 0
        %5565 = vmatpush1.bf16.msra.mxu0 0
        %5566 = vmatprep.subr.bf16.mxu0 0
        %5567 = vmatpush1.bf16.msra.mxu0 0
        %5568 = vmatprep.subr.bf16.mxu0 0
        %5569 = vmatpush1.bf16.msra.mxu0 0
        %5570 = vmatprep.subr.bf16.mxu0 0
        %5571 = vmatpush1.bf16.msra.mxu0 0
        %5572 = vmatprep.subr.bf16.mxu0 0
        %5573 = vmatpush1.bf16.msra.mxu0 0
        %5574 = vmatprep.subr.bf16.mxu0 0
        %5575 = vmatpush1.bf16.msra.mxu0 0
        %5576 = vmatprep.subr.bf16.mxu0 0
        %5577 = vmatpush1.bf16.msra.mxu0 %v4686
        %5578 = vmatprep.subr.bf16.mxu0 0
        %5579 = vmatpush2.bf16.msra.mxu0 0
        %5580 = vmatprep.subr.bf16.mxu0 0
        %5581 = vmatpush2.bf16.msra.mxu0 0
        %5582 = vmatprep.subr.bf16.mxu0 0
        %5583 = vmatpush2.bf16.msra.mxu0 0
        %5584 = vmatprep.subr.bf16.mxu0 0
        %5585 = vmatpush2.bf16.msra.mxu0 0
        %5586 = vmatprep.subr.bf16.mxu0 0
        %5587 = vmatpush2.bf16.msra.mxu0 0
        %5588 = vmatprep.subr.bf16.mxu0 0
        %5589 = vmatpush2.bf16.msra.mxu0 0
        %5590 = vmatprep.subr.bf16.mxu0 0
        %5591 = vmatpush2.bf16.msra.mxu0 0
        %5592 = vmatprep.subr.bf16.mxu0 0
        %5593 = vmatpush2.bf16.msra.mxu0 0
        %5594 = vmatprep.mubr.bf16.mxu0 0
        %5595 = vmatmul.mubr.bf16.gmra.mxu0 %v5560
        %v5596 = vpop.f32.mrf.mxu0
        %v5597 = vadd.f32 0.0, %v5596
        %v5598 = vpop.f32.mrf.mxu0
        %v5599 = vpop.f32.mrf.mxu0
        %v5600 = vpop.f32.mrf.mxu0
        %5601 = vdwg.mxu0
        %v5603 = vsel %vm4698, %v1740, 0
        %5605 = vmatprep.subr.bf16.mxu0 0
        %5606 = vmatpush1.bf16.msra.mxu0 0
        %5607 = vmatprep.subr.bf16.mxu0 0
        %5608 = vmatpush1.bf16.msra.mxu0 0
        %5609 = vmatprep.subr.bf16.mxu0 0
        %5610 = vmatpush1.bf16.msra.mxu0 0
        %5611 = vmatprep.subr.bf16.mxu0 0
        %5612 = vmatpush1.bf16.msra.mxu0 0
        %5613 = vmatprep.subr.bf16.mxu0 0
        %5614 = vmatpush1.bf16.msra.mxu0 0
        %5615 = vmatprep.subr.bf16.mxu0 0
        %5616 = vmatpush1.bf16.msra.mxu0 0
        %5617 = vmatprep.subr.bf16.mxu0 0
        %5618 = vmatpush1.bf16.msra.mxu0 0
        %5619 = vmatprep.subr.bf16.mxu0 0
        %5620 = vmatpush1.bf16.msra.mxu0 %v4687
        %5621 = vmatprep.subr.bf16.mxu0 0
        %5622 = vmatpush2.bf16.msra.mxu0 0
        %5623 = vmatprep.subr.bf16.mxu0 0
        %5624 = vmatpush2.bf16.msra.mxu0 0
        %5625 = vmatprep.subr.bf16.mxu0 0
        %5626 = vmatpush2.bf16.msra.mxu0 0
        %5627 = vmatprep.subr.bf16.mxu0 0
        %5628 = vmatpush2.bf16.msra.mxu0 0
        %5629 = vmatprep.subr.bf16.mxu0 0
        %5630 = vmatpush2.bf16.msra.mxu0 0
        %5631 = vmatprep.subr.bf16.mxu0 0
        %5632 = vmatpush2.bf16.msra.mxu0 0
        %5633 = vmatprep.subr.bf16.mxu0 0
        %5634 = vmatpush2.bf16.msra.mxu0 0
        %5635 = vmatprep.subr.bf16.mxu0 0
        %5636 = vmatpush2.bf16.msra.mxu0 0
        %5637 = vmatprep.mubr.bf16.mxu0 0
        %5638 = vmatmul.mubr.bf16.gmra.mxu0 %v5603
        %v5639 = vpop.f32.mrf.mxu0
        %v5640 = vadd.f32 0.0, %v5639
        %v5641 = vpop.f32.mrf.mxu0
        %v5642 = vpop.f32.mrf.mxu0
        %v5643 = vpop.f32.mrf.mxu0
        %5644 = vdwg.mxu0
        %v5646 = vsel %vm4698, %v1741, 0
        %5648 = vmatprep.subr.bf16.mxu0 0
        %5649 = vmatpush1.bf16.msra.mxu0 0
        %5650 = vmatprep.subr.bf16.mxu0 0
        %5651 = vmatpush1.bf16.msra.mxu0 0
        %5652 = vmatprep.subr.bf16.mxu0 0
        %5653 = vmatpush1.bf16.msra.mxu0 0
        %5654 = vmatprep.subr.bf16.mxu0 0
        %5655 = vmatpush1.bf16.msra.mxu0 0
        %5656 = vmatprep.subr.bf16.mxu0 0
        %5657 = vmatpush1.bf16.msra.mxu0 0
        %5658 = vmatprep.subr.bf16.mxu0 0
        %5659 = vmatpush1.bf16.msra.mxu0 0
        %5660 = vmatprep.subr.bf16.mxu0 0
        %5661 = vmatpush1.bf16.msra.mxu0 0
        %5662 = vmatprep.subr.bf16.mxu0 0
        %5663 = vmatpush1.bf16.msra.mxu0 %v4688
        %5664 = vmatprep.subr.bf16.mxu0 0
        %5665 = vmatpush2.bf16.msra.mxu0 0
        %5666 = vmatprep.subr.bf16.mxu0 0
        %5667 = vmatpush2.bf16.msra.mxu0 0
        %5668 = vmatprep.subr.bf16.mxu0 0
        %5669 = vmatpush2.bf16.msra.mxu0 0
        %5670 = vmatprep.subr.bf16.mxu0 0
        %5671 = vmatpush2.bf16.msra.mxu0 0
        %5672 = vmatprep.subr.bf16.mxu0 0
        %5673 = vmatpush2.bf16.msra.mxu0 0
        %5674 = vmatprep.subr.bf16.mxu0 0
        %5675 = vmatpush2.bf16.msra.mxu0 0
        %5676 = vmatprep.subr.bf16.mxu0 0
        %5677 = vmatpush2.bf16.msra.mxu0 0
        %5678 = vmatprep.subr.bf16.mxu0 0
        %5679 = vmatpush2.bf16.msra.mxu0 0
        %5680 = vmatprep.mubr.bf16.mxu0 0
        %5681 = vmatmul.mubr.bf16.gmra.mxu0 %v5646
        %v5682 = vpop.f32.mrf.mxu0
        %v5683 = vadd.f32 0.0, %v5682
        %v5684 = vpop.f32.mrf.mxu0
        %v5685 = vpop.f32.mrf.mxu0
        %v5686 = vpop.f32.mrf.mxu0
        %5687 = vdwg.mxu0
        %v5689 = vsel %vm4698, %v1742, 0
        %5691 = vmatprep.subr.bf16.mxu0 0
        %5692 = vmatpush1.bf16.msra.mxu0 0
        %5693 = vmatprep.subr.bf16.mxu0 0
        %5694 = vmatpush1.bf16.msra.mxu0 0
        %5695 = vmatprep.subr.bf16.mxu0 0
        %5696 = vmatpush1.bf16.msra.mxu0 0
        %5697 = vmatprep.subr.bf16.mxu0 0
        %5698 = vmatpush1.bf16.msra.mxu0 0
        %5699 = vmatprep.subr.bf16.mxu0 0
        %5700 = vmatpush1.bf16.msra.mxu0 0
        %5701 = vmatprep.subr.bf16.mxu0 0
        %5702 = vmatpush1.bf16.msra.mxu0 0
        %5703 = vmatprep.subr.bf16.mxu0 0
        %5704 = vmatpush1.bf16.msra.mxu0 0
        %5705 = vmatprep.subr.bf16.mxu0 0
        %5706 = vmatpush1.bf16.msra.mxu0 %v4689
        %5707 = vmatprep.subr.bf16.mxu0 0
        %5708 = vmatpush2.bf16.msra.mxu0 0
        %5709 = vmatprep.subr.bf16.mxu0 0
        %5710 = vmatpush2.bf16.msra.mxu0 0
        %5711 = vmatprep.subr.bf16.mxu0 0
        %5712 = vmatpush2.bf16.msra.mxu0 0
        %5713 = vmatprep.subr.bf16.mxu0 0
        %5714 = vmatpush2.bf16.msra.mxu0 0
        %5715 = vmatprep.subr.bf16.mxu0 0
        %5716 = vmatpush2.bf16.msra.mxu0 0
        %5717 = vmatprep.subr.bf16.mxu0 0
        %5718 = vmatpush2.bf16.msra.mxu0 0
        %5719 = vmatprep.subr.bf16.mxu0 0
        %5720 = vmatpush2.bf16.msra.mxu0 0
        %5721 = vmatprep.subr.bf16.mxu0 0
        %5722 = vmatpush2.bf16.msra.mxu0 0
        %5723 = vmatprep.mubr.bf16.mxu0 0
        %5724 = vmatmul.mubr.bf16.gmra.mxu0 %v5689
        %v5725 = vpop.f32.mrf.mxu0
        %v5726 = vadd.f32 0.0, %v5725
        %v5727 = vpop.f32.mrf.mxu0
        %v5728 = vpop.f32.mrf.mxu0
        %v5729 = vpop.f32.mrf.mxu0
        %5730 = vdwg.mxu0
        %v5732 = vsel %vm4698, %v1743, 0
        %5734 = vmatprep.subr.bf16.mxu0 0
        %5735 = vmatpush1.bf16.msra.mxu0 0
        %5736 = vmatprep.subr.bf16.mxu0 0
        %5737 = vmatpush1.bf16.msra.mxu0 0
        %5738 = vmatprep.subr.bf16.mxu0 0
        %5739 = vmatpush1.bf16.msra.mxu0 0
        %5740 = vmatprep.subr.bf16.mxu0 0
        %5741 = vmatpush1.bf16.msra.mxu0 0
        %5742 = vmatprep.subr.bf16.mxu0 0
        %5743 = vmatpush1.bf16.msra.mxu0 0
        %5744 = vmatprep.subr.bf16.mxu0 0
        %5745 = vmatpush1.bf16.msra.mxu0 0
        %5746 = vmatprep.subr.bf16.mxu0 0
        %5747 = vmatpush1.bf16.msra.mxu0 0
        %5748 = vmatprep.subr.bf16.mxu0 0
        %5749 = vmatpush1.bf16.msra.mxu0 %v4690
        %5750 = vmatprep.subr.bf16.mxu0 0
        %5751 = vmatpush2.bf16.msra.mxu0 0
        %5752 = vmatprep.subr.bf16.mxu0 0
        %5753 = vmatpush2.bf16.msra.mxu0 0
        %5754 = vmatprep.subr.bf16.mxu0 0
        %5755 = vmatpush2.bf16.msra.mxu0 0
        %5756 = vmatprep.subr.bf16.mxu0 0
        %5757 = vmatpush2.bf16.msra.mxu0 0
        %5758 = vmatprep.subr.bf16.mxu0 0
        %5759 = vmatpush2.bf16.msra.mxu0 0
        %5760 = vmatprep.subr.bf16.mxu0 0
        %5761 = vmatpush2.bf16.msra.mxu0 0
        %5762 = vmatprep.subr.bf16.mxu0 0
        %5763 = vmatpush2.bf16.msra.mxu0 0
        %5764 = vmatprep.subr.bf16.mxu0 0
        %5765 = vmatpush2.bf16.msra.mxu0 0
        %5766 = vmatprep.mubr.bf16.mxu0 0
        %5767 = vmatmul.mubr.bf16.gmra.mxu0 %v5732
        %v5768 = vpop.f32.mrf.mxu0
        %v5769 = vadd.f32 0.0, %v5768
        %v5770 = vpop.f32.mrf.mxu0
        %v5771 = vpop.f32.mrf.mxu0
        %v5772 = vpop.f32.mrf.mxu0
        %5773 = vdwg.mxu0
        %v5775 = vsel %vm4698, %v1744, 0
        %5777 = vmatprep.subr.bf16.mxu0 0
        %5778 = vmatpush1.bf16.msra.mxu0 0
        %5779 = vmatprep.subr.bf16.mxu0 0
        %5780 = vmatpush1.bf16.msra.mxu0 0
        %5781 = vmatprep.subr.bf16.mxu0 0
        %5782 = vmatpush1.bf16.msra.mxu0 0
        %5783 = vmatprep.subr.bf16.mxu0 0
        %5784 = vmatpush1.bf16.msra.mxu0 0
        %5785 = vmatprep.subr.bf16.mxu0 0
        %5786 = vmatpush1.bf16.msra.mxu0 0
        %5787 = vmatprep.subr.bf16.mxu0 0
        %5788 = vmatpush1.bf16.msra.mxu0 0
        %5789 = vmatprep.subr.bf16.mxu0 0
        %5790 = vmatpush1.bf16.msra.mxu0 0
        %5791 = vmatprep.subr.bf16.mxu0 0
        %5792 = vmatpush1.bf16.msra.mxu0 %v4691
        %5793 = vmatprep.subr.bf16.mxu0 0
        %5794 = vmatpush2.bf16.msra.mxu0 0
        %5795 = vmatprep.subr.bf16.mxu0 0
        %5796 = vmatpush2.bf16.msra.mxu0 0
        %5797 = vmatprep.subr.bf16.mxu0 0
        %5798 = vmatpush2.bf16.msra.mxu0 0
        %5799 = vmatprep.subr.bf16.mxu0 0
        %5800 = vmatpush2.bf16.msra.mxu0 0
        %5801 = vmatprep.subr.bf16.mxu0 0
        %5802 = vmatpush2.bf16.msra.mxu0 0
        %5803 = vmatprep.subr.bf16.mxu0 0
        %5804 = vmatpush2.bf16.msra.mxu0 0
        %5805 = vmatprep.subr.bf16.mxu0 0
        %5806 = vmatpush2.bf16.msra.mxu0 0
        %5807 = vmatprep.subr.bf16.mxu0 0
        %5808 = vmatpush2.bf16.msra.mxu0 0
        %5809 = vmatprep.mubr.bf16.mxu0 0
        %5810 = vmatmul.mubr.bf16.gmra.mxu0 %v5775
        %v5811 = vpop.f32.mrf.mxu0
        %v5812 = vadd.f32 0.0, %v5811
        %v5813 = vpop.f32.mrf.mxu0
        %v5814 = vpop.f32.mrf.mxu0
        %v5815 = vpop.f32.mrf.mxu0
        %5816 = vdwg.mxu0
        %v5818 = vsel %vm4698, %v1745, 0
        %5820 = vmatprep.subr.bf16.mxu0 0
        %5821 = vmatpush1.bf16.msra.mxu0 0
        %5822 = vmatprep.subr.bf16.mxu0 0
        %5823 = vmatpush1.bf16.msra.mxu0 0
        %5824 = vmatprep.subr.bf16.mxu0 0
        %5825 = vmatpush1.bf16.msra.mxu0 0
        %5826 = vmatprep.subr.bf16.mxu0 0
        %5827 = vmatpush1.bf16.msra.mxu0 0
        %5828 = vmatprep.subr.bf16.mxu0 0
        %5829 = vmatpush1.bf16.msra.mxu0 0
        %5830 = vmatprep.subr.bf16.mxu0 0
        %5831 = vmatpush1.bf16.msra.mxu0 0
        %5832 = vmatprep.subr.bf16.mxu0 0
        %5833 = vmatpush1.bf16.msra.mxu0 0
        %5834 = vmatprep.subr.bf16.mxu0 0
        %5835 = vmatpush1.bf16.msra.mxu0 %v4692
        %5836 = vmatprep.subr.bf16.mxu0 0
        %5837 = vmatpush2.bf16.msra.mxu0 0
        %5838 = vmatprep.subr.bf16.mxu0 0
        %5839 = vmatpush2.bf16.msra.mxu0 0
        %5840 = vmatprep.subr.bf16.mxu0 0
        %5841 = vmatpush2.bf16.msra.mxu0 0
        %5842 = vmatprep.subr.bf16.mxu0 0
        %5843 = vmatpush2.bf16.msra.mxu0 0
        %5844 = vmatprep.subr.bf16.mxu0 0
        %5845 = vmatpush2.bf16.msra.mxu0 0
        %5846 = vmatprep.subr.bf16.mxu0 0
        %5847 = vmatpush2.bf16.msra.mxu0 0
        %5848 = vmatprep.subr.bf16.mxu0 0
        %5849 = vmatpush2.bf16.msra.mxu0 0
        %5850 = vmatprep.subr.bf16.mxu0 0
        %5851 = vmatpush2.bf16.msra.mxu0 0
        %5852 = vmatprep.mubr.bf16.mxu0 0
        %5853 = vmatmul.mubr.bf16.gmra.mxu0 %v5818
        %v5854 = vpop.f32.mrf.mxu0
        %v5855 = vadd.f32 0.0, %v5854
        %v5856 = vpop.f32.mrf.mxu0
        %v5857 = vpop.f32.mrf.mxu0
        %v5858 = vpop.f32.mrf.mxu0
        %5859 = vdwg.mxu0
        %v5861 = vsel %vm4698, %v1746, 0
        %5863 = vmatprep.subr.bf16.mxu0 0
        %5864 = vmatpush1.bf16.msra.mxu0 0
        %5865 = vmatprep.subr.bf16.mxu0 0
        %5866 = vmatpush1.bf16.msra.mxu0 0
        %5867 = vmatprep.subr.bf16.mxu0 0
        %5868 = vmatpush1.bf16.msra.mxu0 0
        %5869 = vmatprep.subr.bf16.mxu0 0
        %5870 = vmatpush1.bf16.msra.mxu0 0
        %5871 = vmatprep.subr.bf16.mxu0 0
        %5872 = vmatpush1.bf16.msra.mxu0 0
        %5873 = vmatprep.subr.bf16.mxu0 0
        %5874 = vmatpush1.bf16.msra.mxu0 0
        %5875 = vmatprep.subr.bf16.mxu0 0
        %5876 = vmatpush1.bf16.msra.mxu0 0
        %5877 = vmatprep.subr.bf16.mxu0 0
        %5878 = vmatpush1.bf16.msra.mxu0 %v4693
        %5879 = vmatprep.subr.bf16.mxu0 0
        %5880 = vmatpush2.bf16.msra.mxu0 0
        %5881 = vmatprep.subr.bf16.mxu0 0
        %5882 = vmatpush2.bf16.msra.mxu0 0
        %5883 = vmatprep.subr.bf16.mxu0 0
        %5884 = vmatpush2.bf16.msra.mxu0 0
        %5885 = vmatprep.subr.bf16.mxu0 0
        %5886 = vmatpush2.bf16.msra.mxu0 0
        %5887 = vmatprep.subr.bf16.mxu0 0
        %5888 = vmatpush2.bf16.msra.mxu0 0
        %5889 = vmatprep.subr.bf16.mxu0 0
        %5890 = vmatpush2.bf16.msra.mxu0 0
        %5891 = vmatprep.subr.bf16.mxu0 0
        %5892 = vmatpush2.bf16.msra.mxu0 0
        %5893 = vmatprep.subr.bf16.mxu0 0
        %5894 = vmatpush2.bf16.msra.mxu0 0
        %5895 = vmatprep.mubr.bf16.mxu0 0
        %5896 = vmatmul.mubr.bf16.gmra.mxu0 %v5861
        %v5897 = vpop.f32.mrf.mxu0
        %v5898 = vadd.f32 0.0, %v5897
        %v5899 = vpop.f32.mrf.mxu0
        %v5900 = vpop.f32.mrf.mxu0
        %v5901 = vpop.f32.mrf.mxu0
        %5902 = vdwg.mxu0
        %v5904 = vsel %vm4698, %v1747, 0
        %5906 = vmatprep.subr.bf16.mxu0 0
        %5907 = vmatpush1.bf16.msra.mxu0 0
        %5908 = vmatprep.subr.bf16.mxu0 0
        %5909 = vmatpush1.bf16.msra.mxu0 0
        %5910 = vmatprep.subr.bf16.mxu0 0
        %5911 = vmatpush1.bf16.msra.mxu0 0
        %5912 = vmatprep.subr.bf16.mxu0 0
        %5913 = vmatpush1.bf16.msra.mxu0 0
        %5914 = vmatprep.subr.bf16.mxu0 0
        %5915 = vmatpush1.bf16.msra.mxu0 0
        %5916 = vmatprep.subr.bf16.mxu0 0
        %5917 = vmatpush1.bf16.msra.mxu0 0
        %5918 = vmatprep.subr.bf16.mxu0 0
        %5919 = vmatpush1.bf16.msra.mxu0 0
        %5920 = vmatprep.subr.bf16.mxu0 0
        %5921 = vmatpush1.bf16.msra.mxu0 %v4694
        %5922 = vmatprep.subr.bf16.mxu0 0
        %5923 = vmatpush2.bf16.msra.mxu0 0
        %5924 = vmatprep.subr.bf16.mxu0 0
        %5925 = vmatpush2.bf16.msra.mxu0 0
        %5926 = vmatprep.subr.bf16.mxu0 0
        %5927 = vmatpush2.bf16.msra.mxu0 0
        %5928 = vmatprep.subr.bf16.mxu0 0
        %5929 = vmatpush2.bf16.msra.mxu0 0
        %5930 = vmatprep.subr.bf16.mxu0 0
        %5931 = vmatpush2.bf16.msra.mxu0 0
        %5932 = vmatprep.subr.bf16.mxu0 0
        %5933 = vmatpush2.bf16.msra.mxu0 0
        %5934 = vmatprep.subr.bf16.mxu0 0
        %5935 = vmatpush2.bf16.msra.mxu0 0
        %5936 = vmatprep.subr.bf16.mxu0 0
        %5937 = vmatpush2.bf16.msra.mxu0 0
        %5938 = vmatprep.mubr.bf16.mxu0 0
        %5939 = vmatmul.mubr.bf16.gmra.mxu0 %v5904
        %v5940 = vpop.f32.mrf.mxu0
        %v5941 = vadd.f32 0.0, %v5940
        %v5942 = vpop.f32.mrf.mxu0
        %v5943 = vpop.f32.mrf.mxu0
        %v5944 = vpop.f32.mrf.mxu0
        %5945 = vdwg.mxu0
        %v5947 = vsel %vm4698, %v1748, 0
        %5949 = vmatprep.subr.bf16.mxu0 0
        %5950 = vmatpush1.bf16.msra.mxu0 0
        %5951 = vmatprep.subr.bf16.mxu0 0
        %5952 = vmatpush1.bf16.msra.mxu0 0
        %5953 = vmatprep.subr.bf16.mxu0 0
        %5954 = vmatpush1.bf16.msra.mxu0 0
        %5955 = vmatprep.subr.bf16.mxu0 0
        %5956 = vmatpush1.bf16.msra.mxu0 0
        %5957 = vmatprep.subr.bf16.mxu0 0
        %5958 = vmatpush1.bf16.msra.mxu0 0
        %5959 = vmatprep.subr.bf16.mxu0 0
        %5960 = vmatpush1.bf16.msra.mxu0 0
        %5961 = vmatprep.subr.bf16.mxu0 0
        %5962 = vmatpush1.bf16.msra.mxu0 0
        %5963 = vmatprep.subr.bf16.mxu0 0
        %5964 = vmatpush1.bf16.msra.mxu0 %v4695
        %5965 = vmatprep.subr.bf16.mxu0 0
        %5966 = vmatpush2.bf16.msra.mxu0 0
        %5967 = vmatprep.subr.bf16.mxu0 0
        %5968 = vmatpush2.bf16.msra.mxu0 0
        %5969 = vmatprep.subr.bf16.mxu0 0
        %5970 = vmatpush2.bf16.msra.mxu0 0
        %5971 = vmatprep.subr.bf16.mxu0 0
        %5972 = vmatpush2.bf16.msra.mxu0 0
        %5973 = vmatprep.subr.bf16.mxu0 0
        %5974 = vmatpush2.bf16.msra.mxu0 0
        %5975 = vmatprep.subr.bf16.mxu0 0
        %5976 = vmatpush2.bf16.msra.mxu0 0
        %5977 = vmatprep.subr.bf16.mxu0 0
        %5978 = vmatpush2.bf16.msra.mxu0 0
        %5979 = vmatprep.subr.bf16.mxu0 0
        %5980 = vmatpush2.bf16.msra.mxu0 0
        %5981 = vmatprep.mubr.bf16.mxu0 0
        %5982 = vmatmul.mubr.bf16.gmra.mxu0 %v5947
        %v5983 = vpop.f32.mrf.mxu0
        %v5984 = vadd.f32 0.0, %v5983
        %v5985 = vpop.f32.mrf.mxu0
        %v5986 = vpop.f32.mrf.mxu0
        %v5987 = vpop.f32.mrf.mxu0
        %5988 = vdwg.mxu0
        %v5990 = vsel %vm4698, %v1749, 0
        %5992 = vmatprep.subr.bf16.mxu0 0
        %5993 = vmatpush1.bf16.msra.mxu0 0
        %5994 = vmatprep.subr.bf16.mxu0 0
        %5995 = vmatpush1.bf16.msra.mxu0 0
        %5996 = vmatprep.subr.bf16.mxu0 0
        %5997 = vmatpush1.bf16.msra.mxu0 0
        %5998 = vmatprep.subr.bf16.mxu0 0
        %5999 = vmatpush1.bf16.msra.mxu0 0
        %6000 = vmatprep.subr.bf16.mxu0 0
        %6001 = vmatpush1.bf16.msra.mxu0 0
        %6002 = vmatprep.subr.bf16.mxu0 0
        %6003 = vmatpush1.bf16.msra.mxu0 0
        %6004 = vmatprep.subr.bf16.mxu0 0
        %6005 = vmatpush1.bf16.msra.mxu0 0
        %6006 = vmatprep.subr.bf16.mxu0 0
        %6007 = vmatpush1.bf16.msra.mxu0 %v4696
        %6008 = vmatprep.subr.bf16.mxu0 0
        %6009 = vmatpush2.bf16.msra.mxu0 0
        %6010 = vmatprep.subr.bf16.mxu0 0
        %6011 = vmatpush2.bf16.msra.mxu0 0
        %6012 = vmatprep.subr.bf16.mxu0 0
        %6013 = vmatpush2.bf16.msra.mxu0 0
        %6014 = vmatprep.subr.bf16.mxu0 0
        %6015 = vmatpush2.bf16.msra.mxu0 0
        %6016 = vmatprep.subr.bf16.mxu0 0
        %6017 = vmatpush2.bf16.msra.mxu0 0
        %6018 = vmatprep.subr.bf16.mxu0 0
        %6019 = vmatpush2.bf16.msra.mxu0 0
        %6020 = vmatprep.subr.bf16.mxu0 0
        %6021 = vmatpush2.bf16.msra.mxu0 0
        %6022 = vmatprep.subr.bf16.mxu0 0
        %6023 = vmatpush2.bf16.msra.mxu0 0
        %6024 = vmatprep.mubr.bf16.mxu0 0
        %6025 = vmatmul.mubr.bf16.gmra.mxu0 %v5990
        %v6026 = vpop.f32.mrf.mxu0
        %v6027 = vadd.f32 0.0, %v6026
        %v6028 = vpop.f32.mrf.mxu0
        %v6029 = vpop.f32.mrf.mxu0
        %v6030 = vpop.f32.mrf.mxu0
        %6031 = vdwg.mxu0
        %v6033 = vsel %vm4698, %v1750, 0
        %6035 = vmatprep.subr.bf16.mxu0 0
        %6036 = vmatpush1.bf16.msra.mxu0 0
        %6037 = vmatprep.subr.bf16.mxu0 0
        %6038 = vmatpush1.bf16.msra.mxu0 0
        %6039 = vmatprep.subr.bf16.mxu0 0
        %6040 = vmatpush1.bf16.msra.mxu0 0
        %6041 = vmatprep.subr.bf16.mxu0 0
        %6042 = vmatpush1.bf16.msra.mxu0 0
        %6043 = vmatprep.subr.bf16.mxu0 0
        %6044 = vmatpush1.bf16.msra.mxu0 0
        %6045 = vmatprep.subr.bf16.mxu0 0
        %6046 = vmatpush1.bf16.msra.mxu0 0
        %6047 = vmatprep.subr.bf16.mxu0 0
        %6048 = vmatpush1.bf16.msra.mxu0 0
        %6049 = vmatprep.subr.bf16.mxu0 0
        %6050 = vmatpush1.bf16.msra.mxu0 %v4697
        %6051 = vmatprep.subr.bf16.mxu0 0
        %6052 = vmatpush2.bf16.msra.mxu0 0
        %6053 = vmatprep.subr.bf16.mxu0 0
        %6054 = vmatpush2.bf16.msra.mxu0 0
        %6055 = vmatprep.subr.bf16.mxu0 0
        %6056 = vmatpush2.bf16.msra.mxu0 0
        %6057 = vmatprep.subr.bf16.mxu0 0
        %6058 = vmatpush2.bf16.msra.mxu0 0
        %6059 = vmatprep.subr.bf16.mxu0 0
        %6060 = vmatpush2.bf16.msra.mxu0 0
        %6061 = vmatprep.subr.bf16.mxu0 0
        %6062 = vmatpush2.bf16.msra.mxu0 0
        %6063 = vmatprep.subr.bf16.mxu0 0
        %6064 = vmatpush2.bf16.msra.mxu0 0
        %6065 = vmatprep.subr.bf16.mxu0 0
        %6066 = vmatpush2.bf16.msra.mxu0 0
        %6067 = vmatprep.mubr.bf16.mxu0 0
        %6068 = vmatmul.mubr.bf16.gmra.mxu0 %v6033
        %v6069 = vpop.f32.mrf.mxu0
        %v6070 = vadd.f32 0.0, %v6069
        %v6071 = vpop.f32.mrf.mxu0
        %v6072 = vpop.f32.mrf.mxu0
        %v6073 = vpop.f32.mrf.mxu0
        %6074 = vdwg.mxu0
        %v6075 = vrcp.pop %v4386
        %v6076 = vrcp.pop %v4395
        %v6077 = vrcp.pop %v4404
        %v6078 = vrcp.pop %v4413
        %v6079 = vrcp.pop %v4422
        %v6080 = vrcp.pop %v4431
        %v6081 = vrcp.pop %v4440
        %v6082 = vrcp.pop %v4449
        %v6083 = vrcp.pop %v4458
        %v6084 = vrcp.pop %v4467
        %v6085 = vrcp.pop %v4476
        %v6086 = vrcp.pop %v4485
        %v6087 = vrcp.pop %v4494
        %v6088 = vrcp.pop %v4503
        %v6089 = vrcp.pop %v4512
        %v6090 = vrcp.pop %v4521
        %v6091 = vrcp.pop %v4530
        %v6092 = vrcp.pop %v4539
        %v6093 = vrcp.pop %v4548
        %v6094 = vrcp.pop %v4557
        %v6095 = vrcp.pop %v4566
        %v6096 = vrcp.pop %v4575
        %v6097 = vrcp.pop %v4584
        %v6098 = vrcp.pop %v4593
        %v6099 = vrcp.pop %v4602
        %v6100 = vrcp.pop %v4611
        %v6101 = vrcp.pop %v4620
        %v6102 = vrcp.pop %v4629
        %v6103 = vrcp.pop %v4638
        %v6104 = vrcp.pop %v4647
        %v6105 = vrcp.pop %v4656
        %v6106 = vrcp.pop %v4665
        %v6107 = vmul.f32 %v4737, %v6075
        %v6108 = vmul.f32 %v4780, %v6076
        %v6109 = vmul.f32 %v4823, %v6077
        %v6110 = vmul.f32 %v4866, %v6078
        %v6111 = vmul.f32 %v4909, %v6079
        %v6112 = vmul.f32 %v4952, %v6080
        %v6113 = vmul.f32 %v4995, %v6081
        %v6114 = vmul.f32 %v5038, %v6082
        %v6115 = vmul.f32 %v5081, %v6083
        %v6116 = vmul.f32 %v5124, %v6084
        %v6117 = vmul.f32 %v5167, %v6085
        %v6118 = vmul.f32 %v5210, %v6086
        %v6119 = vmul.f32 %v5253, %v6087
        %v6120 = vmul.f32 %v5296, %v6088
        %v6121 = vmul.f32 %v5339, %v6089
        %v6122 = vmul.f32 %v5382, %v6090
        %v6123 = vmul.f32 %v5425, %v6091
        %v6124 = vmul.f32 %v5468, %v6092
        %v6125 = vmul.f32 %v5511, %v6093
        %v6126 = vmul.f32 %v5554, %v6094
        %v6127 = vmul.f32 %v5597, %v6095
        %v6128 = vmul.f32 %v5640, %v6096
        %v6129 = vmul.f32 %v5683, %v6097
        %v6130 = vmul.f32 %v5726, %v6098
        %v6131 = vmul.f32 %v5769, %v6099
        %v6132 = vmul.f32 %v5812, %v6100
        %v6133 = vmul.f32 %v5855, %v6101
        %v6134 = vmul.f32 %v5898, %v6102
        %v6135 = vmul.f32 %v5941, %v6103
        %v6136 = vmul.f32 %v5984, %v6104
        %v6137 = vmul.f32 %v6027, %v6105
        %v6138 = vmul.f32 %v6070, %v6106
        %v6139 = vpack.c.bf16 %v6107, %v6107
        %v6140 = vpack.c.bf16 %v6108, %v6108
        %v6141 = vpack.c.bf16 %v6109, %v6109
        %v6142 = vpack.c.bf16 %v6110, %v6110
        %v6143 = vpack.c.bf16 %v6111, %v6111
        %v6144 = vpack.c.bf16 %v6112, %v6112
        %v6145 = vpack.c.bf16 %v6113, %v6113
        %v6146 = vpack.c.bf16 %v6114, %v6114
        %v6147 = vpack.c.bf16 %v6115, %v6115
        %v6148 = vpack.c.bf16 %v6116, %v6116
        %v6149 = vpack.c.bf16 %v6117, %v6117
        %v6150 = vpack.c.bf16 %v6118, %v6118
        %v6151 = vpack.c.bf16 %v6119, %v6119
        %v6152 = vpack.c.bf16 %v6120, %v6120
        %v6153 = vpack.c.bf16 %v6121, %v6121
        %v6154 = vpack.c.bf16 %v6122, %v6122
        %v6155 = vpack.c.bf16 %v6123, %v6123
        %v6156 = vpack.c.bf16 %v6124, %v6124
        %v6157 = vpack.c.bf16 %v6125, %v6125
        %v6158 = vpack.c.bf16 %v6126, %v6126
        %v6159 = vpack.c.bf16 %v6127, %v6127
        %v6160 = vpack.c.bf16 %v6128, %v6128
        %v6161 = vpack.c.bf16 %v6129, %v6129
        %v6162 = vpack.c.bf16 %v6130, %v6130
        %v6163 = vpack.c.bf16 %v6131, %v6131
        %v6164 = vpack.c.bf16 %v6132, %v6132
        %v6165 = vpack.c.bf16 %v6133, %v6133
        %v6166 = vpack.c.bf16 %v6134, %v6134
        %v6167 = vpack.c.bf16 %v6135, %v6135
        %v6168 = vpack.c.bf16 %v6136, %v6136
        %v6169 = vpack.c.bf16 %v6137, %v6137
        %v6170 = vpack.c.bf16 %v6138, %v6138
        %6172 = vrot.lane.b32.xlu0 %v6140, 64
        %v6173 = vpop.permute.xlu0 %6172
        %6175 = vrot.lane.b32.xlu0 %v6142, 64
        %v6176 = vpop.permute.xlu0 %6175
        %6178 = vrot.lane.b32.xlu0 %v6144, 64
        %v6179 = vpop.permute.xlu0 %6178
        %6181 = vrot.lane.b32.xlu0 %v6146, 64
        %v6182 = vpop.permute.xlu0 %6181
        %6184 = vrot.lane.b32.xlu0 %v6148, 64
        %v6185 = vpop.permute.xlu0 %6184
        %6187 = vrot.lane.b32.xlu0 %v6150, 64
        %v6188 = vpop.permute.xlu0 %6187
        %6190 = vrot.lane.b32.xlu0 %v6152, 64
        %v6191 = vpop.permute.xlu0 %6190
        %6193 = vrot.lane.b32.xlu0 %v6154, 64
        %v6194 = vpop.permute.xlu0 %6193
        %v6197 = vsel %vm3897, %v6139, %v6173
        %v6200 = vsel %vm3897, %v6141, %v6176
        %v6203 = vsel %vm3897, %v6143, %v6179
        %v6206 = vsel %vm3897, %v6145, %v6182
        %v6209 = vsel %vm3897, %v6147, %v6185
        %v6212 = vsel %vm3897, %v6149, %v6188
        %v6215 = vsel %vm3897, %v6151, %v6191
        %v6218 = vsel %vm3897, %v6153, %v6194
        %6220 = vrot.lane.b32.xlu0 %v6156, 64
        %v6221 = vpop.permute.xlu0 %6220
        %6223 = vrot.lane.b32.xlu0 %v6158, 64
        %v6224 = vpop.permute.xlu0 %6223
        %6226 = vrot.lane.b32.xlu0 %v6160, 64
        %v6227 = vpop.permute.xlu0 %6226
        %6229 = vrot.lane.b32.xlu0 %v6162, 64
        %v6230 = vpop.permute.xlu0 %6229
        %6232 = vrot.lane.b32.xlu0 %v6164, 64
        %v6233 = vpop.permute.xlu0 %6232
        %6235 = vrot.lane.b32.xlu0 %v6166, 64
        %v6236 = vpop.permute.xlu0 %6235
        %6238 = vrot.lane.b32.xlu0 %v6168, 64
        %v6239 = vpop.permute.xlu0 %6238
        %6241 = vrot.lane.b32.xlu0 %v6170, 64
        %v6242 = vpop.permute.xlu0 %6241
        %v6245 = vsel %vm3897, %v6155, %v6221
        %v6248 = vsel %vm3897, %v6157, %v6224
        %v6251 = vsel %vm3897, %v6159, %v6227
        %v6254 = vsel %vm3897, %v6161, %v6230
        %v6257 = vsel %vm3897, %v6163, %v6233
        %v6260 = vsel %vm3897, %v6165, %v6236
        %v6263 = vsel %vm3897, %v6167, %v6239
        %v6266 = vsel %vm3897, %v6169, %v6242
        %v6267 = vld [vmem:[%s4] sm:$0xf]
        %v6268 = vld [vmem:[%s4 + $0x4] sm:$0xf]
        %v6269 = vld [vmem:[%s4 + $0x8] sm:$0xf]
        %v6270 = vld [vmem:[%s4 + $0xc] sm:$0xf]
        %s6271 = sld [smem:[#allocation2]]
        %v6272 = vld [vmem:[%s5] sm:$0xff]
        %6274 = vset.pattern.permute.xlu0 0
        %6275 = vperm.xlu0 %6274, %v6272
        %v6276 = vpop.permute.xlu0 %6275
        %v6279 = vsel %vm1802, %v6267, 0
        %v6281 = vsel %vm1806, %v6197, 0
        %v6283 = vsel %vm1806, %v6200, 0
        %v6285 = vsel %vm1806, %v6203, 0
        %v6287 = vsel %vm1806, %v6206, 0
        %v6289 = vsel %vm1806, %v6209, 0
        %v6291 = vsel %vm1806, %v6212, 0
        %v6293 = vsel %vm1806, %v6215, 0
        %v6295 = vsel %vm1806, %v6218, 0
        %v6297 = vsel %vm1806, %v6245, 0
        %v6299 = vsel %vm1806, %v6248, 0
        %v6301 = vsel %vm1806, %v6251, 0
        %v6303 = vsel %vm1806, %v6254, 0
        %v6305 = vsel %vm1806, %v6257, 0
        %v6307 = vsel %vm1806, %v6260, 0
        %v6309 = vsel %vm1806, %v6263, 0
        %v6311 = vsel %vm1806, %v6266, 0
        %6313 = vmatprep.subr.bf16.mxu0 0
        %6314 = vmatpush1.bf16.msra.mxu0 0
        %6315 = vmatprep.subr.bf16.mxu0 0
        %6316 = vmatpush1.bf16.msra.mxu0 0
        %6317 = vmatprep.subr.bf16.mxu0 0
        %6318 = vmatpush1.bf16.msra.mxu0 0
        %6319 = vmatprep.subr.bf16.mxu0 0
        %6320 = vmatpush1.bf16.msra.mxu0 0
        %6321 = vmatprep.subr.bf16.mxu0 0
        %6322 = vmatpush1.bf16.msra.mxu0 0
        %6323 = vmatprep.subr.bf16.mxu0 0
        %6324 = vmatpush1.bf16.msra.mxu0 0
        %6325 = vmatprep.subr.bf16.mxu0 0
        %6326 = vmatpush1.bf16.msra.mxu0 0
        %6327 = vmatprep.subr.bf16.mxu0 %v6283
        %6328 = vmatpush1.bf16.msra.mxu0 %v6281
        %6329 = vmatprep.subr.bf16.mxu0 0
        %6330 = vmatpush2.bf16.msra.mxu0 0
        %6331 = vmatprep.subr.bf16.mxu0 0
        %6332 = vmatpush2.bf16.msra.mxu0 0
        %6333 = vmatprep.subr.bf16.mxu0 0
        %6334 = vmatpush2.bf16.msra.mxu0 0
        %6335 = vmatprep.subr.bf16.mxu0 0
        %6336 = vmatpush2.bf16.msra.mxu0 0
        %6337 = vmatprep.subr.bf16.mxu0 0
        %6338 = vmatpush2.bf16.msra.mxu0 0
        %6339 = vmatprep.subr.bf16.mxu0 0
        %6340 = vmatpush2.bf16.msra.mxu0 0
        %6341 = vmatprep.subr.bf16.mxu0 0
        %6342 = vmatpush2.bf16.msra.mxu0 0
        %6343 = vmatprep.subr.bf16.mxu0 0
        %6344 = vmatpush2.bf16.msra.mxu0 0
        %6345 = vmatprep.mubr.bf16.mxu0 0
        %6346 = vmatmul.mubr.bf16.gmra.mxu0 %v6279
        %v6347 = vpop.f32.mrf.mxu0
        %v6348 = vadd.f32 %v6276, %v6347
        %v6349 = vpop.f32.mrf.mxu0
        %v6350 = vadd.f32 %v6276, %v6349
        %v6351 = vpop.f32.mrf.mxu0
        %v6352 = vpop.f32.mrf.mxu0
        %6353 = vdwg.mxu0
        %6354 = vmatprep.subr.bf16.mxu0 0
        %6355 = vmatpush1.bf16.msra.mxu0 0
        %6356 = vmatprep.subr.bf16.mxu0 0
        %6357 = vmatpush1.bf16.msra.mxu0 0
        %6358 = vmatprep.subr.bf16.mxu0 0
        %6359 = vmatpush1.bf16.msra.mxu0 0
        %6360 = vmatprep.subr.bf16.mxu0 0
        %6361 = vmatpush1.bf16.msra.mxu0 0
        %6362 = vmatprep.subr.bf16.mxu0 0
        %6363 = vmatpush1.bf16.msra.mxu0 0
        %6364 = vmatprep.subr.bf16.mxu0 0
        %6365 = vmatpush1.bf16.msra.mxu0 0
        %6366 = vmatprep.subr.bf16.mxu0 0
        %6367 = vmatpush1.bf16.msra.mxu0 0
        %6368 = vmatprep.subr.bf16.mxu0 %v6287
        %6369 = vmatpush1.bf16.msra.mxu0 %v6285
        %6370 = vmatprep.subr.bf16.mxu0 0
        %6371 = vmatpush2.bf16.msra.mxu0 0
        %6372 = vmatprep.subr.bf16.mxu0 0
        %6373 = vmatpush2.bf16.msra.mxu0 0
        %6374 = vmatprep.subr.bf16.mxu0 0
        %6375 = vmatpush2.bf16.msra.mxu0 0
        %6376 = vmatprep.subr.bf16.mxu0 0
        %6377 = vmatpush2.bf16.msra.mxu0 0
        %6378 = vmatprep.subr.bf16.mxu0 0
        %6379 = vmatpush2.bf16.msra.mxu0 0
        %6380 = vmatprep.subr.bf16.mxu0 0
        %6381 = vmatpush2.bf16.msra.mxu0 0
        %6382 = vmatprep.subr.bf16.mxu0 0
        %6383 = vmatpush2.bf16.msra.mxu0 0
        %6384 = vmatprep.subr.bf16.mxu0 0
        %6385 = vmatpush2.bf16.msra.mxu0 0
        %6386 = vmatprep.mubr.bf16.mxu0 0
        %6387 = vmatmul.mubr.bf16.gmra.mxu0 %v6279
        %v6388 = vpop.f32.mrf.mxu0
        %v6389 = vadd.f32 %v6276, %v6388
        %v6390 = vpop.f32.mrf.mxu0
        %v6391 = vadd.f32 %v6276, %v6390
        %v6392 = vpop.f32.mrf.mxu0
        %v6393 = vpop.f32.mrf.mxu0
        %6394 = vdwg.mxu0
        %6395 = vmatprep.subr.bf16.mxu0 0
        %6396 = vmatpush1.bf16.msra.mxu0 0
        %6397 = vmatprep.subr.bf16.mxu0 0
        %6398 = vmatpush1.bf16.msra.mxu0 0
        %6399 = vmatprep.subr.bf16.mxu0 0
        %6400 = vmatpush1.bf16.msra.mxu0 0
        %6401 = vmatprep.subr.bf16.mxu0 0
        %6402 = vmatpush1.bf16.msra.mxu0 0
        %6403 = vmatprep.subr.bf16.mxu0 0
        %6404 = vmatpush1.bf16.msra.mxu0 0
        %6405 = vmatprep.subr.bf16.mxu0 0
        %6406 = vmatpush1.bf16.msra.mxu0 0
        %6407 = vmatprep.subr.bf16.mxu0 0
        %6408 = vmatpush1.bf16.msra.mxu0 0
        %6409 = vmatprep.subr.bf16.mxu0 %v6291
        %6410 = vmatpush1.bf16.msra.mxu0 %v6289
        %6411 = vmatprep.subr.bf16.mxu0 0
        %6412 = vmatpush2.bf16.msra.mxu0 0
        %6413 = vmatprep.subr.bf16.mxu0 0
        %6414 = vmatpush2.bf16.msra.mxu0 0
        %6415 = vmatprep.subr.bf16.mxu0 0
        %6416 = vmatpush2.bf16.msra.mxu0 0
        %6417 = vmatprep.subr.bf16.mxu0 0
        %6418 = vmatpush2.bf16.msra.mxu0 0
        %6419 = vmatprep.subr.bf16.mxu0 0
        %6420 = vmatpush2.bf16.msra.mxu0 0
        %6421 = vmatprep.subr.bf16.mxu0 0
        %6422 = vmatpush2.bf16.msra.mxu0 0
        %6423 = vmatprep.subr.bf16.mxu0 0
        %6424 = vmatpush2.bf16.msra.mxu0 0
        %6425 = vmatprep.subr.bf16.mxu0 0
        %6426 = vmatpush2.bf16.msra.mxu0 0
        %6427 = vmatprep.mubr.bf16.mxu0 0
        %6428 = vmatmul.mubr.bf16.gmra.mxu0 %v6279
        %v6429 = vpop.f32.mrf.mxu0
        %v6430 = vadd.f32 %v6276, %v6429
        %v6431 = vpop.f32.mrf.mxu0
        %v6432 = vadd.f32 %v6276, %v6431
        %v6433 = vpop.f32.mrf.mxu0
        %v6434 = vpop.f32.mrf.mxu0
        %6435 = vdwg.mxu0
        %6436 = vmatprep.subr.bf16.mxu0 0
        %6437 = vmatpush1.bf16.msra.mxu0 0
        %6438 = vmatprep.subr.bf16.mxu0 0
        %6439 = vmatpush1.bf16.msra.mxu0 0
        %6440 = vmatprep.subr.bf16.mxu0 0
        %6441 = vmatpush1.bf16.msra.mxu0 0
        %6442 = vmatprep.subr.bf16.mxu0 0
        %6443 = vmatpush1.bf16.msra.mxu0 0
        %6444 = vmatprep.subr.bf16.mxu0 0
        %6445 = vmatpush1.bf16.msra.mxu0 0
        %6446 = vmatprep.subr.bf16.mxu0 0
        %6447 = vmatpush1.bf16.msra.mxu0 0
        %6448 = vmatprep.subr.bf16.mxu0 0
        %6449 = vmatpush1.bf16.msra.mxu0 0
        %6450 = vmatprep.subr.bf16.mxu0 %v6295
        %6451 = vmatpush1.bf16.msra.mxu0 %v6293
        %6452 = vmatprep.subr.bf16.mxu0 0
        %6453 = vmatpush2.bf16.msra.mxu0 0
        %6454 = vmatprep.subr.bf16.mxu0 0
        %6455 = vmatpush2.bf16.msra.mxu0 0
        %6456 = vmatprep.subr.bf16.mxu0 0
        %6457 = vmatpush2.bf16.msra.mxu0 0
        %6458 = vmatprep.subr.bf16.mxu0 0
        %6459 = vmatpush2.bf16.msra.mxu0 0
        %6460 = vmatprep.subr.bf16.mxu0 0
        %6461 = vmatpush2.bf16.msra.mxu0 0
        %6462 = vmatprep.subr.bf16.mxu0 0
        %6463 = vmatpush2.bf16.msra.mxu0 0
        %6464 = vmatprep.subr.bf16.mxu0 0
        %6465 = vmatpush2.bf16.msra.mxu0 0
        %6466 = vmatprep.subr.bf16.mxu0 0
        %6467 = vmatpush2.bf16.msra.mxu0 0
        %6468 = vmatprep.mubr.bf16.mxu0 0
        %6469 = vmatmul.mubr.bf16.gmra.mxu0 %v6279
        %v6470 = vpop.f32.mrf.mxu0
        %v6471 = vadd.f32 %v6276, %v6470
        %v6472 = vpop.f32.mrf.mxu0
        %v6473 = vadd.f32 %v6276, %v6472
        %v6474 = vpop.f32.mrf.mxu0
        %v6475 = vpop.f32.mrf.mxu0
        %6476 = vdwg.mxu0
        %6477 = vmatprep.subr.bf16.mxu0 0
        %6478 = vmatpush1.bf16.msra.mxu0 0
        %6479 = vmatprep.subr.bf16.mxu0 0
        %6480 = vmatpush1.bf16.msra.mxu0 0
        %6481 = vmatprep.subr.bf16.mxu0 0
        %6482 = vmatpush1.bf16.msra.mxu0 0
        %6483 = vmatprep.subr.bf16.mxu0 0
        %6484 = vmatpush1.bf16.msra.mxu0 0
        %6485 = vmatprep.subr.bf16.mxu0 0
        %6486 = vmatpush1.bf16.msra.mxu0 0
        %6487 = vmatprep.subr.bf16.mxu0 0
        %6488 = vmatpush1.bf16.msra.mxu0 0
        %6489 = vmatprep.subr.bf16.mxu0 0
        %6490 = vmatpush1.bf16.msra.mxu0 0
        %6491 = vmatprep.subr.bf16.mxu0 %v6299
        %6492 = vmatpush1.bf16.msra.mxu0 %v6297
        %6493 = vmatprep.subr.bf16.mxu0 0
        %6494 = vmatpush2.bf16.msra.mxu0 0
        %6495 = vmatprep.subr.bf16.mxu0 0
        %6496 = vmatpush2.bf16.msra.mxu0 0
        %6497 = vmatprep.subr.bf16.mxu0 0
        %6498 = vmatpush2.bf16.msra.mxu0 0
        %6499 = vmatprep.subr.bf16.mxu0 0
        %6500 = vmatpush2.bf16.msra.mxu0 0
        %6501 = vmatprep.subr.bf16.mxu0 0
        %6502 = vmatpush2.bf16.msra.mxu0 0
        %6503 = vmatprep.subr.bf16.mxu0 0
        %6504 = vmatpush2.bf16.msra.mxu0 0
        %6505 = vmatprep.subr.bf16.mxu0 0
        %6506 = vmatpush2.bf16.msra.mxu0 0
        %6507 = vmatprep.subr.bf16.mxu0 0
        %6508 = vmatpush2.bf16.msra.mxu0 0
        %6509 = vmatprep.mubr.bf16.mxu0 0
        %6510 = vmatmul.mubr.bf16.gmra.mxu0 %v6279
        %v6511 = vpop.f32.mrf.mxu0
        %v6512 = vadd.f32 %v6276, %v6511
        %v6513 = vpop.f32.mrf.mxu0
        %v6514 = vadd.f32 %v6276, %v6513
        %v6515 = vpop.f32.mrf.mxu0
        %v6516 = vpop.f32.mrf.mxu0
        %6517 = vdwg.mxu0
        %6518 = vmatprep.subr.bf16.mxu0 0
        %6519 = vmatpush1.bf16.msra.mxu0 0
        %6520 = vmatprep.subr.bf16.mxu0 0
        %6521 = vmatpush1.bf16.msra.mxu0 0
        %6522 = vmatprep.subr.bf16.mxu0 0
        %6523 = vmatpush1.bf16.msra.mxu0 0
        %6524 = vmatprep.subr.bf16.mxu0 0
        %6525 = vmatpush1.bf16.msra.mxu0 0
        %6526 = vmatprep.subr.bf16.mxu0 0
        %6527 = vmatpush1.bf16.msra.mxu0 0
        %6528 = vmatprep.subr.bf16.mxu0 0
        %6529 = vmatpush1.bf16.msra.mxu0 0
        %6530 = vmatprep.subr.bf16.mxu0 0
        %6531 = vmatpush1.bf16.msra.mxu0 0
        %6532 = vmatprep.subr.bf16.mxu0 %v6303
        %6533 = vmatpush1.bf16.msra.mxu0 %v6301
        %6534 = vmatprep.subr.bf16.mxu0 0
        %6535 = vmatpush2.bf16.msra.mxu0 0
        %6536 = vmatprep.subr.bf16.mxu0 0
        %6537 = vmatpush2.bf16.msra.mxu0 0
        %6538 = vmatprep.subr.bf16.mxu0 0
        %6539 = vmatpush2.bf16.msra.mxu0 0
        %6540 = vmatprep.subr.bf16.mxu0 0
        %6541 = vmatpush2.bf16.msra.mxu0 0
        %6542 = vmatprep.subr.bf16.mxu0 0
        %6543 = vmatpush2.bf16.msra.mxu0 0
        %6544 = vmatprep.subr.bf16.mxu0 0
        %6545 = vmatpush2.bf16.msra.mxu0 0
        %6546 = vmatprep.subr.bf16.mxu0 0
        %6547 = vmatpush2.bf16.msra.mxu0 0
        %6548 = vmatprep.subr.bf16.mxu0 0
        %6549 = vmatpush2.bf16.msra.mxu0 0
        %6550 = vmatprep.mubr.bf16.mxu0 0
        %6551 = vmatmul.mubr.bf16.gmra.mxu0 %v6279
        %v6552 = vpop.f32.mrf.mxu0
        %v6553 = vadd.f32 %v6276, %v6552
        %v6554 = vpop.f32.mrf.mxu0
        %v6555 = vadd.f32 %v6276, %v6554
        %v6556 = vpop.f32.mrf.mxu0
        %v6557 = vpop.f32.mrf.mxu0
        %6558 = vdwg.mxu0
        %6559 = vmatprep.subr.bf16.mxu0 0
        %6560 = vmatpush1.bf16.msra.mxu0 0
        %6561 = vmatprep.subr.bf16.mxu0 0
        %6562 = vmatpush1.bf16.msra.mxu0 0
        %6563 = vmatprep.subr.bf16.mxu0 0
        %6564 = vmatpush1.bf16.msra.mxu0 0
        %6565 = vmatprep.subr.bf16.mxu0 0
        %6566 = vmatpush1.bf16.msra.mxu0 0
        %6567 = vmatprep.subr.bf16.mxu0 0
        %6568 = vmatpush1.bf16.msra.mxu0 0
        %6569 = vmatprep.subr.bf16.mxu0 0
        %6570 = vmatpush1.bf16.msra.mxu0 0
        %6571 = vmatprep.subr.bf16.mxu0 0
        %6572 = vmatpush1.bf16.msra.mxu0 0
        %6573 = vmatprep.subr.bf16.mxu0 %v6307
        %6574 = vmatpush1.bf16.msra.mxu0 %v6305
        %6575 = vmatprep.subr.bf16.mxu0 0
        %6576 = vmatpush2.bf16.msra.mxu0 0
        %6577 = vmatprep.subr.bf16.mxu0 0
        %6578 = vmatpush2.bf16.msra.mxu0 0
        %6579 = vmatprep.subr.bf16.mxu0 0
        %6580 = vmatpush2.bf16.msra.mxu0 0
        %6581 = vmatprep.subr.bf16.mxu0 0
        %6582 = vmatpush2.bf16.msra.mxu0 0
        %6583 = vmatprep.subr.bf16.mxu0 0
        %6584 = vmatpush2.bf16.msra.mxu0 0
        %6585 = vmatprep.subr.bf16.mxu0 0
        %6586 = vmatpush2.bf16.msra.mxu0 0
        %6587 = vmatprep.subr.bf16.mxu0 0
        %6588 = vmatpush2.bf16.msra.mxu0 0
        %6589 = vmatprep.subr.bf16.mxu0 0
        %6590 = vmatpush2.bf16.msra.mxu0 0
        %6591 = vmatprep.mubr.bf16.mxu0 0
        %6592 = vmatmul.mubr.bf16.gmra.mxu0 %v6279
        %v6593 = vpop.f32.mrf.mxu0
        %v6594 = vadd.f32 %v6276, %v6593
        %v6595 = vpop.f32.mrf.mxu0
        %v6596 = vadd.f32 %v6276, %v6595
        %v6597 = vpop.f32.mrf.mxu0
        %v6598 = vpop.f32.mrf.mxu0
        %6599 = vdwg.mxu0
        %6600 = vmatprep.subr.bf16.mxu0 0
        %6601 = vmatpush1.bf16.msra.mxu0 0
        %6602 = vmatprep.subr.bf16.mxu0 0
        %6603 = vmatpush1.bf16.msra.mxu0 0
        %6604 = vmatprep.subr.bf16.mxu0 0
        %6605 = vmatpush1.bf16.msra.mxu0 0
        %6606 = vmatprep.subr.bf16.mxu0 0
        %6607 = vmatpush1.bf16.msra.mxu0 0
        %6608 = vmatprep.subr.bf16.mxu0 0
        %6609 = vmatpush1.bf16.msra.mxu0 0
        %6610 = vmatprep.subr.bf16.mxu0 0
        %6611 = vmatpush1.bf16.msra.mxu0 0
        %6612 = vmatprep.subr.bf16.mxu0 0
        %6613 = vmatpush1.bf16.msra.mxu0 0
        %6614 = vmatprep.subr.bf16.mxu0 %v6311
        %6615 = vmatpush1.bf16.msra.mxu0 %v6309
        %6616 = vmatprep.subr.bf16.mxu0 0
        %6617 = vmatpush2.bf16.msra.mxu0 0
        %6618 = vmatprep.subr.bf16.mxu0 0
        %6619 = vmatpush2.bf16.msra.mxu0 0
        %6620 = vmatprep.subr.bf16.mxu0 0
        %6621 = vmatpush2.bf16.msra.mxu0 0
        %6622 = vmatprep.subr.bf16.mxu0 0
        %6623 = vmatpush2.bf16.msra.mxu0 0
        %6624 = vmatprep.subr.bf16.mxu0 0
        %6625 = vmatpush2.bf16.msra.mxu0 0
        %6626 = vmatprep.subr.bf16.mxu0 0
        %6627 = vmatpush2.bf16.msra.mxu0 0
        %6628 = vmatprep.subr.bf16.mxu0 0
        %6629 = vmatpush2.bf16.msra.mxu0 0
        %6630 = vmatprep.subr.bf16.mxu0 0
        %6631 = vmatpush2.bf16.msra.mxu0 0
        %6632 = vmatprep.mubr.bf16.mxu0 0
        %6633 = vmatmul.mubr.bf16.gmra.mxu0 %v6279
        %v6634 = vpop.f32.mrf.mxu0
        %v6635 = vadd.f32 %v6276, %v6634
        %v6636 = vpop.f32.mrf.mxu0
        %v6637 = vadd.f32 %v6276, %v6636
        %v6638 = vpop.f32.mrf.mxu0
        %v6639 = vpop.f32.mrf.mxu0
        %6640 = vdwg.mxu0
        %v6641 = vstv %s6271
        %v6642 = vmul.f32 %v6641, %v6348
        %v6643 = vmul.f32 %v6641, %v6350
        %v6644 = vmul.f32 %v6641, %v6389
        %v6645 = vmul.f32 %v6641, %v6391
        %v6646 = vmul.f32 %v6641, %v6430
        %v6647 = vmul.f32 %v6641, %v6432
        %v6648 = vmul.f32 %v6641, %v6471
        %v6649 = vmul.f32 %v6641, %v6473
        %v6650 = vmul.f32 %v6641, %v6512
        %v6651 = vmul.f32 %v6641, %v6514
        %v6652 = vmul.f32 %v6641, %v6553
        %v6653 = vmul.f32 %v6641, %v6555
        %v6654 = vmul.f32 %v6641, %v6594
        %v6655 = vmul.f32 %v6641, %v6596
        %v6656 = vmul.f32 %v6641, %v6635
        %v6657 = vmul.f32 %v6641, %v6637
        %v6658 = vld [vmem:[%s392] sm:$0xff]
        %v6659 = vld [vmem:[%s392 + $0x8] sm:$0xff]
        %v6660 = vld [vmem:[%s392 + $0x10] sm:$0xff]
        %v6661 = vld [vmem:[%s392 + $0x18] sm:$0xff]
        %v6662 = vld [vmem:[%s392 + $0x20] sm:$0xff]
        %v6663 = vld [vmem:[%s392 + $0x28] sm:$0xff]
        %v6664 = vld [vmem:[%s392 + $0x30] sm:$0xff]
        %v6665 = vld [vmem:[%s392 + $0x38] sm:$0xff]
        %v6666 = vld [vmem:[%s392 + $0x40] sm:$0xff]
        %v6667 = vld [vmem:[%s392 + $0x48] sm:$0xff]
        %v6668 = vld [vmem:[%s392 + $0x50] sm:$0xff]
        %v6669 = vld [vmem:[%s392 + $0x58] sm:$0xff]
        %v6670 = vld [vmem:[%s392 + $0x60] sm:$0xff]
        %v6671 = vld [vmem:[%s392 + $0x68] sm:$0xff]
        %v6672 = vld [vmem:[%s392 + $0x70] sm:$0xff]
        %v6673 = vld [vmem:[%s392 + $0x78] sm:$0xff]
        %v6674 = vadd.f32 %v6642, %v6658
        %v6675 = vadd.f32 %v6643, %v6659
        %v6676 = vadd.f32 %v6644, %v6660
        %v6677 = vadd.f32 %v6645, %v6661
        %v6678 = vadd.f32 %v6646, %v6662
        %v6679 = vadd.f32 %v6647, %v6663
        %v6680 = vadd.f32 %v6648, %v6664
        %v6681 = vadd.f32 %v6649, %v6665
        %v6682 = vadd.f32 %v6650, %v6666
        %v6683 = vadd.f32 %v6651, %v6667
        %v6684 = vadd.f32 %v6652, %v6668
        %v6685 = vadd.f32 %v6653, %v6669
        %v6686 = vadd.f32 %v6654, %v6670
        %v6687 = vadd.f32 %v6655, %v6671
        %v6688 = vadd.f32 %v6656, %v6672
        %v6689 = vadd.f32 %v6657, %v6673
        %6690 = vst [vmem:[%s419] sm:$0xff] %v6674
        %6691 = vst [vmem:[%s419 + $0x8] sm:$0xff] %v6675
        %6692 = vst [vmem:[%s419 + $0x10] sm:$0xff] %v6676
        %6693 = vst [vmem:[%s419 + $0x18] sm:$0xff] %v6677
        %6694 = vst [vmem:[%s419 + $0x20] sm:$0xff] %v6678
        %6695 = vst [vmem:[%s419 + $0x28] sm:$0xff] %v6679
        %6696 = vst [vmem:[%s419 + $0x30] sm:$0xff] %v6680
        %6697 = vst [vmem:[%s419 + $0x38] sm:$0xff] %v6681
        %6698 = vst [vmem:[%s419 + $0x40] sm:$0xff] %v6682
        %6699 = vst [vmem:[%s419 + $0x48] sm:$0xff] %v6683
        %6700 = vst [vmem:[%s419 + $0x50] sm:$0xff] %v6684
        %6701 = vst [vmem:[%s419 + $0x58] sm:$0xff] %v6685
        %6702 = vst [vmem:[%s419 + $0x60] sm:$0xff] %v6686
        %6703 = vst [vmem:[%s419 + $0x68] sm:$0xff] %v6687
        %6704 = vst [vmem:[%s419 + $0x70] sm:$0xff] %v6688
        %6705 = vst [vmem:[%s419 + $0x78] sm:$0xff] %v6689
        %v6706 = vld [vmem:[%s5 + $0x8] sm:$0xff]
        %6708 = vset.pattern.permute.xlu0 0
        %6709 = vperm.xlu0 %6708, %v6706
        %v6710 = vpop.permute.xlu0 %6709
        %v6713 = vsel %vm1802, %v6268, 0
        %6715 = vmatprep.subr.bf16.mxu0 0
        %6716 = vmatpush1.bf16.msra.mxu0 0
        %6717 = vmatprep.subr.bf16.mxu0 0
        %6718 = vmatpush1.bf16.msra.mxu0 0
        %6719 = vmatprep.subr.bf16.mxu0 0
        %6720 = vmatpush1.bf16.msra.mxu0 0
        %6721 = vmatprep.subr.bf16.mxu0 0
        %6722 = vmatpush1.bf16.msra.mxu0 0
        %6723 = vmatprep.subr.bf16.mxu0 0
        %6724 = vmatpush1.bf16.msra.mxu0 0
        %6725 = vmatprep.subr.bf16.mxu0 0
        %6726 = vmatpush1.bf16.msra.mxu0 0
        %6727 = vmatprep.subr.bf16.mxu0 0
        %6728 = vmatpush1.bf16.msra.mxu0 0
        %6729 = vmatprep.subr.bf16.mxu0 %v6283
        %6730 = vmatpush1.bf16.msra.mxu0 %v6281
        %6731 = vmatprep.subr.bf16.mxu0 0
        %6732 = vmatpush2.bf16.msra.mxu0 0
        %6733 = vmatprep.subr.bf16.mxu0 0
        %6734 = vmatpush2.bf16.msra.mxu0 0
        %6735 = vmatprep.subr.bf16.mxu0 0
        %6736 = vmatpush2.bf16.msra.mxu0 0
        %6737 = vmatprep.subr.bf16.mxu0 0
        %6738 = vmatpush2.bf16.msra.mxu0 0
        %6739 = vmatprep.subr.bf16.mxu0 0
        %6740 = vmatpush2.bf16.msra.mxu0 0
        %6741 = vmatprep.subr.bf16.mxu0 0
        %6742 = vmatpush2.bf16.msra.mxu0 0
        %6743 = vmatprep.subr.bf16.mxu0 0
        %6744 = vmatpush2.bf16.msra.mxu0 0
        %6745 = vmatprep.subr.bf16.mxu0 0
        %6746 = vmatpush2.bf16.msra.mxu0 0
        %6747 = vmatprep.mubr.bf16.mxu0 0
        %6748 = vmatmul.mubr.bf16.gmra.mxu0 %v6713
        %v6749 = vpop.f32.mrf.mxu0
        %v6750 = vadd.f32 %v6710, %v6749
        %v6751 = vpop.f32.mrf.mxu0
        %v6752 = vadd.f32 %v6710, %v6751
        %v6753 = vpop.f32.mrf.mxu0
        %v6754 = vpop.f32.mrf.mxu0
        %6755 = vdwg.mxu0
        %6756 = vmatprep.subr.bf16.mxu0 0
        %6757 = vmatpush1.bf16.msra.mxu0 0
        %6758 = vmatprep.subr.bf16.mxu0 0
        %6759 = vmatpush1.bf16.msra.mxu0 0
        %6760 = vmatprep.subr.bf16.mxu0 0
        %6761 = vmatpush1.bf16.msra.mxu0 0
        %6762 = vmatprep.subr.bf16.mxu0 0
        %6763 = vmatpush1.bf16.msra.mxu0 0
        %6764 = vmatprep.subr.bf16.mxu0 0
        %6765 = vmatpush1.bf16.msra.mxu0 0
        %6766 = vmatprep.subr.bf16.mxu0 0
        %6767 = vmatpush1.bf16.msra.mxu0 0
        %6768 = vmatprep.subr.bf16.mxu0 0
        %6769 = vmatpush1.bf16.msra.mxu0 0
        %6770 = vmatprep.subr.bf16.mxu0 %v6287
        %6771 = vmatpush1.bf16.msra.mxu0 %v6285
        %6772 = vmatprep.subr.bf16.mxu0 0
        %6773 = vmatpush2.bf16.msra.mxu0 0
        %6774 = vmatprep.subr.bf16.mxu0 0
        %6775 = vmatpush2.bf16.msra.mxu0 0
        %6776 = vmatprep.subr.bf16.mxu0 0
        %6777 = vmatpush2.bf16.msra.mxu0 0
        %6778 = vmatprep.subr.bf16.mxu0 0
        %6779 = vmatpush2.bf16.msra.mxu0 0
        %6780 = vmatprep.subr.bf16.mxu0 0
        %6781 = vmatpush2.bf16.msra.mxu0 0
        %6782 = vmatprep.subr.bf16.mxu0 0
        %6783 = vmatpush2.bf16.msra.mxu0 0
        %6784 = vmatprep.subr.bf16.mxu0 0
        %6785 = vmatpush2.bf16.msra.mxu0 0
        %6786 = vmatprep.subr.bf16.mxu0 0
        %6787 = vmatpush2.bf16.msra.mxu0 0
        %6788 = vmatprep.mubr.bf16.mxu0 0
        %6789 = vmatmul.mubr.bf16.gmra.mxu0 %v6713
        %v6790 = vpop.f32.mrf.mxu0
        %v6791 = vadd.f32 %v6710, %v6790
        %v6792 = vpop.f32.mrf.mxu0
        %v6793 = vadd.f32 %v6710, %v6792
        %v6794 = vpop.f32.mrf.mxu0
        %v6795 = vpop.f32.mrf.mxu0
        %6796 = vdwg.mxu0
        %6797 = vmatprep.subr.bf16.mxu0 0
        %6798 = vmatpush1.bf16.msra.mxu0 0
        %6799 = vmatprep.subr.bf16.mxu0 0
        %6800 = vmatpush1.bf16.msra.mxu0 0
        %6801 = vmatprep.subr.bf16.mxu0 0
        %6802 = vmatpush1.bf16.msra.mxu0 0
        %6803 = vmatprep.subr.bf16.mxu0 0
        %6804 = vmatpush1.bf16.msra.mxu0 0
        %6805 = vmatprep.subr.bf16.mxu0 0
        %6806 = vmatpush1.bf16.msra.mxu0 0
        %6807 = vmatprep.subr.bf16.mxu0 0
        %6808 = vmatpush1.bf16.msra.mxu0 0
        %6809 = vmatprep.subr.bf16.mxu0 0
        %6810 = vmatpush1.bf16.msra.mxu0 0
        %6811 = vmatprep.subr.bf16.mxu0 %v6291
        %6812 = vmatpush1.bf16.msra.mxu0 %v6289
        %6813 = vmatprep.subr.bf16.mxu0 0
        %6814 = vmatpush2.bf16.msra.mxu0 0
        %6815 = vmatprep.subr.bf16.mxu0 0
        %6816 = vmatpush2.bf16.msra.mxu0 0
        %6817 = vmatprep.subr.bf16.mxu0 0
        %6818 = vmatpush2.bf16.msra.mxu0 0
        %6819 = vmatprep.subr.bf16.mxu0 0
        %6820 = vmatpush2.bf16.msra.mxu0 0
        %6821 = vmatprep.subr.bf16.mxu0 0
        %6822 = vmatpush2.bf16.msra.mxu0 0
        %6823 = vmatprep.subr.bf16.mxu0 0
        %6824 = vmatpush2.bf16.msra.mxu0 0
        %6825 = vmatprep.subr.bf16.mxu0 0
        %6826 = vmatpush2.bf16.msra.mxu0 0
        %6827 = vmatprep.subr.bf16.mxu0 0
        %6828 = vmatpush2.bf16.msra.mxu0 0
        %6829 = vmatprep.mubr.bf16.mxu0 0
        %6830 = vmatmul.mubr.bf16.gmra.mxu0 %v6713
        %v6831 = vpop.f32.mrf.mxu0
        %v6832 = vadd.f32 %v6710, %v6831
        %v6833 = vpop.f32.mrf.mxu0
        %v6834 = vadd.f32 %v6710, %v6833
        %v6835 = vpop.f32.mrf.mxu0
        %v6836 = vpop.f32.mrf.mxu0
        %6837 = vdwg.mxu0
        %6838 = vmatprep.subr.bf16.mxu0 0
        %6839 = vmatpush1.bf16.msra.mxu0 0
        %6840 = vmatprep.subr.bf16.mxu0 0
        %6841 = vmatpush1.bf16.msra.mxu0 0
        %6842 = vmatprep.subr.bf16.mxu0 0
        %6843 = vmatpush1.bf16.msra.mxu0 0
        %6844 = vmatprep.subr.bf16.mxu0 0
        %6845 = vmatpush1.bf16.msra.mxu0 0
        %6846 = vmatprep.subr.bf16.mxu0 0
        %6847 = vmatpush1.bf16.msra.mxu0 0
        %6848 = vmatprep.subr.bf16.mxu0 0
        %6849 = vmatpush1.bf16.msra.mxu0 0
        %6850 = vmatprep.subr.bf16.mxu0 0
        %6851 = vmatpush1.bf16.msra.mxu0 0
        %6852 = vmatprep.subr.bf16.mxu0 %v6295
        %6853 = vmatpush1.bf16.msra.mxu0 %v6293
        %6854 = vmatprep.subr.bf16.mxu0 0
        %6855 = vmatpush2.bf16.msra.mxu0 0
        %6856 = vmatprep.subr.bf16.mxu0 0
        %6857 = vmatpush2.bf16.msra.mxu0 0
        %6858 = vmatprep.subr.bf16.mxu0 0
        %6859 = vmatpush2.bf16.msra.mxu0 0
        %6860 = vmatprep.subr.bf16.mxu0 0
        %6861 = vmatpush2.bf16.msra.mxu0 0
        %6862 = vmatprep.subr.bf16.mxu0 0
        %6863 = vmatpush2.bf16.msra.mxu0 0
        %6864 = vmatprep.subr.bf16.mxu0 0
        %6865 = vmatpush2.bf16.msra.mxu0 0
        %6866 = vmatprep.subr.bf16.mxu0 0
        %6867 = vmatpush2.bf16.msra.mxu0 0
        %6868 = vmatprep.subr.bf16.mxu0 0
        %6869 = vmatpush2.bf16.msra.mxu0 0
        %6870 = vmatprep.mubr.bf16.mxu0 0
        %6871 = vmatmul.mubr.bf16.gmra.mxu0 %v6713
        %v6872 = vpop.f32.mrf.mxu0
        %v6873 = vadd.f32 %v6710, %v6872
        %v6874 = vpop.f32.mrf.mxu0
        %v6875 = vadd.f32 %v6710, %v6874
        %v6876 = vpop.f32.mrf.mxu0
        %v6877 = vpop.f32.mrf.mxu0
        %6878 = vdwg.mxu0
        %6879 = vmatprep.subr.bf16.mxu0 0
        %6880 = vmatpush1.bf16.msra.mxu0 0
        %6881 = vmatprep.subr.bf16.mxu0 0
        %6882 = vmatpush1.bf16.msra.mxu0 0
        %6883 = vmatprep.subr.bf16.mxu0 0
        %6884 = vmatpush1.bf16.msra.mxu0 0
        %6885 = vmatprep.subr.bf16.mxu0 0
        %6886 = vmatpush1.bf16.msra.mxu0 0
        %6887 = vmatprep.subr.bf16.mxu0 0
        %6888 = vmatpush1.bf16.msra.mxu0 0
        %6889 = vmatprep.subr.bf16.mxu0 0
        %6890 = vmatpush1.bf16.msra.mxu0 0
        %6891 = vmatprep.subr.bf16.mxu0 0
        %6892 = vmatpush1.bf16.msra.mxu0 0
        %6893 = vmatprep.subr.bf16.mxu0 %v6299
        %6894 = vmatpush1.bf16.msra.mxu0 %v6297
        %6895 = vmatprep.subr.bf16.mxu0 0
        %6896 = vmatpush2.bf16.msra.mxu0 0
        %6897 = vmatprep.subr.bf16.mxu0 0
        %6898 = vmatpush2.bf16.msra.mxu0 0
        %6899 = vmatprep.subr.bf16.mxu0 0
        %6900 = vmatpush2.bf16.msra.mxu0 0
        %6901 = vmatprep.subr.bf16.mxu0 0
        %6902 = vmatpush2.bf16.msra.mxu0 0
        %6903 = vmatprep.subr.bf16.mxu0 0
        %6904 = vmatpush2.bf16.msra.mxu0 0
        %6905 = vmatprep.subr.bf16.mxu0 0
        %6906 = vmatpush2.bf16.msra.mxu0 0
        %6907 = vmatprep.subr.bf16.mxu0 0
        %6908 = vmatpush2.bf16.msra.mxu0 0
        %6909 = vmatprep.subr.bf16.mxu0 0
        %6910 = vmatpush2.bf16.msra.mxu0 0
        %6911 = vmatprep.mubr.bf16.mxu0 0
        %6912 = vmatmul.mubr.bf16.gmra.mxu0 %v6713
        %v6913 = vpop.f32.mrf.mxu0
        %v6914 = vadd.f32 %v6710, %v6913
        %v6915 = vpop.f32.mrf.mxu0
        %v6916 = vadd.f32 %v6710, %v6915
        %v6917 = vpop.f32.mrf.mxu0
        %v6918 = vpop.f32.mrf.mxu0
        %6919 = vdwg.mxu0
        %6920 = vmatprep.subr.bf16.mxu0 0
        %6921 = vmatpush1.bf16.msra.mxu0 0
        %6922 = vmatprep.subr.bf16.mxu0 0
        %6923 = vmatpush1.bf16.msra.mxu0 0
        %6924 = vmatprep.subr.bf16.mxu0 0
        %6925 = vmatpush1.bf16.msra.mxu0 0
        %6926 = vmatprep.subr.bf16.mxu0 0
        %6927 = vmatpush1.bf16.msra.mxu0 0
        %6928 = vmatprep.subr.bf16.mxu0 0
        %6929 = vmatpush1.bf16.msra.mxu0 0
        %6930 = vmatprep.subr.bf16.mxu0 0
        %6931 = vmatpush1.bf16.msra.mxu0 0
        %6932 = vmatprep.subr.bf16.mxu0 0
        %6933 = vmatpush1.bf16.msra.mxu0 0
        %6934 = vmatprep.subr.bf16.mxu0 %v6303
        %6935 = vmatpush1.bf16.msra.mxu0 %v6301
        %6936 = vmatprep.subr.bf16.mxu0 0
        %6937 = vmatpush2.bf16.msra.mxu0 0
        %6938 = vmatprep.subr.bf16.mxu0 0
        %6939 = vmatpush2.bf16.msra.mxu0 0
        %6940 = vmatprep.subr.bf16.mxu0 0
        %6941 = vmatpush2.bf16.msra.mxu0 0
        %6942 = vmatprep.subr.bf16.mxu0 0
        %6943 = vmatpush2.bf16.msra.mxu0 0
        %6944 = vmatprep.subr.bf16.mxu0 0
        %6945 = vmatpush2.bf16.msra.mxu0 0
        %6946 = vmatprep.subr.bf16.mxu0 0
        %6947 = vmatpush2.bf16.msra.mxu0 0
        %6948 = vmatprep.subr.bf16.mxu0 0
        %6949 = vmatpush2.bf16.msra.mxu0 0
        %6950 = vmatprep.subr.bf16.mxu0 0
        %6951 = vmatpush2.bf16.msra.mxu0 0
        %6952 = vmatprep.mubr.bf16.mxu0 0
        %6953 = vmatmul.mubr.bf16.gmra.mxu0 %v6713
        %v6954 = vpop.f32.mrf.mxu0
        %v6955 = vadd.f32 %v6710, %v6954
        %v6956 = vpop.f32.mrf.mxu0
        %v6957 = vadd.f32 %v6710, %v6956
        %v6958 = vpop.f32.mrf.mxu0
        %v6959 = vpop.f32.mrf.mxu0
        %6960 = vdwg.mxu0
        %6961 = vmatprep.subr.bf16.mxu0 0
        %6962 = vmatpush1.bf16.msra.mxu0 0
        %6963 = vmatprep.subr.bf16.mxu0 0
        %6964 = vmatpush1.bf16.msra.mxu0 0
        %6965 = vmatprep.subr.bf16.mxu0 0
        %6966 = vmatpush1.bf16.msra.mxu0 0
        %6967 = vmatprep.subr.bf16.mxu0 0
        %6968 = vmatpush1.bf16.msra.mxu0 0
        %6969 = vmatprep.subr.bf16.mxu0 0
        %6970 = vmatpush1.bf16.msra.mxu0 0
        %6971 = vmatprep.subr.bf16.mxu0 0
        %6972 = vmatpush1.bf16.msra.mxu0 0
        %6973 = vmatprep.subr.bf16.mxu0 0
        %6974 = vmatpush1.bf16.msra.mxu0 0
        %6975 = vmatprep.subr.bf16.mxu0 %v6307
        %6976 = vmatpush1.bf16.msra.mxu0 %v6305
        %6977 = vmatprep.subr.bf16.mxu0 0
        %6978 = vmatpush2.bf16.msra.mxu0 0
        %6979 = vmatprep.subr.bf16.mxu0 0
        %6980 = vmatpush2.bf16.msra.mxu0 0
        %6981 = vmatprep.subr.bf16.mxu0 0
        %6982 = vmatpush2.bf16.msra.mxu0 0
        %6983 = vmatprep.subr.bf16.mxu0 0
        %6984 = vmatpush2.bf16.msra.mxu0 0
        %6985 = vmatprep.subr.bf16.mxu0 0
        %6986 = vmatpush2.bf16.msra.mxu0 0
        %6987 = vmatprep.subr.bf16.mxu0 0
        %6988 = vmatpush2.bf16.msra.mxu0 0
        %6989 = vmatprep.subr.bf16.mxu0 0
        %6990 = vmatpush2.bf16.msra.mxu0 0
        %6991 = vmatprep.subr.bf16.mxu0 0
        %6992 = vmatpush2.bf16.msra.mxu0 0
        %6993 = vmatprep.mubr.bf16.mxu0 0
        %6994 = vmatmul.mubr.bf16.gmra.mxu0 %v6713
        %v6995 = vpop.f32.mrf.mxu0
        %v6996 = vadd.f32 %v6710, %v6995
        %v6997 = vpop.f32.mrf.mxu0
        %v6998 = vadd.f32 %v6710, %v6997
        %v6999 = vpop.f32.mrf.mxu0
        %v7000 = vpop.f32.mrf.mxu0
        %7001 = vdwg.mxu0
        %7002 = vmatprep.subr.bf16.mxu0 0
        %7003 = vmatpush1.bf16.msra.mxu0 0
        %7004 = vmatprep.subr.bf16.mxu0 0
        %7005 = vmatpush1.bf16.msra.mxu0 0
        %7006 = vmatprep.subr.bf16.mxu0 0
        %7007 = vmatpush1.bf16.msra.mxu0 0
        %7008 = vmatprep.subr.bf16.mxu0 0
        %7009 = vmatpush1.bf16.msra.mxu0 0
        %7010 = vmatprep.subr.bf16.mxu0 0
        %7011 = vmatpush1.bf16.msra.mxu0 0
        %7012 = vmatprep.subr.bf16.mxu0 0
        %7013 = vmatpush1.bf16.msra.mxu0 0
        %7014 = vmatprep.subr.bf16.mxu0 0
        %7015 = vmatpush1.bf16.msra.mxu0 0
        %7016 = vmatprep.subr.bf16.mxu0 %v6311
        %7017 = vmatpush1.bf16.msra.mxu0 %v6309
        %7018 = vmatprep.subr.bf16.mxu0 0
        %7019 = vmatpush2.bf16.msra.mxu0 0
        %7020 = vmatprep.subr.bf16.mxu0 0
        %7021 = vmatpush2.bf16.msra.mxu0 0
        %7022 = vmatprep.subr.bf16.mxu0 0
        %7023 = vmatpush2.bf16.msra.mxu0 0
        %7024 = vmatprep.subr.bf16.mxu0 0
        %7025 = vmatpush2.bf16.msra.mxu0 0
        %7026 = vmatprep.subr.bf16.mxu0 0
        %7027 = vmatpush2.bf16.msra.mxu0 0
        %7028 = vmatprep.subr.bf16.mxu0 0
        %7029 = vmatpush2.bf16.msra.mxu0 0
        %7030 = vmatprep.subr.bf16.mxu0 0
        %7031 = vmatpush2.bf16.msra.mxu0 0
        %7032 = vmatprep.subr.bf16.mxu0 0
        %7033 = vmatpush2.bf16.msra.mxu0 0
        %7034 = vmatprep.mubr.bf16.mxu0 0
        %7035 = vmatmul.mubr.bf16.gmra.mxu0 %v6713
        %v7036 = vpop.f32.mrf.mxu0
        %v7037 = vadd.f32 %v6710, %v7036
        %v7038 = vpop.f32.mrf.mxu0
        %v7039 = vadd.f32 %v6710, %v7038
        %v7040 = vpop.f32.mrf.mxu0
        %v7041 = vpop.f32.mrf.mxu0
        %7042 = vdwg.mxu0
        %v7043 = vmul.f32 %v6641, %v6750
        %v7044 = vmul.f32 %v6641, %v6752
        %v7045 = vmul.f32 %v6641, %v6791
        %v7046 = vmul.f32 %v6641, %v6793
        %v7047 = vmul.f32 %v6641, %v6832
        %v7048 = vmul.f32 %v6641, %v6834
        %v7049 = vmul.f32 %v6641, %v6873
        %v7050 = vmul.f32 %v6641, %v6875
        %v7051 = vmul.f32 %v6641, %v6914
        %v7052 = vmul.f32 %v6641, %v6916
        %v7053 = vmul.f32 %v6641, %v6955
        %v7054 = vmul.f32 %v6641, %v6957
        %v7055 = vmul.f32 %v6641, %v6996
        %v7056 = vmul.f32 %v6641, %v6998
        %v7057 = vmul.f32 %v6641, %v7037
        %v7058 = vmul.f32 %v6641, %v7039
        %v7059 = vld [vmem:[%s392 + $0x80] sm:$0xff]
        %v7060 = vld [vmem:[%s392 + $0x88] sm:$0xff]
        %v7061 = vld [vmem:[%s392 + $0x90] sm:$0xff]
        %v7062 = vld [vmem:[%s392 + $0x98] sm:$0xff]
        %v7063 = vld [vmem:[%s392 + $0xa0] sm:$0xff]
        %v7064 = vld [vmem:[%s392 + $0xa8] sm:$0xff]
        %v7065 = vld [vmem:[%s392 + $0xb0] sm:$0xff]
        %v7066 = vld [vmem:[%s392 + $0xb8] sm:$0xff]
        %v7067 = vld [vmem:[%s392 + $0xc0] sm:$0xff]
        %v7068 = vld [vmem:[%s392 + $0xc8] sm:$0xff]
        %v7069 = vld [vmem:[%s392 + $0xd0] sm:$0xff]
        %v7070 = vld [vmem:[%s392 + $0xd8] sm:$0xff]
        %v7071 = vld [vmem:[%s392 + $0xe0] sm:$0xff]
        %v7072 = vld [vmem:[%s392 + $0xe8] sm:$0xff]
        %v7073 = vld [vmem:[%s392 + $0xf0] sm:$0xff]
        %v7074 = vld [vmem:[%s392 + $0xf8] sm:$0xff]
        %v7075 = vadd.f32 %v7043, %v7059
        %v7076 = vadd.f32 %v7044, %v7060
        %v7077 = vadd.f32 %v7045, %v7061
        %v7078 = vadd.f32 %v7046, %v7062
        %v7079 = vadd.f32 %v7047, %v7063
        %v7080 = vadd.f32 %v7048, %v7064
        %v7081 = vadd.f32 %v7049, %v7065
        %v7082 = vadd.f32 %v7050, %v7066
        %v7083 = vadd.f32 %v7051, %v7067
        %v7084 = vadd.f32 %v7052, %v7068
        %v7085 = vadd.f32 %v7053, %v7069
        %v7086 = vadd.f32 %v7054, %v7070
        %v7087 = vadd.f32 %v7055, %v7071
        %v7088 = vadd.f32 %v7056, %v7072
        %v7089 = vadd.f32 %v7057, %v7073
        %v7090 = vadd.f32 %v7058, %v7074
        %7091 = vst [vmem:[%s419 + $0x80] sm:$0xff] %v7075
        %7092 = vst [vmem:[%s419 + $0x88] sm:$0xff] %v7076
        %7093 = vst [vmem:[%s419 + $0x90] sm:$0xff] %v7077
        %7094 = vst [vmem:[%s419 + $0x98] sm:$0xff] %v7078
        %7095 = vst [vmem:[%s419 + $0xa0] sm:$0xff] %v7079
        %7096 = vst [vmem:[%s419 + $0xa8] sm:$0xff] %v7080
        %7097 = vst [vmem:[%s419 + $0xb0] sm:$0xff] %v7081
        %7098 = vst [vmem:[%s419 + $0xb8] sm:$0xff] %v7082
        %7099 = vst [vmem:[%s419 + $0xc0] sm:$0xff] %v7083
        %7100 = vst [vmem:[%s419 + $0xc8] sm:$0xff] %v7084
        %7101 = vst [vmem:[%s419 + $0xd0] sm:$0xff] %v7085
        %7102 = vst [vmem:[%s419 + $0xd8] sm:$0xff] %v7086
        %7103 = vst [vmem:[%s419 + $0xe0] sm:$0xff] %v7087
        %7104 = vst [vmem:[%s419 + $0xe8] sm:$0xff] %v7088
        %7105 = vst [vmem:[%s419 + $0xf0] sm:$0xff] %v7089
        %7106 = vst [vmem:[%s419 + $0xf8] sm:$0xff] %v7090
        %v7107 = vld [vmem:[%s5 + $0x10] sm:$0xff]
        %7109 = vset.pattern.permute.xlu0 0
        %7110 = vperm.xlu0 %7109, %v7107
        %v7111 = vpop.permute.xlu0 %7110
        %v7114 = vsel %vm1802, %v6269, 0
        %7116 = vmatprep.subr.bf16.mxu0 0
        %7117 = vmatpush1.bf16.msra.mxu0 0
        %7118 = vmatprep.subr.bf16.mxu0 0
        %7119 = vmatpush1.bf16.msra.mxu0 0
        %7120 = vmatprep.subr.bf16.mxu0 0
        %7121 = vmatpush1.bf16.msra.mxu0 0
        %7122 = vmatprep.subr.bf16.mxu0 0
        %7123 = vmatpush1.bf16.msra.mxu0 0
        %7124 = vmatprep.subr.bf16.mxu0 0
        %7125 = vmatpush1.bf16.msra.mxu0 0
        %7126 = vmatprep.subr.bf16.mxu0 0
        %7127 = vmatpush1.bf16.msra.mxu0 0
        %7128 = vmatprep.subr.bf16.mxu0 0
        %7129 = vmatpush1.bf16.msra.mxu0 0
        %7130 = vmatprep.subr.bf16.mxu0 %v6283
        %7131 = vmatpush1.bf16.msra.mxu0 %v6281
        %7132 = vmatprep.subr.bf16.mxu0 0
        %7133 = vmatpush2.bf16.msra.mxu0 0
        %7134 = vmatprep.subr.bf16.mxu0 0
        %7135 = vmatpush2.bf16.msra.mxu0 0
        %7136 = vmatprep.subr.bf16.mxu0 0
        %7137 = vmatpush2.bf16.msra.mxu0 0
        %7138 = vmatprep.subr.bf16.mxu0 0
        %7139 = vmatpush2.bf16.msra.mxu0 0
        %7140 = vmatprep.subr.bf16.mxu0 0
        %7141 = vmatpush2.bf16.msra.mxu0 0
        %7142 = vmatprep.subr.bf16.mxu0 0
        %7143 = vmatpush2.bf16.msra.mxu0 0
        %7144 = vmatprep.subr.bf16.mxu0 0
        %7145 = vmatpush2.bf16.msra.mxu0 0
        %7146 = vmatprep.subr.bf16.mxu0 0
        %7147 = vmatpush2.bf16.msra.mxu0 0
        %7148 = vmatprep.mubr.bf16.mxu0 0
        %7149 = vmatmul.mubr.bf16.gmra.mxu0 %v7114
        %v7150 = vpop.f32.mrf.mxu0
        %v7151 = vadd.f32 %v7111, %v7150
        %v7152 = vpop.f32.mrf.mxu0
        %v7153 = vadd.f32 %v7111, %v7152
        %v7154 = vpop.f32.mrf.mxu0
        %v7155 = vpop.f32.mrf.mxu0
        %7156 = vdwg.mxu0
        %7157 = vmatprep.subr.bf16.mxu0 0
        %7158 = vmatpush1.bf16.msra.mxu0 0
        %7159 = vmatprep.subr.bf16.mxu0 0
        %7160 = vmatpush1.bf16.msra.mxu0 0
        %7161 = vmatprep.subr.bf16.mxu0 0
        %7162 = vmatpush1.bf16.msra.mxu0 0
        %7163 = vmatprep.subr.bf16.mxu0 0
        %7164 = vmatpush1.bf16.msra.mxu0 0
        %7165 = vmatprep.subr.bf16.mxu0 0
        %7166 = vmatpush1.bf16.msra.mxu0 0
        %7167 = vmatprep.subr.bf16.mxu0 0
        %7168 = vmatpush1.bf16.msra.mxu0 0
        %7169 = vmatprep.subr.bf16.mxu0 0
        %7170 = vmatpush1.bf16.msra.mxu0 0
        %7171 = vmatprep.subr.bf16.mxu0 %v6287
        %7172 = vmatpush1.bf16.msra.mxu0 %v6285
        %7173 = vmatprep.subr.bf16.mxu0 0
        %7174 = vmatpush2.bf16.msra.mxu0 0
        %7175 = vmatprep.subr.bf16.mxu0 0
        %7176 = vmatpush2.bf16.msra.mxu0 0
        %7177 = vmatprep.subr.bf16.mxu0 0
        %7178 = vmatpush2.bf16.msra.mxu0 0
        %7179 = vmatprep.subr.bf16.mxu0 0
        %7180 = vmatpush2.bf16.msra.mxu0 0
        %7181 = vmatprep.subr.bf16.mxu0 0
        %7182 = vmatpush2.bf16.msra.mxu0 0
        %7183 = vmatprep.subr.bf16.mxu0 0
        %7184 = vmatpush2.bf16.msra.mxu0 0
        %7185 = vmatprep.subr.bf16.mxu0 0
        %7186 = vmatpush2.bf16.msra.mxu0 0
        %7187 = vmatprep.subr.bf16.mxu0 0
        %7188 = vmatpush2.bf16.msra.mxu0 0
        %7189 = vmatprep.mubr.bf16.mxu0 0
        %7190 = vmatmul.mubr.bf16.gmra.mxu0 %v7114
        %v7191 = vpop.f32.mrf.mxu0
        %v7192 = vadd.f32 %v7111, %v7191
        %v7193 = vpop.f32.mrf.mxu0
        %v7194 = vadd.f32 %v7111, %v7193
        %v7195 = vpop.f32.mrf.mxu0
        %v7196 = vpop.f32.mrf.mxu0
        %7197 = vdwg.mxu0
        %7198 = vmatprep.subr.bf16.mxu0 0
        %7199 = vmatpush1.bf16.msra.mxu0 0
        %7200 = vmatprep.subr.bf16.mxu0 0
        %7201 = vmatpush1.bf16.msra.mxu0 0
        %7202 = vmatprep.subr.bf16.mxu0 0
        %7203 = vmatpush1.bf16.msra.mxu0 0
        %7204 = vmatprep.subr.bf16.mxu0 0
        %7205 = vmatpush1.bf16.msra.mxu0 0
        %7206 = vmatprep.subr.bf16.mxu0 0
        %7207 = vmatpush1.bf16.msra.mxu0 0
        %7208 = vmatprep.subr.bf16.mxu0 0
        %7209 = vmatpush1.bf16.msra.mxu0 0
        %7210 = vmatprep.subr.bf16.mxu0 0
        %7211 = vmatpush1.bf16.msra.mxu0 0
        %7212 = vmatprep.subr.bf16.mxu0 %v6291
        %7213 = vmatpush1.bf16.msra.mxu0 %v6289
        %7214 = vmatprep.subr.bf16.mxu0 0
        %7215 = vmatpush2.bf16.msra.mxu0 0
        %7216 = vmatprep.subr.bf16.mxu0 0
        %7217 = vmatpush2.bf16.msra.mxu0 0
        %7218 = vmatprep.subr.bf16.mxu0 0
        %7219 = vmatpush2.bf16.msra.mxu0 0
        %7220 = vmatprep.subr.bf16.mxu0 0
        %7221 = vmatpush2.bf16.msra.mxu0 0
        %7222 = vmatprep.subr.bf16.mxu0 0
        %7223 = vmatpush2.bf16.msra.mxu0 0
        %7224 = vmatprep.subr.bf16.mxu0 0
        %7225 = vmatpush2.bf16.msra.mxu0 0
        %7226 = vmatprep.subr.bf16.mxu0 0
        %7227 = vmatpush2.bf16.msra.mxu0 0
        %7228 = vmatprep.subr.bf16.mxu0 0
        %7229 = vmatpush2.bf16.msra.mxu0 0
        %7230 = vmatprep.mubr.bf16.mxu0 0
        %7231 = vmatmul.mubr.bf16.gmra.mxu0 %v7114
        %v7232 = vpop.f32.mrf.mxu0
        %v7233 = vadd.f32 %v7111, %v7232
        %v7234 = vpop.f32.mrf.mxu0
        %v7235 = vadd.f32 %v7111, %v7234
        %v7236 = vpop.f32.mrf.mxu0
        %v7237 = vpop.f32.mrf.mxu0
        %7238 = vdwg.mxu0
        %7239 = vmatprep.subr.bf16.mxu0 0
        %7240 = vmatpush1.bf16.msra.mxu0 0
        %7241 = vmatprep.subr.bf16.mxu0 0
        %7242 = vmatpush1.bf16.msra.mxu0 0
        %7243 = vmatprep.subr.bf16.mxu0 0
        %7244 = vmatpush1.bf16.msra.mxu0 0
        %7245 = vmatprep.subr.bf16.mxu0 0
        %7246 = vmatpush1.bf16.msra.mxu0 0
        %7247 = vmatprep.subr.bf16.mxu0 0
        %7248 = vmatpush1.bf16.msra.mxu0 0
        %7249 = vmatprep.subr.bf16.mxu0 0
        %7250 = vmatpush1.bf16.msra.mxu0 0
        %7251 = vmatprep.subr.bf16.mxu0 0
        %7252 = vmatpush1.bf16.msra.mxu0 0
        %7253 = vmatprep.subr.bf16.mxu0 %v6295
        %7254 = vmatpush1.bf16.msra.mxu0 %v6293
        %7255 = vmatprep.subr.bf16.mxu0 0
        %7256 = vmatpush2.bf16.msra.mxu0 0
        %7257 = vmatprep.subr.bf16.mxu0 0
        %7258 = vmatpush2.bf16.msra.mxu0 0
        %7259 = vmatprep.subr.bf16.mxu0 0
        %7260 = vmatpush2.bf16.msra.mxu0 0
        %7261 = vmatprep.subr.bf16.mxu0 0
        %7262 = vmatpush2.bf16.msra.mxu0 0
        %7263 = vmatprep.subr.bf16.mxu0 0
        %7264 = vmatpush2.bf16.msra.mxu0 0
        %7265 = vmatprep.subr.bf16.mxu0 0
        %7266 = vmatpush2.bf16.msra.mxu0 0
        %7267 = vmatprep.subr.bf16.mxu0 0
        %7268 = vmatpush2.bf16.msra.mxu0 0
        %7269 = vmatprep.subr.bf16.mxu0 0
        %7270 = vmatpush2.bf16.msra.mxu0 0
        %7271 = vmatprep.mubr.bf16.mxu0 0
        %7272 = vmatmul.mubr.bf16.gmra.mxu0 %v7114
        %v7273 = vpop.f32.mrf.mxu0
        %v7274 = vadd.f32 %v7111, %v7273
        %v7275 = vpop.f32.mrf.mxu0
        %v7276 = vadd.f32 %v7111, %v7275
        %v7277 = vpop.f32.mrf.mxu0
        %v7278 = vpop.f32.mrf.mxu0
        %7279 = vdwg.mxu0
        %7280 = vmatprep.subr.bf16.mxu0 0
        %7281 = vmatpush1.bf16.msra.mxu0 0
        %7282 = vmatprep.subr.bf16.mxu0 0
        %7283 = vmatpush1.bf16.msra.mxu0 0
        %7284 = vmatprep.subr.bf16.mxu0 0
        %7285 = vmatpush1.bf16.msra.mxu0 0
        %7286 = vmatprep.subr.bf16.mxu0 0
        %7287 = vmatpush1.bf16.msra.mxu0 0
        %7288 = vmatprep.subr.bf16.mxu0 0
        %7289 = vmatpush1.bf16.msra.mxu0 0
        %7290 = vmatprep.subr.bf16.mxu0 0
        %7291 = vmatpush1.bf16.msra.mxu0 0
        %7292 = vmatprep.subr.bf16.mxu0 0
        %7293 = vmatpush1.bf16.msra.mxu0 0
        %7294 = vmatprep.subr.bf16.mxu0 %v6299
        %7295 = vmatpush1.bf16.msra.mxu0 %v6297
        %7296 = vmatprep.subr.bf16.mxu0 0
        %7297 = vmatpush2.bf16.msra.mxu0 0
        %7298 = vmatprep.subr.bf16.mxu0 0
        %7299 = vmatpush2.bf16.msra.mxu0 0
        %7300 = vmatprep.subr.bf16.mxu0 0
        %7301 = vmatpush2.bf16.msra.mxu0 0
        %7302 = vmatprep.subr.bf16.mxu0 0
        %7303 = vmatpush2.bf16.msra.mxu0 0
        %7304 = vmatprep.subr.bf16.mxu0 0
        %7305 = vmatpush2.bf16.msra.mxu0 0
        %7306 = vmatprep.subr.bf16.mxu0 0
        %7307 = vmatpush2.bf16.msra.mxu0 0
        %7308 = vmatprep.subr.bf16.mxu0 0
        %7309 = vmatpush2.bf16.msra.mxu0 0
        %7310 = vmatprep.subr.bf16.mxu0 0
        %7311 = vmatpush2.bf16.msra.mxu0 0
        %7312 = vmatprep.mubr.bf16.mxu0 0
        %7313 = vmatmul.mubr.bf16.gmra.mxu0 %v7114
        %v7314 = vpop.f32.mrf.mxu0
        %v7315 = vadd.f32 %v7111, %v7314
        %v7316 = vpop.f32.mrf.mxu0
        %v7317 = vadd.f32 %v7111, %v7316
        %v7318 = vpop.f32.mrf.mxu0
        %v7319 = vpop.f32.mrf.mxu0
        %7320 = vdwg.mxu0
        %7321 = vmatprep.subr.bf16.mxu0 0
        %7322 = vmatpush1.bf16.msra.mxu0 0
        %7323 = vmatprep.subr.bf16.mxu0 0
        %7324 = vmatpush1.bf16.msra.mxu0 0
        %7325 = vmatprep.subr.bf16.mxu0 0
        %7326 = vmatpush1.bf16.msra.mxu0 0
        %7327 = vmatprep.subr.bf16.mxu0 0
        %7328 = vmatpush1.bf16.msra.mxu0 0
        %7329 = vmatprep.subr.bf16.mxu0 0
        %7330 = vmatpush1.bf16.msra.mxu0 0
        %7331 = vmatprep.subr.bf16.mxu0 0
        %7332 = vmatpush1.bf16.msra.mxu0 0
        %7333 = vmatprep.subr.bf16.mxu0 0
        %7334 = vmatpush1.bf16.msra.mxu0 0
        %7335 = vmatprep.subr.bf16.mxu0 %v6303
        %7336 = vmatpush1.bf16.msra.mxu0 %v6301
        %7337 = vmatprep.subr.bf16.mxu0 0
        %7338 = vmatpush2.bf16.msra.mxu0 0
        %7339 = vmatprep.subr.bf16.mxu0 0
        %7340 = vmatpush2.bf16.msra.mxu0 0
        %7341 = vmatprep.subr.bf16.mxu0 0
        %7342 = vmatpush2.bf16.msra.mxu0 0
        %7343 = vmatprep.subr.bf16.mxu0 0
        %7344 = vmatpush2.bf16.msra.mxu0 0
        %7345 = vmatprep.subr.bf16.mxu0 0
        %7346 = vmatpush2.bf16.msra.mxu0 0
        %7347 = vmatprep.subr.bf16.mxu0 0
        %7348 = vmatpush2.bf16.msra.mxu0 0
        %7349 = vmatprep.subr.bf16.mxu0 0
        %7350 = vmatpush2.bf16.msra.mxu0 0
        %7351 = vmatprep.subr.bf16.mxu0 0
        %7352 = vmatpush2.bf16.msra.mxu0 0
        %7353 = vmatprep.mubr.bf16.mxu0 0
        %7354 = vmatmul.mubr.bf16.gmra.mxu0 %v7114
        %v7355 = vpop.f32.mrf.mxu0
        %v7356 = vadd.f32 %v7111, %v7355
        %v7357 = vpop.f32.mrf.mxu0
        %v7358 = vadd.f32 %v7111, %v7357
        %v7359 = vpop.f32.mrf.mxu0
        %v7360 = vpop.f32.mrf.mxu0
        %7361 = vdwg.mxu0
        %7362 = vmatprep.subr.bf16.mxu0 0
        %7363 = vmatpush1.bf16.msra.mxu0 0
        %7364 = vmatprep.subr.bf16.mxu0 0
        %7365 = vmatpush1.bf16.msra.mxu0 0
        %7366 = vmatprep.subr.bf16.mxu0 0
        %7367 = vmatpush1.bf16.msra.mxu0 0
        %7368 = vmatprep.subr.bf16.mxu0 0
        %7369 = vmatpush1.bf16.msra.mxu0 0
        %7370 = vmatprep.subr.bf16.mxu0 0
        %7371 = vmatpush1.bf16.msra.mxu0 0
        %7372 = vmatprep.subr.bf16.mxu0 0
        %7373 = vmatpush1.bf16.msra.mxu0 0
        %7374 = vmatprep.subr.bf16.mxu0 0
        %7375 = vmatpush1.bf16.msra.mxu0 0
        %7376 = vmatprep.subr.bf16.mxu0 %v6307
        %7377 = vmatpush1.bf16.msra.mxu0 %v6305
        %7378 = vmatprep.subr.bf16.mxu0 0
        %7379 = vmatpush2.bf16.msra.mxu0 0
        %7380 = vmatprep.subr.bf16.mxu0 0
        %7381 = vmatpush2.bf16.msra.mxu0 0
        %7382 = vmatprep.subr.bf16.mxu0 0
        %7383 = vmatpush2.bf16.msra.mxu0 0
        %7384 = vmatprep.subr.bf16.mxu0 0
        %7385 = vmatpush2.bf16.msra.mxu0 0
        %7386 = vmatprep.subr.bf16.mxu0 0
        %7387 = vmatpush2.bf16.msra.mxu0 0
        %7388 = vmatprep.subr.bf16.mxu0 0
        %7389 = vmatpush2.bf16.msra.mxu0 0
        %7390 = vmatprep.subr.bf16.mxu0 0
        %7391 = vmatpush2.bf16.msra.mxu0 0
        %7392 = vmatprep.subr.bf16.mxu0 0
        %7393 = vmatpush2.bf16.msra.mxu0 0
        %7394 = vmatprep.mubr.bf16.mxu0 0
        %7395 = vmatmul.mubr.bf16.gmra.mxu0 %v7114
        %v7396 = vpop.f32.mrf.mxu0
        %v7397 = vadd.f32 %v7111, %v7396
        %v7398 = vpop.f32.mrf.mxu0
        %v7399 = vadd.f32 %v7111, %v7398
        %v7400 = vpop.f32.mrf.mxu0
        %v7401 = vpop.f32.mrf.mxu0
        %7402 = vdwg.mxu0
        %7403 = vmatprep.subr.bf16.mxu0 0
        %7404 = vmatpush1.bf16.msra.mxu0 0
        %7405 = vmatprep.subr.bf16.mxu0 0
        %7406 = vmatpush1.bf16.msra.mxu0 0
        %7407 = vmatprep.subr.bf16.mxu0 0
        %7408 = vmatpush1.bf16.msra.mxu0 0
        %7409 = vmatprep.subr.bf16.mxu0 0
        %7410 = vmatpush1.bf16.msra.mxu0 0
        %7411 = vmatprep.subr.bf16.mxu0 0
        %7412 = vmatpush1.bf16.msra.mxu0 0
        %7413 = vmatprep.subr.bf16.mxu0 0
        %7414 = vmatpush1.bf16.msra.mxu0 0
        %7415 = vmatprep.subr.bf16.mxu0 0
        %7416 = vmatpush1.bf16.msra.mxu0 0
        %7417 = vmatprep.subr.bf16.mxu0 %v6311
        %7418 = vmatpush1.bf16.msra.mxu0 %v6309
        %7419 = vmatprep.subr.bf16.mxu0 0
        %7420 = vmatpush2.bf16.msra.mxu0 0
        %7421 = vmatprep.subr.bf16.mxu0 0
        %7422 = vmatpush2.bf16.msra.mxu0 0
        %7423 = vmatprep.subr.bf16.mxu0 0
        %7424 = vmatpush2.bf16.msra.mxu0 0
        %7425 = vmatprep.subr.bf16.mxu0 0
        %7426 = vmatpush2.bf16.msra.mxu0 0
        %7427 = vmatprep.subr.bf16.mxu0 0
        %7428 = vmatpush2.bf16.msra.mxu0 0
        %7429 = vmatprep.subr.bf16.mxu0 0
        %7430 = vmatpush2.bf16.msra.mxu0 0
        %7431 = vmatprep.subr.bf16.mxu0 0
        %7432 = vmatpush2.bf16.msra.mxu0 0
        %7433 = vmatprep.subr.bf16.mxu0 0
        %7434 = vmatpush2.bf16.msra.mxu0 0
        %7435 = vmatprep.mubr.bf16.mxu0 0
        %7436 = vmatmul.mubr.bf16.gmra.mxu0 %v7114
        %v7437 = vpop.f32.mrf.mxu0
        %v7438 = vadd.f32 %v7111, %v7437
        %v7439 = vpop.f32.mrf.mxu0
        %v7440 = vadd.f32 %v7111, %v7439
        %v7441 = vpop.f32.mrf.mxu0
        %v7442 = vpop.f32.mrf.mxu0
        %7443 = vdwg.mxu0
        %v7444 = vmul.f32 %v6641, %v7151
        %v7445 = vmul.f32 %v6641, %v7153
        %v7446 = vmul.f32 %v6641, %v7192
        %v7447 = vmul.f32 %v6641, %v7194
        %v7448 = vmul.f32 %v6641, %v7233
        %v7449 = vmul.f32 %v6641, %v7235
        %v7450 = vmul.f32 %v6641, %v7274
        %v7451 = vmul.f32 %v6641, %v7276
        %v7452 = vmul.f32 %v6641, %v7315
        %v7453 = vmul.f32 %v6641, %v7317
        %v7454 = vmul.f32 %v6641, %v7356
        %v7455 = vmul.f32 %v6641, %v7358
        %v7456 = vmul.f32 %v6641, %v7397
        %v7457 = vmul.f32 %v6641, %v7399
        %v7458 = vmul.f32 %v6641, %v7438
        %v7459 = vmul.f32 %v6641, %v7440
        %v7460 = vld [vmem:[%s392 + $0x100] sm:$0xff]
        %v7461 = vld [vmem:[%s392 + $0x108] sm:$0xff]
        %v7462 = vld [vmem:[%s392 + $0x110] sm:$0xff]
        %v7463 = vld [vmem:[%s392 + $0x118] sm:$0xff]
        %v7464 = vld [vmem:[%s392 + $0x120] sm:$0xff]
        %v7465 = vld [vmem:[%s392 + $0x128] sm:$0xff]
        %v7466 = vld [vmem:[%s392 + $0x130] sm:$0xff]
        %v7467 = vld [vmem:[%s392 + $0x138] sm:$0xff]
        %v7468 = vld [vmem:[%s392 + $0x140] sm:$0xff]
        %v7469 = vld [vmem:[%s392 + $0x148] sm:$0xff]
        %v7470 = vld [vmem:[%s392 + $0x150] sm:$0xff]
        %v7471 = vld [vmem:[%s392 + $0x158] sm:$0xff]
        %v7472 = vld [vmem:[%s392 + $0x160] sm:$0xff]
        %v7473 = vld [vmem:[%s392 + $0x168] sm:$0xff]
        %v7474 = vld [vmem:[%s392 + $0x170] sm:$0xff]
        %v7475 = vld [vmem:[%s392 + $0x178] sm:$0xff]
        %v7476 = vadd.f32 %v7444, %v7460
        %v7477 = vadd.f32 %v7445, %v7461
        %v7478 = vadd.f32 %v7446, %v7462
        %v7479 = vadd.f32 %v7447, %v7463
        %v7480 = vadd.f32 %v7448, %v7464
        %v7481 = vadd.f32 %v7449, %v7465
        %v7482 = vadd.f32 %v7450, %v7466
        %v7483 = vadd.f32 %v7451, %v7467
        %v7484 = vadd.f32 %v7452, %v7468
        %v7485 = vadd.f32 %v7453, %v7469
        %v7486 = vadd.f32 %v7454, %v7470
        %v7487 = vadd.f32 %v7455, %v7471
        %v7488 = vadd.f32 %v7456, %v7472
        %v7489 = vadd.f32 %v7457, %v7473
        %v7490 = vadd.f32 %v7458, %v7474
        %v7491 = vadd.f32 %v7459, %v7475
        %7492 = vst [vmem:[%s419 + $0x100] sm:$0xff] %v7476
        %7493 = vst [vmem:[%s419 + $0x108] sm:$0xff] %v7477
        %7494 = vst [vmem:[%s419 + $0x110] sm:$0xff] %v7478
        %7495 = vst [vmem:[%s419 + $0x118] sm:$0xff] %v7479
        %7496 = vst [vmem:[%s419 + $0x120] sm:$0xff] %v7480
        %7497 = vst [vmem:[%s419 + $0x128] sm:$0xff] %v7481
        %7498 = vst [vmem:[%s419 + $0x130] sm:$0xff] %v7482
        %7499 = vst [vmem:[%s419 + $0x138] sm:$0xff] %v7483
        %7500 = vst [vmem:[%s419 + $0x140] sm:$0xff] %v7484
        %7501 = vst [vmem:[%s419 + $0x148] sm:$0xff] %v7485
        %7502 = vst [vmem:[%s419 + $0x150] sm:$0xff] %v7486
        %7503 = vst [vmem:[%s419 + $0x158] sm:$0xff] %v7487
        %7504 = vst [vmem:[%s419 + $0x160] sm:$0xff] %v7488
        %7505 = vst [vmem:[%s419 + $0x168] sm:$0xff] %v7489
        %7506 = vst [vmem:[%s419 + $0x170] sm:$0xff] %v7490
        %7507 = vst [vmem:[%s419 + $0x178] sm:$0xff] %v7491
        %v7508 = vld [vmem:[%s5 + $0x18] sm:$0xff]
        %7510 = vset.pattern.permute.xlu0 0
        %7511 = vperm.xlu0 %7510, %v7508
        %v7512 = vpop.permute.xlu0 %7511
        %v7515 = vsel %vm1802, %v6270, 0
        %7517 = vmatprep.subr.bf16.mxu0 0
        %7518 = vmatpush1.bf16.msra.mxu0 0
        %7519 = vmatprep.subr.bf16.mxu0 0
        %7520 = vmatpush1.bf16.msra.mxu0 0
        %7521 = vmatprep.subr.bf16.mxu0 0
        %7522 = vmatpush1.bf16.msra.mxu0 0
        %7523 = vmatprep.subr.bf16.mxu0 0
        %7524 = vmatpush1.bf16.msra.mxu0 0
        %7525 = vmatprep.subr.bf16.mxu0 0
        %7526 = vmatpush1.bf16.msra.mxu0 0
        %7527 = vmatprep.subr.bf16.mxu0 0
        %7528 = vmatpush1.bf16.msra.mxu0 0
        %7529 = vmatprep.subr.bf16.mxu0 0
        %7530 = vmatpush1.bf16.msra.mxu0 0
        %7531 = vmatprep.subr.bf16.mxu0 %v6283
        %7532 = vmatpush1.bf16.msra.mxu0 %v6281
        %7533 = vmatprep.subr.bf16.mxu0 0
        %7534 = vmatpush2.bf16.msra.mxu0 0
        %7535 = vmatprep.subr.bf16.mxu0 0
        %7536 = vmatpush2.bf16.msra.mxu0 0
        %7537 = vmatprep.subr.bf16.mxu0 0
        %7538 = vmatpush2.bf16.msra.mxu0 0
        %7539 = vmatprep.subr.bf16.mxu0 0
        %7540 = vmatpush2.bf16.msra.mxu0 0
        %7541 = vmatprep.subr.bf16.mxu0 0
        %7542 = vmatpush2.bf16.msra.mxu0 0
        %7543 = vmatprep.subr.bf16.mxu0 0
        %7544 = vmatpush2.bf16.msra.mxu0 0
        %7545 = vmatprep.subr.bf16.mxu0 0
        %7546 = vmatpush2.bf16.msra.mxu0 0
        %7547 = vmatprep.subr.bf16.mxu0 0
        %7548 = vmatpush2.bf16.msra.mxu0 0
        %7549 = vmatprep.mubr.bf16.mxu0 0
        %7550 = vmatmul.mubr.bf16.gmra.mxu0 %v7515
        %v7551 = vpop.f32.mrf.mxu0
        %v7552 = vadd.f32 %v7512, %v7551
        %v7553 = vpop.f32.mrf.mxu0
        %v7554 = vadd.f32 %v7512, %v7553
        %v7555 = vpop.f32.mrf.mxu0
        %v7556 = vpop.f32.mrf.mxu0
        %7557 = vdwg.mxu0
        %7558 = vmatprep.subr.bf16.mxu0 0
        %7559 = vmatpush1.bf16.msra.mxu0 0
        %7560 = vmatprep.subr.bf16.mxu0 0
        %7561 = vmatpush1.bf16.msra.mxu0 0
        %7562 = vmatprep.subr.bf16.mxu0 0
        %7563 = vmatpush1.bf16.msra.mxu0 0
        %7564 = vmatprep.subr.bf16.mxu0 0
        %7565 = vmatpush1.bf16.msra.mxu0 0
        %7566 = vmatprep.subr.bf16.mxu0 0
        %7567 = vmatpush1.bf16.msra.mxu0 0
        %7568 = vmatprep.subr.bf16.mxu0 0
        %7569 = vmatpush1.bf16.msra.mxu0 0
        %7570 = vmatprep.subr.bf16.mxu0 0
        %7571 = vmatpush1.bf16.msra.mxu0 0
        %7572 = vmatprep.subr.bf16.mxu0 %v6287
        %7573 = vmatpush1.bf16.msra.mxu0 %v6285
        %7574 = vmatprep.subr.bf16.mxu0 0
        %7575 = vmatpush2.bf16.msra.mxu0 0
        %7576 = vmatprep.subr.bf16.mxu0 0
        %7577 = vmatpush2.bf16.msra.mxu0 0
        %7578 = vmatprep.subr.bf16.mxu0 0
        %7579 = vmatpush2.bf16.msra.mxu0 0
        %7580 = vmatprep.subr.bf16.mxu0 0
        %7581 = vmatpush2.bf16.msra.mxu0 0
        %7582 = vmatprep.subr.bf16.mxu0 0
        %7583 = vmatpush2.bf16.msra.mxu0 0
        %7584 = vmatprep.subr.bf16.mxu0 0
        %7585 = vmatpush2.bf16.msra.mxu0 0
        %7586 = vmatprep.subr.bf16.mxu0 0
        %7587 = vmatpush2.bf16.msra.mxu0 0
        %7588 = vmatprep.subr.bf16.mxu0 0
        %7589 = vmatpush2.bf16.msra.mxu0 0
        %7590 = vmatprep.mubr.bf16.mxu0 0
        %7591 = vmatmul.mubr.bf16.gmra.mxu0 %v7515
        %v7592 = vpop.f32.mrf.mxu0
        %v7593 = vadd.f32 %v7512, %v7592
        %v7594 = vpop.f32.mrf.mxu0
        %v7595 = vadd.f32 %v7512, %v7594
        %v7596 = vpop.f32.mrf.mxu0
        %v7597 = vpop.f32.mrf.mxu0
        %7598 = vdwg.mxu0
        %7599 = vmatprep.subr.bf16.mxu0 0
        %7600 = vmatpush1.bf16.msra.mxu0 0
        %7601 = vmatprep.subr.bf16.mxu0 0
        %7602 = vmatpush1.bf16.msra.mxu0 0
        %7603 = vmatprep.subr.bf16.mxu0 0
        %7604 = vmatpush1.bf16.msra.mxu0 0
        %7605 = vmatprep.subr.bf16.mxu0 0
        %7606 = vmatpush1.bf16.msra.mxu0 0
        %7607 = vmatprep.subr.bf16.mxu0 0
        %7608 = vmatpush1.bf16.msra.mxu0 0
        %7609 = vmatprep.subr.bf16.mxu0 0
        %7610 = vmatpush1.bf16.msra.mxu0 0
        %7611 = vmatprep.subr.bf16.mxu0 0
        %7612 = vmatpush1.bf16.msra.mxu0 0
        %7613 = vmatprep.subr.bf16.mxu0 %v6291
        %7614 = vmatpush1.bf16.msra.mxu0 %v6289
        %7615 = vmatprep.subr.bf16.mxu0 0
        %7616 = vmatpush2.bf16.msra.mxu0 0
        %7617 = vmatprep.subr.bf16.mxu0 0
        %7618 = vmatpush2.bf16.msra.mxu0 0
        %7619 = vmatprep.subr.bf16.mxu0 0
        %7620 = vmatpush2.bf16.msra.mxu0 0
        %7621 = vmatprep.subr.bf16.mxu0 0
        %7622 = vmatpush2.bf16.msra.mxu0 0
        %7623 = vmatprep.subr.bf16.mxu0 0
        %7624 = vmatpush2.bf16.msra.mxu0 0
        %7625 = vmatprep.subr.bf16.mxu0 0
        %7626 = vmatpush2.bf16.msra.mxu0 0
        %7627 = vmatprep.subr.bf16.mxu0 0
        %7628 = vmatpush2.bf16.msra.mxu0 0
        %7629 = vmatprep.subr.bf16.mxu0 0
        %7630 = vmatpush2.bf16.msra.mxu0 0
        %7631 = vmatprep.mubr.bf16.mxu0 0
        %7632 = vmatmul.mubr.bf16.gmra.mxu0 %v7515
        %v7633 = vpop.f32.mrf.mxu0
        %v7634 = vadd.f32 %v7512, %v7633
        %v7635 = vpop.f32.mrf.mxu0
        %v7636 = vadd.f32 %v7512, %v7635
        %v7637 = vpop.f32.mrf.mxu0
        %v7638 = vpop.f32.mrf.mxu0
        %7639 = vdwg.mxu0
        %7640 = vmatprep.subr.bf16.mxu0 0
        %7641 = vmatpush1.bf16.msra.mxu0 0
        %7642 = vmatprep.subr.bf16.mxu0 0
        %7643 = vmatpush1.bf16.msra.mxu0 0
        %7644 = vmatprep.subr.bf16.mxu0 0
        %7645 = vmatpush1.bf16.msra.mxu0 0
        %7646 = vmatprep.subr.bf16.mxu0 0
        %7647 = vmatpush1.bf16.msra.mxu0 0
        %7648 = vmatprep.subr.bf16.mxu0 0
        %7649 = vmatpush1.bf16.msra.mxu0 0
        %7650 = vmatprep.subr.bf16.mxu0 0
        %7651 = vmatpush1.bf16.msra.mxu0 0
        %7652 = vmatprep.subr.bf16.mxu0 0
        %7653 = vmatpush1.bf16.msra.mxu0 0
        %7654 = vmatprep.subr.bf16.mxu0 %v6295
        %7655 = vmatpush1.bf16.msra.mxu0 %v6293
        %7656 = vmatprep.subr.bf16.mxu0 0
        %7657 = vmatpush2.bf16.msra.mxu0 0
        %7658 = vmatprep.subr.bf16.mxu0 0
        %7659 = vmatpush2.bf16.msra.mxu0 0
        %7660 = vmatprep.subr.bf16.mxu0 0
        %7661 = vmatpush2.bf16.msra.mxu0 0
        %7662 = vmatprep.subr.bf16.mxu0 0
        %7663 = vmatpush2.bf16.msra.mxu0 0
        %7664 = vmatprep.subr.bf16.mxu0 0
        %7665 = vmatpush2.bf16.msra.mxu0 0
        %7666 = vmatprep.subr.bf16.mxu0 0
        %7667 = vmatpush2.bf16.msra.mxu0 0
        %7668 = vmatprep.subr.bf16.mxu0 0
        %7669 = vmatpush2.bf16.msra.mxu0 0
        %7670 = vmatprep.subr.bf16.mxu0 0
        %7671 = vmatpush2.bf16.msra.mxu0 0
        %7672 = vmatprep.mubr.bf16.mxu0 0
        %7673 = vmatmul.mubr.bf16.gmra.mxu0 %v7515
        %v7674 = vpop.f32.mrf.mxu0
        %v7675 = vadd.f32 %v7512, %v7674
        %v7676 = vpop.f32.mrf.mxu0
        %v7677 = vadd.f32 %v7512, %v7676
        %v7678 = vpop.f32.mrf.mxu0
        %v7679 = vpop.f32.mrf.mxu0
        %7680 = vdwg.mxu0
        %7681 = vmatprep.subr.bf16.mxu0 0
        %7682 = vmatpush1.bf16.msra.mxu0 0
        %7683 = vmatprep.subr.bf16.mxu0 0
        %7684 = vmatpush1.bf16.msra.mxu0 0
        %7685 = vmatprep.subr.bf16.mxu0 0
        %7686 = vmatpush1.bf16.msra.mxu0 0
        %7687 = vmatprep.subr.bf16.mxu0 0
        %7688 = vmatpush1.bf16.msra.mxu0 0
        %7689 = vmatprep.subr.bf16.mxu0 0
        %7690 = vmatpush1.bf16.msra.mxu0 0
        %7691 = vmatprep.subr.bf16.mxu0 0
        %7692 = vmatpush1.bf16.msra.mxu0 0
        %7693 = vmatprep.subr.bf16.mxu0 0
        %7694 = vmatpush1.bf16.msra.mxu0 0
        %7695 = vmatprep.subr.bf16.mxu0 %v6299
        %7696 = vmatpush1.bf16.msra.mxu0 %v6297
        %7697 = vmatprep.subr.bf16.mxu0 0
        %7698 = vmatpush2.bf16.msra.mxu0 0
        %7699 = vmatprep.subr.bf16.mxu0 0
        %7700 = vmatpush2.bf16.msra.mxu0 0
        %7701 = vmatprep.subr.bf16.mxu0 0
        %7702 = vmatpush2.bf16.msra.mxu0 0
        %7703 = vmatprep.subr.bf16.mxu0 0
        %7704 = vmatpush2.bf16.msra.mxu0 0
        %7705 = vmatprep.subr.bf16.mxu0 0
        %7706 = vmatpush2.bf16.msra.mxu0 0
        %7707 = vmatprep.subr.bf16.mxu0 0
        %7708 = vmatpush2.bf16.msra.mxu0 0
        %7709 = vmatprep.subr.bf16.mxu0 0
        %7710 = vmatpush2.bf16.msra.mxu0 0
        %7711 = vmatprep.subr.bf16.mxu0 0
        %7712 = vmatpush2.bf16.msra.mxu0 0
        %7713 = vmatprep.mubr.bf16.mxu0 0
        %7714 = vmatmul.mubr.bf16.gmra.mxu0 %v7515
        %v7715 = vpop.f32.mrf.mxu0
        %v7716 = vadd.f32 %v7512, %v7715
        %v7717 = vpop.f32.mrf.mxu0
        %v7718 = vadd.f32 %v7512, %v7717
        %v7719 = vpop.f32.mrf.mxu0
        %v7720 = vpop.f32.mrf.mxu0
        %7721 = vdwg.mxu0
        %7722 = vmatprep.subr.bf16.mxu0 0
        %7723 = vmatpush1.bf16.msra.mxu0 0
        %7724 = vmatprep.subr.bf16.mxu0 0
        %7725 = vmatpush1.bf16.msra.mxu0 0
        %7726 = vmatprep.subr.bf16.mxu0 0
        %7727 = vmatpush1.bf16.msra.mxu0 0
        %7728 = vmatprep.subr.bf16.mxu0 0
        %7729 = vmatpush1.bf16.msra.mxu0 0
        %7730 = vmatprep.subr.bf16.mxu0 0
        %7731 = vmatpush1.bf16.msra.mxu0 0
        %7732 = vmatprep.subr.bf16.mxu0 0
        %7733 = vmatpush1.bf16.msra.mxu0 0
        %7734 = vmatprep.subr.bf16.mxu0 0
        %7735 = vmatpush1.bf16.msra.mxu0 0
        %7736 = vmatprep.subr.bf16.mxu0 %v6303
        %7737 = vmatpush1.bf16.msra.mxu0 %v6301
        %7738 = vmatprep.subr.bf16.mxu0 0
        %7739 = vmatpush2.bf16.msra.mxu0 0
        %7740 = vmatprep.subr.bf16.mxu0 0
        %7741 = vmatpush2.bf16.msra.mxu0 0
        %7742 = vmatprep.subr.bf16.mxu0 0
        %7743 = vmatpush2.bf16.msra.mxu0 0
        %7744 = vmatprep.subr.bf16.mxu0 0
        %7745 = vmatpush2.bf16.msra.mxu0 0
        %7746 = vmatprep.subr.bf16.mxu0 0
        %7747 = vmatpush2.bf16.msra.mxu0 0
        %7748 = vmatprep.subr.bf16.mxu0 0
        %7749 = vmatpush2.bf16.msra.mxu0 0
        %7750 = vmatprep.subr.bf16.mxu0 0
        %7751 = vmatpush2.bf16.msra.mxu0 0
        %7752 = vmatprep.subr.bf16.mxu0 0
        %7753 = vmatpush2.bf16.msra.mxu0 0
        %7754 = vmatprep.mubr.bf16.mxu0 0
        %7755 = vmatmul.mubr.bf16.gmra.mxu0 %v7515
        %v7756 = vpop.f32.mrf.mxu0
        %v7757 = vadd.f32 %v7512, %v7756
        %v7758 = vpop.f32.mrf.mxu0
        %v7759 = vadd.f32 %v7512, %v7758
        %v7760 = vpop.f32.mrf.mxu0
        %v7761 = vpop.f32.mrf.mxu0
        %7762 = vdwg.mxu0
        %7763 = vmatprep.subr.bf16.mxu0 0
        %7764 = vmatpush1.bf16.msra.mxu0 0
        %7765 = vmatprep.subr.bf16.mxu0 0
        %7766 = vmatpush1.bf16.msra.mxu0 0
        %7767 = vmatprep.subr.bf16.mxu0 0
        %7768 = vmatpush1.bf16.msra.mxu0 0
        %7769 = vmatprep.subr.bf16.mxu0 0
        %7770 = vmatpush1.bf16.msra.mxu0 0
        %7771 = vmatprep.subr.bf16.mxu0 0
        %7772 = vmatpush1.bf16.msra.mxu0 0
        %7773 = vmatprep.subr.bf16.mxu0 0
        %7774 = vmatpush1.bf16.msra.mxu0 0
        %7775 = vmatprep.subr.bf16.mxu0 0
        %7776 = vmatpush1.bf16.msra.mxu0 0
        %7777 = vmatprep.subr.bf16.mxu0 %v6307
        %7778 = vmatpush1.bf16.msra.mxu0 %v6305
        %7779 = vmatprep.subr.bf16.mxu0 0
        %7780 = vmatpush2.bf16.msra.mxu0 0
        %7781 = vmatprep.subr.bf16.mxu0 0
        %7782 = vmatpush2.bf16.msra.mxu0 0
        %7783 = vmatprep.subr.bf16.mxu0 0
        %7784 = vmatpush2.bf16.msra.mxu0 0
        %7785 = vmatprep.subr.bf16.mxu0 0
        %7786 = vmatpush2.bf16.msra.mxu0 0
        %7787 = vmatprep.subr.bf16.mxu0 0
        %7788 = vmatpush2.bf16.msra.mxu0 0
        %7789 = vmatprep.subr.bf16.mxu0 0
        %7790 = vmatpush2.bf16.msra.mxu0 0
        %7791 = vmatprep.subr.bf16.mxu0 0
        %7792 = vmatpush2.bf16.msra.mxu0 0
        %7793 = vmatprep.subr.bf16.mxu0 0
        %7794 = vmatpush2.bf16.msra.mxu0 0
        %7795 = vmatprep.mubr.bf16.mxu0 0
        %7796 = vmatmul.mubr.bf16.gmra.mxu0 %v7515
        %v7797 = vpop.f32.mrf.mxu0
        %v7798 = vadd.f32 %v7512, %v7797
        %v7799 = vpop.f32.mrf.mxu0
        %v7800 = vadd.f32 %v7512, %v7799
        %v7801 = vpop.f32.mrf.mxu0
        %v7802 = vpop.f32.mrf.mxu0
        %7803 = vdwg.mxu0
        %7804 = vmatprep.subr.bf16.mxu0 0
        %7805 = vmatpush1.bf16.msra.mxu0 0
        %7806 = vmatprep.subr.bf16.mxu0 0
        %7807 = vmatpush1.bf16.msra.mxu0 0
        %7808 = vmatprep.subr.bf16.mxu0 0
        %7809 = vmatpush1.bf16.msra.mxu0 0
        %7810 = vmatprep.subr.bf16.mxu0 0
        %7811 = vmatpush1.bf16.msra.mxu0 0
        %7812 = vmatprep.subr.bf16.mxu0 0
        %7813 = vmatpush1.bf16.msra.mxu0 0
        %7814 = vmatprep.subr.bf16.mxu0 0
        %7815 = vmatpush1.bf16.msra.mxu0 0
        %7816 = vmatprep.subr.bf16.mxu0 0
        %7817 = vmatpush1.bf16.msra.mxu0 0
        %7818 = vmatprep.subr.bf16.mxu0 %v6311
        %7819 = vmatpush1.bf16.msra.mxu0 %v6309
        %7820 = vmatprep.subr.bf16.mxu0 0
        %7821 = vmatpush2.bf16.msra.mxu0 0
        %7822 = vmatprep.subr.bf16.mxu0 0
        %7823 = vmatpush2.bf16.msra.mxu0 0
        %7824 = vmatprep.subr.bf16.mxu0 0
        %7825 = vmatpush2.bf16.msra.mxu0 0
        %7826 = vmatprep.subr.bf16.mxu0 0
        %7827 = vmatpush2.bf16.msra.mxu0 0
        %7828 = vmatprep.subr.bf16.mxu0 0
        %7829 = vmatpush2.bf16.msra.mxu0 0
        %7830 = vmatprep.subr.bf16.mxu0 0
        %7831 = vmatpush2.bf16.msra.mxu0 0
        %7832 = vmatprep.subr.bf16.mxu0 0
        %7833 = vmatpush2.bf16.msra.mxu0 0
        %7834 = vmatprep.subr.bf16.mxu0 0
        %7835 = vmatpush2.bf16.msra.mxu0 0
        %7836 = vmatprep.mubr.bf16.mxu0 0
        %7837 = vmatmul.mubr.bf16.gmra.mxu0 %v7515
        %v7838 = vpop.f32.mrf.mxu0
        %v7839 = vadd.f32 %v7512, %v7838
        %v7840 = vpop.f32.mrf.mxu0
        %v7841 = vadd.f32 %v7512, %v7840
        %v7842 = vpop.f32.mrf.mxu0
        %v7843 = vpop.f32.mrf.mxu0
        %7844 = vdwg.mxu0
        %v7845 = vmul.f32 %v6641, %v7552
        %v7846 = vmul.f32 %v6641, %v7554
        %v7847 = vmul.f32 %v6641, %v7593
        %v7848 = vmul.f32 %v6641, %v7595
        %v7849 = vmul.f32 %v6641, %v7634
        %v7850 = vmul.f32 %v6641, %v7636
        %v7851 = vmul.f32 %v6641, %v7675
        %v7852 = vmul.f32 %v6641, %v7677
        %v7853 = vmul.f32 %v6641, %v7716
        %v7854 = vmul.f32 %v6641, %v7718
        %v7855 = vmul.f32 %v6641, %v7757
        %v7856 = vmul.f32 %v6641, %v7759
        %v7857 = vmul.f32 %v6641, %v7798
        %v7858 = vmul.f32 %v6641, %v7800
        %v7859 = vmul.f32 %v6641, %v7839
        %v7860 = vmul.f32 %v6641, %v7841
        %v7861 = vld [vmem:[%s392 + $0x180] sm:$0xff]
        %v7862 = vld [vmem:[%s392 + $0x188] sm:$0xff]
        %v7863 = vld [vmem:[%s392 + $0x190] sm:$0xff]
        %v7864 = vld [vmem:[%s392 + $0x198] sm:$0xff]
        %v7865 = vld [vmem:[%s392 + $0x1a0] sm:$0xff]
        %v7866 = vld [vmem:[%s392 + $0x1a8] sm:$0xff]
        %v7867 = vld [vmem:[%s392 + $0x1b0] sm:$0xff]
        %v7868 = vld [vmem:[%s392 + $0x1b8] sm:$0xff]
        %v7869 = vld [vmem:[%s392 + $0x1c0] sm:$0xff]
        %v7870 = vld [vmem:[%s392 + $0x1c8] sm:$0xff]
        %v7871 = vld [vmem:[%s392 + $0x1d0] sm:$0xff]
        %v7872 = vld [vmem:[%s392 + $0x1d8] sm:$0xff]
        %v7873 = vld [vmem:[%s392 + $0x1e0] sm:$0xff]
        %v7874 = vld [vmem:[%s392 + $0x1e8] sm:$0xff]
        %v7875 = vld [vmem:[%s392 + $0x1f0] sm:$0xff]
        %v7876 = vld [vmem:[%s392 + $0x1f8] sm:$0xff]
        %v7877 = vadd.f32 %v7845, %v7861
        %v7878 = vadd.f32 %v7846, %v7862
        %v7879 = vadd.f32 %v7847, %v7863
        %v7880 = vadd.f32 %v7848, %v7864
        %v7881 = vadd.f32 %v7849, %v7865
        %v7882 = vadd.f32 %v7850, %v7866
        %v7883 = vadd.f32 %v7851, %v7867
        %v7884 = vadd.f32 %v7852, %v7868
        %v7885 = vadd.f32 %v7853, %v7869
        %v7886 = vadd.f32 %v7854, %v7870
        %v7887 = vadd.f32 %v7855, %v7871
        %v7888 = vadd.f32 %v7856, %v7872
        %v7889 = vadd.f32 %v7857, %v7873
        %v7890 = vadd.f32 %v7858, %v7874
        %v7891 = vadd.f32 %v7859, %v7875
        %v7892 = vadd.f32 %v7860, %v7876
        %7893 = vst [vmem:[%s419 + $0x180] sm:$0xff] %v7877
        %7894 = vst [vmem:[%s419 + $0x188] sm:$0xff] %v7878
        %7895 = vst [vmem:[%s419 + $0x190] sm:$0xff] %v7879
        %7896 = vst [vmem:[%s419 + $0x198] sm:$0xff] %v7880
        %7897 = vst [vmem:[%s419 + $0x1a0] sm:$0xff] %v7881
        %7898 = vst [vmem:[%s419 + $0x1a8] sm:$0xff] %v7882
        %7899 = vst [vmem:[%s419 + $0x1b0] sm:$0xff] %v7883
        %7900 = vst [vmem:[%s419 + $0x1b8] sm:$0xff] %v7884
        %7901 = vst [vmem:[%s419 + $0x1c0] sm:$0xff] %v7885
        %7902 = vst [vmem:[%s419 + $0x1c8] sm:$0xff] %v7886
        %7903 = vst [vmem:[%s419 + $0x1d0] sm:$0xff] %v7887
        %7904 = vst [vmem:[%s419 + $0x1d8] sm:$0xff] %v7888
        %7905 = vst [vmem:[%s419 + $0x1e0] sm:$0xff] %v7889
        %7906 = vst [vmem:[%s419 + $0x1e8] sm:$0xff] %v7890
        %7907 = vst [vmem:[%s419 + $0x1f0] sm:$0xff] %v7891
        %7908 = vst [vmem:[%s419 + $0x1f8] sm:$0xff] %v7892
        %s7909 = sand.u32 %s179, 1
        %s7910 = sand.u32 %s179, 1
        %s7911 = smul.addr %s7910, 512
        %s7912 = scalar_lea.vmem [#allocation4], %s7911
        // Predicated region
        $region72: #{chunked_self_attn_fm.1} parent=66 // pred_check
          %p7913 = pneg %p189
        $region73: #{chunked_self_attn_fm.1} parent=66 // pred_check_branch
          %7915 = sbr.rel (%p7913) target = $region75
        $region74: #{chunked_self_attn_fm.1} parent=66 // pred_region
          %s7916 = smul.u32 16, %s19
          %s7917 = smul.addr %s7916, 8
          %s7918 = scalar_lea.vmem %s7, %s7917
          // Predicated region
          $region76: #{chunked_self_attn_fm.1} parent=74 // pred_check
            _
          $region77: #{chunked_self_attn_fm.1} parent=74 // pred_check_branch
            %7920 = sbr.rel (0) target = $region79
          $region78: #{chunked_self_attn_fm.1} parent=74 // pred_region
            // Predicated region
            $region80: #{chunked_self_attn_fm.1} parent=78 // pred_check
              _
            $region81: #{chunked_self_attn_fm.1} parent=78 // pred_check_branch
              %7922 = sbr.rel (0) target = $region83
            $region82: #{chunked_self_attn_fm.1} parent=78 // pred_region
              loop: start=0, step=1, limit=1
              $region84: #{chunked_self_attn_fm.1} parent=82 // loop_pre_header
                _
              $region85: #{chunked_self_attn_fm.1} parent=82 // loop_header
                %s7924 = sphi 0, %s7928
                %p7925 = scmp.ge.s32.totalorder %s7924, 1
                %s7929 = sphi %s7912, %s7912
                %s7930 = sphi %s7918, %s7918
              $region86: #{chunked_self_attn_fm.1} parent=82 // loop_header_branch
                %7927 = sbr.rel (%p7925) target = $region90
              $region87: #{chunked_self_attn_fm.1} parent=82 // loop_body
                %v7931 = vld [vmem:[%s7929] sm:$0xff]
                %7932 = vst [vmem:[%s7930] sm:$0xff] %v7931
                %v7933 = vld [vmem:[%s7929 + $0x8] sm:$0xff]
                %7934 = vst [vmem:[%s7930 + $0x8] sm:$0xff] %v7933
                %v7935 = vld [vmem:[%s7929 + $0x10] sm:$0xff]
                %7936 = vst [vmem:[%s7930 + $0x10] sm:$0xff] %v7935
                %v7937 = vld [vmem:[%s7929 + $0x18] sm:$0xff]
                %7938 = vst [vmem:[%s7930 + $0x18] sm:$0xff] %v7937
                %v7939 = vld [vmem:[%s7929 + $0x20] sm:$0xff]
                %7940 = vst [vmem:[%s7930 + $0x20] sm:$0xff] %v7939
                %v7941 = vld [vmem:[%s7929 + $0x28] sm:$0xff]
                %7942 = vst [vmem:[%s7930 + $0x28] sm:$0xff] %v7941
                %v7943 = vld [vmem:[%s7929 + $0x30] sm:$0xff]
                %7944 = vst [vmem:[%s7930 + $0x30] sm:$0xff] %v7943
                %v7945 = vld [vmem:[%s7929 + $0x38] sm:$0xff]
                %7946 = vst [vmem:[%s7930 + $0x38] sm:$0xff] %v7945
                %v7947 = vld [vmem:[%s7929 + $0x40] sm:$0xff]
                %7948 = vst [vmem:[%s7930 + $0x40] sm:$0xff] %v7947
                %v7949 = vld [vmem:[%s7929 + $0x48] sm:$0xff]
                %7950 = vst [vmem:[%s7930 + $0x48] sm:$0xff] %v7949
                %v7951 = vld [vmem:[%s7929 + $0x50] sm:$0xff]
                %7952 = vst [vmem:[%s7930 + $0x50] sm:$0xff] %v7951
                %v7953 = vld [vmem:[%s7929 + $0x58] sm:$0xff]
                %7954 = vst [vmem:[%s7930 + $0x58] sm:$0xff] %v7953
                %v7955 = vld [vmem:[%s7929 + $0x60] sm:$0xff]
                %7956 = vst [vmem:[%s7930 + $0x60] sm:$0xff] %v7955
                %v7957 = vld [vmem:[%s7929 + $0x68] sm:$0xff]
                %7958 = vst [vmem:[%s7930 + $0x68] sm:$0xff] %v7957
                %v7959 = vld [vmem:[%s7929 + $0x70] sm:$0xff]
                %7960 = vst [vmem:[%s7930 + $0x70] sm:$0xff] %v7959
                %v7961 = vld [vmem:[%s7929 + $0x78] sm:$0xff]
                %7962 = vst [vmem:[%s7930 + $0x78] sm:$0xff] %v7961
                %v7963 = vld [vmem:[%s7929 + $0x80] sm:$0xff]
                %7964 = vst [vmem:[%s7930 + $0x200] sm:$0xff] %v7963
                %v7965 = vld [vmem:[%s7929 + $0x88] sm:$0xff]
                %7966 = vst [vmem:[%s7930 + $0x208] sm:$0xff] %v7965
                %v7967 = vld [vmem:[%s7929 + $0x90] sm:$0xff]
                %7968 = vst [vmem:[%s7930 + $0x210] sm:$0xff] %v7967
                %v7969 = vld [vmem:[%s7929 + $0x98] sm:$0xff]
                %7970 = vst [vmem:[%s7930 + $0x218] sm:$0xff] %v7969
                %v7971 = vld [vmem:[%s7929 + $0xa0] sm:$0xff]
                %7972 = vst [vmem:[%s7930 + $0x220] sm:$0xff] %v7971
                %v7973 = vld [vmem:[%s7929 + $0xa8] sm:$0xff]
                %7974 = vst [vmem:[%s7930 + $0x228] sm:$0xff] %v7973
                %v7975 = vld [vmem:[%s7929 + $0xb0] sm:$0xff]
                %7976 = vst [vmem:[%s7930 + $0x230] sm:$0xff] %v7975
                %v7977 = vld [vmem:[%s7929 + $0xb8] sm:$0xff]
                %7978 = vst [vmem:[%s7930 + $0x238] sm:$0xff] %v7977
                %v7979 = vld [vmem:[%s7929 + $0xc0] sm:$0xff]
                %7980 = vst [vmem:[%s7930 + $0x240] sm:$0xff] %v7979
                %v7981 = vld [vmem:[%s7929 + $0xc8] sm:$0xff]
                %7982 = vst [vmem:[%s7930 + $0x248] sm:$0xff] %v7981
                %v7983 = vld [vmem:[%s7929 + $0xd0] sm:$0xff]
                %7984 = vst [vmem:[%s7930 + $0x250] sm:$0xff] %v7983
                %v7985 = vld [vmem:[%s7929 + $0xd8] sm:$0xff]
                %7986 = vst [vmem:[%s7930 + $0x258] sm:$0xff] %v7985
                %v7987 = vld [vmem:[%s7929 + $0xe0] sm:$0xff]
                %7988 = vst [vmem:[%s7930 + $0x260] sm:$0xff] %v7987
                %v7989 = vld [vmem:[%s7929 + $0xe8] sm:$0xff]
                %7990 = vst [vmem:[%s7930 + $0x268] sm:$0xff] %v7989
                %v7991 = vld [vmem:[%s7929 + $0xf0] sm:$0xff]
                %7992 = vst [vmem:[%s7930 + $0x270] sm:$0xff] %v7991
                %v7993 = vld [vmem:[%s7929 + $0xf8] sm:$0xff]
                %7994 = vst [vmem:[%s7930 + $0x278] sm:$0xff] %v7993
                %v7995 = vld [vmem:[%s7929 + $0x100] sm:$0xff]
                %7996 = vst [vmem:[%s7930 + $0x400] sm:$0xff] %v7995
                %v7997 = vld [vmem:[%s7929 + $0x108] sm:$0xff]
                %7998 = vst [vmem:[%s7930 + $0x408] sm:$0xff] %v7997
                %v7999 = vld [vmem:[%s7929 + $0x110] sm:$0xff]
                %8000 = vst [vmem:[%s7930 + $0x410] sm:$0xff] %v7999
                %v8001 = vld [vmem:[%s7929 + $0x118] sm:$0xff]
                %8002 = vst [vmem:[%s7930 + $0x418] sm:$0xff] %v8001
                %v8003 = vld [vmem:[%s7929 + $0x120] sm:$0xff]
                %8004 = vst [vmem:[%s7930 + $0x420] sm:$0xff] %v8003
                %v8005 = vld [vmem:[%s7929 + $0x128] sm:$0xff]
                %8006 = vst [vmem:[%s7930 + $0x428] sm:$0xff] %v8005
                %v8007 = vld [vmem:[%s7929 + $0x130] sm:$0xff]
                %8008 = vst [vmem:[%s7930 + $0x430] sm:$0xff] %v8007
                %v8009 = vld [vmem:[%s7929 + $0x138] sm:$0xff]
                %8010 = vst [vmem:[%s7930 + $0x438] sm:$0xff] %v8009
                %v8011 = vld [vmem:[%s7929 + $0x140] sm:$0xff]
                %8012 = vst [vmem:[%s7930 + $0x440] sm:$0xff] %v8011
                %v8013 = vld [vmem:[%s7929 + $0x148] sm:$0xff]
                %8014 = vst [vmem:[%s7930 + $0x448] sm:$0xff] %v8013
                %v8015 = vld [vmem:[%s7929 + $0x150] sm:$0xff]
                %8016 = vst [vmem:[%s7930 + $0x450] sm:$0xff] %v8015
                %v8017 = vld [vmem:[%s7929 + $0x158] sm:$0xff]
                %8018 = vst [vmem:[%s7930 + $0x458] sm:$0xff] %v8017
                %v8019 = vld [vmem:[%s7929 + $0x160] sm:$0xff]
                %8020 = vst [vmem:[%s7930 + $0x460] sm:$0xff] %v8019
                %v8021 = vld [vmem:[%s7929 + $0x168] sm:$0xff]
                %8022 = vst [vmem:[%s7930 + $0x468] sm:$0xff] %v8021
                %v8023 = vld [vmem:[%s7929 + $0x170] sm:$0xff]
                %8024 = vst [vmem:[%s7930 + $0x470] sm:$0xff] %v8023
                %v8025 = vld [vmem:[%s7929 + $0x178] sm:$0xff]
                %8026 = vst [vmem:[%s7930 + $0x478] sm:$0xff] %v8025
                %v8027 = vld [vmem:[%s7929 + $0x180] sm:$0xff]
                %8028 = vst [vmem:[%s7930 + $0x600] sm:$0xff] %v8027
                %v8029 = vld [vmem:[%s7929 + $0x188] sm:$0xff]
                %8030 = vst [vmem:[%s7930 + $0x608] sm:$0xff] %v8029
                %v8031 = vld [vmem:[%s7929 + $0x190] sm:$0xff]
                %8032 = vst [vmem:[%s7930 + $0x610] sm:$0xff] %v8031
                %v8033 = vld [vmem:[%s7929 + $0x198] sm:$0xff]
                %8034 = vst [vmem:[%s7930 + $0x618] sm:$0xff] %v8033
                %v8035 = vld [vmem:[%s7929 + $0x1a0] sm:$0xff]
                %8036 = vst [vmem:[%s7930 + $0x620] sm:$0xff] %v8035
                %v8037 = vld [vmem:[%s7929 + $0x1a8] sm:$0xff]
                %8038 = vst [vmem:[%s7930 + $0x628] sm:$0xff] %v8037
                %v8039 = vld [vmem:[%s7929 + $0x1b0] sm:$0xff]
                %8040 = vst [vmem:[%s7930 + $0x630] sm:$0xff] %v8039
                %v8041 = vld [vmem:[%s7929 + $0x1b8] sm:$0xff]
                %8042 = vst [vmem:[%s7930 + $0x638] sm:$0xff] %v8041
                %v8043 = vld [vmem:[%s7929 + $0x1c0] sm:$0xff]
                %8044 = vst [vmem:[%s7930 + $0x640] sm:$0xff] %v8043
                %v8045 = vld [vmem:[%s7929 + $0x1c8] sm:$0xff]
                %8046 = vst [vmem:[%s7930 + $0x648] sm:$0xff] %v8045
                %v8047 = vld [vmem:[%s7929 + $0x1d0] sm:$0xff]
                %8048 = vst [vmem:[%s7930 + $0x650] sm:$0xff] %v8047
                %v8049 = vld [vmem:[%s7929 + $0x1d8] sm:$0xff]
                %8050 = vst [vmem:[%s7930 + $0x658] sm:$0xff] %v8049
                %v8051 = vld [vmem:[%s7929 + $0x1e0] sm:$0xff]
                %8052 = vst [vmem:[%s7930 + $0x660] sm:$0xff] %v8051
                %v8053 = vld [vmem:[%s7929 + $0x1e8] sm:$0xff]
                %8054 = vst [vmem:[%s7930 + $0x668] sm:$0xff] %v8053
                %v8055 = vld [vmem:[%s7929 + $0x1f0] sm:$0xff]
                %8056 = vst [vmem:[%s7930 + $0x670] sm:$0xff] %v8055
                %v8057 = vld [vmem:[%s7929 + $0x1f8] sm:$0xff]
                %8058 = vst [vmem:[%s7930 + $0x678] sm:$0xff] %v8057
              $region88: #{chunked_self_attn_fm.1} parent=82 // loop_footer
                %s7928 = sadd.s32 1, %s7924
              $region89: #{chunked_self_attn_fm.1} parent=82 // loop_footer_branch
                %7923 = sbr.rel target = $region85
              $region90: #{chunked_self_attn_fm.1} parent=82 // loop_exit
                _
            $region83: #{chunked_self_attn_fm.1} parent=78 // pred_fallthru
              _
            // Predicated region
            $region91: #{chunked_self_attn_fm.1} parent=78 // pred_check
              _
            $region92: #{chunked_self_attn_fm.1} parent=78 // pred_check_branch
              %8060 = sbr.rel target = $region94
            $region93: #{chunked_self_attn_fm.1} parent=78 // pred_region
              _
            $region94: #{chunked_self_attn_fm.1} parent=78 // pred_fallthru
              _
          $region79: #{chunked_self_attn_fm.1} parent=74 // pred_fallthru
            _
          %8061 = vnop
        $region75: #{chunked_self_attn_fm.1} parent=66 // pred_fallthru
          _
      $region67: #{chunked_self_attn_fm.1} parent=5 // pred_fallthru
        _
      %p8062 = scmp.le.s32.totalorder 2, %s14
      // Predicated region
      $region95: #{chunked_self_attn_fm.1} parent=5 // pred_check
        %p8063 = pneg %p8062
      $region96: #{chunked_self_attn_fm.1} parent=5 // pred_check_branch
        %8065 = sbr.rel (%p8063) target = $region98
      $region97: #{chunked_self_attn_fm.1} parent=5 // pred_region
        %s8066 = ssub.s32 %s14, 2
        // Predicated region
        $region99: #{chunked_self_attn_fm.1} parent=97 // pred_check
          %p8067 = pneg %p195
        $region100: #{chunked_self_attn_fm.1} parent=97 // pred_check_branch
          %8069 = sbr.rel (%p8067) target = $region102
        $region101: #{chunked_self_attn_fm.1} parent=97 // pred_region
          %s8070 = sand.u32 %s180, 1
          %s8071 = sand.u32 %s180, 1
          %s8072 = smul.addr %s8071, 512
          %s8073 = scalar_lea.vmem [#allocation4], %s8072
        $region102: #{chunked_self_attn_fm.1} parent=97 // pred_fallthru
          _
      $region98: #{chunked_self_attn_fm.1} parent=5 // pred_fallthru
        _
    $region6: #{chunked_self_attn_fm.1} parent=1 // loop_footer
      %s18 = sadd.s32 1, %s14
    $region7: #{chunked_self_attn_fm.1} parent=1 // loop_footer_branch
      %13 = sbr.rel target = $region3
    $region8: #{chunked_self_attn_fm.1} parent=1 // loop_exit
      _

</llo_original>
